<compile_context>
chip_gen: v5e
topology: v5e:2x2
jax: 0.10.0
libtpu: 0.0.40
codegen_flags: <defaults>
</compile_context>

<pallas_src>
import jax
import jax.numpy as jnp
from jax import lax
from jax.experimental import pallas as pl
from jax.experimental.pallas import tpu as pltpu

K = 4                       # kernel size of every ConvTranspose2d
STRIDES = [1, 2, 2, 2, 2]
PADS    = [0, 1, 1, 1, 1]
BN_EPS  = 1e-5
FINAL_LANE_TILES = 2        # one tile per TensorCore on v7x


# ----------------------------- Pallas kernels ------------------------------

def _gemm_bn_elu_kernel(w_ref, p_ref, g_ref, b_ref, o_ref):
    """Fused (transposed im2col GEMM) + BatchNorm(batch stats) + ELU.

    One grid step: y (Cout, M) is produced once on the MXU (bf16 x bf16 -> f32),
    per-channel stats are a lane (XLU) reduction, normalization broadcasts
    along lanes, and the tile is stored once with dense lane stores.
    """
    y = jnp.dot(w_ref[...], p_ref[...], preferred_element_type=jnp.float32)
    mean = jnp.mean(y, axis=1, keepdims=True)
    c = y - mean
    var = jnp.mean(c * c, axis=1, keepdims=True)          # two-pass: no cancellation
    yn = c * lax.rsqrt(var + BN_EPS) * g_ref[...] + b_ref[...]
    o_ref[...] = jnp.where(yn > 0, yn, jnp.exp(yn) - 1.0).astype(o_ref.dtype)


def _gemm_tanh_kernel(w_ref, p_ref, o_ref):
    """Final layer: (Cout, Kdim) bf16 @ (Kdim, tn) bf16 -> f32 on the MXU, tanh."""
    y = jnp.dot(w_ref[...], p_ref[...], preferred_element_type=jnp.float32)
    o_ref[...] = jnp.tanh(y)


# ------------------------------ call wrappers -------------------------------

def fused_gemm_bn_elu(w_t, patches_t, gamma, beta):
    """w_t (Cout, Kdim) bf16, patches_t (Kdim, M) bf16 -> (Cout, M) bf16."""
    cout, kdim = w_t.shape
    m = patches_t.shape[1]
    return pl.pallas_call(
        _gemm_bn_elu_kernel,
        out_shape=jax.ShapeDtypeStruct((cout, m), jnp.bfloat16),
        grid=(1,),
        in_specs=[pl.BlockSpec((cout, kdim), lambda i: (0, 0)),
                  pl.BlockSpec((kdim, m), lambda i: (0, 0)),
                  pl.BlockSpec((cout, 1), lambda i: (0, 0)),
                  pl.BlockSpec((cout, 1), lambda i: (0, 0))],
        out_specs=pl.BlockSpec((cout, m), lambda i: (0, 0)),
        compiler_params=pltpu.CompilerParams(
            dimension_semantics=("arbitrary",)),
    )(w_t, patches_t, gamma, beta)


def fused_gemm_tanh(w_t, patches_t):
    """w_t (Cout, Kdim) bf16, patches_t (Kdim, M) bf16 -> (Cout, M) f32."""
    cout, kdim = w_t.shape
    m = patches_t.shape[1]
    n_tiles = FINAL_LANE_TILES if m % (128 * FINAL_LANE_TILES) == 0 else 1
    tn = m // n_tiles
    return pl.pallas_call(
        _gemm_tanh_kernel,
        out_shape=jax.ShapeDtypeStruct((cout, m), jnp.float32),
        grid=(n_tiles,),
        in_specs=[pl.BlockSpec((cout, kdim), lambda j: (0, 0)),
                  pl.BlockSpec((kdim, tn), lambda j: (0, j))],
        out_specs=pl.BlockSpec((cout, tn), lambda j: (0, j)),
        compiler_params=pltpu.CompilerParams(
            dimension_semantics=("parallel",)),
    )(w_t, patches_t)


# ------------------------------ JAX glue ops ---------------------------------

def dilate_pad(x_cnhw, stride, pad):
    """Interior-dilate spatial dims by (stride-1) zeros and edge-pad by `pad`,
    in one lax.pad.  x is (C, N, H, W)."""
    zero = jnp.zeros((), x_cnhw.dtype)
    cfg = ((0, 0, 0), (0, 0, 0),
           (pad, pad, stride - 1), (pad, pad, stride - 1))
    return lax.pad(x_cnhw, zero, cfg)


def im2col_t(xp, k):
    """(C, N, Hp, Wp) -> ((k*k*C, N*Ho*Wo), (N, Ho, Wo)) transposed patches."""
    C, N, Hp, Wp = xp.shape
    Ho, Wo = Hp - k + 1, Wp - k + 1
    cols = [xp[:, :, di:di + Ho, dj:dj + Wo]
            for di in range(k) for dj in range(k)]
    patches = jnp.stack(cols, axis=0)            # (k*k, C, N, Ho, Wo)
    return patches.reshape(k * k * C, N * Ho * Wo), (N, Ho, Wo)


def weight_to_gemm_t(w_t):
    """ConvTranspose2d weight (Cin, Cout, k, k) -> GEMM matrix (Cout, k*k*Cin)
    for the equivalent flipped-kernel valid conv, transposed layout."""
    wf = w_t[:, :, ::-1, ::-1]                   # spatial flip
    wm = jnp.transpose(wf, (2, 3, 0, 1))         # (kh, kw, Cin, Cout)
    return wm.reshape(-1, w_t.shape[1]).T        # (Cout, kh*kw*Cin)


# -------------------------- Generator forward --------------------------------

def init_generator_params(key, context, features, channels):
    dims = [(context, features * 8),
            (features * 8, features * 4),
            (features * 4, features * 2),
            (features * 2, features),
            (features, channels)]
    params = []
    n = len(dims)
    for i, (cin, cout) in enumerate(dims):
        key, sub = jax.random.split(key)
        w = jax.random.normal(sub, (cin, cout, K, K), jnp.float32) * 0.05
        layer = {"wT": weight_to_gemm_t(w).astype(jnp.bfloat16)}   # (Cout, Kdim)
        if i < n - 1:                            # BatchNorm after first 4 layers
            layer["gamma"] = jnp.ones((cout, 1), jnp.float32)
            layer["beta"] = jnp.zeros((cout, 1), jnp.float32)
        params.append(layer)
    return params


@jax.jit
def generator_forward(x_nchw, params):
    """x_nchw: (N, context, 1, 1) -> (N, channels, 64, 64)"""
    # channels-first (C, N, H, W) bf16 pipeline
    x = jnp.transpose(x_nchw, (1, 0, 2, 3)).astype(jnp.bfloat16)
    n_layers = len(params)
    for i, p in enumerate(params):
        stride, pad = STRIDES[i], PADS[i]
        xp = dilate_pad(x, stride, K - 1 - pad)
        patches_t, (N, Ho, Wo) = im2col_t(xp, K)
        cout = p["wT"].shape[0]
        if i < n_layers - 1:
            y = fused_gemm_bn_elu(p["wT"], patches_t, p["gamma"], p["beta"])
            x = y.reshape(cout, N, Ho, Wo)
        else:
            y = fused_gemm_tanh(p["wT"], patches_t)          # (cout, M) f32
            return jnp.transpose(y.reshape(cout, N, Ho, Wo), (1, 0, 2, 3))


@jax.jit
def generator_forward_ref(x_nchw, params):
    """Pure-jnp reference using the same math / quantization points."""
    x = jnp.transpose(x_nchw, (1, 0, 2, 3)).astype(jnp.bfloat16)
    n_layers = len(params)
    for i, p in enumerate(params):
        stride, pad = STRIDES[i], PADS[i]
        xp = dilate_pad(x, stride, K - 1 - pad)
        patches_t, (N, Ho, Wo) = im2col_t(xp, K)
        w = p["wT"].astype(jnp.float32)
        y = w @ patches_t.astype(jnp.float32)
        cout = w.shape[0]
        if i == n_layers - 1:
            y = jnp.tanh(y)
            return jnp.transpose(y.reshape(cout, N, Ho, Wo), (1, 0, 2, 3))
        mean = jnp.mean(y, axis=1, keepdims=True)
        c = y - mean
        var = jnp.mean(c * c, axis=1, keepdims=True)
        yn = c * lax.rsqrt(var + BN_EPS) * p["gamma"] + p["beta"]
        y = jnp.where(yn > 0, yn, jnp.exp(yn) - 1.0)
        x = y.astype(jnp.bfloat16).reshape(cout, N, Ho, Wo)


# --------------------------------- main ---------------------------------------

if __name__ == "__main__":
    context, features, channels, batch = 16, 8, 1, 2

    key = jax.random.PRNGKey(0)
    key_w, key_x = jax.random.split(key)
    params = init_generator_params(key_w, context, features, channels)

    # DCGAN latent: (N, context, 1, 1)
    x = jax.random.normal(key_x, (batch, context, 1, 1), jnp.float32)

    out = jax.block_until_ready(generator_forward(x, params))
    assert out.shape == (batch, channels, 64, 64), out.shape
    assert out.dtype == jnp.float32

    ref = jax.block_until_ready(generator_forward_ref(x, params))
    max_err = float(jnp.max(jnp.abs(out - ref)))
    # bf16 MXU inputs + f32 accumulation on both paths; tolerance covers
    # accumulation-order / bf16-rounding differences only.
    assert jnp.allclose(out, ref, atol=1e-2, rtol=1e-2), max_err

    print("KERNEL_OK")
</pallas_src>

<mosaic_0001>
module attributes {stable_mosaic.version = 11 : i64} {
  func.func @_gemm_bn_elu_kernel(%arg0: i32, %arg1: memref<64x256xbf16, #tpu.memory_space<vmem>>, %arg2: memref<256x32xbf16, #tpu.memory_space<vmem>>, %arg3: memref<64x1xf32, #tpu.memory_space<vmem>>, %arg4: memref<64x1xf32, #tpu.memory_space<vmem>>, %arg5: memref<64x32xbf16, #tpu.memory_space<vmem>>) attributes {dimension_semantics = [#tpu.dimension_semantics<arbitrary>], iteration_bounds = array<i64: 1>, scalar_prefetch = 0 : i64, scratch_operands = 0 : i64, tpu.core_type = #tpu.core_type<tc>, window_params = [{pipeline_mode = #tpu.pipeline_mode<synchronous>, transform_indices = @transform_0, window_bounds = array<i64: 64, 256>}, {pipeline_mode = #tpu.pipeline_mode<synchronous>, transform_indices = @transform_1, window_bounds = array<i64: 256, 32>}, {pipeline_mode = #tpu.pipeline_mode<synchronous>, transform_indices = @transform_2, window_bounds = array<i64: 64, 1>}, {pipeline_mode = #tpu.pipeline_mode<synchronous>, transform_indices = @transform_3, window_bounds = array<i64: 64, 1>}, {pipeline_mode = #tpu.pipeline_mode<synchronous>, transform_indices = @transform_4, window_bounds = array<i64: 64, 32>}]} {
    %c0 = arith.constant 0 : index
    %c0_0 = arith.constant 0 : index
    %0 = vector.load %arg1[%c0, %c0_0] : memref<64x256xbf16, #tpu.memory_space<vmem>>, vector<64x256xbf16>
    %c0_1 = arith.constant 0 : index
    %c0_2 = arith.constant 0 : index
    %1 = vector.load %arg2[%c0_1, %c0_2] : memref<256x32xbf16, #tpu.memory_space<vmem>>, vector<256x32xbf16>
    %cst = arith.constant dense<0.000000e+00> : vector<64x32xf32>
    %2 = tpu.matmul %0, %1, %cst {dimension_numbers = #tpu.dot_dimension_numbers<[1], [0], [0], [1], [0, 0, 1, 1], [], []>} : vector<64x256xbf16>, vector<256x32xbf16>, vector<64x32xf32> -> vector<64x32xf32>
    %cst_3 = arith.constant dense<0.000000e+00> : vector<64xf32>
    %3 = vector.multi_reduction <add>, %2, %cst_3 [1] : vector<64x32xf32> to vector<64xf32>
    %4 = vector.shape_cast %3 : vector<64xf32> to vector<64x1xf32>
    %cst_4 = arith.constant 3.200000e+01 : f32
    %5 = vector.broadcast %cst_4 : f32 to vector<64x1xf32>
    %6 = arith.divf %4, %5 : vector<64x1xf32>
    %7 = vector.broadcast %6 : vector<64x1xf32> to vector<64x32xf32>
    %8 = arith.subf %2, %7 : vector<64x32xf32>
    %9 = arith.mulf %8, %8 : vector<64x32xf32>
    %cst_5 = arith.constant dense<0.000000e+00> : vector<64xf32>
    %10 = vector.multi_reduction <add>, %9, %cst_5 [1] : vector<64x32xf32> to vector<64xf32>
    %11 = vector.shape_cast %10 : vector<64xf32> to vector<64x1xf32>
    %cst_6 = arith.constant 3.200000e+01 : f32
    %12 = vector.broadcast %cst_6 : f32 to vector<64x1xf32>
    %13 = arith.divf %11, %12 : vector<64x1xf32>
    %cst_7 = arith.constant 9.99999974E-6 : f32
    %14 = vector.broadcast %cst_7 : f32 to vector<64x1xf32>
    %15 = arith.addf %13, %14 : vector<64x1xf32>
    %16 = math.rsqrt %15 : vector<64x1xf32>
    %17 = vector.broadcast %16 : vector<64x1xf32> to vector<64x32xf32>
    %18 = arith.mulf %8, %17 : vector<64x32xf32>
    %c0_8 = arith.constant 0 : index
    %c0_9 = arith.constant 0 : index
    %19 = vector.load %arg3[%c0_8, %c0_9] : memref<64x1xf32, #tpu.memory_space<vmem>>, vector<64x1xf32>
    %20 = vector.broadcast %19 : vector<64x1xf32> to vector<64x32xf32>
    %21 = arith.mulf %18, %20 : vector<64x32xf32>
    %c0_10 = arith.constant 0 : index
    %c0_11 = arith.constant 0 : index
    %22 = vector.load %arg4[%c0_10, %c0_11] : memref<64x1xf32, #tpu.memory_space<vmem>>, vector<64x1xf32>
    %23 = vector.broadcast %22 : vector<64x1xf32> to vector<64x32xf32>
    %24 = arith.addf %21, %23 : vector<64x32xf32>
    %cst_12 = arith.constant 0.000000e+00 : f32
    %25 = vector.broadcast %cst_12 : f32 to vector<64x32xf32>
    %26 = arith.cmpf ogt, %24, %25 : vector<64x32xf32>
    %27 = math.exp %24 : vector<64x32xf32>
    %cst_13 = arith.constant 1.000000e+00 : f32
    %28 = vector.broadcast %cst_13 : f32 to vector<64x32xf32>
    %29 = arith.subf %27, %28 : vector<64x32xf32>
    %30 = arith.select %26, %24, %29 : vector<64x32xi1>, vector<64x32xf32>
    %31 = arith.truncf %30 : vector<64x32xf32> to vector<64x32xbf16>
    %c0_14 = arith.constant 0 : index
    %c0_15 = arith.constant 0 : index
    %32 = vector.load %arg5[%c0_14, %c0_15] : memref<64x32xbf16, #tpu.memory_space<vmem>>, vector<64x32xbf16>
    tpu.vector_store %arg5[%c0_14, %c0_15], %31 {strides = array<i32>} : memref<64x32xbf16, #tpu.memory_space<vmem>>, vector<64x32xbf16>,
    return
  }
  func.func @transform_0(%arg0: i32) -> (i32, i32) {
    %c0_i32 = arith.constant 0 : i32
    %c0_i32_0 = arith.constant 0 : i32
    %c0_i32_1 = arith.constant 0 : i32
    return %c0_i32, %c0_i32_0 : i32, i32
  }
  func.func @transform_1(%arg0: i32) -> (i32, i32) {
    %c0_i32 = arith.constant 0 : i32
    %c0_i32_0 = arith.constant 0 : i32
    %c0_i32_1 = arith.constant 0 : i32
    return %c0_i32, %c0_i32_0 : i32, i32
  }
  func.func @transform_2(%arg0: i32) -> (i32, i32) {
    %c0_i32 = arith.constant 0 : i32
    %c0_i32_0 = arith.constant 0 : i32
    %c0_i32_1 = arith.constant 0 : i32
    return %c0_i32, %c0_i32_0 : i32, i32
  }
  func.func @transform_3(%arg0: i32) -> (i32, i32) {
    %c0_i32 = arith.constant 0 : i32
    %c0_i32_0 = arith.constant 0 : i32
    %c0_i32_1 = arith.constant 0 : i32
    return %c0_i32, %c0_i32_0 : i32, i32
  }
  func.func @transform_4(%arg0: i32) -> (i32, i32) {
    %c0_i32 = arith.constant 0 : i32
    %c0_i32_0 = arith.constant 0 : i32
    %c0_i32_1 = arith.constant 0 : i32
    return %c0_i32, %c0_i32_0 : i32, i32
  }
}

module attributes {stable_mosaic.version = 11 : i64} {
  func.func @_gemm_bn_elu_kernel(%arg0: i32, %arg1: memref<32x1024xbf16, #tpu.memory_space<vmem>>, %arg2: memref<1024x128xbf16, #tpu.memory_space<vmem>>, %arg3: memref<32x1xf32, #tpu.memory_space<vmem>>, %arg4: memref<32x1xf32, #tpu.memory_space<vmem>>, %arg5: memref<32x128xbf16, #tpu.memory_space<vmem>>) attributes {dimension_semantics = [#tpu.dimension_semantics<arbitrary>], iteration_bounds = array<i64: 1>, scalar_prefetch = 0 : i64, scratch_operands = 0 : i64, tpu.core_type = #tpu.core_type<tc>, window_params = [{pipeline_mode = #tpu.pipeline_mode<synchronous>, transform_indices = @transform_0, window_bounds = array<i64: 32, 1024>}, {pipeline_mode = #tpu.pipeline_mode<synchronous>, transform_indices = @transform_1, window_bounds = array<i64: 1024, 128>}, {pipeline_mode = #tpu.pipeline_mode<synchronous>, transform_indices = @transform_2, window_bounds = array<i64: 32, 1>}, {pipeline_mode = #tpu.pipeline_mode<synchronous>, transform_indices = @transform_3, window_bounds = array<i64: 32, 1>}, {pipeline_mode = #tpu.pipeline_mode<synchronous>, transform_indices = @transform_4, window_bounds = array<i64: 32, 128>}]} {
    %c0 = arith.constant 0 : index
    %c0_0 = arith.constant 0 : index
    %0 = vector.load %arg1[%c0, %c0_0] : memref<32x1024xbf16, #tpu.memory_space<vmem>>, vector<32x1024xbf16>
    %c0_1 = arith.constant 0 : index
    %c0_2 = arith.constant 0 : index
    %1 = vector.load %arg2[%c0_1, %c0_2] : memref<1024x128xbf16, #tpu.memory_space<vmem>>, vector<1024x128xbf16>
    %cst = arith.constant dense<0.000000e+00> : vector<32x128xf32>
    %2 = tpu.matmul %0, %1, %cst {dimension_numbers = #tpu.dot_dimension_numbers<[1], [0], [0], [1], [0, 0, 1, 1], [], []>} : vector<32x1024xbf16>, vector<1024x128xbf16>, vector<32x128xf32> -> vector<32x128xf32>
    %cst_3 = arith.constant dense<0.000000e+00> : vector<32xf32>
    %3 = vector.multi_reduction <add>, %2, %cst_3 [1] : vector<32x128xf32> to vector<32xf32>
    %4 = vector.shape_cast %3 : vector<32xf32> to vector<32x1xf32>
    %cst_4 = arith.constant 1.280000e+02 : f32
    %5 = vector.broadcast %cst_4 : f32 to vector<32x1xf32>
    %6 = arith.divf %4, %5 : vector<32x1xf32>
    %7 = vector.broadcast %6 : vector<32x1xf32> to vector<32x128xf32>
    %8 = arith.subf %2, %7 : vector<32x128xf32>
    %9 = arith.mulf %8, %8 : vector<32x128xf32>
    %cst_5 = arith.constant dense<0.000000e+00> : vector<32xf32>
    %10 = vector.multi_reduction <add>, %9, %cst_5 [1] : vector<32x128xf32> to vector<32xf32>
    %11 = vector.shape_cast %10 : vector<32xf32> to vector<32x1xf32>
    %cst_6 = arith.constant 1.280000e+02 : f32
    %12 = vector.broadcast %cst_6 : f32 to vector<32x1xf32>
    %13 = arith.divf %11, %12 : vector<32x1xf32>
    %cst_7 = arith.constant 9.99999974E-6 : f32
    %14 = vector.broadcast %cst_7 : f32 to vector<32x1xf32>
    %15 = arith.addf %13, %14 : vector<32x1xf32>
    %16 = math.rsqrt %15 : vector<32x1xf32>
    %17 = vector.broadcast %16 : vector<32x1xf32> to vector<32x128xf32>
    %18 = arith.mulf %8, %17 : vector<32x128xf32>
    %c0_8 = arith.constant 0 : index
    %c0_9 = arith.constant 0 : index
    %19 = vector.load %arg3[%c0_8, %c0_9] : memref<32x1xf32, #tpu.memory_space<vmem>>, vector<32x1xf32>
    %20 = vector.broadcast %19 : vector<32x1xf32> to vector<32x128xf32>
    %21 = arith.mulf %18, %20 : vector<32x128xf32>
    %c0_10 = arith.constant 0 : index
    %c0_11 = arith.constant 0 : index
    %22 = vector.load %arg4[%c0_10, %c0_11] : memref<32x1xf32, #tpu.memory_space<vmem>>, vector<32x1xf32>
    %23 = vector.broadcast %22 : vector<32x1xf32> to vector<32x128xf32>
    %24 = arith.addf %21, %23 : vector<32x128xf32>
    %cst_12 = arith.constant 0.000000e+00 : f32
    %25 = vector.broadcast %cst_12 : f32 to vector<32x128xf32>
    %26 = arith.cmpf ogt, %24, %25 : vector<32x128xf32>
    %27 = math.exp %24 : vector<32x128xf32>
    %cst_13 = arith.constant 1.000000e+00 : f32
    %28 = vector.broadcast %cst_13 : f32 to vector<32x128xf32>
    %29 = arith.subf %27, %28 : vector<32x128xf32>
    %30 = arith.select %26, %24, %29 : vector<32x128xi1>, vector<32x128xf32>
    %31 = arith.truncf %30 : vector<32x128xf32> to vector<32x128xbf16>
    %c0_14 = arith.constant 0 : index
    %c0_15 = arith.constant 0 : index
    %32 = vector.load %arg5[%c0_14, %c0_15] : memref<32x128xbf16, #tpu.memory_space<vmem>>, vector<32x128xbf16>
    tpu.vector_store %arg5[%c0_14, %c0_15], %31 {strides = array<i32>} : memref<32x128xbf16, #tpu.memory_space<vmem>>, vector<32x128xbf16>,
    return
  }
  func.func @transform_0(%arg0: i32) -> (i32, i32) {
    %c0_i32 = arith.constant 0 : i32
    %c0_i32_0 = arith.constant 0 : i32
    %c0_i32_1 = arith.constant 0 : i32
    return %c0_i32, %c0_i32_0 : i32, i32
  }
  func.func @transform_1(%arg0: i32) -> (i32, i32) {
    %c0_i32 = arith.constant 0 : i32
    %c0_i32_0 = arith.constant 0 : i32
    %c0_i32_1 = arith.constant 0 : i32
    return %c0_i32, %c0_i32_0 : i32, i32
  }
  func.func @transform_2(%arg0: i32) -> (i32, i32) {
    %c0_i32 = arith.constant 0 : i32
    %c0_i32_0 = arith.constant 0 : i32
    %c0_i32_1 = arith.constant 0 : i32
    return %c0_i32, %c0_i32_0 : i32, i32
  }
  func.func @transform_3(%arg0: i32) -> (i32, i32) {
    %c0_i32 = arith.constant 0 : i32
    %c0_i32_0 = arith.constant 0 : i32
    %c0_i32_1 = arith.constant 0 : i32
    return %c0_i32, %c0_i32_0 : i32, i32
  }
  func.func @transform_4(%arg0: i32) -> (i32, i32) {
    %c0_i32 = arith.constant 0 : i32
    %c0_i32_0 = arith.constant 0 : i32
    %c0_i32_1 = arith.constant 0 : i32
    return %c0_i32, %c0_i32_0 : i32, i32
  }
}

module attributes {stable_mosaic.version = 11 : i64} {
  func.func @_gemm_bn_elu_kernel(%arg0: i32, %arg1: memref<16x512xbf16, #tpu.memory_space<vmem>>, %arg2: memref<512x512xbf16, #tpu.memory_space<vmem>>, %arg3: memref<16x1xf32, #tpu.memory_space<vmem>>, %arg4: memref<16x1xf32, #tpu.memory_space<vmem>>, %arg5: memref<16x512xbf16, #tpu.memory_space<vmem>>) attributes {dimension_semantics = [#tpu.dimension_semantics<arbitrary>], iteration_bounds = array<i64: 1>, scalar_prefetch = 0 : i64, scratch_operands = 0 : i64, tpu.core_type = #tpu.core_type<tc>, window_params = [{pipeline_mode = #tpu.pipeline_mode<synchronous>, transform_indices = @transform_0, window_bounds = array<i64: 16, 512>}, {pipeline_mode = #tpu.pipeline_mode<synchronous>, transform_indices = @transform_1, window_bounds = array<i64: 512, 512>}, {pipeline_mode = #tpu.pipeline_mode<synchronous>, transform_indices = @transform_2, window_bounds = array<i64: 16, 1>}, {pipeline_mode = #tpu.pipeline_mode<synchronous>, transform_indices = @transform_3, window_bounds = array<i64: 16, 1>}, {pipeline_mode = #tpu.pipeline_mode<synchronous>, transform_indices = @transform_4, window_bounds = array<i64: 16, 512>}]} {
    %c0 = arith.constant 0 : index
    %c0_0 = arith.constant 0 : index
    %0 = vector.load %arg1[%c0, %c0_0] : memref<16x512xbf16, #tpu.memory_space<vmem>>, vector<16x512xbf16>
    %c0_1 = arith.constant 0 : index
    %c0_2 = arith.constant 0 : index
    %1 = vector.load %arg2[%c0_1, %c0_2] : memref<512x512xbf16, #tpu.memory_space<vmem>>, vector<512x512xbf16>
    %cst = arith.constant dense<0.000000e+00> : vector<16x512xf32>
    %2 = tpu.matmul %0, %1, %cst {dimension_numbers = #tpu.dot_dimension_numbers<[1], [0], [0], [1], [0, 0, 1, 1], [], []>} : vector<16x512xbf16>, vector<512x512xbf16>, vector<16x512xf32> -> vector<16x512xf32>
    %cst_3 = arith.constant dense<0.000000e+00> : vector<16xf32>
    %3 = vector.multi_reduction <add>, %2, %cst_3 [1] : vector<16x512xf32> to vector<16xf32>
    %4 = vector.shape_cast %3 : vector<16xf32> to vector<16x1xf32>
    %cst_4 = arith.constant 5.120000e+02 : f32
    %5 = vector.broadcast %cst_4 : f32 to vector<16x1xf32>
    %6 = arith.divf %4, %5 : vector<16x1xf32>
    %7 = vector.broadcast %6 : vector<16x1xf32> to vector<16x512xf32>
    %8 = arith.subf %2, %7 : vector<16x512xf32>
    %9 = arith.mulf %8, %8 : vector<16x512xf32>
    %cst_5 = arith.constant dense<0.000000e+00> : vector<16xf32>
    %10 = vector.multi_reduction <add>, %9, %cst_5 [1] : vector<16x512xf32> to vector<16xf32>
    %11 = vector.shape_cast %10 : vector<16xf32> to vector<16x1xf32>
    %cst_6 = arith.constant 5.120000e+02 : f32
    %12 = vector.broadcast %cst_6 : f32 to vector<16x1xf32>
    %13 = arith.divf %11, %12 : vector<16x1xf32>
    %cst_7 = arith.constant 9.99999974E-6 : f32
    %14 = vector.broadcast %cst_7 : f32 to vector<16x1xf32>
    %15 = arith.addf %13, %14 : vector<16x1xf32>
    %16 = math.rsqrt %15 : vector<16x1xf32>
    %17 = vector.broadcast %16 : vector<16x1xf32> to vector<16x512xf32>
    %18 = arith.mulf %8, %17 : vector<16x512xf32>
    %c0_8 = arith.constant 0 : index
    %c0_9 = arith.constant 0 : index
    %19 = vector.load %arg3[%c0_8, %c0_9] : memref<16x1xf32, #tpu.memory_space<vmem>>, vector<16x1xf32>
    %20 = vector.broadcast %19 : vector<16x1xf32> to vector<16x512xf32>
    %21 = arith.mulf %18, %20 : vector<16x512xf32>
    %c0_10 = arith.constant 0 : index
    %c0_11 = arith.constant 0 : index
    %22 = vector.load %arg4[%c0_10, %c0_11] : memref<16x1xf32, #tpu.memory_space<vmem>>, vector<16x1xf32>
    %23 = vector.broadcast %22 : vector<16x1xf32> to vector<16x512xf32>
    %24 = arith.addf %21, %23 : vector<16x512xf32>
    %cst_12 = arith.constant 0.000000e+00 : f32
    %25 = vector.broadcast %cst_12 : f32 to vector<16x512xf32>
    %26 = arith.cmpf ogt, %24, %25 : vector<16x512xf32>
    %27 = math.exp %24 : vector<16x512xf32>
    %cst_13 = arith.constant 1.000000e+00 : f32
    %28 = vector.broadcast %cst_13 : f32 to vector<16x512xf32>
    %29 = arith.subf %27, %28 : vector<16x512xf32>
    %30 = arith.select %26, %24, %29 : vector<16x512xi1>, vector<16x512xf32>
    %31 = arith.truncf %30 : vector<16x512xf32> to vector<16x512xbf16>
    %c0_14 = arith.constant 0 : index
    %c0_15 = arith.constant 0 : index
    %32 = vector.load %arg5[%c0_14, %c0_15] : memref<16x512xbf16, #tpu.memory_space<vmem>>, vector<16x512xbf16>
    tpu.vector_store %arg5[%c0_14, %c0_15], %31 {strides = array<i32>} : memref<16x512xbf16, #tpu.memory_space<vmem>>, vector<16x512xbf16>,
    return
  }
  func.func @transform_0(%arg0: i32) -> (i32, i32) {
    %c0_i32 = arith.constant 0 : i32
    %c0_i32_0 = arith.constant 0 : i32
    %c0_i32_1 = arith.constant 0 : i32
    return %c0_i32, %c0_i32_0 : i32, i32
  }
  func.func @transform_1(%arg0: i32) -> (i32, i32) {
    %c0_i32 = arith.constant 0 : i32
    %c0_i32_0 = arith.constant 0 : i32
    %c0_i32_1 = arith.constant 0 : i32
    return %c0_i32, %c0_i32_0 : i32, i32
  }
  func.func @transform_2(%arg0: i32) -> (i32, i32) {
    %c0_i32 = arith.constant 0 : i32
    %c0_i32_0 = arith.constant 0 : i32
    %c0_i32_1 = arith.constant 0 : i32
    return %c0_i32, %c0_i32_0 : i32, i32
  }
  func.func @transform_3(%arg0: i32) -> (i32, i32) {
    %c0_i32 = arith.constant 0 : i32
    %c0_i32_0 = arith.constant 0 : i32
    %c0_i32_1 = arith.constant 0 : i32
    return %c0_i32, %c0_i32_0 : i32, i32
  }
  func.func @transform_4(%arg0: i32) -> (i32, i32) {
    %c0_i32 = arith.constant 0 : i32
    %c0_i32_0 = arith.constant 0 : i32
    %c0_i32_1 = arith.constant 0 : i32
    return %c0_i32, %c0_i32_0 : i32, i32
  }
}

module attributes {stable_mosaic.version = 11 : i64} {
  func.func @_gemm_bn_elu_kernel(%arg0: i32, %arg1: memref<8x256xbf16, #tpu.memory_space<vmem>>, %arg2: memref<256x2048xbf16, #tpu.memory_space<vmem>>, %arg3: memref<8x1xf32, #tpu.memory_space<vmem>>, %arg4: memref<8x1xf32, #tpu.memory_space<vmem>>, %arg5: memref<8x2048xbf16, #tpu.memory_space<vmem>>) attributes {dimension_semantics = [#tpu.dimension_semantics<arbitrary>], iteration_bounds = array<i64: 1>, scalar_prefetch = 0 : i64, scratch_operands = 0 : i64, tpu.core_type = #tpu.core_type<tc>, window_params = [{pipeline_mode = #tpu.pipeline_mode<synchronous>, transform_indices = @transform_0, window_bounds = array<i64: 8, 256>}, {pipeline_mode = #tpu.pipeline_mode<synchronous>, transform_indices = @transform_1, window_bounds = array<i64: 256, 2048>}, {pipeline_mode = #tpu.pipeline_mode<synchronous>, transform_indices = @transform_2, window_bounds = array<i64: 8, 1>}, {pipeline_mode = #tpu.pipeline_mode<synchronous>, transform_indices = @transform_3, window_bounds = array<i64: 8, 1>}, {pipeline_mode = #tpu.pipeline_mode<synchronous>, transform_indices = @transform_4, window_bounds = array<i64: 8, 2048>}]} {
    %c0 = arith.constant 0 : index
    %c0_0 = arith.constant 0 : index
    %0 = vector.load %arg1[%c0, %c0_0] : memref<8x256xbf16, #tpu.memory_space<vmem>>, vector<8x256xbf16>
    %c0_1 = arith.constant 0 : index
    %c0_2 = arith.constant 0 : index
    %1 = vector.load %arg2[%c0_1, %c0_2] : memref<256x2048xbf16, #tpu.memory_space<vmem>>, vector<256x2048xbf16>
    %cst = arith.constant dense<0.000000e+00> : vector<8x2048xf32>
    %2 = tpu.matmul %0, %1, %cst {dimension_numbers = #tpu.dot_dimension_numbers<[1], [0], [0], [1], [0, 0, 1, 1], [], []>} : vector<8x256xbf16>, vector<256x2048xbf16>, vector<8x2048xf32> -> vector<8x2048xf32>
    %cst_3 = arith.constant dense<0.000000e+00> : vector<8xf32>
    %3 = vector.multi_reduction <add>, %2, %cst_3 [1] : vector<8x2048xf32> to vector<8xf32>
    %4 = vector.shape_cast %3 : vector<8xf32> to vector<8x1xf32>
    %cst_4 = arith.constant 2.048000e+03 : f32
    %5 = vector.broadcast %cst_4 : f32 to vector<8x1xf32>
    %6 = arith.divf %4, %5 : vector<8x1xf32>
    %7 = vector.broadcast %6 : vector<8x1xf32> to vector<8x2048xf32>
    %8 = arith.subf %2, %7 : vector<8x2048xf32>
    %9 = arith.mulf %8, %8 : vector<8x2048xf32>
    %cst_5 = arith.constant dense<0.000000e+00> : vector<8xf32>
    %10 = vector.multi_reduction <add>, %9, %cst_5 [1] : vector<8x2048xf32> to vector<8xf32>
    %11 = vector.shape_cast %10 : vector<8xf32> to vector<8x1xf32>
    %cst_6 = arith.constant 2.048000e+03 : f32
    %12 = vector.broadcast %cst_6 : f32 to vector<8x1xf32>
    %13 = arith.divf %11, %12 : vector<8x1xf32>
    %cst_7 = arith.constant 9.99999974E-6 : f32
    %14 = vector.broadcast %cst_7 : f32 to vector<8x1xf32>
    %15 = arith.addf %13, %14 : vector<8x1xf32>
    %16 = math.rsqrt %15 : vector<8x1xf32>
    %17 = vector.broadcast %16 : vector<8x1xf32> to vector<8x2048xf32>
    %18 = arith.mulf %8, %17 : vector<8x2048xf32>
    %c0_8 = arith.constant 0 : index
    %c0_9 = arith.constant 0 : index
    %19 = vector.load %arg3[%c0_8, %c0_9] : memref<8x1xf32, #tpu.memory_space<vmem>>, vector<8x1xf32>
    %20 = vector.broadcast %19 : vector<8x1xf32> to vector<8x2048xf32>
    %21 = arith.mulf %18, %20 : vector<8x2048xf32>
    %c0_10 = arith.constant 0 : index
    %c0_11 = arith.constant 0 : index
    %22 = vector.load %arg4[%c0_10, %c0_11] : memref<8x1xf32, #tpu.memory_space<vmem>>, vector<8x1xf32>
    %23 = vector.broadcast %22 : vector<8x1xf32> to vector<8x2048xf32>
    %24 = arith.addf %21, %23 : vector<8x2048xf32>
    %cst_12 = arith.constant 0.000000e+00 : f32
    %25 = vector.broadcast %cst_12 : f32 to vector<8x2048xf32>
    %26 = arith.cmpf ogt, %24, %25 : vector<8x2048xf32>
    %27 = math.exp %24 : vector<8x2048xf32>
    %cst_13 = arith.constant 1.000000e+00 : f32
    %28 = vector.broadcast %cst_13 : f32 to vector<8x2048xf32>
    %29 = arith.subf %27, %28 : vector<8x2048xf32>
    %30 = arith.select %26, %24, %29 : vector<8x2048xi1>, vector<8x2048xf32>
    %31 = arith.truncf %30 : vector<8x2048xf32> to vector<8x2048xbf16>
    %c0_14 = arith.constant 0 : index
    %c0_15 = arith.constant 0 : index
    %32 = vector.load %arg5[%c0_14, %c0_15] : memref<8x2048xbf16, #tpu.memory_space<vmem>>, vector<8x2048xbf16>
    tpu.vector_store %arg5[%c0_14, %c0_15], %31 {strides = array<i32>} : memref<8x2048xbf16, #tpu.memory_space<vmem>>, vector<8x2048xbf16>,
    return
  }
  func.func @transform_0(%arg0: i32) -> (i32, i32) {
    %c0_i32 = arith.constant 0 : i32
    %c0_i32_0 = arith.constant 0 : i32
    %c0_i32_1 = arith.constant 0 : i32
    return %c0_i32, %c0_i32_0 : i32, i32
  }
  func.func @transform_1(%arg0: i32) -> (i32, i32) {
    %c0_i32 = arith.constant 0 : i32
    %c0_i32_0 = arith.constant 0 : i32
    %c0_i32_1 = arith.constant 0 : i32
    return %c0_i32, %c0_i32_0 : i32, i32
  }
  func.func @transform_2(%arg0: i32) -> (i32, i32) {
    %c0_i32 = arith.constant 0 : i32
    %c0_i32_0 = arith.constant 0 : i32
    %c0_i32_1 = arith.constant 0 : i32
    return %c0_i32, %c0_i32_0 : i32, i32
  }
  func.func @transform_3(%arg0: i32) -> (i32, i32) {
    %c0_i32 = arith.constant 0 : i32
    %c0_i32_0 = arith.constant 0 : i32
    %c0_i32_1 = arith.constant 0 : i32
    return %c0_i32, %c0_i32_0 : i32, i32
  }
  func.func @transform_4(%arg0: i32) -> (i32, i32) {
    %c0_i32 = arith.constant 0 : i32
    %c0_i32_0 = arith.constant 0 : i32
    %c0_i32_1 = arith.constant 0 : i32
    return %c0_i32, %c0_i32_0 : i32, i32
  }
}

module attributes {stable_mosaic.version = 11 : i64} {
  func.func @_gemm_tanh_kernel(%arg0: i32, %arg1: memref<1x128xbf16, #tpu.memory_space<vmem>>, %arg2: memref<128x4096xbf16, #tpu.memory_space<vmem>>, %arg3: memref<1x4096xf32, #tpu.memory_space<vmem>>) attributes {dimension_semantics = [#tpu.dimension_semantics<parallel>], iteration_bounds = array<i64: 2>, scalar_prefetch = 0 : i64, scratch_operands = 0 : i64, tpu.core_type = #tpu.core_type<tc>, window_params = [{pipeline_mode = #tpu.pipeline_mode<synchronous>, transform_indices = @transform_0, window_bounds = array<i64: 1, 128>}, {transform_indices = @transform_1, window_bounds = array<i64: 128, 4096>}, {transform_indices = @transform_2, window_bounds = array<i64: 1, 4096>}]} {
    %c0 = arith.constant 0 : index
    %c0_0 = arith.constant 0 : index
    %0 = vector.load %arg1[%c0, %c0_0] : memref<1x128xbf16, #tpu.memory_space<vmem>>, vector<1x128xbf16>
    %c0_1 = arith.constant 0 : index
    %c0_2 = arith.constant 0 : index
    %1 = vector.load %arg2[%c0_1, %c0_2] : memref<128x4096xbf16, #tpu.memory_space<vmem>>, vector<128x4096xbf16>
    %cst = arith.constant dense<0.000000e+00> : vector<1x4096xf32>
    %2 = tpu.matmul %0, %1, %cst {dimension_numbers = #tpu.dot_dimension_numbers<[1], [0], [0], [1], [0, 0, 1, 1], [], []>} : vector<1x128xbf16>, vector<128x4096xbf16>, vector<1x4096xf32> -> vector<1x4096xf32>
    %3 = math.tanh %2 : vector<1x4096xf32>
    %c0_3 = arith.constant 0 : index
    %c0_4 = arith.constant 0 : index
    %4 = vector.load %arg3[%c0_3, %c0_4] : memref<1x4096xf32, #tpu.memory_space<vmem>>, vector<1x4096xf32>
    tpu.vector_store %arg3[%c0_3, %c0_4], %3 {strides = array<i32>} : memref<1x4096xf32, #tpu.memory_space<vmem>>, vector<1x4096xf32>,
    return
  }
  func.func @transform_0(%arg0: i32) -> (i32, i32) {
    %c0_i32 = arith.constant 0 : i32
    %c0_i32_0 = arith.constant 0 : i32
    %c0_i32_1 = arith.constant 0 : i32
    return %c0_i32, %c0_i32_0 : i32, i32
  }
  func.func @transform_1(%arg0: i32) -> (i32, i32) {
    %c0_i32 = arith.constant 0 : i32
    %c0_i32_0 = arith.constant 0 : i32
    return %c0_i32, %arg0 : i32, i32
  }
  func.func @transform_2(%arg0: i32) -> (i32, i32) {
    %c0_i32 = arith.constant 0 : i32
    %c0_i32_0 = arith.constant 0 : i32
    return %c0_i32, %arg0 : i32, i32
  }
}

</mosaic_0001>

<llo_original>
// kernel: generator_forward.5
$region0: #{generator_forward.5}
  #allocation0 [shape = 'u32[]', space=smem, size = 0x4, offset = 0x4, fixed_abs, tag = 'smem constant byte address 0x4 - core index']
  #allocation1 [shape = 'u32[72,128]{1,0:T(1,128)}', space=vmem, size = 0x9000, scoped, tag = 'internal scratch']
  %s0 = inlined_call_operand.hbm [shape: bf16[64,256], index: 0, kind: input, shape index: {}]
  %s1 = inlined_call_operand.vmem [shape: bf16[256,32], index: 1, kind: input, shape index: {}]
  %s2 = inlined_call_operand.vmem [shape: f32[64,1], index: 2, kind: input, shape index: {}]
  %s3 = inlined_call_operand.vmem [shape: f32[64,1], index: 3, kind: input, shape index: {}]
  %s4 = inlined_call_operand.vmem [shape: bf16[64,32], index: 4, kind: output, shape index: {}]
  %s5 = sld [smem:[#allocation0]]
  $region30: #{generator_forward.5} parent=0
    _
  %s7 = ssub.s32 1, %s5
  %s8 = scalar_select 0, %s7, %s5
  $region1: #{generator_forward.5} parent=0
    #allocation2 [shape = 'u8[32768]{0}', space=vmem, size = 0x8000, scoped, tag = 'input window, operand 0, single buffered']
    #allocation3 [shape = 's32[1]{0}', space=sflag, size = 0x4, scoped, tag = 'scoped memory for generator_forward.5']
    %9 = vsyncpa [#allocation3], 0
    // Predicated region
    $region2: #{generator_forward.5} parent=1 // pred_check
      _
    $region3: #{generator_forward.5} parent=1 // pred_check_branch
      %11 = sbr.rel (0) target = $region5
    $region4: #{generator_forward.5} parent=1 // pred_region
      %13 = vsyncadd [#allocation3], 0
      %s14 = sshll.u32 %s0, 4
      %s15 = int_to_ptr.hbm [resolvable:$true] %s14
      %s16 = sshll.u32 [#allocation2], 4
      %s17 = int_to_ptr.vmem [resolvable:$true] %s16
      %22 = dma.hbm_to_vmem [thread:$0]  %s15, 1024, %s17, [#allocation3], 128, 128, 8
    $region5: #{generator_forward.5} parent=1 // pred_fallthru
      _
    // Predicated region
    $region6: #{generator_forward.5} parent=1 // pred_check
      _
    $region7: #{generator_forward.5} parent=1 // pred_check_branch
      %24 = sbr.rel (0) target = $region9
    $region8: #{generator_forward.5} parent=1 // pred_region
      _
    $region9: #{generator_forward.5} parent=1 // pred_fallthru
      _
    // Predicated region
    $region10: #{generator_forward.5} parent=1 // pred_check
      _
    $region11: #{generator_forward.5} parent=1 // pred_check_branch
      %26 = sbr.rel (0) target = $region13
    $region12: #{generator_forward.5} parent=1 // pred_region
      _
    $region13: #{generator_forward.5} parent=1 // pred_fallthru
      _
    // Predicated region
    $region14: #{generator_forward.5} parent=1 // pred_check
      _
    $region15: #{generator_forward.5} parent=1 // pred_check_branch
      %28 = sbr.rel (0) target = $region17
    $region16: #{generator_forward.5} parent=1 // pred_region
      _
    $region17: #{generator_forward.5} parent=1 // pred_fallthru
      _
    // Predicated region
    $region18: #{generator_forward.5} parent=1 // pred_check
      _
    $region19: #{generator_forward.5} parent=1 // pred_check_branch
      %30 = sbr.rel (0) target = $region21
    $region20: #{generator_forward.5} parent=1 // pred_region
      %32 = dma.done [#allocation3], 1024
    $region21: #{generator_forward.5} parent=1 // pred_fallthru
      _
    %v33 = vld [vmem:[#allocation2] sm:$0xff]
    %v34 = vld [vmem:[#allocation2 + $0x8] sm:$0xff]
    %v35 = vld [vmem:[#allocation2 + $0x10] sm:$0xff]
    %v36 = vld [vmem:[#allocation2 + $0x18] sm:$0xff]
    %v37 = vld [vmem:[#allocation2 + $0x20] sm:$0xff]
    %v38 = vld [vmem:[#allocation2 + $0x28] sm:$0xff]
    %v39 = vld [vmem:[#allocation2 + $0x30] sm:$0xff]
    %v40 = vld [vmem:[#allocation2 + $0x38] sm:$0xff]
    %v41 = vld [vmem:[%s1] sm:$0xf]
    %v42 = vld [vmem:[%s1 + $0x4] sm:$0xf]
    %v43 = vld [vmem:[%s1 + $0x8] sm:$0xf]
    %v44 = vld [vmem:[%s1 + $0xc] sm:$0xf]
    %v45 = vld [vmem:[%s1 + $0x10] sm:$0xf]
    %v46 = vld [vmem:[%s1 + $0x14] sm:$0xf]
    %v47 = vld [vmem:[%s1 + $0x18] sm:$0xf]
    %v48 = vld [vmem:[%s1 + $0x1c] sm:$0xf]
    %v49 = vld [vmem:[%s1 + $0x20] sm:$0xf]
    %v50 = vld [vmem:[%s1 + $0x24] sm:$0xf]
    %v51 = vld [vmem:[%s1 + $0x28] sm:$0xf]
    %v52 = vld [vmem:[%s1 + $0x2c] sm:$0xf]
    %v53 = vld [vmem:[%s1 + $0x30] sm:$0xf]
    %v54 = vld [vmem:[%s1 + $0x34] sm:$0xf]
    %v55 = vld [vmem:[%s1 + $0x38] sm:$0xf]
    %v56 = vld [vmem:[%s1 + $0x3c] sm:$0xf]
    %v57 = vld [vmem:[%s1 + $0x40] sm:$0xf]
    %v58 = vld [vmem:[%s1 + $0x44] sm:$0xf]
    %v59 = vld [vmem:[%s1 + $0x48] sm:$0xf]
    %v60 = vld [vmem:[%s1 + $0x4c] sm:$0xf]
    %v61 = vld [vmem:[%s1 + $0x50] sm:$0xf]
    %v62 = vld [vmem:[%s1 + $0x54] sm:$0xf]
    %v63 = vld [vmem:[%s1 + $0x58] sm:$0xf]
    %v64 = vld [vmem:[%s1 + $0x5c] sm:$0xf]
    %v65 = vld [vmem:[%s1 + $0x60] sm:$0xf]
    %v66 = vld [vmem:[%s1 + $0x64] sm:$0xf]
    %v67 = vld [vmem:[%s1 + $0x68] sm:$0xf]
    %v68 = vld [vmem:[%s1 + $0x6c] sm:$0xf]
    %v69 = vld [vmem:[%s1 + $0x70] sm:$0xf]
    %v70 = vld [vmem:[%s1 + $0x74] sm:$0xf]
    %v71 = vld [vmem:[%s1 + $0x78] sm:$0xf]
    %v72 = vld [vmem:[%s1 + $0x7c] sm:$0xf]
    %v81 = vunpack.c.l.b16 %v33
    %v82 = vunpack.c.h.b16 %v33
    %v83 = vunpack.c.l.b16 %v34
    %v84 = vunpack.c.h.b16 %v34
    %v85 = vunpack.c.l.b16 %v35
    %v86 = vunpack.c.h.b16 %v35
    %v87 = vunpack.c.l.b16 %v36
    %v88 = vunpack.c.h.b16 %v36
    %v89 = vunpack.c.l.b16 %v37
    %v90 = vunpack.c.h.b16 %v37
    %v91 = vunpack.c.l.b16 %v38
    %v92 = vunpack.c.h.b16 %v38
    %v93 = vunpack.c.l.b16 %v39
    %v94 = vunpack.c.h.b16 %v39
    %v95 = vunpack.c.l.b16 %v40
    %v96 = vunpack.c.h.b16 %v40
    %v97 = vpack.c.b16 %v83, %v81
    %v98 = vpack.c.b16 %v84, %v82
    %v99 = vpack.c.b16 %v87, %v85
    %v100 = vpack.c.b16 %v88, %v86
    %v101 = vpack.c.b16 %v91, %v89
    %v102 = vpack.c.b16 %v92, %v90
    %v103 = vpack.c.b16 %v95, %v93
    %v104 = vpack.c.b16 %v96, %v94
    %v145 = vunpack.c.l.b16 %v41
    %v146 = vunpack.c.l.b16 %v42
    %v147 = vunpack.c.l.b16 %v43
    %v148 = vunpack.c.l.b16 %v44
    %v149 = vunpack.c.l.b16 %v45
    %v150 = vunpack.c.l.b16 %v46
    %v151 = vunpack.c.l.b16 %v47
    %v152 = vunpack.c.l.b16 %v48
    %v153 = vunpack.c.l.b16 %v49
    %v154 = vunpack.c.l.b16 %v50
    %v155 = vunpack.c.l.b16 %v51
    %v156 = vunpack.c.l.b16 %v52
    %v157 = vunpack.c.l.b16 %v53
    %v158 = vunpack.c.l.b16 %v54
    %v159 = vunpack.c.l.b16 %v55
    %v160 = vunpack.c.l.b16 %v56
    %v161 = vunpack.c.l.b16 %v57
    %v162 = vunpack.c.l.b16 %v58
    %v163 = vunpack.c.l.b16 %v59
    %v164 = vunpack.c.l.b16 %v60
    %v165 = vunpack.c.l.b16 %v61
    %v166 = vunpack.c.l.b16 %v62
    %v167 = vunpack.c.l.b16 %v63
    %v168 = vunpack.c.l.b16 %v64
    %v169 = vunpack.c.l.b16 %v65
    %v170 = vunpack.c.l.b16 %v66
    %v171 = vunpack.c.l.b16 %v67
    %v172 = vunpack.c.l.b16 %v68
    %v173 = vunpack.c.l.b16 %v69
    %v174 = vunpack.c.l.b16 %v70
    %v175 = vunpack.c.l.b16 %v71
    %v176 = vunpack.c.l.b16 %v72
    %v177 = vpack.c.b16 %v146, %v145
    %v178 = vpack.c.b16 %v148, %v147
    %v179 = vpack.c.b16 %v150, %v149
    %v180 = vpack.c.b16 %v152, %v151
    %v181 = vpack.c.b16 %v154, %v153
    %v182 = vpack.c.b16 %v156, %v155
    %v183 = vpack.c.b16 %v158, %v157
    %v184 = vpack.c.b16 %v160, %v159
    %v185 = vpack.c.b16 %v162, %v161
    %v186 = vpack.c.b16 %v164, %v163
    %v187 = vpack.c.b16 %v166, %v165
    %v188 = vpack.c.b16 %v168, %v167
    %v189 = vpack.c.b16 %v170, %v169
    %v190 = vpack.c.b16 %v172, %v171
    %v191 = vpack.c.b16 %v174, %v173
    %v192 = vpack.c.b16 %v176, %v175
    %209 = vmatpush.bf16.msra.mxu0 %v184
    %210 = vmatpush.bf16.msra.mxu0 %v183
    %211 = vmatpush.bf16.msra.mxu0 %v182
    %212 = vmatpush.bf16.msra.mxu0 %v181
    %213 = vmatpush.bf16.msra.mxu0 %v180
    %214 = vmatpush.bf16.msra.mxu0 %v179
    %215 = vmatpush.bf16.msra.mxu0 %v178
    %216 = vmatpush.bf16.msra.mxu0 %v177
    %217 = vmatmul.bf16.gmra.mxu0 %v97
    %v218 = vpop.f32.mrf.mxu0
    %v219 = vadd.f32 0.0, %v218
    %v220 = vpop.f32.mrf.mxu0
    %v221 = vadd.f32 0.0, %v220
    %222 = vmatmul.bf16.gmra.mxu0 %v99
    %v223 = vpop.f32.mrf.mxu0
    %v224 = vadd.f32 0.0, %v223
    %v225 = vpop.f32.mrf.mxu0
    %v226 = vadd.f32 0.0, %v225
    %227 = vmatmul.bf16.gmra.mxu0 %v101
    %v228 = vpop.f32.mrf.mxu0
    %v229 = vadd.f32 0.0, %v228
    %v230 = vpop.f32.mrf.mxu0
    %v231 = vadd.f32 0.0, %v230
    %232 = vmatmul.bf16.gmra.mxu0 %v103
    %v233 = vpop.f32.mrf.mxu0
    %v234 = vadd.f32 0.0, %v233
    %v235 = vpop.f32.mrf.mxu0
    %v236 = vadd.f32 0.0, %v235
    %237 = vdwg.mxu0
    %238 = vmatpush.bf16.msra.mxu0 %v192
    %239 = vmatpush.bf16.msra.mxu0 %v191
    %240 = vmatpush.bf16.msra.mxu0 %v190
    %241 = vmatpush.bf16.msra.mxu0 %v189
    %242 = vmatpush.bf16.msra.mxu0 %v188
    %243 = vmatpush.bf16.msra.mxu0 %v187
    %244 = vmatpush.bf16.msra.mxu0 %v186
    %245 = vmatpush.bf16.msra.mxu0 %v185
    %246 = vmatmul.bf16.gmra.mxu0 %v98
    %v247 = vpop.f32.mrf.mxu0
    %v248 = vadd.f32 %v219, %v247
    %v249 = vpop.f32.mrf.mxu0
    %v250 = vadd.f32 %v221, %v249
    %251 = vmatmul.bf16.gmra.mxu0 %v100
    %v252 = vpop.f32.mrf.mxu0
    %v253 = vadd.f32 %v224, %v252
    %v254 = vpop.f32.mrf.mxu0
    %v255 = vadd.f32 %v226, %v254
    %256 = vmatmul.bf16.gmra.mxu0 %v102
    %v257 = vpop.f32.mrf.mxu0
    %v258 = vadd.f32 %v229, %v257
    %v259 = vpop.f32.mrf.mxu0
    %v260 = vadd.f32 %v231, %v259
    %261 = vmatmul.bf16.gmra.mxu0 %v104
    %v262 = vpop.f32.mrf.mxu0
    %v263 = vadd.f32 %v234, %v262
    %v264 = vpop.f32.mrf.mxu0
    %v265 = vadd.f32 %v236, %v264
    %266 = vdwg.mxu0
    %vm267 = vcmask 261120
    %v268 = vsel %vm267, %v248, 0.0
    %269 = vadd.xlane.f32.xlu0 %v268
    %v270 = vpop.xlane.xlu0 %269
    %v271 = vsel %vm267, %v250, 0.0
    %272 = vadd.xlane.f32.xlu0 %v271
    %v273 = vpop.xlane.xlu0 %272
    %v274 = vsel %vm267, %v253, 0.0
    %275 = vadd.xlane.f32.xlu0 %v274
    %v276 = vpop.xlane.xlu0 %275
    %v277 = vsel %vm267, %v255, 0.0
    %278 = vadd.xlane.f32.xlu0 %v277
    %v279 = vpop.xlane.xlu0 %278
    %v280 = vsel %vm267, %v258, 0.0
    %281 = vadd.xlane.f32.xlu0 %v280
    %v282 = vpop.xlane.xlu0 %281
    %v283 = vsel %vm267, %v260, 0.0
    %284 = vadd.xlane.f32.xlu0 %v283
    %v285 = vpop.xlane.xlu0 %284
    %v286 = vsel %vm267, %v263, 0.0
    %287 = vadd.xlane.f32.xlu0 %v286
    %v288 = vpop.xlane.xlu0 %287
    %v289 = vsel %vm267, %v265, 0.0
    %290 = vadd.xlane.f32.xlu0 %v289
    %v291 = vpop.xlane.xlu0 %290
    %v292 = vrcp.pop 32.0
    %v293 = vmul.f32 32.0, %v292
    %v294 = vsub.f32 1.0, %v293
    %v295 = vmul.f32 %v292, %v294
    %v296 = vadd.f32 %v292, %v295
    %vm297 = vweird.f32 %v292
    %v298 = vsel %vm297, %v292, %v296
    %v299 = vmul.f32 %v270, %v298
    %v300 = vmul.f32 %v273, %v298
    %v301 = vmul.f32 %v276, %v298
    %v302 = vmul.f32 %v279, %v298
    %v303 = vmul.f32 %v282, %v298
    %v304 = vmul.f32 %v285, %v298
    %v305 = vmul.f32 %v288, %v298
    %v306 = vmul.f32 %v291, %v298
    %v307 = vsub.f32 %v248, %v299
    %v308 = vsub.f32 %v250, %v300
    %v309 = vsub.f32 %v253, %v301
    %v310 = vsub.f32 %v255, %v302
    %v311 = vsub.f32 %v258, %v303
    %v312 = vsub.f32 %v260, %v304
    %v313 = vsub.f32 %v263, %v305
    %v314 = vsub.f32 %v265, %v306
    %v315 = vmul.f32 %v307, %v307
    %v316 = vmul.f32 %v308, %v308
    %v317 = vmul.f32 %v309, %v309
    %v318 = vmul.f32 %v310, %v310
    %v319 = vmul.f32 %v311, %v311
    %v320 = vmul.f32 %v312, %v312
    %v321 = vmul.f32 %v313, %v313
    %v322 = vmul.f32 %v314, %v314
    %v323 = vsel %vm267, %v315, 0.0
    %324 = vadd.xlane.f32.xlu0 %v323
    %v325 = vpop.xlane.xlu0 %324
    %v326 = vsel %vm267, %v316, 0.0
    %327 = vadd.xlane.f32.xlu0 %v326
    %v328 = vpop.xlane.xlu0 %327
    %v329 = vsel %vm267, %v317, 0.0
    %330 = vadd.xlane.f32.xlu0 %v329
    %v331 = vpop.xlane.xlu0 %330
    %v332 = vsel %vm267, %v318, 0.0
    %333 = vadd.xlane.f32.xlu0 %v332
    %v334 = vpop.xlane.xlu0 %333
    %v335 = vsel %vm267, %v319, 0.0
    %336 = vadd.xlane.f32.xlu0 %v335
    %v337 = vpop.xlane.xlu0 %336
    %v338 = vsel %vm267, %v320, 0.0
    %339 = vadd.xlane.f32.xlu0 %v338
    %v340 = vpop.xlane.xlu0 %339
    %v341 = vsel %vm267, %v321, 0.0
    %342 = vadd.xlane.f32.xlu0 %v341
    %v343 = vpop.xlane.xlu0 %342
    %v344 = vsel %vm267, %v322, 0.0
    %345 = vadd.xlane.f32.xlu0 %v344
    %v346 = vpop.xlane.xlu0 %345
    %v347 = vmul.f32 %v325, %v298
    %v348 = vmul.f32 %v328, %v298
    %v349 = vmul.f32 %v331, %v298
    %v350 = vmul.f32 %v334, %v298
    %v351 = vmul.f32 %v337, %v298
    %v352 = vmul.f32 %v340, %v298
    %v353 = vmul.f32 %v343, %v298
    %v354 = vmul.f32 %v346, %v298
    %v355 = vadd.f32 %v347, 1e-05
    %v356 = vadd.f32 %v348, 1e-05
    %v357 = vadd.f32 %v349, 1e-05
    %v358 = vadd.f32 %v350, 1e-05
    %v359 = vadd.f32 %v351, 1e-05
    %v360 = vadd.f32 %v352, 1e-05
    %v361 = vadd.f32 %v353, 1e-05
    %v362 = vadd.f32 %v354, 1e-05
    %v363 = vrsqrt.pop %v355
    %v364 = vmul.f32 %v363, %v355
    %v365 = vmul.f32 %v364, %v363
    %v366 = vmul.f32 0.5, %v365
    %v367 = vsub.f32 1.5, %v366
    %v368 = vmul.f32 %v363, %v367
    %vm369 = vweird.f32 %v355
    %vm370 = vweird.f32 %v363
    %vm371 = vmor %vm369, %vm370
    %v372 = vsel %vm371, %v363, %v368
    %v373 = vrsqrt.pop %v356
    %v374 = vmul.f32 %v373, %v356
    %v375 = vmul.f32 %v374, %v373
    %v376 = vmul.f32 0.5, %v375
    %v377 = vsub.f32 1.5, %v376
    %v378 = vmul.f32 %v373, %v377
    %vm379 = vweird.f32 %v356
    %vm380 = vweird.f32 %v373
    %vm381 = vmor %vm379, %vm380
    %v382 = vsel %vm381, %v373, %v378
    %v383 = vrsqrt.pop %v357
    %v384 = vmul.f32 %v383, %v357
    %v385 = vmul.f32 %v384, %v383
    %v386 = vmul.f32 0.5, %v385
    %v387 = vsub.f32 1.5, %v386
    %v388 = vmul.f32 %v383, %v387
    %vm389 = vweird.f32 %v357
    %vm390 = vweird.f32 %v383
    %vm391 = vmor %vm389, %vm390
    %v392 = vsel %vm391, %v383, %v388
    %v393 = vrsqrt.pop %v358
    %v394 = vmul.f32 %v393, %v358
    %v395 = vmul.f32 %v394, %v393
    %v396 = vmul.f32 0.5, %v395
    %v397 = vsub.f32 1.5, %v396
    %v398 = vmul.f32 %v393, %v397
    %vm399 = vweird.f32 %v358
    %vm400 = vweird.f32 %v393
    %vm401 = vmor %vm399, %vm400
    %v402 = vsel %vm401, %v393, %v398
    %v403 = vrsqrt.pop %v359
    %v404 = vmul.f32 %v403, %v359
    %v405 = vmul.f32 %v404, %v403
    %v406 = vmul.f32 0.5, %v405
    %v407 = vsub.f32 1.5, %v406
    %v408 = vmul.f32 %v403, %v407
    %vm409 = vweird.f32 %v359
    %vm410 = vweird.f32 %v403
    %vm411 = vmor %vm409, %vm410
    %v412 = vsel %vm411, %v403, %v408
    %v413 = vrsqrt.pop %v360
    %v414 = vmul.f32 %v413, %v360
    %v415 = vmul.f32 %v414, %v413
    %v416 = vmul.f32 0.5, %v415
    %v417 = vsub.f32 1.5, %v416
    %v418 = vmul.f32 %v413, %v417
    %vm419 = vweird.f32 %v360
    %vm420 = vweird.f32 %v413
    %vm421 = vmor %vm419, %vm420
    %v422 = vsel %vm421, %v413, %v418
    %v423 = vrsqrt.pop %v361
    %v424 = vmul.f32 %v423, %v361
    %v425 = vmul.f32 %v424, %v423
    %v426 = vmul.f32 0.5, %v425
    %v427 = vsub.f32 1.5, %v426
    %v428 = vmul.f32 %v423, %v427
    %vm429 = vweird.f32 %v361
    %vm430 = vweird.f32 %v423
    %vm431 = vmor %vm429, %vm430
    %v432 = vsel %vm431, %v423, %v428
    %v433 = vrsqrt.pop %v362
    %v434 = vmul.f32 %v433, %v362
    %v435 = vmul.f32 %v434, %v433
    %v436 = vmul.f32 0.5, %v435
    %v437 = vsub.f32 1.5, %v436
    %v438 = vmul.f32 %v433, %v437
    %vm439 = vweird.f32 %v362
    %vm440 = vweird.f32 %v433
    %vm441 = vmor %vm439, %vm440
    %v442 = vsel %vm441, %v433, %v438
    %v443 = vmul.f32 %v307, %v372
    %v444 = vmul.f32 %v308, %v382
    %v445 = vmul.f32 %v309, %v392
    %v446 = vmul.f32 %v310, %v402
    %v447 = vmul.f32 %v311, %v412
    %v448 = vmul.f32 %v312, %v422
    %v449 = vmul.f32 %v313, %v432
    %v450 = vmul.f32 %v314, %v442
    %v451 = vld [vmem:[%s2] sm:$0xff]
    %v452 = vld [vmem:[%s2 + $0x8] sm:$0xff]
    %v453 = vld [vmem:[%s2 + $0x10] sm:$0xff]
    %v454 = vld [vmem:[%s2 + $0x18] sm:$0xff]
    %v455 = vld [vmem:[%s2 + $0x20] sm:$0xff]
    %v456 = vld [vmem:[%s2 + $0x28] sm:$0xff]
    %v457 = vld [vmem:[%s2 + $0x30] sm:$0xff]
    %v458 = vld [vmem:[%s2 + $0x38] sm:$0xff]
    %460 = vset.pattern.permute.xlu0 0
    %461 = vperm.xlu0 %460, %v451
    %v462 = vpop.permute.xlu0 %461
    %465 = vset.pattern.permute.xlu0 0
    %466 = vperm.xlu0 %465, %v452
    %v467 = vpop.permute.xlu0 %466
    %470 = vset.pattern.permute.xlu0 0
    %471 = vperm.xlu0 %470, %v453
    %v472 = vpop.permute.xlu0 %471
    %475 = vset.pattern.permute.xlu0 0
    %476 = vperm.xlu0 %475, %v454
    %v477 = vpop.permute.xlu0 %476
    %480 = vset.pattern.permute.xlu0 0
    %481 = vperm.xlu0 %480, %v455
    %v482 = vpop.permute.xlu0 %481
    %485 = vset.pattern.permute.xlu0 0
    %486 = vperm.xlu0 %485, %v456
    %v487 = vpop.permute.xlu0 %486
    %490 = vset.pattern.permute.xlu0 0
    %491 = vperm.xlu0 %490, %v457
    %v492 = vpop.permute.xlu0 %491
    %495 = vset.pattern.permute.xlu0 0
    %496 = vperm.xlu0 %495, %v458
    %v497 = vpop.permute.xlu0 %496
    %v499 = vmul.f32 %v443, %v462
    %v500 = vmul.f32 %v444, %v467
    %v501 = vmul.f32 %v445, %v472
    %v502 = vmul.f32 %v446, %v477
    %v503 = vmul.f32 %v447, %v482
    %v504 = vmul.f32 %v448, %v487
    %v505 = vmul.f32 %v449, %v492
    %v506 = vmul.f32 %v450, %v497
    %v507 = vld [vmem:[%s3] sm:$0xff]
    %v508 = vld [vmem:[%s3 + $0x8] sm:$0xff]
    %v509 = vld [vmem:[%s3 + $0x10] sm:$0xff]
    %v510 = vld [vmem:[%s3 + $0x18] sm:$0xff]
    %v511 = vld [vmem:[%s3 + $0x20] sm:$0xff]
    %v512 = vld [vmem:[%s3 + $0x28] sm:$0xff]
    %v513 = vld [vmem:[%s3 + $0x30] sm:$0xff]
    %v514 = vld [vmem:[%s3 + $0x38] sm:$0xff]
    %516 = vset.pattern.permute.xlu0 0
    %517 = vperm.xlu0 %516, %v507
    %v518 = vpop.permute.xlu0 %517
    %521 = vset.pattern.permute.xlu0 0
    %522 = vperm.xlu0 %521, %v508
    %v523 = vpop.permute.xlu0 %522
    %526 = vset.pattern.permute.xlu0 0
    %527 = vperm.xlu0 %526, %v509
    %v528 = vpop.permute.xlu0 %527
    %531 = vset.pattern.permute.xlu0 0
    %532 = vperm.xlu0 %531, %v510
    %v533 = vpop.permute.xlu0 %532
    %536 = vset.pattern.permute.xlu0 0
    %537 = vperm.xlu0 %536, %v511
    %v538 = vpop.permute.xlu0 %537
    %541 = vset.pattern.permute.xlu0 0
    %542 = vperm.xlu0 %541, %v512
    %v543 = vpop.permute.xlu0 %542
    %546 = vset.pattern.permute.xlu0 0
    %547 = vperm.xlu0 %546, %v513
    %v548 = vpop.permute.xlu0 %547
    %551 = vset.pattern.permute.xlu0 0
    %552 = vperm.xlu0 %551, %v514
    %v553 = vpop.permute.xlu0 %552
    %v555 = vadd.f32 %v499, %v518
    %v556 = vadd.f32 %v500, %v523
    %v557 = vadd.f32 %v501, %v528
    %v558 = vadd.f32 %v502, %v533
    %v559 = vadd.f32 %v503, %v538
    %v560 = vadd.f32 %v504, %v543
    %v561 = vadd.f32 %v505, %v548
    %v562 = vadd.f32 %v506, %v553
    %vm563 = vcmp.gt.f32.partialorder %v555, 0.0
    %vm564 = vcmp.gt.f32.partialorder %v556, 0.0
    %vm565 = vcmp.gt.f32.partialorder %v557, 0.0
    %vm566 = vcmp.gt.f32.partialorder %v558, 0.0
    %vm567 = vcmp.gt.f32.partialorder %v559, 0.0
    %vm568 = vcmp.gt.f32.partialorder %v560, 0.0
    %vm569 = vcmp.gt.f32.partialorder %v561, 0.0
    %vm570 = vcmp.gt.f32.partialorder %v562, 0.0
    %v571 = vmul.f32 %v555, 1.442695
    %v572 = vpow.pop %v571
    %v573 = vmul.f32 %v556, 1.442695
    %v574 = vpow.pop %v573
    %v575 = vmul.f32 %v557, 1.442695
    %v576 = vpow.pop %v575
    %v577 = vmul.f32 %v558, 1.442695
    %v578 = vpow.pop %v577
    %v579 = vmul.f32 %v559, 1.442695
    %v580 = vpow.pop %v579
    %v581 = vmul.f32 %v560, 1.442695
    %v582 = vpow.pop %v581
    %v583 = vmul.f32 %v561, 1.442695
    %v584 = vpow.pop %v583
    %v585 = vmul.f32 %v562, 1.442695
    %v586 = vpow.pop %v585
    %v587 = vsub.f32 %v572, 1.0
    %v588 = vsub.f32 %v574, 1.0
    %v589 = vsub.f32 %v576, 1.0
    %v590 = vsub.f32 %v578, 1.0
    %v591 = vsub.f32 %v580, 1.0
    %v592 = vsub.f32 %v582, 1.0
    %v593 = vsub.f32 %v584, 1.0
    %v594 = vsub.f32 %v586, 1.0
    %v595 = vsel %vm563, %v555, %v587
    %v596 = vsel %vm564, %v556, %v588
    %v597 = vsel %vm565, %v557, %v589
    %v598 = vsel %vm566, %v558, %v590
    %v599 = vsel %vm567, %v559, %v591
    %v600 = vsel %vm568, %v560, %v592
    %v601 = vsel %vm569, %v561, %v593
    %v602 = vsel %vm570, %v562, %v594
    %v603 = vpack.c.bf16 %v595, %v595
    %v604 = vpack.c.bf16 %v596, %v596
    %v605 = vpack.c.bf16 %v597, %v597
    %v606 = vpack.c.bf16 %v598, %v598
    %v607 = vpack.c.bf16 %v599, %v599
    %v608 = vpack.c.bf16 %v600, %v600
    %v609 = vpack.c.bf16 %v601, %v601
    %v610 = vpack.c.bf16 %v602, %v602
    %vm611 = vcmask 257024
    %612 = vst.msk [vmem:[%s4] sm:$0xf] %vm611, %v603
    %613 = vst.msk [vmem:[%s4 + $0x4] sm:$0xf] %vm611, %v604
    %614 = vst.msk [vmem:[%s4 + $0x8] sm:$0xf] %vm611, %v605
    %615 = vst.msk [vmem:[%s4 + $0xc] sm:$0xf] %vm611, %v606
    %616 = vst.msk [vmem:[%s4 + $0x10] sm:$0xf] %vm611, %v607
    %617 = vst.msk [vmem:[%s4 + $0x14] sm:$0xf] %vm611, %v608
    %618 = vst.msk [vmem:[%s4 + $0x18] sm:$0xf] %vm611, %v609
    %619 = vst.msk [vmem:[%s4 + $0x1c] sm:$0xf] %vm611, %v610
    // Predicated region
    $region22: #{generator_forward.5} parent=1 // pred_check
      _
    $region23: #{generator_forward.5} parent=1 // pred_check_branch
      %621 = sbr.rel (0) target = $region25
    $region24: #{generator_forward.5} parent=1 // pred_region
      _
    $region25: #{generator_forward.5} parent=1 // pred_fallthru
      _
    // Predicated region
    $region26: #{generator_forward.5} parent=1 // pred_check
      _
    $region27: #{generator_forward.5} parent=1 // pred_check_branch
      %623 = sbr.rel (0) target = $region29
    $region28: #{generator_forward.5} parent=1 // pred_region
      _
    $region29: #{generator_forward.5} parent=1 // pred_fallthru
      _
    %624 = vsyncpa [#allocation3], 1

// kernel: generator_forward.6
$region0: #{generator_forward.6}
  #allocation0 [shape = 'u32[]', space=smem, size = 0x4, offset = 0x4, fixed_abs, tag = 'smem constant byte address 0x4 - core index']
  #allocation1 [shape = 'u32[72,128]{1,0:T(1,128)}', space=vmem, size = 0x9000, scoped, tag = 'internal scratch']
  %s0 = inlined_call_operand.vmem [shape: bf16[32,1024], index: 0, kind: input, shape index: {}]
  %s1 = inlined_call_operand.vmem [shape: bf16[1024,128], index: 1, kind: input, shape index: {}]
  %s2 = inlined_call_operand.vmem [shape: f32[32,1], index: 2, kind: input, shape index: {}]
  %s3 = inlined_call_operand.vmem [shape: f32[32,1], index: 3, kind: input, shape index: {}]
  %s4 = inlined_call_operand.vmem [shape: bf16[32,128], index: 4, kind: output, shape index: {}]
  %s5 = sld [smem:[#allocation0]]
  $region26: #{generator_forward.6} parent=0
    _
  %s7 = ssub.s32 1, %s5
  %s8 = scalar_select 0, %s7, %s5
  // Predicated region
  $region2: #{generator_forward.6} parent=0 // pred_check
    _
  $region3: #{generator_forward.6} parent=0 // pred_check_branch
    %10 = sbr.rel (0) target = $region5
  $region4: #{generator_forward.6} parent=0 // pred_region
    _
  $region5: #{generator_forward.6} parent=0 // pred_fallthru
    _
  // Predicated region
  $region6: #{generator_forward.6} parent=0 // pred_check
    _
  $region7: #{generator_forward.6} parent=0 // pred_check_branch
    %12 = sbr.rel (0) target = $region9
  $region8: #{generator_forward.6} parent=0 // pred_region
    _
  $region9: #{generator_forward.6} parent=0 // pred_fallthru
    _
  // Predicated region
  $region10: #{generator_forward.6} parent=0 // pred_check
    _
  $region11: #{generator_forward.6} parent=0 // pred_check_branch
    %14 = sbr.rel (0) target = $region13
  $region12: #{generator_forward.6} parent=0 // pred_region
    _
  $region13: #{generator_forward.6} parent=0 // pred_fallthru
    _
  // Predicated region
  $region14: #{generator_forward.6} parent=0 // pred_check
    _
  $region15: #{generator_forward.6} parent=0 // pred_check_branch
    %16 = sbr.rel (0) target = $region17
  $region16: #{generator_forward.6} parent=0 // pred_region
    _
  $region17: #{generator_forward.6} parent=0 // pred_fallthru
    _
  %v17 = vld [vmem:[%s0] sm:$0xff]
  %v18 = vld [vmem:[%s0 + $0x8] sm:$0xff]
  %v19 = vld [vmem:[%s0 + $0x10] sm:$0xff]
  %v20 = vld [vmem:[%s0 + $0x18] sm:$0xff]
  %v21 = vld [vmem:[%s0 + $0x20] sm:$0xff]
  %v22 = vld [vmem:[%s0 + $0x28] sm:$0xff]
  %v23 = vld [vmem:[%s0 + $0x30] sm:$0xff]
  %v24 = vld [vmem:[%s0 + $0x38] sm:$0xff]
  %v25 = vld [vmem:[%s0 + $0x40] sm:$0xff]
  %v26 = vld [vmem:[%s0 + $0x48] sm:$0xff]
  %v27 = vld [vmem:[%s0 + $0x50] sm:$0xff]
  %v28 = vld [vmem:[%s0 + $0x58] sm:$0xff]
  %v29 = vld [vmem:[%s0 + $0x60] sm:$0xff]
  %v30 = vld [vmem:[%s0 + $0x68] sm:$0xff]
  %v31 = vld [vmem:[%s0 + $0x70] sm:$0xff]
  %v32 = vld [vmem:[%s0 + $0x78] sm:$0xff]
  %v33 = vld [vmem:[%s1] sm:$0xf]
  %v34 = vld [vmem:[%s1 + $0x4] sm:$0xf]
  %v35 = vld [vmem:[%s1 + $0x8] sm:$0xf]
  %v36 = vld [vmem:[%s1 + $0xc] sm:$0xf]
  %v37 = vld [vmem:[%s1 + $0x10] sm:$0xf]
  %v38 = vld [vmem:[%s1 + $0x14] sm:$0xf]
  %v39 = vld [vmem:[%s1 + $0x18] sm:$0xf]
  %v40 = vld [vmem:[%s1 + $0x1c] sm:$0xf]
  %v41 = vld [vmem:[%s1 + $0x20] sm:$0xf]
  %v42 = vld [vmem:[%s1 + $0x24] sm:$0xf]
  %v43 = vld [vmem:[%s1 + $0x28] sm:$0xf]
  %v44 = vld [vmem:[%s1 + $0x2c] sm:$0xf]
  %v45 = vld [vmem:[%s1 + $0x30] sm:$0xf]
  %v46 = vld [vmem:[%s1 + $0x34] sm:$0xf]
  %v47 = vld [vmem:[%s1 + $0x38] sm:$0xf]
  %v48 = vld [vmem:[%s1 + $0x3c] sm:$0xf]
  %v49 = vld [vmem:[%s1 + $0x40] sm:$0xf]
  %v50 = vld [vmem:[%s1 + $0x44] sm:$0xf]
  %v51 = vld [vmem:[%s1 + $0x48] sm:$0xf]
  %v52 = vld [vmem:[%s1 + $0x4c] sm:$0xf]
  %v53 = vld [vmem:[%s1 + $0x50] sm:$0xf]
  %v54 = vld [vmem:[%s1 + $0x54] sm:$0xf]
  %v55 = vld [vmem:[%s1 + $0x58] sm:$0xf]
  %v56 = vld [vmem:[%s1 + $0x5c] sm:$0xf]
  %v57 = vld [vmem:[%s1 + $0x60] sm:$0xf]
  %v58 = vld [vmem:[%s1 + $0x64] sm:$0xf]
  %v59 = vld [vmem:[%s1 + $0x68] sm:$0xf]
  %v60 = vld [vmem:[%s1 + $0x6c] sm:$0xf]
  %v61 = vld [vmem:[%s1 + $0x70] sm:$0xf]
  %v62 = vld [vmem:[%s1 + $0x74] sm:$0xf]
  %v63 = vld [vmem:[%s1 + $0x78] sm:$0xf]
  %v64 = vld [vmem:[%s1 + $0x7c] sm:$0xf]
  %v65 = vld [vmem:[%s1 + $0x80] sm:$0xf]
  %v66 = vld [vmem:[%s1 + $0x84] sm:$0xf]
  %v67 = vld [vmem:[%s1 + $0x88] sm:$0xf]
  %v68 = vld [vmem:[%s1 + $0x8c] sm:$0xf]
  %v69 = vld [vmem:[%s1 + $0x90] sm:$0xf]
  %v70 = vld [vmem:[%s1 + $0x94] sm:$0xf]
  %v71 = vld [vmem:[%s1 + $0x98] sm:$0xf]
  %v72 = vld [vmem:[%s1 + $0x9c] sm:$0xf]
  %v73 = vld [vmem:[%s1 + $0xa0] sm:$0xf]
  %v74 = vld [vmem:[%s1 + $0xa4] sm:$0xf]
  %v75 = vld [vmem:[%s1 + $0xa8] sm:$0xf]
  %v76 = vld [vmem:[%s1 + $0xac] sm:$0xf]
  %v77 = vld [vmem:[%s1 + $0xb0] sm:$0xf]
  %v78 = vld [vmem:[%s1 + $0xb4] sm:$0xf]
  %v79 = vld [vmem:[%s1 + $0xb8] sm:$0xf]
  %v80 = vld [vmem:[%s1 + $0xbc] sm:$0xf]
  %v81 = vld [vmem:[%s1 + $0xc0] sm:$0xf]
  %v82 = vld [vmem:[%s1 + $0xc4] sm:$0xf]
  %v83 = vld [vmem:[%s1 + $0xc8] sm:$0xf]
  %v84 = vld [vmem:[%s1 + $0xcc] sm:$0xf]
  %v85 = vld [vmem:[%s1 + $0xd0] sm:$0xf]
  %v86 = vld [vmem:[%s1 + $0xd4] sm:$0xf]
  %v87 = vld [vmem:[%s1 + $0xd8] sm:$0xf]
  %v88 = vld [vmem:[%s1 + $0xdc] sm:$0xf]
  %v89 = vld [vmem:[%s1 + $0xe0] sm:$0xf]
  %v90 = vld [vmem:[%s1 + $0xe4] sm:$0xf]
  %v91 = vld [vmem:[%s1 + $0xe8] sm:$0xf]
  %v92 = vld [vmem:[%s1 + $0xec] sm:$0xf]
  %v93 = vld [vmem:[%s1 + $0xf0] sm:$0xf]
  %v94 = vld [vmem:[%s1 + $0xf4] sm:$0xf]
  %v95 = vld [vmem:[%s1 + $0xf8] sm:$0xf]
  %v96 = vld [vmem:[%s1 + $0xfc] sm:$0xf]
  %v97 = vld [vmem:[%s1 + $0x100] sm:$0xf]
  %v98 = vld [vmem:[%s1 + $0x104] sm:$0xf]
  %v99 = vld [vmem:[%s1 + $0x108] sm:$0xf]
  %v100 = vld [vmem:[%s1 + $0x10c] sm:$0xf]
  %v101 = vld [vmem:[%s1 + $0x110] sm:$0xf]
  %v102 = vld [vmem:[%s1 + $0x114] sm:$0xf]
  %v103 = vld [vmem:[%s1 + $0x118] sm:$0xf]
  %v104 = vld [vmem:[%s1 + $0x11c] sm:$0xf]
  %v105 = vld [vmem:[%s1 + $0x120] sm:$0xf]
  %v106 = vld [vmem:[%s1 + $0x124] sm:$0xf]
  %v107 = vld [vmem:[%s1 + $0x128] sm:$0xf]
  %v108 = vld [vmem:[%s1 + $0x12c] sm:$0xf]
  %v109 = vld [vmem:[%s1 + $0x130] sm:$0xf]
  %v110 = vld [vmem:[%s1 + $0x134] sm:$0xf]
  %v111 = vld [vmem:[%s1 + $0x138] sm:$0xf]
  %v112 = vld [vmem:[%s1 + $0x13c] sm:$0xf]
  %v113 = vld [vmem:[%s1 + $0x140] sm:$0xf]
  %v114 = vld [vmem:[%s1 + $0x144] sm:$0xf]
  %v115 = vld [vmem:[%s1 + $0x148] sm:$0xf]
  %v116 = vld [vmem:[%s1 + $0x14c] sm:$0xf]
  %v117 = vld [vmem:[%s1 + $0x150] sm:$0xf]
  %v118 = vld [vmem:[%s1 + $0x154] sm:$0xf]
  %v119 = vld [vmem:[%s1 + $0x158] sm:$0xf]
  %v120 = vld [vmem:[%s1 + $0x15c] sm:$0xf]
  %v121 = vld [vmem:[%s1 + $0x160] sm:$0xf]
  %v122 = vld [vmem:[%s1 + $0x164] sm:$0xf]
  %v123 = vld [vmem:[%s1 + $0x168] sm:$0xf]
  %v124 = vld [vmem:[%s1 + $0x16c] sm:$0xf]
  %v125 = vld [vmem:[%s1 + $0x170] sm:$0xf]
  %v126 = vld [vmem:[%s1 + $0x174] sm:$0xf]
  %v127 = vld [vmem:[%s1 + $0x178] sm:$0xf]
  %v128 = vld [vmem:[%s1 + $0x17c] sm:$0xf]
  %v129 = vld [vmem:[%s1 + $0x180] sm:$0xf]
  %v130 = vld [vmem:[%s1 + $0x184] sm:$0xf]
  %v131 = vld [vmem:[%s1 + $0x188] sm:$0xf]
  %v132 = vld [vmem:[%s1 + $0x18c] sm:$0xf]
  %v133 = vld [vmem:[%s1 + $0x190] sm:$0xf]
  %v134 = vld [vmem:[%s1 + $0x194] sm:$0xf]
  %v135 = vld [vmem:[%s1 + $0x198] sm:$0xf]
  %v136 = vld [vmem:[%s1 + $0x19c] sm:$0xf]
  %v137 = vld [vmem:[%s1 + $0x1a0] sm:$0xf]
  %v138 = vld [vmem:[%s1 + $0x1a4] sm:$0xf]
  %v139 = vld [vmem:[%s1 + $0x1a8] sm:$0xf]
  %v140 = vld [vmem:[%s1 + $0x1ac] sm:$0xf]
  %v141 = vld [vmem:[%s1 + $0x1b0] sm:$0xf]
  %v142 = vld [vmem:[%s1 + $0x1b4] sm:$0xf]
  %v143 = vld [vmem:[%s1 + $0x1b8] sm:$0xf]
  %v144 = vld [vmem:[%s1 + $0x1bc] sm:$0xf]
  %v145 = vld [vmem:[%s1 + $0x1c0] sm:$0xf]
  %v146 = vld [vmem:[%s1 + $0x1c4] sm:$0xf]
  %v147 = vld [vmem:[%s1 + $0x1c8] sm:$0xf]
  %v148 = vld [vmem:[%s1 + $0x1cc] sm:$0xf]
  %v149 = vld [vmem:[%s1 + $0x1d0] sm:$0xf]
  %v150 = vld [vmem:[%s1 + $0x1d4] sm:$0xf]
  %v151 = vld [vmem:[%s1 + $0x1d8] sm:$0xf]
  %v152 = vld [vmem:[%s1 + $0x1dc] sm:$0xf]
  %v153 = vld [vmem:[%s1 + $0x1e0] sm:$0xf]
  %v154 = vld [vmem:[%s1 + $0x1e4] sm:$0xf]
  %v155 = vld [vmem:[%s1 + $0x1e8] sm:$0xf]
  %v156 = vld [vmem:[%s1 + $0x1ec] sm:$0xf]
  %v157 = vld [vmem:[%s1 + $0x1f0] sm:$0xf]
  %v158 = vld [vmem:[%s1 + $0x1f4] sm:$0xf]
  %v159 = vld [vmem:[%s1 + $0x1f8] sm:$0xf]
  %v160 = vld [vmem:[%s1 + $0x1fc] sm:$0xf]
  %v177 = vunpack.c.l.b16 %v17
  %v178 = vunpack.c.h.b16 %v17
  %v179 = vunpack.c.l.b16 %v18
  %v180 = vunpack.c.h.b16 %v18
  %v181 = vunpack.c.l.b16 %v19
  %v182 = vunpack.c.h.b16 %v19
  %v183 = vunpack.c.l.b16 %v20
  %v184 = vunpack.c.h.b16 %v20
  %v185 = vunpack.c.l.b16 %v21
  %v186 = vunpack.c.h.b16 %v21
  %v187 = vunpack.c.l.b16 %v22
  %v188 = vunpack.c.h.b16 %v22
  %v189 = vunpack.c.l.b16 %v23
  %v190 = vunpack.c.h.b16 %v23
  %v191 = vunpack.c.l.b16 %v24
  %v192 = vunpack.c.h.b16 %v24
  %v193 = vunpack.c.l.b16 %v25
  %v194 = vunpack.c.h.b16 %v25
  %v195 = vunpack.c.l.b16 %v26
  %v196 = vunpack.c.h.b16 %v26
  %v197 = vunpack.c.l.b16 %v27
  %v198 = vunpack.c.h.b16 %v27
  %v199 = vunpack.c.l.b16 %v28
  %v200 = vunpack.c.h.b16 %v28
  %v201 = vunpack.c.l.b16 %v29
  %v202 = vunpack.c.h.b16 %v29
  %v203 = vunpack.c.l.b16 %v30
  %v204 = vunpack.c.h.b16 %v30
  %v205 = vunpack.c.l.b16 %v31
  %v206 = vunpack.c.h.b16 %v31
  %v207 = vunpack.c.l.b16 %v32
  %v208 = vunpack.c.h.b16 %v32
  %v209 = vpack.c.b16 %v185, %v177
  %v210 = vpack.c.b16 %v186, %v178
  %v211 = vpack.c.b16 %v187, %v179
  %v212 = vpack.c.b16 %v188, %v180
  %v213 = vpack.c.b16 %v189, %v181
  %v214 = vpack.c.b16 %v190, %v182
  %v215 = vpack.c.b16 %v191, %v183
  %v216 = vpack.c.b16 %v192, %v184
  %v217 = vpack.c.b16 %v201, %v193
  %v218 = vpack.c.b16 %v202, %v194
  %v219 = vpack.c.b16 %v203, %v195
  %v220 = vpack.c.b16 %v204, %v196
  %v221 = vpack.c.b16 %v205, %v197
  %v222 = vpack.c.b16 %v206, %v198
  %v223 = vpack.c.b16 %v207, %v199
  %v224 = vpack.c.b16 %v208, %v200
  %v369 = vunpack.c.l.b16 %v33
  %v370 = vunpack.c.l.b16 %v34
  %v371 = vunpack.c.l.b16 %v35
  %v372 = vunpack.c.l.b16 %v36
  %v373 = vunpack.c.l.b16 %v37
  %v374 = vunpack.c.l.b16 %v38
  %v375 = vunpack.c.l.b16 %v39
  %v376 = vunpack.c.l.b16 %v40
  %v377 = vunpack.c.l.b16 %v41
  %v378 = vunpack.c.l.b16 %v42
  %v379 = vunpack.c.l.b16 %v43
  %v380 = vunpack.c.l.b16 %v44
  %v381 = vunpack.c.l.b16 %v45
  %v382 = vunpack.c.l.b16 %v46
  %v383 = vunpack.c.l.b16 %v47
  %v384 = vunpack.c.l.b16 %v48
  %v385 = vunpack.c.l.b16 %v49
  %v386 = vunpack.c.l.b16 %v50
  %v387 = vunpack.c.l.b16 %v51
  %v388 = vunpack.c.l.b16 %v52
  %v389 = vunpack.c.l.b16 %v53
  %v390 = vunpack.c.l.b16 %v54
  %v391 = vunpack.c.l.b16 %v55
  %v392 = vunpack.c.l.b16 %v56
  %v393 = vunpack.c.l.b16 %v57
  %v394 = vunpack.c.l.b16 %v58
  %v395 = vunpack.c.l.b16 %v59
  %v396 = vunpack.c.l.b16 %v60
  %v397 = vunpack.c.l.b16 %v61
  %v398 = vunpack.c.l.b16 %v62
  %v399 = vunpack.c.l.b16 %v63
  %v400 = vunpack.c.l.b16 %v64
  %v401 = vunpack.c.l.b16 %v65
  %v402 = vunpack.c.l.b16 %v66
  %v403 = vunpack.c.l.b16 %v67
  %v404 = vunpack.c.l.b16 %v68
  %v405 = vunpack.c.l.b16 %v69
  %v406 = vunpack.c.l.b16 %v70
  %v407 = vunpack.c.l.b16 %v71
  %v408 = vunpack.c.l.b16 %v72
  %v409 = vunpack.c.l.b16 %v73
  %v410 = vunpack.c.l.b16 %v74
  %v411 = vunpack.c.l.b16 %v75
  %v412 = vunpack.c.l.b16 %v76
  %v413 = vunpack.c.l.b16 %v77
  %v414 = vunpack.c.l.b16 %v78
  %v415 = vunpack.c.l.b16 %v79
  %v416 = vunpack.c.l.b16 %v80
  %v417 = vunpack.c.l.b16 %v81
  %v418 = vunpack.c.l.b16 %v82
  %v419 = vunpack.c.l.b16 %v83
  %v420 = vunpack.c.l.b16 %v84
  %v421 = vunpack.c.l.b16 %v85
  %v422 = vunpack.c.l.b16 %v86
  %v423 = vunpack.c.l.b16 %v87
  %v424 = vunpack.c.l.b16 %v88
  %v425 = vunpack.c.l.b16 %v89
  %v426 = vunpack.c.l.b16 %v90
  %v427 = vunpack.c.l.b16 %v91
  %v428 = vunpack.c.l.b16 %v92
  %v429 = vunpack.c.l.b16 %v93
  %v430 = vunpack.c.l.b16 %v94
  %v431 = vunpack.c.l.b16 %v95
  %v432 = vunpack.c.l.b16 %v96
  %v433 = vunpack.c.l.b16 %v97
  %v434 = vunpack.c.l.b16 %v98
  %v435 = vunpack.c.l.b16 %v99
  %v436 = vunpack.c.l.b16 %v100
  %v437 = vunpack.c.l.b16 %v101
  %v438 = vunpack.c.l.b16 %v102
  %v439 = vunpack.c.l.b16 %v103
  %v440 = vunpack.c.l.b16 %v104
  %v441 = vunpack.c.l.b16 %v105
  %v442 = vunpack.c.l.b16 %v106
  %v443 = vunpack.c.l.b16 %v107
  %v444 = vunpack.c.l.b16 %v108
  %v445 = vunpack.c.l.b16 %v109
  %v446 = vunpack.c.l.b16 %v110
  %v447 = vunpack.c.l.b16 %v111
  %v448 = vunpack.c.l.b16 %v112
  %v449 = vunpack.c.l.b16 %v113
  %v450 = vunpack.c.l.b16 %v114
  %v451 = vunpack.c.l.b16 %v115
  %v452 = vunpack.c.l.b16 %v116
  %v453 = vunpack.c.l.b16 %v117
  %v454 = vunpack.c.l.b16 %v118
  %v455 = vunpack.c.l.b16 %v119
  %v456 = vunpack.c.l.b16 %v120
  %v457 = vunpack.c.l.b16 %v121
  %v458 = vunpack.c.l.b16 %v122
  %v459 = vunpack.c.l.b16 %v123
  %v460 = vunpack.c.l.b16 %v124
  %v461 = vunpack.c.l.b16 %v125
  %v462 = vunpack.c.l.b16 %v126
  %v463 = vunpack.c.l.b16 %v127
  %v464 = vunpack.c.l.b16 %v128
  %v465 = vunpack.c.l.b16 %v129
  %v466 = vunpack.c.l.b16 %v130
  %v467 = vunpack.c.l.b16 %v131
  %v468 = vunpack.c.l.b16 %v132
  %v469 = vunpack.c.l.b16 %v133
  %v470 = vunpack.c.l.b16 %v134
  %v471 = vunpack.c.l.b16 %v135
  %v472 = vunpack.c.l.b16 %v136
  %v473 = vunpack.c.l.b16 %v137
  %v474 = vunpack.c.l.b16 %v138
  %v475 = vunpack.c.l.b16 %v139
  %v476 = vunpack.c.l.b16 %v140
  %v477 = vunpack.c.l.b16 %v141
  %v478 = vunpack.c.l.b16 %v142
  %v479 = vunpack.c.l.b16 %v143
  %v480 = vunpack.c.l.b16 %v144
  %v481 = vunpack.c.l.b16 %v145
  %v482 = vunpack.c.l.b16 %v146
  %v483 = vunpack.c.l.b16 %v147
  %v484 = vunpack.c.l.b16 %v148
  %v485 = vunpack.c.l.b16 %v149
  %v486 = vunpack.c.l.b16 %v150
  %v487 = vunpack.c.l.b16 %v151
  %v488 = vunpack.c.l.b16 %v152
  %v489 = vunpack.c.l.b16 %v153
  %v490 = vunpack.c.l.b16 %v154
  %v491 = vunpack.c.l.b16 %v155
  %v492 = vunpack.c.l.b16 %v156
  %v493 = vunpack.c.l.b16 %v157
  %v494 = vunpack.c.l.b16 %v158
  %v495 = vunpack.c.l.b16 %v159
  %v496 = vunpack.c.l.b16 %v160
  %v497 = vpack.c.b16 %v370, %v369
  %v498 = vpack.c.b16 %v372, %v371
  %v499 = vpack.c.b16 %v374, %v373
  %v500 = vpack.c.b16 %v376, %v375
  %v501 = vpack.c.b16 %v378, %v377
  %v502 = vpack.c.b16 %v380, %v379
  %v503 = vpack.c.b16 %v382, %v381
  %v504 = vpack.c.b16 %v384, %v383
  %v505 = vpack.c.b16 %v386, %v385
  %v506 = vpack.c.b16 %v388, %v387
  %v507 = vpack.c.b16 %v390, %v389
  %v508 = vpack.c.b16 %v392, %v391
  %v509 = vpack.c.b16 %v394, %v393
  %v510 = vpack.c.b16 %v396, %v395
  %v511 = vpack.c.b16 %v398, %v397
  %v512 = vpack.c.b16 %v400, %v399
  %v513 = vpack.c.b16 %v402, %v401
  %v514 = vpack.c.b16 %v404, %v403
  %v515 = vpack.c.b16 %v406, %v405
  %v516 = vpack.c.b16 %v408, %v407
  %v517 = vpack.c.b16 %v410, %v409
  %v518 = vpack.c.b16 %v412, %v411
  %v519 = vpack.c.b16 %v414, %v413
  %v520 = vpack.c.b16 %v416, %v415
  %v521 = vpack.c.b16 %v418, %v417
  %v522 = vpack.c.b16 %v420, %v419
  %v523 = vpack.c.b16 %v422, %v421
  %v524 = vpack.c.b16 %v424, %v423
  %v525 = vpack.c.b16 %v426, %v425
  %v526 = vpack.c.b16 %v428, %v427
  %v527 = vpack.c.b16 %v430, %v429
  %v528 = vpack.c.b16 %v432, %v431
  %v529 = vpack.c.b16 %v434, %v433
  %v530 = vpack.c.b16 %v436, %v435
  %v531 = vpack.c.b16 %v438, %v437
  %v532 = vpack.c.b16 %v440, %v439
  %v533 = vpack.c.b16 %v442, %v441
  %v534 = vpack.c.b16 %v444, %v443
  %v535 = vpack.c.b16 %v446, %v445
  %v536 = vpack.c.b16 %v448, %v447
  %v537 = vpack.c.b16 %v450, %v449
  %v538 = vpack.c.b16 %v452, %v451
  %v539 = vpack.c.b16 %v454, %v453
  %v540 = vpack.c.b16 %v456, %v455
  %v541 = vpack.c.b16 %v458, %v457
  %v542 = vpack.c.b16 %v460, %v459
  %v543 = vpack.c.b16 %v462, %v461
  %v544 = vpack.c.b16 %v464, %v463
  %v545 = vpack.c.b16 %v466, %v465
  %v546 = vpack.c.b16 %v468, %v467
  %v547 = vpack.c.b16 %v470, %v469
  %v548 = vpack.c.b16 %v472, %v471
  %v549 = vpack.c.b16 %v474, %v473
  %v550 = vpack.c.b16 %v476, %v475
  %v551 = vpack.c.b16 %v478, %v477
  %v552 = vpack.c.b16 %v480, %v479
  %v553 = vpack.c.b16 %v482, %v481
  %v554 = vpack.c.b16 %v484, %v483
  %v555 = vpack.c.b16 %v486, %v485
  %v556 = vpack.c.b16 %v488, %v487
  %v557 = vpack.c.b16 %v490, %v489
  %v558 = vpack.c.b16 %v492, %v491
  %v559 = vpack.c.b16 %v494, %v493
  %v560 = vpack.c.b16 %v496, %v495
  %625 = vmatpush.bf16.msra.mxu0 %v504
  %626 = vmatpush.bf16.msra.mxu0 %v503
  %627 = vmatpush.bf16.msra.mxu0 %v502
  %628 = vmatpush.bf16.msra.mxu0 %v501
  %629 = vmatpush.bf16.msra.mxu0 %v500
  %630 = vmatpush.bf16.msra.mxu0 %v499
  %631 = vmatpush.bf16.msra.mxu0 %v498
  %632 = vmatpush.bf16.msra.mxu0 %v497
  %633 = vmatmul.bf16.gmra.mxu0 %v209
  %v634 = vpop.f32.mrf.mxu0
  %v635 = vadd.f32 0.0, %v634
  %v636 = vpop.f32.mrf.mxu0
  %v637 = vadd.f32 0.0, %v636
  %638 = vmatmul.bf16.gmra.mxu0 %v217
  %v639 = vpop.f32.mrf.mxu0
  %v640 = vadd.f32 0.0, %v639
  %v641 = vpop.f32.mrf.mxu0
  %v642 = vadd.f32 0.0, %v641
  %643 = vdwg.mxu0
  %644 = vmatpush.bf16.msra.mxu0 %v512
  %645 = vmatpush.bf16.msra.mxu0 %v511
  %646 = vmatpush.bf16.msra.mxu0 %v510
  %647 = vmatpush.bf16.msra.mxu0 %v509
  %648 = vmatpush.bf16.msra.mxu0 %v508
  %649 = vmatpush.bf16.msra.mxu0 %v507
  %650 = vmatpush.bf16.msra.mxu0 %v506
  %651 = vmatpush.bf16.msra.mxu0 %v505
  %652 = vmatmul.bf16.gmra.mxu0 %v210
  %v653 = vpop.f32.mrf.mxu0
  %v654 = vadd.f32 %v635, %v653
  %v655 = vpop.f32.mrf.mxu0
  %v656 = vadd.f32 %v637, %v655
  %657 = vmatmul.bf16.gmra.mxu0 %v218
  %v658 = vpop.f32.mrf.mxu0
  %v659 = vadd.f32 %v640, %v658
  %v660 = vpop.f32.mrf.mxu0
  %v661 = vadd.f32 %v642, %v660
  %662 = vdwg.mxu0
  %663 = vmatpush.bf16.msra.mxu0 %v520
  %664 = vmatpush.bf16.msra.mxu0 %v519
  %665 = vmatpush.bf16.msra.mxu0 %v518
  %666 = vmatpush.bf16.msra.mxu0 %v517
  %667 = vmatpush.bf16.msra.mxu0 %v516
  %668 = vmatpush.bf16.msra.mxu0 %v515
  %669 = vmatpush.bf16.msra.mxu0 %v514
  %670 = vmatpush.bf16.msra.mxu0 %v513
  %671 = vmatmul.bf16.gmra.mxu0 %v211
  %v672 = vpop.f32.mrf.mxu0
  %v673 = vadd.f32 %v654, %v672
  %v674 = vpop.f32.mrf.mxu0
  %v675 = vadd.f32 %v656, %v674
  %676 = vmatmul.bf16.gmra.mxu0 %v219
  %v677 = vpop.f32.mrf.mxu0
  %v678 = vadd.f32 %v659, %v677
  %v679 = vpop.f32.mrf.mxu0
  %v680 = vadd.f32 %v661, %v679
  %681 = vdwg.mxu0
  %682 = vmatpush.bf16.msra.mxu0 %v528
  %683 = vmatpush.bf16.msra.mxu0 %v527
  %684 = vmatpush.bf16.msra.mxu0 %v526
  %685 = vmatpush.bf16.msra.mxu0 %v525
  %686 = vmatpush.bf16.msra.mxu0 %v524
  %687 = vmatpush.bf16.msra.mxu0 %v523
  %688 = vmatpush.bf16.msra.mxu0 %v522
  %689 = vmatpush.bf16.msra.mxu0 %v521
  %690 = vmatmul.bf16.gmra.mxu0 %v212
  %v691 = vpop.f32.mrf.mxu0
  %v692 = vadd.f32 %v673, %v691
  %v693 = vpop.f32.mrf.mxu0
  %v694 = vadd.f32 %v675, %v693
  %695 = vmatmul.bf16.gmra.mxu0 %v220
  %v696 = vpop.f32.mrf.mxu0
  %v697 = vadd.f32 %v678, %v696
  %v698 = vpop.f32.mrf.mxu0
  %v699 = vadd.f32 %v680, %v698
  %700 = vdwg.mxu0
  %701 = vmatpush.bf16.msra.mxu0 %v536
  %702 = vmatpush.bf16.msra.mxu0 %v535
  %703 = vmatpush.bf16.msra.mxu0 %v534
  %704 = vmatpush.bf16.msra.mxu0 %v533
  %705 = vmatpush.bf16.msra.mxu0 %v532
  %706 = vmatpush.bf16.msra.mxu0 %v531
  %707 = vmatpush.bf16.msra.mxu0 %v530
  %708 = vmatpush.bf16.msra.mxu0 %v529
  %709 = vmatmul.bf16.gmra.mxu0 %v213
  %v710 = vpop.f32.mrf.mxu0
  %v711 = vadd.f32 %v692, %v710
  %v712 = vpop.f32.mrf.mxu0
  %v713 = vadd.f32 %v694, %v712
  %714 = vmatmul.bf16.gmra.mxu0 %v221
  %v715 = vpop.f32.mrf.mxu0
  %v716 = vadd.f32 %v697, %v715
  %v717 = vpop.f32.mrf.mxu0
  %v718 = vadd.f32 %v699, %v717
  %719 = vdwg.mxu0
  %720 = vmatpush.bf16.msra.mxu0 %v544
  %721 = vmatpush.bf16.msra.mxu0 %v543
  %722 = vmatpush.bf16.msra.mxu0 %v542
  %723 = vmatpush.bf16.msra.mxu0 %v541
  %724 = vmatpush.bf16.msra.mxu0 %v540
  %725 = vmatpush.bf16.msra.mxu0 %v539
  %726 = vmatpush.bf16.msra.mxu0 %v538
  %727 = vmatpush.bf16.msra.mxu0 %v537
  %728 = vmatmul.bf16.gmra.mxu0 %v214
  %v729 = vpop.f32.mrf.mxu0
  %v730 = vadd.f32 %v711, %v729
  %v731 = vpop.f32.mrf.mxu0
  %v732 = vadd.f32 %v713, %v731
  %733 = vmatmul.bf16.gmra.mxu0 %v222
  %v734 = vpop.f32.mrf.mxu0
  %v735 = vadd.f32 %v716, %v734
  %v736 = vpop.f32.mrf.mxu0
  %v737 = vadd.f32 %v718, %v736
  %738 = vdwg.mxu0
  %739 = vmatpush.bf16.msra.mxu0 %v552
  %740 = vmatpush.bf16.msra.mxu0 %v551
  %741 = vmatpush.bf16.msra.mxu0 %v550
  %742 = vmatpush.bf16.msra.mxu0 %v549
  %743 = vmatpush.bf16.msra.mxu0 %v548
  %744 = vmatpush.bf16.msra.mxu0 %v547
  %745 = vmatpush.bf16.msra.mxu0 %v546
  %746 = vmatpush.bf16.msra.mxu0 %v545
  %747 = vmatmul.bf16.gmra.mxu0 %v215
  %v748 = vpop.f32.mrf.mxu0
  %v749 = vadd.f32 %v730, %v748
  %v750 = vpop.f32.mrf.mxu0
  %v751 = vadd.f32 %v732, %v750
  %752 = vmatmul.bf16.gmra.mxu0 %v223
  %v753 = vpop.f32.mrf.mxu0
  %v754 = vadd.f32 %v735, %v753
  %v755 = vpop.f32.mrf.mxu0
  %v756 = vadd.f32 %v737, %v755
  %757 = vdwg.mxu0
  %758 = vmatpush.bf16.msra.mxu0 %v560
  %759 = vmatpush.bf16.msra.mxu0 %v559
  %760 = vmatpush.bf16.msra.mxu0 %v558
  %761 = vmatpush.bf16.msra.mxu0 %v557
  %762 = vmatpush.bf16.msra.mxu0 %v556
  %763 = vmatpush.bf16.msra.mxu0 %v555
  %764 = vmatpush.bf16.msra.mxu0 %v554
  %765 = vmatpush.bf16.msra.mxu0 %v553
  %766 = vmatmul.bf16.gmra.mxu0 %v216
  %v767 = vpop.f32.mrf.mxu0
  %v768 = vadd.f32 %v749, %v767
  %v769 = vpop.f32.mrf.mxu0
  %v770 = vadd.f32 %v751, %v769
  %771 = vmatmul.bf16.gmra.mxu0 %v224
  %v772 = vpop.f32.mrf.mxu0
  %v773 = vadd.f32 %v754, %v772
  %v774 = vpop.f32.mrf.mxu0
  %v775 = vadd.f32 %v756, %v774
  %776 = vdwg.mxu0
  %777 = vadd.xlane.f32.xlu0 %v768
  %v778 = vpop.xlane.xlu0 %777
  %779 = vadd.xlane.f32.xlu0 %v770
  %v780 = vpop.xlane.xlu0 %779
  %781 = vadd.xlane.f32.xlu0 %v773
  %v782 = vpop.xlane.xlu0 %781
  %783 = vadd.xlane.f32.xlu0 %v775
  %v784 = vpop.xlane.xlu0 %783
  %v785 = vrcp.pop 128.0
  %v786 = vmul.f32 128.0, %v785
  %v787 = vsub.f32 1.0, %v786
  %v788 = vmul.f32 %v785, %v787
  %v789 = vadd.f32 %v785, %v788
  %vm790 = vweird.f32 %v785
  %v791 = vsel %vm790, %v785, %v789
  %v792 = vmul.f32 %v778, %v791
  %v793 = vmul.f32 %v780, %v791
  %v794 = vmul.f32 %v782, %v791
  %v795 = vmul.f32 %v784, %v791
  %v796 = vsub.f32 %v768, %v792
  %v797 = vsub.f32 %v770, %v793
  %v798 = vsub.f32 %v773, %v794
  %v799 = vsub.f32 %v775, %v795
  %v800 = vmul.f32 %v796, %v796
  %v801 = vmul.f32 %v797, %v797
  %v802 = vmul.f32 %v798, %v798
  %v803 = vmul.f32 %v799, %v799
  %804 = vadd.xlane.f32.xlu0 %v800
  %v805 = vpop.xlane.xlu0 %804
  %806 = vadd.xlane.f32.xlu0 %v801
  %v807 = vpop.xlane.xlu0 %806
  %808 = vadd.xlane.f32.xlu0 %v802
  %v809 = vpop.xlane.xlu0 %808
  %810 = vadd.xlane.f32.xlu0 %v803
  %v811 = vpop.xlane.xlu0 %810
  %v812 = vmul.f32 %v805, %v791
  %v813 = vmul.f32 %v807, %v791
  %v814 = vmul.f32 %v809, %v791
  %v815 = vmul.f32 %v811, %v791
  %v816 = vadd.f32 %v812, 1e-05
  %v817 = vadd.f32 %v813, 1e-05
  %v818 = vadd.f32 %v814, 1e-05
  %v819 = vadd.f32 %v815, 1e-05
  %v820 = vrsqrt.pop %v816
  %v821 = vmul.f32 %v820, %v816
  %v822 = vmul.f32 %v821, %v820
  %v823 = vmul.f32 0.5, %v822
  %v824 = vsub.f32 1.5, %v823
  %v825 = vmul.f32 %v820, %v824
  %vm826 = vweird.f32 %v816
  %vm827 = vweird.f32 %v820
  %vm828 = vmor %vm826, %vm827
  %v829 = vsel %vm828, %v820, %v825
  %v830 = vrsqrt.pop %v817
  %v831 = vmul.f32 %v830, %v817
  %v832 = vmul.f32 %v831, %v830
  %v833 = vmul.f32 0.5, %v832
  %v834 = vsub.f32 1.5, %v833
  %v835 = vmul.f32 %v830, %v834
  %vm836 = vweird.f32 %v817
  %vm837 = vweird.f32 %v830
  %vm838 = vmor %vm836, %vm837
  %v839 = vsel %vm838, %v830, %v835
  %v840 = vrsqrt.pop %v818
  %v841 = vmul.f32 %v840, %v818
  %v842 = vmul.f32 %v841, %v840
  %v843 = vmul.f32 0.5, %v842
  %v844 = vsub.f32 1.5, %v843
  %v845 = vmul.f32 %v840, %v844
  %vm846 = vweird.f32 %v818
  %vm847 = vweird.f32 %v840
  %vm848 = vmor %vm846, %vm847
  %v849 = vsel %vm848, %v840, %v845
  %v850 = vrsqrt.pop %v819
  %v851 = vmul.f32 %v850, %v819
  %v852 = vmul.f32 %v851, %v850
  %v853 = vmul.f32 0.5, %v852
  %v854 = vsub.f32 1.5, %v853
  %v855 = vmul.f32 %v850, %v854
  %vm856 = vweird.f32 %v819
  %vm857 = vweird.f32 %v850
  %vm858 = vmor %vm856, %vm857
  %v859 = vsel %vm858, %v850, %v855
  %v860 = vmul.f32 %v796, %v829
  %v861 = vmul.f32 %v797, %v839
  %v862 = vmul.f32 %v798, %v849
  %v863 = vmul.f32 %v799, %v859
  %v864 = vld [vmem:[%s2] sm:$0xff]
  %v865 = vld [vmem:[%s2 + $0x8] sm:$0xff]
  %v866 = vld [vmem:[%s2 + $0x10] sm:$0xff]
  %v867 = vld [vmem:[%s2 + $0x18] sm:$0xff]
  %869 = vset.pattern.permute.xlu0 0
  %870 = vperm.xlu0 %869, %v864
  %v871 = vpop.permute.xlu0 %870
  %874 = vset.pattern.permute.xlu0 0
  %875 = vperm.xlu0 %874, %v865
  %v876 = vpop.permute.xlu0 %875
  %879 = vset.pattern.permute.xlu0 0
  %880 = vperm.xlu0 %879, %v866
  %v881 = vpop.permute.xlu0 %880
  %884 = vset.pattern.permute.xlu0 0
  %885 = vperm.xlu0 %884, %v867
  %v886 = vpop.permute.xlu0 %885
  %v888 = vmul.f32 %v860, %v871
  %v889 = vmul.f32 %v861, %v876
  %v890 = vmul.f32 %v862, %v881
  %v891 = vmul.f32 %v863, %v886
  %v892 = vld [vmem:[%s3] sm:$0xff]
  %v893 = vld [vmem:[%s3 + $0x8] sm:$0xff]
  %v894 = vld [vmem:[%s3 + $0x10] sm:$0xff]
  %v895 = vld [vmem:[%s3 + $0x18] sm:$0xff]
  %897 = vset.pattern.permute.xlu0 0
  %898 = vperm.xlu0 %897, %v892
  %v899 = vpop.permute.xlu0 %898
  %902 = vset.pattern.permute.xlu0 0
  %903 = vperm.xlu0 %902, %v893
  %v904 = vpop.permute.xlu0 %903
  %907 = vset.pattern.permute.xlu0 0
  %908 = vperm.xlu0 %907, %v894
  %v909 = vpop.permute.xlu0 %908
  %912 = vset.pattern.permute.xlu0 0
  %913 = vperm.xlu0 %912, %v895
  %v914 = vpop.permute.xlu0 %913
  %v916 = vadd.f32 %v888, %v899
  %v917 = vadd.f32 %v889, %v904
  %v918 = vadd.f32 %v890, %v909
  %v919 = vadd.f32 %v891, %v914
  %vm920 = vcmp.gt.f32.partialorder %v916, 0.0
  %vm921 = vcmp.gt.f32.partialorder %v917, 0.0
  %vm922 = vcmp.gt.f32.partialorder %v918, 0.0
  %vm923 = vcmp.gt.f32.partialorder %v919, 0.0
  %v924 = vmul.f32 %v916, 1.442695
  %v925 = vpow.pop %v924
  %v926 = vmul.f32 %v917, 1.442695
  %v927 = vpow.pop %v926
  %v928 = vmul.f32 %v918, 1.442695
  %v929 = vpow.pop %v928
  %v930 = vmul.f32 %v919, 1.442695
  %v931 = vpow.pop %v930
  %v932 = vsub.f32 %v925, 1.0
  %v933 = vsub.f32 %v927, 1.0
  %v934 = vsub.f32 %v929, 1.0
  %v935 = vsub.f32 %v931, 1.0
  %v936 = vsel %vm920, %v916, %v932
  %v937 = vsel %vm921, %v917, %v933
  %v938 = vsel %vm922, %v918, %v934
  %v939 = vsel %vm923, %v919, %v935
  %v940 = vpack.c.bf16 %v936, %v936
  %v941 = vpack.c.bf16 %v937, %v937
  %v942 = vpack.c.bf16 %v938, %v938
  %v943 = vpack.c.bf16 %v939, %v939
  %944 = vst [vmem:[%s4] sm:$0xf] %v940
  %945 = vst [vmem:[%s4 + $0x4] sm:$0xf] %v941
  %946 = vst [vmem:[%s4 + $0x8] sm:$0xf] %v942
  %947 = vst [vmem:[%s4 + $0xc] sm:$0xf] %v943
  // Predicated region
  $region18: #{generator_forward.6} parent=0 // pred_check
    _
  $region19: #{generator_forward.6} parent=0 // pred_check_branch
    %949 = sbr.rel (0) target = $region21
  $region20: #{generator_forward.6} parent=0 // pred_region
    _
  $region21: #{generator_forward.6} parent=0 // pred_fallthru
    _
  // Predicated region
  $region22: #{generator_forward.6} parent=0 // pred_check
    _
  $region23: #{generator_forward.6} parent=0 // pred_check_branch
    %951 = sbr.rel (0) target = $region25
  $region24: #{generator_forward.6} parent=0 // pred_region
    _
  $region25: #{generator_forward.6} parent=0 // pred_fallthru
    _

// kernel: generator_forward.7
$region0: #{generator_forward.7}
  #allocation0 [shape = 'u32[]', space=smem, size = 0x4, offset = 0x4, fixed_abs, tag = 'smem constant byte address 0x4 - core index']
  #allocation1 [shape = 'u32[72,128]{1,0:T(1,128)}', space=vmem, size = 0x9000, scoped, tag = 'internal scratch']
  %s0 = inlined_call_operand.vmem [shape: bf16[16,512], index: 0, kind: input, shape index: {}]
  %s1 = inlined_call_operand.vmem [shape: bf16[512,512], index: 1, kind: input, shape index: {}]
  %s2 = inlined_call_operand.vmem [shape: f32[16,1], index: 2, kind: input, shape index: {}]
  %s3 = inlined_call_operand.vmem [shape: f32[16,1], index: 3, kind: input, shape index: {}]
  %s4 = inlined_call_operand.vmem [shape: bf16[16,512], index: 4, kind: output, shape index: {}]
  %s5 = sld [smem:[#allocation0]]
  $region26: #{generator_forward.7} parent=0
    _
  %s7 = ssub.s32 1, %s5
  %s8 = scalar_select 0, %s7, %s5
  // Predicated region
  $region2: #{generator_forward.7} parent=0 // pred_check
    _
  $region3: #{generator_forward.7} parent=0 // pred_check_branch
    %10 = sbr.rel (0) target = $region5
  $region4: #{generator_forward.7} parent=0 // pred_region
    _
  $region5: #{generator_forward.7} parent=0 // pred_fallthru
    _
  // Predicated region
  $region6: #{generator_forward.7} parent=0 // pred_check
    _
  $region7: #{generator_forward.7} parent=0 // pred_check_branch
    %12 = sbr.rel (0) target = $region9
  $region8: #{generator_forward.7} parent=0 // pred_region
    _
  $region9: #{generator_forward.7} parent=0 // pred_fallthru
    _
  // Predicated region
  $region10: #{generator_forward.7} parent=0 // pred_check
    _
  $region11: #{generator_forward.7} parent=0 // pred_check_branch
    %14 = sbr.rel (0) target = $region13
  $region12: #{generator_forward.7} parent=0 // pred_region
    _
  $region13: #{generator_forward.7} parent=0 // pred_fallthru
    _
  // Predicated region
  $region14: #{generator_forward.7} parent=0 // pred_check
    _
  $region15: #{generator_forward.7} parent=0 // pred_check_branch
    %16 = sbr.rel (0) target = $region17
  $region16: #{generator_forward.7} parent=0 // pred_region
    _
  $region17: #{generator_forward.7} parent=0 // pred_fallthru
    _
  %v17 = vld [vmem:[%s0] sm:$0xff]
  %v18 = vld [vmem:[%s0 + $0x8] sm:$0xff]
  %v19 = vld [vmem:[%s0 + $0x10] sm:$0xff]
  %v20 = vld [vmem:[%s0 + $0x18] sm:$0xff]
  %v21 = vld [vmem:[%s1] sm:$0xff]
  %v22 = vld [vmem:[%s1 + $0x8] sm:$0xff]
  %v23 = vld [vmem:[%s1 + $0x10] sm:$0xff]
  %v24 = vld [vmem:[%s1 + $0x18] sm:$0xff]
  %v25 = vld [vmem:[%s1 + $0x20] sm:$0xff]
  %v26 = vld [vmem:[%s1 + $0x28] sm:$0xff]
  %v27 = vld [vmem:[%s1 + $0x30] sm:$0xff]
  %v28 = vld [vmem:[%s1 + $0x38] sm:$0xff]
  %v29 = vld [vmem:[%s1 + $0x40] sm:$0xff]
  %v30 = vld [vmem:[%s1 + $0x48] sm:$0xff]
  %v31 = vld [vmem:[%s1 + $0x50] sm:$0xff]
  %v32 = vld [vmem:[%s1 + $0x58] sm:$0xff]
  %v33 = vld [vmem:[%s1 + $0x60] sm:$0xff]
  %v34 = vld [vmem:[%s1 + $0x68] sm:$0xff]
  %v35 = vld [vmem:[%s1 + $0x70] sm:$0xff]
  %v36 = vld [vmem:[%s1 + $0x78] sm:$0xff]
  %v37 = vld [vmem:[%s1 + $0x80] sm:$0xff]
  %v38 = vld [vmem:[%s1 + $0x88] sm:$0xff]
  %v39 = vld [vmem:[%s1 + $0x90] sm:$0xff]
  %v40 = vld [vmem:[%s1 + $0x98] sm:$0xff]
  %v41 = vld [vmem:[%s1 + $0xa0] sm:$0xff]
  %v42 = vld [vmem:[%s1 + $0xa8] sm:$0xff]
  %v43 = vld [vmem:[%s1 + $0xb0] sm:$0xff]
  %v44 = vld [vmem:[%s1 + $0xb8] sm:$0xff]
  %v45 = vld [vmem:[%s1 + $0xc0] sm:$0xff]
  %v46 = vld [vmem:[%s1 + $0xc8] sm:$0xff]
  %v47 = vld [vmem:[%s1 + $0xd0] sm:$0xff]
  %v48 = vld [vmem:[%s1 + $0xd8] sm:$0xff]
  %v49 = vld [vmem:[%s1 + $0xe0] sm:$0xff]
  %v50 = vld [vmem:[%s1 + $0xe8] sm:$0xff]
  %v51 = vld [vmem:[%s1 + $0xf0] sm:$0xff]
  %v52 = vld [vmem:[%s1 + $0xf8] sm:$0xff]
  %v53 = vld [vmem:[%s1 + $0x100] sm:$0xff]
  %v54 = vld [vmem:[%s1 + $0x108] sm:$0xff]
  %v55 = vld [vmem:[%s1 + $0x110] sm:$0xff]
  %v56 = vld [vmem:[%s1 + $0x118] sm:$0xff]
  %v57 = vld [vmem:[%s1 + $0x120] sm:$0xff]
  %v58 = vld [vmem:[%s1 + $0x128] sm:$0xff]
  %v59 = vld [vmem:[%s1 + $0x130] sm:$0xff]
  %v60 = vld [vmem:[%s1 + $0x138] sm:$0xff]
  %v61 = vld [vmem:[%s1 + $0x140] sm:$0xff]
  %v62 = vld [vmem:[%s1 + $0x148] sm:$0xff]
  %v63 = vld [vmem:[%s1 + $0x150] sm:$0xff]
  %v64 = vld [vmem:[%s1 + $0x158] sm:$0xff]
  %v65 = vld [vmem:[%s1 + $0x160] sm:$0xff]
  %v66 = vld [vmem:[%s1 + $0x168] sm:$0xff]
  %v67 = vld [vmem:[%s1 + $0x170] sm:$0xff]
  %v68 = vld [vmem:[%s1 + $0x178] sm:$0xff]
  %v69 = vld [vmem:[%s1 + $0x180] sm:$0xff]
  %v70 = vld [vmem:[%s1 + $0x188] sm:$0xff]
  %v71 = vld [vmem:[%s1 + $0x190] sm:$0xff]
  %v72 = vld [vmem:[%s1 + $0x198] sm:$0xff]
  %v73 = vld [vmem:[%s1 + $0x1a0] sm:$0xff]
  %v74 = vld [vmem:[%s1 + $0x1a8] sm:$0xff]
  %v75 = vld [vmem:[%s1 + $0x1b0] sm:$0xff]
  %v76 = vld [vmem:[%s1 + $0x1b8] sm:$0xff]
  %v77 = vld [vmem:[%s1 + $0x1c0] sm:$0xff]
  %v78 = vld [vmem:[%s1 + $0x1c8] sm:$0xff]
  %v79 = vld [vmem:[%s1 + $0x1d0] sm:$0xff]
  %v80 = vld [vmem:[%s1 + $0x1d8] sm:$0xff]
  %v81 = vld [vmem:[%s1 + $0x1e0] sm:$0xff]
  %v82 = vld [vmem:[%s1 + $0x1e8] sm:$0xff]
  %v83 = vld [vmem:[%s1 + $0x1f0] sm:$0xff]
  %v84 = vld [vmem:[%s1 + $0x1f8] sm:$0xff]
  %v85 = vld [vmem:[%s1 + $0x200] sm:$0xff]
  %v86 = vld [vmem:[%s1 + $0x208] sm:$0xff]
  %v87 = vld [vmem:[%s1 + $0x210] sm:$0xff]
  %v88 = vld [vmem:[%s1 + $0x218] sm:$0xff]
  %v89 = vld [vmem:[%s1 + $0x220] sm:$0xff]
  %v90 = vld [vmem:[%s1 + $0x228] sm:$0xff]
  %v91 = vld [vmem:[%s1 + $0x230] sm:$0xff]
  %v92 = vld [vmem:[%s1 + $0x238] sm:$0xff]
  %v93 = vld [vmem:[%s1 + $0x240] sm:$0xff]
  %v94 = vld [vmem:[%s1 + $0x248] sm:$0xff]
  %v95 = vld [vmem:[%s1 + $0x250] sm:$0xff]
  %v96 = vld [vmem:[%s1 + $0x258] sm:$0xff]
  %v97 = vld [vmem:[%s1 + $0x260] sm:$0xff]
  %v98 = vld [vmem:[%s1 + $0x268] sm:$0xff]
  %v99 = vld [vmem:[%s1 + $0x270] sm:$0xff]
  %v100 = vld [vmem:[%s1 + $0x278] sm:$0xff]
  %v101 = vld [vmem:[%s1 + $0x280] sm:$0xff]
  %v102 = vld [vmem:[%s1 + $0x288] sm:$0xff]
  %v103 = vld [vmem:[%s1 + $0x290] sm:$0xff]
  %v104 = vld [vmem:[%s1 + $0x298] sm:$0xff]
  %v105 = vld [vmem:[%s1 + $0x2a0] sm:$0xff]
  %v106 = vld [vmem:[%s1 + $0x2a8] sm:$0xff]
  %v107 = vld [vmem:[%s1 + $0x2b0] sm:$0xff]
  %v108 = vld [vmem:[%s1 + $0x2b8] sm:$0xff]
  %v109 = vld [vmem:[%s1 + $0x2c0] sm:$0xff]
  %v110 = vld [vmem:[%s1 + $0x2c8] sm:$0xff]
  %v111 = vld [vmem:[%s1 + $0x2d0] sm:$0xff]
  %v112 = vld [vmem:[%s1 + $0x2d8] sm:$0xff]
  %v113 = vld [vmem:[%s1 + $0x2e0] sm:$0xff]
  %v114 = vld [vmem:[%s1 + $0x2e8] sm:$0xff]
  %v115 = vld [vmem:[%s1 + $0x2f0] sm:$0xff]
  %v116 = vld [vmem:[%s1 + $0x2f8] sm:$0xff]
  %v117 = vld [vmem:[%s1 + $0x300] sm:$0xff]
  %v118 = vld [vmem:[%s1 + $0x308] sm:$0xff]
  %v119 = vld [vmem:[%s1 + $0x310] sm:$0xff]
  %v120 = vld [vmem:[%s1 + $0x318] sm:$0xff]
  %v121 = vld [vmem:[%s1 + $0x320] sm:$0xff]
  %v122 = vld [vmem:[%s1 + $0x328] sm:$0xff]
  %v123 = vld [vmem:[%s1 + $0x330] sm:$0xff]
  %v124 = vld [vmem:[%s1 + $0x338] sm:$0xff]
  %v125 = vld [vmem:[%s1 + $0x340] sm:$0xff]
  %v126 = vld [vmem:[%s1 + $0x348] sm:$0xff]
  %v127 = vld [vmem:[%s1 + $0x350] sm:$0xff]
  %v128 = vld [vmem:[%s1 + $0x358] sm:$0xff]
  %v129 = vld [vmem:[%s1 + $0x360] sm:$0xff]
  %v130 = vld [vmem:[%s1 + $0x368] sm:$0xff]
  %v131 = vld [vmem:[%s1 + $0x370] sm:$0xff]
  %v132 = vld [vmem:[%s1 + $0x378] sm:$0xff]
  %v133 = vld [vmem:[%s1 + $0x380] sm:$0xff]
  %v134 = vld [vmem:[%s1 + $0x388] sm:$0xff]
  %v135 = vld [vmem:[%s1 + $0x390] sm:$0xff]
  %v136 = vld [vmem:[%s1 + $0x398] sm:$0xff]
  %v137 = vld [vmem:[%s1 + $0x3a0] sm:$0xff]
  %v138 = vld [vmem:[%s1 + $0x3a8] sm:$0xff]
  %v139 = vld [vmem:[%s1 + $0x3b0] sm:$0xff]
  %v140 = vld [vmem:[%s1 + $0x3b8] sm:$0xff]
  %v141 = vld [vmem:[%s1 + $0x3c0] sm:$0xff]
  %v142 = vld [vmem:[%s1 + $0x3c8] sm:$0xff]
  %v143 = vld [vmem:[%s1 + $0x3d0] sm:$0xff]
  %v144 = vld [vmem:[%s1 + $0x3d8] sm:$0xff]
  %v145 = vld [vmem:[%s1 + $0x3e0] sm:$0xff]
  %v146 = vld [vmem:[%s1 + $0x3e8] sm:$0xff]
  %v147 = vld [vmem:[%s1 + $0x3f0] sm:$0xff]
  %v148 = vld [vmem:[%s1 + $0x3f8] sm:$0xff]
  %v153 = vunpack.c.l.b16 %v17
  %v154 = vunpack.c.h.b16 %v17
  %v155 = vunpack.c.l.b16 %v18
  %v156 = vunpack.c.h.b16 %v18
  %v157 = vunpack.c.l.b16 %v19
  %v158 = vunpack.c.h.b16 %v19
  %v159 = vunpack.c.l.b16 %v20
  %v160 = vunpack.c.h.b16 %v20
  %v161 = vpack.c.b16 %v157, %v153
  %v162 = vpack.c.b16 %v158, %v154
  %v163 = vpack.c.b16 %v159, %v155
  %v164 = vpack.c.b16 %v160, %v156
  %v297 = vunpack.c.l.b16 %v21
  %v298 = vunpack.c.h.b16 %v21
  %v299 = vunpack.c.l.b16 %v22
  %v300 = vunpack.c.h.b16 %v22
  %v301 = vunpack.c.l.b16 %v23
  %v302 = vunpack.c.h.b16 %v23
  %v303 = vunpack.c.l.b16 %v24
  %v304 = vunpack.c.h.b16 %v24
  %v305 = vunpack.c.l.b16 %v25
  %v306 = vunpack.c.h.b16 %v25
  %v307 = vunpack.c.l.b16 %v26
  %v308 = vunpack.c.h.b16 %v26
  %v309 = vunpack.c.l.b16 %v27
  %v310 = vunpack.c.h.b16 %v27
  %v311 = vunpack.c.l.b16 %v28
  %v312 = vunpack.c.h.b16 %v28
  %v313 = vunpack.c.l.b16 %v29
  %v314 = vunpack.c.h.b16 %v29
  %v315 = vunpack.c.l.b16 %v30
  %v316 = vunpack.c.h.b16 %v30
  %v317 = vunpack.c.l.b16 %v31
  %v318 = vunpack.c.h.b16 %v31
  %v319 = vunpack.c.l.b16 %v32
  %v320 = vunpack.c.h.b16 %v32
  %v321 = vunpack.c.l.b16 %v33
  %v322 = vunpack.c.h.b16 %v33
  %v323 = vunpack.c.l.b16 %v34
  %v324 = vunpack.c.h.b16 %v34
  %v325 = vunpack.c.l.b16 %v35
  %v326 = vunpack.c.h.b16 %v35
  %v327 = vunpack.c.l.b16 %v36
  %v328 = vunpack.c.h.b16 %v36
  %v329 = vunpack.c.l.b16 %v37
  %v330 = vunpack.c.h.b16 %v37
  %v331 = vunpack.c.l.b16 %v38
  %v332 = vunpack.c.h.b16 %v38
  %v333 = vunpack.c.l.b16 %v39
  %v334 = vunpack.c.h.b16 %v39
  %v335 = vunpack.c.l.b16 %v40
  %v336 = vunpack.c.h.b16 %v40
  %v337 = vunpack.c.l.b16 %v41
  %v338 = vunpack.c.h.b16 %v41
  %v339 = vunpack.c.l.b16 %v42
  %v340 = vunpack.c.h.b16 %v42
  %v341 = vunpack.c.l.b16 %v43
  %v342 = vunpack.c.h.b16 %v43
  %v343 = vunpack.c.l.b16 %v44
  %v344 = vunpack.c.h.b16 %v44
  %v345 = vunpack.c.l.b16 %v45
  %v346 = vunpack.c.h.b16 %v45
  %v347 = vunpack.c.l.b16 %v46
  %v348 = vunpack.c.h.b16 %v46
  %v349 = vunpack.c.l.b16 %v47
  %v350 = vunpack.c.h.b16 %v47
  %v351 = vunpack.c.l.b16 %v48
  %v352 = vunpack.c.h.b16 %v48
  %v353 = vunpack.c.l.b16 %v49
  %v354 = vunpack.c.h.b16 %v49
  %v355 = vunpack.c.l.b16 %v50
  %v356 = vunpack.c.h.b16 %v50
  %v357 = vunpack.c.l.b16 %v51
  %v358 = vunpack.c.h.b16 %v51
  %v359 = vunpack.c.l.b16 %v52
  %v360 = vunpack.c.h.b16 %v52
  %v361 = vunpack.c.l.b16 %v53
  %v362 = vunpack.c.h.b16 %v53
  %v363 = vunpack.c.l.b16 %v54
  %v364 = vunpack.c.h.b16 %v54
  %v365 = vunpack.c.l.b16 %v55
  %v366 = vunpack.c.h.b16 %v55
  %v367 = vunpack.c.l.b16 %v56
  %v368 = vunpack.c.h.b16 %v56
  %v369 = vunpack.c.l.b16 %v57
  %v370 = vunpack.c.h.b16 %v57
  %v371 = vunpack.c.l.b16 %v58
  %v372 = vunpack.c.h.b16 %v58
  %v373 = vunpack.c.l.b16 %v59
  %v374 = vunpack.c.h.b16 %v59
  %v375 = vunpack.c.l.b16 %v60
  %v376 = vunpack.c.h.b16 %v60
  %v377 = vunpack.c.l.b16 %v61
  %v378 = vunpack.c.h.b16 %v61
  %v379 = vunpack.c.l.b16 %v62
  %v380 = vunpack.c.h.b16 %v62
  %v381 = vunpack.c.l.b16 %v63
  %v382 = vunpack.c.h.b16 %v63
  %v383 = vunpack.c.l.b16 %v64
  %v384 = vunpack.c.h.b16 %v64
  %v385 = vunpack.c.l.b16 %v65
  %v386 = vunpack.c.h.b16 %v65
  %v387 = vunpack.c.l.b16 %v66
  %v388 = vunpack.c.h.b16 %v66
  %v389 = vunpack.c.l.b16 %v67
  %v390 = vunpack.c.h.b16 %v67
  %v391 = vunpack.c.l.b16 %v68
  %v392 = vunpack.c.h.b16 %v68
  %v393 = vunpack.c.l.b16 %v69
  %v394 = vunpack.c.h.b16 %v69
  %v395 = vunpack.c.l.b16 %v70
  %v396 = vunpack.c.h.b16 %v70
  %v397 = vunpack.c.l.b16 %v71
  %v398 = vunpack.c.h.b16 %v71
  %v399 = vunpack.c.l.b16 %v72
  %v400 = vunpack.c.h.b16 %v72
  %v401 = vunpack.c.l.b16 %v73
  %v402 = vunpack.c.h.b16 %v73
  %v403 = vunpack.c.l.b16 %v74
  %v404 = vunpack.c.h.b16 %v74
  %v405 = vunpack.c.l.b16 %v75
  %v406 = vunpack.c.h.b16 %v75
  %v407 = vunpack.c.l.b16 %v76
  %v408 = vunpack.c.h.b16 %v76
  %v409 = vunpack.c.l.b16 %v77
  %v410 = vunpack.c.h.b16 %v77
  %v411 = vunpack.c.l.b16 %v78
  %v412 = vunpack.c.h.b16 %v78
  %v413 = vunpack.c.l.b16 %v79
  %v414 = vunpack.c.h.b16 %v79
  %v415 = vunpack.c.l.b16 %v80
  %v416 = vunpack.c.h.b16 %v80
  %v417 = vunpack.c.l.b16 %v81
  %v418 = vunpack.c.h.b16 %v81
  %v419 = vunpack.c.l.b16 %v82
  %v420 = vunpack.c.h.b16 %v82
  %v421 = vunpack.c.l.b16 %v83
  %v422 = vunpack.c.h.b16 %v83
  %v423 = vunpack.c.l.b16 %v84
  %v424 = vunpack.c.h.b16 %v84
  %v425 = vunpack.c.l.b16 %v85
  %v426 = vunpack.c.h.b16 %v85
  %v427 = vunpack.c.l.b16 %v86
  %v428 = vunpack.c.h.b16 %v86
  %v429 = vunpack.c.l.b16 %v87
  %v430 = vunpack.c.h.b16 %v87
  %v431 = vunpack.c.l.b16 %v88
  %v432 = vunpack.c.h.b16 %v88
  %v433 = vunpack.c.l.b16 %v89
  %v434 = vunpack.c.h.b16 %v89
  %v435 = vunpack.c.l.b16 %v90
  %v436 = vunpack.c.h.b16 %v90
  %v437 = vunpack.c.l.b16 %v91
  %v438 = vunpack.c.h.b16 %v91
  %v439 = vunpack.c.l.b16 %v92
  %v440 = vunpack.c.h.b16 %v92
  %v441 = vunpack.c.l.b16 %v93
  %v442 = vunpack.c.h.b16 %v93
  %v443 = vunpack.c.l.b16 %v94
  %v444 = vunpack.c.h.b16 %v94
  %v445 = vunpack.c.l.b16 %v95
  %v446 = vunpack.c.h.b16 %v95
  %v447 = vunpack.c.l.b16 %v96
  %v448 = vunpack.c.h.b16 %v96
  %v449 = vunpack.c.l.b16 %v97
  %v450 = vunpack.c.h.b16 %v97
  %v451 = vunpack.c.l.b16 %v98
  %v452 = vunpack.c.h.b16 %v98
  %v453 = vunpack.c.l.b16 %v99
  %v454 = vunpack.c.h.b16 %v99
  %v455 = vunpack.c.l.b16 %v100
  %v456 = vunpack.c.h.b16 %v100
  %v457 = vunpack.c.l.b16 %v101
  %v458 = vunpack.c.h.b16 %v101
  %v459 = vunpack.c.l.b16 %v102
  %v460 = vunpack.c.h.b16 %v102
  %v461 = vunpack.c.l.b16 %v103
  %v462 = vunpack.c.h.b16 %v103
  %v463 = vunpack.c.l.b16 %v104
  %v464 = vunpack.c.h.b16 %v104
  %v465 = vunpack.c.l.b16 %v105
  %v466 = vunpack.c.h.b16 %v105
  %v467 = vunpack.c.l.b16 %v106
  %v468 = vunpack.c.h.b16 %v106
  %v469 = vunpack.c.l.b16 %v107
  %v470 = vunpack.c.h.b16 %v107
  %v471 = vunpack.c.l.b16 %v108
  %v472 = vunpack.c.h.b16 %v108
  %v473 = vunpack.c.l.b16 %v109
  %v474 = vunpack.c.h.b16 %v109
  %v475 = vunpack.c.l.b16 %v110
  %v476 = vunpack.c.h.b16 %v110
  %v477 = vunpack.c.l.b16 %v111
  %v478 = vunpack.c.h.b16 %v111
  %v479 = vunpack.c.l.b16 %v112
  %v480 = vunpack.c.h.b16 %v112
  %v481 = vunpack.c.l.b16 %v113
  %v482 = vunpack.c.h.b16 %v113
  %v483 = vunpack.c.l.b16 %v114
  %v484 = vunpack.c.h.b16 %v114
  %v485 = vunpack.c.l.b16 %v115
  %v486 = vunpack.c.h.b16 %v115
  %v487 = vunpack.c.l.b16 %v116
  %v488 = vunpack.c.h.b16 %v116
  %v489 = vunpack.c.l.b16 %v117
  %v490 = vunpack.c.h.b16 %v117
  %v491 = vunpack.c.l.b16 %v118
  %v492 = vunpack.c.h.b16 %v118
  %v493 = vunpack.c.l.b16 %v119
  %v494 = vunpack.c.h.b16 %v119
  %v495 = vunpack.c.l.b16 %v120
  %v496 = vunpack.c.h.b16 %v120
  %v497 = vunpack.c.l.b16 %v121
  %v498 = vunpack.c.h.b16 %v121
  %v499 = vunpack.c.l.b16 %v122
  %v500 = vunpack.c.h.b16 %v122
  %v501 = vunpack.c.l.b16 %v123
  %v502 = vunpack.c.h.b16 %v123
  %v503 = vunpack.c.l.b16 %v124
  %v504 = vunpack.c.h.b16 %v124
  %v505 = vunpack.c.l.b16 %v125
  %v506 = vunpack.c.h.b16 %v125
  %v507 = vunpack.c.l.b16 %v126
  %v508 = vunpack.c.h.b16 %v126
  %v509 = vunpack.c.l.b16 %v127
  %v510 = vunpack.c.h.b16 %v127
  %v511 = vunpack.c.l.b16 %v128
  %v512 = vunpack.c.h.b16 %v128
  %v513 = vunpack.c.l.b16 %v129
  %v514 = vunpack.c.h.b16 %v129
  %v515 = vunpack.c.l.b16 %v130
  %v516 = vunpack.c.h.b16 %v130
  %v517 = vunpack.c.l.b16 %v131
  %v518 = vunpack.c.h.b16 %v131
  %v519 = vunpack.c.l.b16 %v132
  %v520 = vunpack.c.h.b16 %v132
  %v521 = vunpack.c.l.b16 %v133
  %v522 = vunpack.c.h.b16 %v133
  %v523 = vunpack.c.l.b16 %v134
  %v524 = vunpack.c.h.b16 %v134
  %v525 = vunpack.c.l.b16 %v135
  %v526 = vunpack.c.h.b16 %v135
  %v527 = vunpack.c.l.b16 %v136
  %v528 = vunpack.c.h.b16 %v136
  %v529 = vunpack.c.l.b16 %v137
  %v530 = vunpack.c.h.b16 %v137
  %v531 = vunpack.c.l.b16 %v138
  %v532 = vunpack.c.h.b16 %v138
  %v533 = vunpack.c.l.b16 %v139
  %v534 = vunpack.c.h.b16 %v139
  %v535 = vunpack.c.l.b16 %v140
  %v536 = vunpack.c.h.b16 %v140
  %v537 = vunpack.c.l.b16 %v141
  %v538 = vunpack.c.h.b16 %v141
  %v539 = vunpack.c.l.b16 %v142
  %v540 = vunpack.c.h.b16 %v142
  %v541 = vunpack.c.l.b16 %v143
  %v542 = vunpack.c.h.b16 %v143
  %v543 = vunpack.c.l.b16 %v144
  %v544 = vunpack.c.h.b16 %v144
  %v545 = vunpack.c.l.b16 %v145
  %v546 = vunpack.c.h.b16 %v145
  %v547 = vunpack.c.l.b16 %v146
  %v548 = vunpack.c.h.b16 %v146
  %v549 = vunpack.c.l.b16 %v147
  %v550 = vunpack.c.h.b16 %v147
  %v551 = vunpack.c.l.b16 %v148
  %v552 = vunpack.c.h.b16 %v148
  %v553 = vpack.c.b16 %v301, %v297
  %v554 = vpack.c.b16 %v302, %v298
  %v555 = vpack.c.b16 %v303, %v299
  %v556 = vpack.c.b16 %v304, %v300
  %v557 = vpack.c.b16 %v309, %v305
  %v558 = vpack.c.b16 %v310, %v306
  %v559 = vpack.c.b16 %v311, %v307
  %v560 = vpack.c.b16 %v312, %v308
  %v561 = vpack.c.b16 %v317, %v313
  %v562 = vpack.c.b16 %v318, %v314
  %v563 = vpack.c.b16 %v319, %v315
  %v564 = vpack.c.b16 %v320, %v316
  %v565 = vpack.c.b16 %v325, %v321
  %v566 = vpack.c.b16 %v326, %v322
  %v567 = vpack.c.b16 %v327, %v323
  %v568 = vpack.c.b16 %v328, %v324
  %v569 = vpack.c.b16 %v333, %v329
  %v570 = vpack.c.b16 %v334, %v330
  %v571 = vpack.c.b16 %v335, %v331
  %v572 = vpack.c.b16 %v336, %v332
  %v573 = vpack.c.b16 %v341, %v337
  %v574 = vpack.c.b16 %v342, %v338
  %v575 = vpack.c.b16 %v343, %v339
  %v576 = vpack.c.b16 %v344, %v340
  %v577 = vpack.c.b16 %v349, %v345
  %v578 = vpack.c.b16 %v350, %v346
  %v579 = vpack.c.b16 %v351, %v347
  %v580 = vpack.c.b16 %v352, %v348
  %v581 = vpack.c.b16 %v357, %v353
  %v582 = vpack.c.b16 %v358, %v354
  %v583 = vpack.c.b16 %v359, %v355
  %v584 = vpack.c.b16 %v360, %v356
  %v585 = vpack.c.b16 %v365, %v361
  %v586 = vpack.c.b16 %v366, %v362
  %v587 = vpack.c.b16 %v367, %v363
  %v588 = vpack.c.b16 %v368, %v364
  %v589 = vpack.c.b16 %v373, %v369
  %v590 = vpack.c.b16 %v374, %v370
  %v591 = vpack.c.b16 %v375, %v371
  %v592 = vpack.c.b16 %v376, %v372
  %v593 = vpack.c.b16 %v381, %v377
  %v594 = vpack.c.b16 %v382, %v378
  %v595 = vpack.c.b16 %v383, %v379
  %v596 = vpack.c.b16 %v384, %v380
  %v597 = vpack.c.b16 %v389, %v385
  %v598 = vpack.c.b16 %v390, %v386
  %v599 = vpack.c.b16 %v391, %v387
  %v600 = vpack.c.b16 %v392, %v388
  %v601 = vpack.c.b16 %v397, %v393
  %v602 = vpack.c.b16 %v398, %v394
  %v603 = vpack.c.b16 %v399, %v395
  %v604 = vpack.c.b16 %v400, %v396
  %v605 = vpack.c.b16 %v405, %v401
  %v606 = vpack.c.b16 %v406, %v402
  %v607 = vpack.c.b16 %v407, %v403
  %v608 = vpack.c.b16 %v408, %v404
  %v609 = vpack.c.b16 %v413, %v409
  %v610 = vpack.c.b16 %v414, %v410
  %v611 = vpack.c.b16 %v415, %v411
  %v612 = vpack.c.b16 %v416, %v412
  %v613 = vpack.c.b16 %v421, %v417
  %v614 = vpack.c.b16 %v422, %v418
  %v615 = vpack.c.b16 %v423, %v419
  %v616 = vpack.c.b16 %v424, %v420
  %v617 = vpack.c.b16 %v429, %v425
  %v618 = vpack.c.b16 %v430, %v426
  %v619 = vpack.c.b16 %v431, %v427
  %v620 = vpack.c.b16 %v432, %v428
  %v621 = vpack.c.b16 %v437, %v433
  %v622 = vpack.c.b16 %v438, %v434
  %v623 = vpack.c.b16 %v439, %v435
  %v624 = vpack.c.b16 %v440, %v436
  %v625 = vpack.c.b16 %v445, %v441
  %v626 = vpack.c.b16 %v446, %v442
  %v627 = vpack.c.b16 %v447, %v443
  %v628 = vpack.c.b16 %v448, %v444
  %v629 = vpack.c.b16 %v453, %v449
  %v630 = vpack.c.b16 %v454, %v450
  %v631 = vpack.c.b16 %v455, %v451
  %v632 = vpack.c.b16 %v456, %v452
  %v633 = vpack.c.b16 %v461, %v457
  %v634 = vpack.c.b16 %v462, %v458
  %v635 = vpack.c.b16 %v463, %v459
  %v636 = vpack.c.b16 %v464, %v460
  %v637 = vpack.c.b16 %v469, %v465
  %v638 = vpack.c.b16 %v470, %v466
  %v639 = vpack.c.b16 %v471, %v467
  %v640 = vpack.c.b16 %v472, %v468
  %v641 = vpack.c.b16 %v477, %v473
  %v642 = vpack.c.b16 %v478, %v474
  %v643 = vpack.c.b16 %v479, %v475
  %v644 = vpack.c.b16 %v480, %v476
  %v645 = vpack.c.b16 %v485, %v481
  %v646 = vpack.c.b16 %v486, %v482
  %v647 = vpack.c.b16 %v487, %v483
  %v648 = vpack.c.b16 %v488, %v484
  %v649 = vpack.c.b16 %v493, %v489
  %v650 = vpack.c.b16 %v494, %v490
  %v651 = vpack.c.b16 %v495, %v491
  %v652 = vpack.c.b16 %v496, %v492
  %v653 = vpack.c.b16 %v501, %v497
  %v654 = vpack.c.b16 %v502, %v498
  %v655 = vpack.c.b16 %v503, %v499
  %v656 = vpack.c.b16 %v504, %v500
  %v657 = vpack.c.b16 %v509, %v505
  %v658 = vpack.c.b16 %v510, %v506
  %v659 = vpack.c.b16 %v511, %v507
  %v660 = vpack.c.b16 %v512, %v508
  %v661 = vpack.c.b16 %v517, %v513
  %v662 = vpack.c.b16 %v518, %v514
  %v663 = vpack.c.b16 %v519, %v515
  %v664 = vpack.c.b16 %v520, %v516
  %v665 = vpack.c.b16 %v525, %v521
  %v666 = vpack.c.b16 %v526, %v522
  %v667 = vpack.c.b16 %v527, %v523
  %v668 = vpack.c.b16 %v528, %v524
  %v669 = vpack.c.b16 %v533, %v529
  %v670 = vpack.c.b16 %v534, %v530
  %v671 = vpack.c.b16 %v535, %v531
  %v672 = vpack.c.b16 %v536, %v532
  %v673 = vpack.c.b16 %v541, %v537
  %v674 = vpack.c.b16 %v542, %v538
  %v675 = vpack.c.b16 %v543, %v539
  %v676 = vpack.c.b16 %v544, %v540
  %v677 = vpack.c.b16 %v549, %v545
  %v678 = vpack.c.b16 %v550, %v546
  %v679 = vpack.c.b16 %v551, %v547
  %v680 = vpack.c.b16 %v552, %v548
  %809 = vmatpush.bf16.msra.mxu0 %v581
  %810 = vmatpush.bf16.msra.mxu0 %v577
  %811 = vmatpush.bf16.msra.mxu0 %v573
  %812 = vmatpush.bf16.msra.mxu0 %v569
  %813 = vmatpush.bf16.msra.mxu0 %v565
  %814 = vmatpush.bf16.msra.mxu0 %v561
  %815 = vmatpush.bf16.msra.mxu0 %v557
  %816 = vmatpush.bf16.msra.mxu0 %v553
  %817 = vmatmul.bf16.gmra.mxu0 %v161
  %v818 = vpop.f32.mrf.mxu0
  %v819 = vadd.f32 0.0, %v818
  %v820 = vpop.f32.mrf.mxu0
  %v821 = vadd.f32 0.0, %v820
  %822 = vdwg.mxu0
  %823 = vmatpush.bf16.msra.mxu0 %v613
  %824 = vmatpush.bf16.msra.mxu0 %v609
  %825 = vmatpush.bf16.msra.mxu0 %v605
  %826 = vmatpush.bf16.msra.mxu0 %v601
  %827 = vmatpush.bf16.msra.mxu0 %v597
  %828 = vmatpush.bf16.msra.mxu0 %v593
  %829 = vmatpush.bf16.msra.mxu0 %v589
  %830 = vmatpush.bf16.msra.mxu0 %v585
  %831 = vmatmul.bf16.gmra.mxu0 %v162
  %v832 = vpop.f32.mrf.mxu0
  %v833 = vadd.f32 %v819, %v832
  %v834 = vpop.f32.mrf.mxu0
  %v835 = vadd.f32 %v821, %v834
  %836 = vdwg.mxu0
  %837 = vmatpush.bf16.msra.mxu0 %v645
  %838 = vmatpush.bf16.msra.mxu0 %v641
  %839 = vmatpush.bf16.msra.mxu0 %v637
  %840 = vmatpush.bf16.msra.mxu0 %v633
  %841 = vmatpush.bf16.msra.mxu0 %v629
  %842 = vmatpush.bf16.msra.mxu0 %v625
  %843 = vmatpush.bf16.msra.mxu0 %v621
  %844 = vmatpush.bf16.msra.mxu0 %v617
  %845 = vmatmul.bf16.gmra.mxu0 %v163
  %v846 = vpop.f32.mrf.mxu0
  %v847 = vadd.f32 %v833, %v846
  %v848 = vpop.f32.mrf.mxu0
  %v849 = vadd.f32 %v835, %v848
  %850 = vdwg.mxu0
  %851 = vmatpush.bf16.msra.mxu0 %v677
  %852 = vmatpush.bf16.msra.mxu0 %v673
  %853 = vmatpush.bf16.msra.mxu0 %v669
  %854 = vmatpush.bf16.msra.mxu0 %v665
  %855 = vmatpush.bf16.msra.mxu0 %v661
  %856 = vmatpush.bf16.msra.mxu0 %v657
  %857 = vmatpush.bf16.msra.mxu0 %v653
  %858 = vmatpush.bf16.msra.mxu0 %v649
  %859 = vmatmul.bf16.gmra.mxu0 %v164
  %v860 = vpop.f32.mrf.mxu0
  %v861 = vadd.f32 %v847, %v860
  %v862 = vpop.f32.mrf.mxu0
  %v863 = vadd.f32 %v849, %v862
  %864 = vdwg.mxu0
  %865 = vmatpush.bf16.msra.mxu0 %v582
  %866 = vmatpush.bf16.msra.mxu0 %v578
  %867 = vmatpush.bf16.msra.mxu0 %v574
  %868 = vmatpush.bf16.msra.mxu0 %v570
  %869 = vmatpush.bf16.msra.mxu0 %v566
  %870 = vmatpush.bf16.msra.mxu0 %v562
  %871 = vmatpush.bf16.msra.mxu0 %v558
  %872 = vmatpush.bf16.msra.mxu0 %v554
  %873 = vmatmul.bf16.gmra.mxu0 %v161
  %v874 = vpop.f32.mrf.mxu0
  %v875 = vadd.f32 0.0, %v874
  %v876 = vpop.f32.mrf.mxu0
  %v877 = vadd.f32 0.0, %v876
  %878 = vdwg.mxu0
  %879 = vmatpush.bf16.msra.mxu0 %v614
  %880 = vmatpush.bf16.msra.mxu0 %v610
  %881 = vmatpush.bf16.msra.mxu0 %v606
  %882 = vmatpush.bf16.msra.mxu0 %v602
  %883 = vmatpush.bf16.msra.mxu0 %v598
  %884 = vmatpush.bf16.msra.mxu0 %v594
  %885 = vmatpush.bf16.msra.mxu0 %v590
  %886 = vmatpush.bf16.msra.mxu0 %v586
  %887 = vmatmul.bf16.gmra.mxu0 %v162
  %v888 = vpop.f32.mrf.mxu0
  %v889 = vadd.f32 %v875, %v888
  %v890 = vpop.f32.mrf.mxu0
  %v891 = vadd.f32 %v877, %v890
  %892 = vdwg.mxu0
  %893 = vmatpush.bf16.msra.mxu0 %v646
  %894 = vmatpush.bf16.msra.mxu0 %v642
  %895 = vmatpush.bf16.msra.mxu0 %v638
  %896 = vmatpush.bf16.msra.mxu0 %v634
  %897 = vmatpush.bf16.msra.mxu0 %v630
  %898 = vmatpush.bf16.msra.mxu0 %v626
  %899 = vmatpush.bf16.msra.mxu0 %v622
  %900 = vmatpush.bf16.msra.mxu0 %v618
  %901 = vmatmul.bf16.gmra.mxu0 %v163
  %v902 = vpop.f32.mrf.mxu0
  %v903 = vadd.f32 %v889, %v902
  %v904 = vpop.f32.mrf.mxu0
  %v905 = vadd.f32 %v891, %v904
  %906 = vdwg.mxu0
  %907 = vmatpush.bf16.msra.mxu0 %v678
  %908 = vmatpush.bf16.msra.mxu0 %v674
  %909 = vmatpush.bf16.msra.mxu0 %v670
  %910 = vmatpush.bf16.msra.mxu0 %v666
  %911 = vmatpush.bf16.msra.mxu0 %v662
  %912 = vmatpush.bf16.msra.mxu0 %v658
  %913 = vmatpush.bf16.msra.mxu0 %v654
  %914 = vmatpush.bf16.msra.mxu0 %v650
  %915 = vmatmul.bf16.gmra.mxu0 %v164
  %v916 = vpop.f32.mrf.mxu0
  %v917 = vadd.f32 %v903, %v916
  %v918 = vpop.f32.mrf.mxu0
  %v919 = vadd.f32 %v905, %v918
  %920 = vdwg.mxu0
  %921 = vmatpush.bf16.msra.mxu0 %v583
  %922 = vmatpush.bf16.msra.mxu0 %v579
  %923 = vmatpush.bf16.msra.mxu0 %v575
  %924 = vmatpush.bf16.msra.mxu0 %v571
  %925 = vmatpush.bf16.msra.mxu0 %v567
  %926 = vmatpush.bf16.msra.mxu0 %v563
  %927 = vmatpush.bf16.msra.mxu0 %v559
  %928 = vmatpush.bf16.msra.mxu0 %v555
  %929 = vmatmul.bf16.gmra.mxu0 %v161
  %v930 = vpop.f32.mrf.mxu0
  %v931 = vadd.f32 0.0, %v930
  %v932 = vpop.f32.mrf.mxu0
  %v933 = vadd.f32 0.0, %v932
  %934 = vdwg.mxu0
  %935 = vmatpush.bf16.msra.mxu0 %v615
  %936 = vmatpush.bf16.msra.mxu0 %v611
  %937 = vmatpush.bf16.msra.mxu0 %v607
  %938 = vmatpush.bf16.msra.mxu0 %v603
  %939 = vmatpush.bf16.msra.mxu0 %v599
  %940 = vmatpush.bf16.msra.mxu0 %v595
  %941 = vmatpush.bf16.msra.mxu0 %v591
  %942 = vmatpush.bf16.msra.mxu0 %v587
  %943 = vmatmul.bf16.gmra.mxu0 %v162
  %v944 = vpop.f32.mrf.mxu0
  %v945 = vadd.f32 %v931, %v944
  %v946 = vpop.f32.mrf.mxu0
  %v947 = vadd.f32 %v933, %v946
  %948 = vdwg.mxu0
  %949 = vmatpush.bf16.msra.mxu0 %v647
  %950 = vmatpush.bf16.msra.mxu0 %v643
  %951 = vmatpush.bf16.msra.mxu0 %v639
  %952 = vmatpush.bf16.msra.mxu0 %v635
  %953 = vmatpush.bf16.msra.mxu0 %v631
  %954 = vmatpush.bf16.msra.mxu0 %v627
  %955 = vmatpush.bf16.msra.mxu0 %v623
  %956 = vmatpush.bf16.msra.mxu0 %v619
  %957 = vmatmul.bf16.gmra.mxu0 %v163
  %v958 = vpop.f32.mrf.mxu0
  %v959 = vadd.f32 %v945, %v958
  %v960 = vpop.f32.mrf.mxu0
  %v961 = vadd.f32 %v947, %v960
  %962 = vdwg.mxu0
  %963 = vmatpush.bf16.msra.mxu0 %v679
  %964 = vmatpush.bf16.msra.mxu0 %v675
  %965 = vmatpush.bf16.msra.mxu0 %v671
  %966 = vmatpush.bf16.msra.mxu0 %v667
  %967 = vmatpush.bf16.msra.mxu0 %v663
  %968 = vmatpush.bf16.msra.mxu0 %v659
  %969 = vmatpush.bf16.msra.mxu0 %v655
  %970 = vmatpush.bf16.msra.mxu0 %v651
  %971 = vmatmul.bf16.gmra.mxu0 %v164
  %v972 = vpop.f32.mrf.mxu0
  %v973 = vadd.f32 %v959, %v972
  %v974 = vpop.f32.mrf.mxu0
  %v975 = vadd.f32 %v961, %v974
  %976 = vdwg.mxu0
  %977 = vmatpush.bf16.msra.mxu0 %v584
  %978 = vmatpush.bf16.msra.mxu0 %v580
  %979 = vmatpush.bf16.msra.mxu0 %v576
  %980 = vmatpush.bf16.msra.mxu0 %v572
  %981 = vmatpush.bf16.msra.mxu0 %v568
  %982 = vmatpush.bf16.msra.mxu0 %v564
  %983 = vmatpush.bf16.msra.mxu0 %v560
  %984 = vmatpush.bf16.msra.mxu0 %v556
  %985 = vmatmul.bf16.gmra.mxu0 %v161
  %v986 = vpop.f32.mrf.mxu0
  %v987 = vadd.f32 0.0, %v986
  %v988 = vpop.f32.mrf.mxu0
  %v989 = vadd.f32 0.0, %v988
  %990 = vdwg.mxu0
  %991 = vmatpush.bf16.msra.mxu0 %v616
  %992 = vmatpush.bf16.msra.mxu0 %v612
  %993 = vmatpush.bf16.msra.mxu0 %v608
  %994 = vmatpush.bf16.msra.mxu0 %v604
  %995 = vmatpush.bf16.msra.mxu0 %v600
  %996 = vmatpush.bf16.msra.mxu0 %v596
  %997 = vmatpush.bf16.msra.mxu0 %v592
  %998 = vmatpush.bf16.msra.mxu0 %v588
  %999 = vmatmul.bf16.gmra.mxu0 %v162
  %v1000 = vpop.f32.mrf.mxu0
  %v1001 = vadd.f32 %v987, %v1000
  %v1002 = vpop.f32.mrf.mxu0
  %v1003 = vadd.f32 %v989, %v1002
  %1004 = vdwg.mxu0
  %1005 = vmatpush.bf16.msra.mxu0 %v648
  %1006 = vmatpush.bf16.msra.mxu0 %v644
  %1007 = vmatpush.bf16.msra.mxu0 %v640
  %1008 = vmatpush.bf16.msra.mxu0 %v636
  %1009 = vmatpush.bf16.msra.mxu0 %v632
  %1010 = vmatpush.bf16.msra.mxu0 %v628
  %1011 = vmatpush.bf16.msra.mxu0 %v624
  %1012 = vmatpush.bf16.msra.mxu0 %v620
  %1013 = vmatmul.bf16.gmra.mxu0 %v163
  %v1014 = vpop.f32.mrf.mxu0
  %v1015 = vadd.f32 %v1001, %v1014
  %v1016 = vpop.f32.mrf.mxu0
  %v1017 = vadd.f32 %v1003, %v1016
  %1018 = vdwg.mxu0
  %1019 = vmatpush.bf16.msra.mxu0 %v680
  %1020 = vmatpush.bf16.msra.mxu0 %v676
  %1021 = vmatpush.bf16.msra.mxu0 %v672
  %1022 = vmatpush.bf16.msra.mxu0 %v668
  %1023 = vmatpush.bf16.msra.mxu0 %v664
  %1024 = vmatpush.bf16.msra.mxu0 %v660
  %1025 = vmatpush.bf16.msra.mxu0 %v656
  %1026 = vmatpush.bf16.msra.mxu0 %v652
  %1027 = vmatmul.bf16.gmra.mxu0 %v164
  %v1028 = vpop.f32.mrf.mxu0
  %v1029 = vadd.f32 %v1015, %v1028
  %v1030 = vpop.f32.mrf.mxu0
  %v1031 = vadd.f32 %v1017, %v1030
  %1032 = vdwg.mxu0
  %v1033 = vadd.f32 %v861, %v917
  %v1034 = vadd.f32 %v1033, %v973
  %v1035 = vadd.f32 %v1034, %v1029
  %1036 = vadd.xlane.f32.xlu0 %v1035
  %v1037 = vpop.xlane.xlu0 %1036
  %v1038 = vadd.f32 %v863, %v919
  %v1039 = vadd.f32 %v1038, %v975
  %v1040 = vadd.f32 %v1039, %v1031
  %1041 = vadd.xlane.f32.xlu0 %v1040
  %v1042 = vpop.xlane.xlu0 %1041
  %v1043 = vrcp.pop 512.0
  %v1044 = vmul.f32 512.0, %v1043
  %v1045 = vsub.f32 1.0, %v1044
  %v1046 = vmul.f32 %v1043, %v1045
  %v1047 = vadd.f32 %v1043, %v1046
  %vm1048 = vweird.f32 %v1043
  %v1049 = vsel %vm1048, %v1043, %v1047
  %v1050 = vmul.f32 %v1037, %v1049
  %v1051 = vmul.f32 %v1042, %v1049
  %v1052 = vsub.f32 %v861, %v1050
  %v1053 = vsub.f32 %v917, %v1050
  %v1054 = vsub.f32 %v973, %v1050
  %v1055 = vsub.f32 %v1029, %v1050
  %v1056 = vsub.f32 %v863, %v1051
  %v1057 = vsub.f32 %v919, %v1051
  %v1058 = vsub.f32 %v975, %v1051
  %v1059 = vsub.f32 %v1031, %v1051
  %v1060 = vmul.f32 %v1052, %v1052
  %v1061 = vmul.f32 %v1053, %v1053
  %v1062 = vmul.f32 %v1054, %v1054
  %v1063 = vmul.f32 %v1055, %v1055
  %v1064 = vmul.f32 %v1056, %v1056
  %v1065 = vmul.f32 %v1057, %v1057
  %v1066 = vmul.f32 %v1058, %v1058
  %v1067 = vmul.f32 %v1059, %v1059
  %v1068 = vadd.f32 %v1060, %v1061
  %v1069 = vadd.f32 %v1068, %v1062
  %v1070 = vadd.f32 %v1069, %v1063
  %1071 = vadd.xlane.f32.xlu0 %v1070
  %v1072 = vpop.xlane.xlu0 %1071
  %v1073 = vadd.f32 %v1064, %v1065
  %v1074 = vadd.f32 %v1073, %v1066
  %v1075 = vadd.f32 %v1074, %v1067
  %1076 = vadd.xlane.f32.xlu0 %v1075
  %v1077 = vpop.xlane.xlu0 %1076
  %v1078 = vmul.f32 %v1072, %v1049
  %v1079 = vmul.f32 %v1077, %v1049
  %v1080 = vadd.f32 %v1078, 1e-05
  %v1081 = vadd.f32 %v1079, 1e-05
  %v1082 = vrsqrt.pop %v1080
  %v1083 = vmul.f32 %v1082, %v1080
  %v1084 = vmul.f32 %v1083, %v1082
  %v1085 = vmul.f32 0.5, %v1084
  %v1086 = vsub.f32 1.5, %v1085
  %v1087 = vmul.f32 %v1082, %v1086
  %vm1088 = vweird.f32 %v1080
  %vm1089 = vweird.f32 %v1082
  %vm1090 = vmor %vm1088, %vm1089
  %v1091 = vsel %vm1090, %v1082, %v1087
  %v1092 = vrsqrt.pop %v1081
  %v1093 = vmul.f32 %v1092, %v1081
  %v1094 = vmul.f32 %v1093, %v1092
  %v1095 = vmul.f32 0.5, %v1094
  %v1096 = vsub.f32 1.5, %v1095
  %v1097 = vmul.f32 %v1092, %v1096
  %vm1098 = vweird.f32 %v1081
  %vm1099 = vweird.f32 %v1092
  %vm1100 = vmor %vm1098, %vm1099
  %v1101 = vsel %vm1100, %v1092, %v1097
  %v1102 = vmul.f32 %v1052, %v1091
  %v1103 = vmul.f32 %v1053, %v1091
  %v1104 = vmul.f32 %v1054, %v1091
  %v1105 = vmul.f32 %v1055, %v1091
  %v1106 = vmul.f32 %v1056, %v1101
  %v1107 = vmul.f32 %v1057, %v1101
  %v1108 = vmul.f32 %v1058, %v1101
  %v1109 = vmul.f32 %v1059, %v1101
  %v1110 = vld [vmem:[%s2] sm:$0xff]
  %v1111 = vld [vmem:[%s2 + $0x8] sm:$0xff]
  %1113 = vset.pattern.permute.xlu0 0
  %1114 = vperm.xlu0 %1113, %v1110
  %v1115 = vpop.permute.xlu0 %1114
  %1118 = vset.pattern.permute.xlu0 0
  %1119 = vperm.xlu0 %1118, %v1111
  %v1120 = vpop.permute.xlu0 %1119
  %v1122 = vmul.f32 %v1102, %v1115
  %v1123 = vmul.f32 %v1103, %v1115
  %v1124 = vmul.f32 %v1104, %v1115
  %v1125 = vmul.f32 %v1105, %v1115
  %v1126 = vmul.f32 %v1106, %v1120
  %v1127 = vmul.f32 %v1107, %v1120
  %v1128 = vmul.f32 %v1108, %v1120
  %v1129 = vmul.f32 %v1109, %v1120
  %v1130 = vld [vmem:[%s3] sm:$0xff]
  %v1131 = vld [vmem:[%s3 + $0x8] sm:$0xff]
  %1133 = vset.pattern.permute.xlu0 0
  %1134 = vperm.xlu0 %1133, %v1130
  %v1135 = vpop.permute.xlu0 %1134
  %1138 = vset.pattern.permute.xlu0 0
  %1139 = vperm.xlu0 %1138, %v1131
  %v1140 = vpop.permute.xlu0 %1139
  %v1142 = vadd.f32 %v1122, %v1135
  %v1143 = vadd.f32 %v1123, %v1135
  %v1144 = vadd.f32 %v1124, %v1135
  %v1145 = vadd.f32 %v1125, %v1135
  %v1146 = vadd.f32 %v1126, %v1140
  %v1147 = vadd.f32 %v1127, %v1140
  %v1148 = vadd.f32 %v1128, %v1140
  %v1149 = vadd.f32 %v1129, %v1140
  %vm1150 = vcmp.gt.f32.partialorder %v1142, 0.0
  %vm1151 = vcmp.gt.f32.partialorder %v1143, 0.0
  %vm1152 = vcmp.gt.f32.partialorder %v1144, 0.0
  %vm1153 = vcmp.gt.f32.partialorder %v1145, 0.0
  %vm1154 = vcmp.gt.f32.partialorder %v1146, 0.0
  %vm1155 = vcmp.gt.f32.partialorder %v1147, 0.0
  %vm1156 = vcmp.gt.f32.partialorder %v1148, 0.0
  %vm1157 = vcmp.gt.f32.partialorder %v1149, 0.0
  %v1158 = vmul.f32 %v1142, 1.442695
  %v1159 = vpow.pop %v1158
  %v1160 = vmul.f32 %v1143, 1.442695
  %v1161 = vpow.pop %v1160
  %v1162 = vmul.f32 %v1144, 1.442695
  %v1163 = vpow.pop %v1162
  %v1164 = vmul.f32 %v1145, 1.442695
  %v1165 = vpow.pop %v1164
  %v1166 = vmul.f32 %v1146, 1.442695
  %v1167 = vpow.pop %v1166
  %v1168 = vmul.f32 %v1147, 1.442695
  %v1169 = vpow.pop %v1168
  %v1170 = vmul.f32 %v1148, 1.442695
  %v1171 = vpow.pop %v1170
  %v1172 = vmul.f32 %v1149, 1.442695
  %v1173 = vpow.pop %v1172
  %v1174 = vsub.f32 %v1159, 1.0
  %v1175 = vsub.f32 %v1161, 1.0
  %v1176 = vsub.f32 %v1163, 1.0
  %v1177 = vsub.f32 %v1165, 1.0
  %v1178 = vsub.f32 %v1167, 1.0
  %v1179 = vsub.f32 %v1169, 1.0
  %v1180 = vsub.f32 %v1171, 1.0
  %v1181 = vsub.f32 %v1173, 1.0
  %v1182 = vsel %vm1150, %v1142, %v1174
  %v1183 = vsel %vm1151, %v1143, %v1175
  %v1184 = vsel %vm1152, %v1144, %v1176
  %v1185 = vsel %vm1153, %v1145, %v1177
  %v1186 = vsel %vm1154, %v1146, %v1178
  %v1187 = vsel %vm1155, %v1147, %v1179
  %v1188 = vsel %vm1156, %v1148, %v1180
  %v1189 = vsel %vm1157, %v1149, %v1181
  %v1190 = vpack.c.bf16 %v1183, %v1182
  %v1191 = vpack.c.bf16 %v1185, %v1184
  %v1192 = vpack.c.bf16 %v1187, %v1186
  %v1193 = vpack.c.bf16 %v1189, %v1188
  %1194 = vst [vmem:[%s4] sm:$0xff] %v1190
  %1195 = vst [vmem:[%s4 + $0x8] sm:$0xff] %v1191
  %1196 = vst [vmem:[%s4 + $0x10] sm:$0xff] %v1192
  %1197 = vst [vmem:[%s4 + $0x18] sm:$0xff] %v1193
  // Predicated region
  $region18: #{generator_forward.7} parent=0 // pred_check
    _
  $region19: #{generator_forward.7} parent=0 // pred_check_branch
    %1199 = sbr.rel (0) target = $region21
  $region20: #{generator_forward.7} parent=0 // pred_region
    _
  $region21: #{generator_forward.7} parent=0 // pred_fallthru
    _
  // Predicated region
  $region22: #{generator_forward.7} parent=0 // pred_check
    _
  $region23: #{generator_forward.7} parent=0 // pred_check_branch
    %1201 = sbr.rel (0) target = $region25
  $region24: #{generator_forward.7} parent=0 // pred_region
    _
  $region25: #{generator_forward.7} parent=0 // pred_fallthru
    _

// kernel: generator_forward.8
$region0: #{generator_forward.8}
  #allocation0 [shape = 'u32[]', space=smem, size = 0x4, offset = 0x4, fixed_abs, tag = 'smem constant byte address 0x4 - core index']
  #allocation1 [shape = 'u32[72,128]{1,0:T(1,128)}', space=vmem, size = 0x9000, scoped, tag = 'internal scratch']
  %s0 = inlined_call_operand.vmem [shape: bf16[8,256], index: 0, kind: input, shape index: {}]
  %s1 = inlined_call_operand.vmem [shape: bf16[256,2048], index: 1, kind: input, shape index: {}]
  %s2 = inlined_call_operand.vmem [shape: f32[8,1], index: 2, kind: input, shape index: {}]
  %s3 = inlined_call_operand.vmem [shape: f32[8,1], index: 3, kind: input, shape index: {}]
  %s4 = inlined_call_operand.vmem [shape: bf16[8,2048], index: 4, kind: output, shape index: {}]
  %s5 = sld [smem:[#allocation0]]
  $region26: #{generator_forward.8} parent=0
    _
  %s7 = ssub.s32 1, %s5
  %s8 = scalar_select 0, %s7, %s5
  // Predicated region
  $region2: #{generator_forward.8} parent=0 // pred_check
    _
  $region3: #{generator_forward.8} parent=0 // pred_check_branch
    %10 = sbr.rel (0) target = $region5
  $region4: #{generator_forward.8} parent=0 // pred_region
    _
  $region5: #{generator_forward.8} parent=0 // pred_fallthru
    _
  // Predicated region
  $region6: #{generator_forward.8} parent=0 // pred_check
    _
  $region7: #{generator_forward.8} parent=0 // pred_check_branch
    %12 = sbr.rel (0) target = $region9
  $region8: #{generator_forward.8} parent=0 // pred_region
    _
  $region9: #{generator_forward.8} parent=0 // pred_fallthru
    _
  // Predicated region
  $region10: #{generator_forward.8} parent=0 // pred_check
    _
  $region11: #{generator_forward.8} parent=0 // pred_check_branch
    %14 = sbr.rel (0) target = $region13
  $region12: #{generator_forward.8} parent=0 // pred_region
    _
  $region13: #{generator_forward.8} parent=0 // pred_fallthru
    _
  // Predicated region
  $region14: #{generator_forward.8} parent=0 // pred_check
    _
  $region15: #{generator_forward.8} parent=0 // pred_check_branch
    %16 = sbr.rel (0) target = $region17
  $region16: #{generator_forward.8} parent=0 // pred_region
    _
  $region17: #{generator_forward.8} parent=0 // pred_fallthru
    _
  %v17 = vld [vmem:[%s0] sm:$0xff]
  %v18 = vld [vmem:[%s1] sm:$0xff]
  %v19 = vld [vmem:[%s1 + $0x8] sm:$0xff]
  %v20 = vld [vmem:[%s1 + $0x10] sm:$0xff]
  %v21 = vld [vmem:[%s1 + $0x18] sm:$0xff]
  %v22 = vld [vmem:[%s1 + $0x20] sm:$0xff]
  %v23 = vld [vmem:[%s1 + $0x28] sm:$0xff]
  %v24 = vld [vmem:[%s1 + $0x30] sm:$0xff]
  %v25 = vld [vmem:[%s1 + $0x38] sm:$0xff]
  %v26 = vld [vmem:[%s1 + $0x40] sm:$0xff]
  %v27 = vld [vmem:[%s1 + $0x48] sm:$0xff]
  %v28 = vld [vmem:[%s1 + $0x50] sm:$0xff]
  %v29 = vld [vmem:[%s1 + $0x58] sm:$0xff]
  %v30 = vld [vmem:[%s1 + $0x60] sm:$0xff]
  %v31 = vld [vmem:[%s1 + $0x68] sm:$0xff]
  %v32 = vld [vmem:[%s1 + $0x70] sm:$0xff]
  %v33 = vld [vmem:[%s1 + $0x78] sm:$0xff]
  %v34 = vld [vmem:[%s1 + $0x80] sm:$0xff]
  %v35 = vld [vmem:[%s1 + $0x88] sm:$0xff]
  %v36 = vld [vmem:[%s1 + $0x90] sm:$0xff]
  %v37 = vld [vmem:[%s1 + $0x98] sm:$0xff]
  %v38 = vld [vmem:[%s1 + $0xa0] sm:$0xff]
  %v39 = vld [vmem:[%s1 + $0xa8] sm:$0xff]
  %v40 = vld [vmem:[%s1 + $0xb0] sm:$0xff]
  %v41 = vld [vmem:[%s1 + $0xb8] sm:$0xff]
  %v42 = vld [vmem:[%s1 + $0xc0] sm:$0xff]
  %v43 = vld [vmem:[%s1 + $0xc8] sm:$0xff]
  %v44 = vld [vmem:[%s1 + $0xd0] sm:$0xff]
  %v45 = vld [vmem:[%s1 + $0xd8] sm:$0xff]
  %v46 = vld [vmem:[%s1 + $0xe0] sm:$0xff]
  %v47 = vld [vmem:[%s1 + $0xe8] sm:$0xff]
  %v48 = vld [vmem:[%s1 + $0xf0] sm:$0xff]
  %v49 = vld [vmem:[%s1 + $0xf8] sm:$0xff]
  %v50 = vld [vmem:[%s1 + $0x100] sm:$0xff]
  %v51 = vld [vmem:[%s1 + $0x108] sm:$0xff]
  %v52 = vld [vmem:[%s1 + $0x110] sm:$0xff]
  %v53 = vld [vmem:[%s1 + $0x118] sm:$0xff]
  %v54 = vld [vmem:[%s1 + $0x120] sm:$0xff]
  %v55 = vld [vmem:[%s1 + $0x128] sm:$0xff]
  %v56 = vld [vmem:[%s1 + $0x130] sm:$0xff]
  %v57 = vld [vmem:[%s1 + $0x138] sm:$0xff]
  %v58 = vld [vmem:[%s1 + $0x140] sm:$0xff]
  %v59 = vld [vmem:[%s1 + $0x148] sm:$0xff]
  %v60 = vld [vmem:[%s1 + $0x150] sm:$0xff]
  %v61 = vld [vmem:[%s1 + $0x158] sm:$0xff]
  %v62 = vld [vmem:[%s1 + $0x160] sm:$0xff]
  %v63 = vld [vmem:[%s1 + $0x168] sm:$0xff]
  %v64 = vld [vmem:[%s1 + $0x170] sm:$0xff]
  %v65 = vld [vmem:[%s1 + $0x178] sm:$0xff]
  %v66 = vld [vmem:[%s1 + $0x180] sm:$0xff]
  %v67 = vld [vmem:[%s1 + $0x188] sm:$0xff]
  %v68 = vld [vmem:[%s1 + $0x190] sm:$0xff]
  %v69 = vld [vmem:[%s1 + $0x198] sm:$0xff]
  %v70 = vld [vmem:[%s1 + $0x1a0] sm:$0xff]
  %v71 = vld [vmem:[%s1 + $0x1a8] sm:$0xff]
  %v72 = vld [vmem:[%s1 + $0x1b0] sm:$0xff]
  %v73 = vld [vmem:[%s1 + $0x1b8] sm:$0xff]
  %v74 = vld [vmem:[%s1 + $0x1c0] sm:$0xff]
  %v75 = vld [vmem:[%s1 + $0x1c8] sm:$0xff]
  %v76 = vld [vmem:[%s1 + $0x1d0] sm:$0xff]
  %v77 = vld [vmem:[%s1 + $0x1d8] sm:$0xff]
  %v78 = vld [vmem:[%s1 + $0x1e0] sm:$0xff]
  %v79 = vld [vmem:[%s1 + $0x1e8] sm:$0xff]
  %v80 = vld [vmem:[%s1 + $0x1f0] sm:$0xff]
  %v81 = vld [vmem:[%s1 + $0x1f8] sm:$0xff]
  %v82 = vld [vmem:[%s1 + $0x200] sm:$0xff]
  %v83 = vld [vmem:[%s1 + $0x208] sm:$0xff]
  %v84 = vld [vmem:[%s1 + $0x210] sm:$0xff]
  %v85 = vld [vmem:[%s1 + $0x218] sm:$0xff]
  %v86 = vld [vmem:[%s1 + $0x220] sm:$0xff]
  %v87 = vld [vmem:[%s1 + $0x228] sm:$0xff]
  %v88 = vld [vmem:[%s1 + $0x230] sm:$0xff]
  %v89 = vld [vmem:[%s1 + $0x238] sm:$0xff]
  %v90 = vld [vmem:[%s1 + $0x240] sm:$0xff]
  %v91 = vld [vmem:[%s1 + $0x248] sm:$0xff]
  %v92 = vld [vmem:[%s1 + $0x250] sm:$0xff]
  %v93 = vld [vmem:[%s1 + $0x258] sm:$0xff]
  %v94 = vld [vmem:[%s1 + $0x260] sm:$0xff]
  %v95 = vld [vmem:[%s1 + $0x268] sm:$0xff]
  %v96 = vld [vmem:[%s1 + $0x270] sm:$0xff]
  %v97 = vld [vmem:[%s1 + $0x278] sm:$0xff]
  %v98 = vld [vmem:[%s1 + $0x280] sm:$0xff]
  %v99 = vld [vmem:[%s1 + $0x288] sm:$0xff]
  %v100 = vld [vmem:[%s1 + $0x290] sm:$0xff]
  %v101 = vld [vmem:[%s1 + $0x298] sm:$0xff]
  %v102 = vld [vmem:[%s1 + $0x2a0] sm:$0xff]
  %v103 = vld [vmem:[%s1 + $0x2a8] sm:$0xff]
  %v104 = vld [vmem:[%s1 + $0x2b0] sm:$0xff]
  %v105 = vld [vmem:[%s1 + $0x2b8] sm:$0xff]
  %v106 = vld [vmem:[%s1 + $0x2c0] sm:$0xff]
  %v107 = vld [vmem:[%s1 + $0x2c8] sm:$0xff]
  %v108 = vld [vmem:[%s1 + $0x2d0] sm:$0xff]
  %v109 = vld [vmem:[%s1 + $0x2d8] sm:$0xff]
  %v110 = vld [vmem:[%s1 + $0x2e0] sm:$0xff]
  %v111 = vld [vmem:[%s1 + $0x2e8] sm:$0xff]
  %v112 = vld [vmem:[%s1 + $0x2f0] sm:$0xff]
  %v113 = vld [vmem:[%s1 + $0x2f8] sm:$0xff]
  %v114 = vld [vmem:[%s1 + $0x300] sm:$0xff]
  %v115 = vld [vmem:[%s1 + $0x308] sm:$0xff]
  %v116 = vld [vmem:[%s1 + $0x310] sm:$0xff]
  %v117 = vld [vmem:[%s1 + $0x318] sm:$0xff]
  %v118 = vld [vmem:[%s1 + $0x320] sm:$0xff]
  %v119 = vld [vmem:[%s1 + $0x328] sm:$0xff]
  %v120 = vld [vmem:[%s1 + $0x330] sm:$0xff]
  %v121 = vld [vmem:[%s1 + $0x338] sm:$0xff]
  %v122 = vld [vmem:[%s1 + $0x340] sm:$0xff]
  %v123 = vld [vmem:[%s1 + $0x348] sm:$0xff]
  %v124 = vld [vmem:[%s1 + $0x350] sm:$0xff]
  %v125 = vld [vmem:[%s1 + $0x358] sm:$0xff]
  %v126 = vld [vmem:[%s1 + $0x360] sm:$0xff]
  %v127 = vld [vmem:[%s1 + $0x368] sm:$0xff]
  %v128 = vld [vmem:[%s1 + $0x370] sm:$0xff]
  %v129 = vld [vmem:[%s1 + $0x378] sm:$0xff]
  %v130 = vld [vmem:[%s1 + $0x380] sm:$0xff]
  %v131 = vld [vmem:[%s1 + $0x388] sm:$0xff]
  %v132 = vld [vmem:[%s1 + $0x390] sm:$0xff]
  %v133 = vld [vmem:[%s1 + $0x398] sm:$0xff]
  %v134 = vld [vmem:[%s1 + $0x3a0] sm:$0xff]
  %v135 = vld [vmem:[%s1 + $0x3a8] sm:$0xff]
  %v136 = vld [vmem:[%s1 + $0x3b0] sm:$0xff]
  %v137 = vld [vmem:[%s1 + $0x3b8] sm:$0xff]
  %v138 = vld [vmem:[%s1 + $0x3c0] sm:$0xff]
  %v139 = vld [vmem:[%s1 + $0x3c8] sm:$0xff]
  %v140 = vld [vmem:[%s1 + $0x3d0] sm:$0xff]
  %v141 = vld [vmem:[%s1 + $0x3d8] sm:$0xff]
  %v142 = vld [vmem:[%s1 + $0x3e0] sm:$0xff]
  %v143 = vld [vmem:[%s1 + $0x3e8] sm:$0xff]
  %v144 = vld [vmem:[%s1 + $0x3f0] sm:$0xff]
  %v145 = vld [vmem:[%s1 + $0x3f8] sm:$0xff]
  %v146 = vld [vmem:[%s1 + $0x400] sm:$0xff]
  %v147 = vld [vmem:[%s1 + $0x408] sm:$0xff]
  %v148 = vld [vmem:[%s1 + $0x410] sm:$0xff]
  %v149 = vld [vmem:[%s1 + $0x418] sm:$0xff]
  %v150 = vld [vmem:[%s1 + $0x420] sm:$0xff]
  %v151 = vld [vmem:[%s1 + $0x428] sm:$0xff]
  %v152 = vld [vmem:[%s1 + $0x430] sm:$0xff]
  %v153 = vld [vmem:[%s1 + $0x438] sm:$0xff]
  %v154 = vld [vmem:[%s1 + $0x440] sm:$0xff]
  %v155 = vld [vmem:[%s1 + $0x448] sm:$0xff]
  %v156 = vld [vmem:[%s1 + $0x450] sm:$0xff]
  %v157 = vld [vmem:[%s1 + $0x458] sm:$0xff]
  %v158 = vld [vmem:[%s1 + $0x460] sm:$0xff]
  %v159 = vld [vmem:[%s1 + $0x468] sm:$0xff]
  %v160 = vld [vmem:[%s1 + $0x470] sm:$0xff]
  %v161 = vld [vmem:[%s1 + $0x478] sm:$0xff]
  %v162 = vld [vmem:[%s1 + $0x480] sm:$0xff]
  %v163 = vld [vmem:[%s1 + $0x488] sm:$0xff]
  %v164 = vld [vmem:[%s1 + $0x490] sm:$0xff]
  %v165 = vld [vmem:[%s1 + $0x498] sm:$0xff]
  %v166 = vld [vmem:[%s1 + $0x4a0] sm:$0xff]
  %v167 = vld [vmem:[%s1 + $0x4a8] sm:$0xff]
  %v168 = vld [vmem:[%s1 + $0x4b0] sm:$0xff]
  %v169 = vld [vmem:[%s1 + $0x4b8] sm:$0xff]
  %v170 = vld [vmem:[%s1 + $0x4c0] sm:$0xff]
  %v171 = vld [vmem:[%s1 + $0x4c8] sm:$0xff]
  %v172 = vld [vmem:[%s1 + $0x4d0] sm:$0xff]
  %v173 = vld [vmem:[%s1 + $0x4d8] sm:$0xff]
  %v174 = vld [vmem:[%s1 + $0x4e0] sm:$0xff]
  %v175 = vld [vmem:[%s1 + $0x4e8] sm:$0xff]
  %v176 = vld [vmem:[%s1 + $0x4f0] sm:$0xff]
  %v177 = vld [vmem:[%s1 + $0x4f8] sm:$0xff]
  %v178 = vld [vmem:[%s1 + $0x500] sm:$0xff]
  %v179 = vld [vmem:[%s1 + $0x508] sm:$0xff]
  %v180 = vld [vmem:[%s1 + $0x510] sm:$0xff]
  %v181 = vld [vmem:[%s1 + $0x518] sm:$0xff]
  %v182 = vld [vmem:[%s1 + $0x520] sm:$0xff]
  %v183 = vld [vmem:[%s1 + $0x528] sm:$0xff]
  %v184 = vld [vmem:[%s1 + $0x530] sm:$0xff]
  %v185 = vld [vmem:[%s1 + $0x538] sm:$0xff]
  %v186 = vld [vmem:[%s1 + $0x540] sm:$0xff]
  %v187 = vld [vmem:[%s1 + $0x548] sm:$0xff]
  %v188 = vld [vmem:[%s1 + $0x550] sm:$0xff]
  %v189 = vld [vmem:[%s1 + $0x558] sm:$0xff]
  %v190 = vld [vmem:[%s1 + $0x560] sm:$0xff]
  %v191 = vld [vmem:[%s1 + $0x568] sm:$0xff]
  %v192 = vld [vmem:[%s1 + $0x570] sm:$0xff]
  %v193 = vld [vmem:[%s1 + $0x578] sm:$0xff]
  %v194 = vld [vmem:[%s1 + $0x580] sm:$0xff]
  %v195 = vld [vmem:[%s1 + $0x588] sm:$0xff]
  %v196 = vld [vmem:[%s1 + $0x590] sm:$0xff]
  %v197 = vld [vmem:[%s1 + $0x598] sm:$0xff]
  %v198 = vld [vmem:[%s1 + $0x5a0] sm:$0xff]
  %v199 = vld [vmem:[%s1 + $0x5a8] sm:$0xff]
  %v200 = vld [vmem:[%s1 + $0x5b0] sm:$0xff]
  %v201 = vld [vmem:[%s1 + $0x5b8] sm:$0xff]
  %v202 = vld [vmem:[%s1 + $0x5c0] sm:$0xff]
  %v203 = vld [vmem:[%s1 + $0x5c8] sm:$0xff]
  %v204 = vld [vmem:[%s1 + $0x5d0] sm:$0xff]
  %v205 = vld [vmem:[%s1 + $0x5d8] sm:$0xff]
  %v206 = vld [vmem:[%s1 + $0x5e0] sm:$0xff]
  %v207 = vld [vmem:[%s1 + $0x5e8] sm:$0xff]
  %v208 = vld [vmem:[%s1 + $0x5f0] sm:$0xff]
  %v209 = vld [vmem:[%s1 + $0x5f8] sm:$0xff]
  %v210 = vld [vmem:[%s1 + $0x600] sm:$0xff]
  %v211 = vld [vmem:[%s1 + $0x608] sm:$0xff]
  %v212 = vld [vmem:[%s1 + $0x610] sm:$0xff]
  %v213 = vld [vmem:[%s1 + $0x618] sm:$0xff]
  %v214 = vld [vmem:[%s1 + $0x620] sm:$0xff]
  %v215 = vld [vmem:[%s1 + $0x628] sm:$0xff]
  %v216 = vld [vmem:[%s1 + $0x630] sm:$0xff]
  %v217 = vld [vmem:[%s1 + $0x638] sm:$0xff]
  %v218 = vld [vmem:[%s1 + $0x640] sm:$0xff]
  %v219 = vld [vmem:[%s1 + $0x648] sm:$0xff]
  %v220 = vld [vmem:[%s1 + $0x650] sm:$0xff]
  %v221 = vld [vmem:[%s1 + $0x658] sm:$0xff]
  %v222 = vld [vmem:[%s1 + $0x660] sm:$0xff]
  %v223 = vld [vmem:[%s1 + $0x668] sm:$0xff]
  %v224 = vld [vmem:[%s1 + $0x670] sm:$0xff]
  %v225 = vld [vmem:[%s1 + $0x678] sm:$0xff]
  %v226 = vld [vmem:[%s1 + $0x680] sm:$0xff]
  %v227 = vld [vmem:[%s1 + $0x688] sm:$0xff]
  %v228 = vld [vmem:[%s1 + $0x690] sm:$0xff]
  %v229 = vld [vmem:[%s1 + $0x698] sm:$0xff]
  %v230 = vld [vmem:[%s1 + $0x6a0] sm:$0xff]
  %v231 = vld [vmem:[%s1 + $0x6a8] sm:$0xff]
  %v232 = vld [vmem:[%s1 + $0x6b0] sm:$0xff]
  %v233 = vld [vmem:[%s1 + $0x6b8] sm:$0xff]
  %v234 = vld [vmem:[%s1 + $0x6c0] sm:$0xff]
  %v235 = vld [vmem:[%s1 + $0x6c8] sm:$0xff]
  %v236 = vld [vmem:[%s1 + $0x6d0] sm:$0xff]
  %v237 = vld [vmem:[%s1 + $0x6d8] sm:$0xff]
  %v238 = vld [vmem:[%s1 + $0x6e0] sm:$0xff]
  %v239 = vld [vmem:[%s1 + $0x6e8] sm:$0xff]
  %v240 = vld [vmem:[%s1 + $0x6f0] sm:$0xff]
  %v241 = vld [vmem:[%s1 + $0x6f8] sm:$0xff]
  %v242 = vld [vmem:[%s1 + $0x700] sm:$0xff]
  %v243 = vld [vmem:[%s1 + $0x708] sm:$0xff]
  %v244 = vld [vmem:[%s1 + $0x710] sm:$0xff]
  %v245 = vld [vmem:[%s1 + $0x718] sm:$0xff]
  %v246 = vld [vmem:[%s1 + $0x720] sm:$0xff]
  %v247 = vld [vmem:[%s1 + $0x728] sm:$0xff]
  %v248 = vld [vmem:[%s1 + $0x730] sm:$0xff]
  %v249 = vld [vmem:[%s1 + $0x738] sm:$0xff]
  %v250 = vld [vmem:[%s1 + $0x740] sm:$0xff]
  %v251 = vld [vmem:[%s1 + $0x748] sm:$0xff]
  %v252 = vld [vmem:[%s1 + $0x750] sm:$0xff]
  %v253 = vld [vmem:[%s1 + $0x758] sm:$0xff]
  %v254 = vld [vmem:[%s1 + $0x760] sm:$0xff]
  %v255 = vld [vmem:[%s1 + $0x768] sm:$0xff]
  %v256 = vld [vmem:[%s1 + $0x770] sm:$0xff]
  %v257 = vld [vmem:[%s1 + $0x778] sm:$0xff]
  %v258 = vld [vmem:[%s1 + $0x780] sm:$0xff]
  %v259 = vld [vmem:[%s1 + $0x788] sm:$0xff]
  %v260 = vld [vmem:[%s1 + $0x790] sm:$0xff]
  %v261 = vld [vmem:[%s1 + $0x798] sm:$0xff]
  %v262 = vld [vmem:[%s1 + $0x7a0] sm:$0xff]
  %v263 = vld [vmem:[%s1 + $0x7a8] sm:$0xff]
  %v264 = vld [vmem:[%s1 + $0x7b0] sm:$0xff]
  %v265 = vld [vmem:[%s1 + $0x7b8] sm:$0xff]
  %v266 = vld [vmem:[%s1 + $0x7c0] sm:$0xff]
  %v267 = vld [vmem:[%s1 + $0x7c8] sm:$0xff]
  %v268 = vld [vmem:[%s1 + $0x7d0] sm:$0xff]
  %v269 = vld [vmem:[%s1 + $0x7d8] sm:$0xff]
  %v270 = vld [vmem:[%s1 + $0x7e0] sm:$0xff]
  %v271 = vld [vmem:[%s1 + $0x7e8] sm:$0xff]
  %v272 = vld [vmem:[%s1 + $0x7f0] sm:$0xff]
  %v273 = vld [vmem:[%s1 + $0x7f8] sm:$0xff]
  %v275 = vunpack.c.l.b16 %v17
  %v276 = vunpack.c.h.b16 %v17
  %v277 = vpack.c.b16 %v275, %v275
  %v278 = vpack.c.b16 %v276, %v276
  %v537 = vunpack.c.l.b16 %v18
  %v538 = vunpack.c.h.b16 %v18
  %v539 = vunpack.c.l.b16 %v19
  %v540 = vunpack.c.h.b16 %v19
  %v541 = vunpack.c.l.b16 %v20
  %v542 = vunpack.c.h.b16 %v20
  %v543 = vunpack.c.l.b16 %v21
  %v544 = vunpack.c.h.b16 %v21
  %v545 = vunpack.c.l.b16 %v22
  %v546 = vunpack.c.h.b16 %v22
  %v547 = vunpack.c.l.b16 %v23
  %v548 = vunpack.c.h.b16 %v23
  %v549 = vunpack.c.l.b16 %v24
  %v550 = vunpack.c.h.b16 %v24
  %v551 = vunpack.c.l.b16 %v25
  %v552 = vunpack.c.h.b16 %v25
  %v553 = vunpack.c.l.b16 %v26
  %v554 = vunpack.c.h.b16 %v26
  %v555 = vunpack.c.l.b16 %v27
  %v556 = vunpack.c.h.b16 %v27
  %v557 = vunpack.c.l.b16 %v28
  %v558 = vunpack.c.h.b16 %v28
  %v559 = vunpack.c.l.b16 %v29
  %v560 = vunpack.c.h.b16 %v29
  %v561 = vunpack.c.l.b16 %v30
  %v562 = vunpack.c.h.b16 %v30
  %v563 = vunpack.c.l.b16 %v31
  %v564 = vunpack.c.h.b16 %v31
  %v565 = vunpack.c.l.b16 %v32
  %v566 = vunpack.c.h.b16 %v32
  %v567 = vunpack.c.l.b16 %v33
  %v568 = vunpack.c.h.b16 %v33
  %v569 = vunpack.c.l.b16 %v34
  %v570 = vunpack.c.h.b16 %v34
  %v571 = vunpack.c.l.b16 %v35
  %v572 = vunpack.c.h.b16 %v35
  %v573 = vunpack.c.l.b16 %v36
  %v574 = vunpack.c.h.b16 %v36
  %v575 = vunpack.c.l.b16 %v37
  %v576 = vunpack.c.h.b16 %v37
  %v577 = vunpack.c.l.b16 %v38
  %v578 = vunpack.c.h.b16 %v38
  %v579 = vunpack.c.l.b16 %v39
  %v580 = vunpack.c.h.b16 %v39
  %v581 = vunpack.c.l.b16 %v40
  %v582 = vunpack.c.h.b16 %v40
  %v583 = vunpack.c.l.b16 %v41
  %v584 = vunpack.c.h.b16 %v41
  %v585 = vunpack.c.l.b16 %v42
  %v586 = vunpack.c.h.b16 %v42
  %v587 = vunpack.c.l.b16 %v43
  %v588 = vunpack.c.h.b16 %v43
  %v589 = vunpack.c.l.b16 %v44
  %v590 = vunpack.c.h.b16 %v44
  %v591 = vunpack.c.l.b16 %v45
  %v592 = vunpack.c.h.b16 %v45
  %v593 = vunpack.c.l.b16 %v46
  %v594 = vunpack.c.h.b16 %v46
  %v595 = vunpack.c.l.b16 %v47
  %v596 = vunpack.c.h.b16 %v47
  %v597 = vunpack.c.l.b16 %v48
  %v598 = vunpack.c.h.b16 %v48
  %v599 = vunpack.c.l.b16 %v49
  %v600 = vunpack.c.h.b16 %v49
  %v601 = vunpack.c.l.b16 %v50
  %v602 = vunpack.c.h.b16 %v50
  %v603 = vunpack.c.l.b16 %v51
  %v604 = vunpack.c.h.b16 %v51
  %v605 = vunpack.c.l.b16 %v52
  %v606 = vunpack.c.h.b16 %v52
  %v607 = vunpack.c.l.b16 %v53
  %v608 = vunpack.c.h.b16 %v53
  %v609 = vunpack.c.l.b16 %v54
  %v610 = vunpack.c.h.b16 %v54
  %v611 = vunpack.c.l.b16 %v55
  %v612 = vunpack.c.h.b16 %v55
  %v613 = vunpack.c.l.b16 %v56
  %v614 = vunpack.c.h.b16 %v56
  %v615 = vunpack.c.l.b16 %v57
  %v616 = vunpack.c.h.b16 %v57
  %v617 = vunpack.c.l.b16 %v58
  %v618 = vunpack.c.h.b16 %v58
  %v619 = vunpack.c.l.b16 %v59
  %v620 = vunpack.c.h.b16 %v59
  %v621 = vunpack.c.l.b16 %v60
  %v622 = vunpack.c.h.b16 %v60
  %v623 = vunpack.c.l.b16 %v61
  %v624 = vunpack.c.h.b16 %v61
  %v625 = vunpack.c.l.b16 %v62
  %v626 = vunpack.c.h.b16 %v62
  %v627 = vunpack.c.l.b16 %v63
  %v628 = vunpack.c.h.b16 %v63
  %v629 = vunpack.c.l.b16 %v64
  %v630 = vunpack.c.h.b16 %v64
  %v631 = vunpack.c.l.b16 %v65
  %v632 = vunpack.c.h.b16 %v65
  %v633 = vunpack.c.l.b16 %v66
  %v634 = vunpack.c.h.b16 %v66
  %v635 = vunpack.c.l.b16 %v67
  %v636 = vunpack.c.h.b16 %v67
  %v637 = vunpack.c.l.b16 %v68
  %v638 = vunpack.c.h.b16 %v68
  %v639 = vunpack.c.l.b16 %v69
  %v640 = vunpack.c.h.b16 %v69
  %v641 = vunpack.c.l.b16 %v70
  %v642 = vunpack.c.h.b16 %v70
  %v643 = vunpack.c.l.b16 %v71
  %v644 = vunpack.c.h.b16 %v71
  %v645 = vunpack.c.l.b16 %v72
  %v646 = vunpack.c.h.b16 %v72
  %v647 = vunpack.c.l.b16 %v73
  %v648 = vunpack.c.h.b16 %v73
  %v649 = vunpack.c.l.b16 %v74
  %v650 = vunpack.c.h.b16 %v74
  %v651 = vunpack.c.l.b16 %v75
  %v652 = vunpack.c.h.b16 %v75
  %v653 = vunpack.c.l.b16 %v76
  %v654 = vunpack.c.h.b16 %v76
  %v655 = vunpack.c.l.b16 %v77
  %v656 = vunpack.c.h.b16 %v77
  %v657 = vunpack.c.l.b16 %v78
  %v658 = vunpack.c.h.b16 %v78
  %v659 = vunpack.c.l.b16 %v79
  %v660 = vunpack.c.h.b16 %v79
  %v661 = vunpack.c.l.b16 %v80
  %v662 = vunpack.c.h.b16 %v80
  %v663 = vunpack.c.l.b16 %v81
  %v664 = vunpack.c.h.b16 %v81
  %v665 = vunpack.c.l.b16 %v82
  %v666 = vunpack.c.h.b16 %v82
  %v667 = vunpack.c.l.b16 %v83
  %v668 = vunpack.c.h.b16 %v83
  %v669 = vunpack.c.l.b16 %v84
  %v670 = vunpack.c.h.b16 %v84
  %v671 = vunpack.c.l.b16 %v85
  %v672 = vunpack.c.h.b16 %v85
  %v673 = vunpack.c.l.b16 %v86
  %v674 = vunpack.c.h.b16 %v86
  %v675 = vunpack.c.l.b16 %v87
  %v676 = vunpack.c.h.b16 %v87
  %v677 = vunpack.c.l.b16 %v88
  %v678 = vunpack.c.h.b16 %v88
  %v679 = vunpack.c.l.b16 %v89
  %v680 = vunpack.c.h.b16 %v89
  %v681 = vunpack.c.l.b16 %v90
  %v682 = vunpack.c.h.b16 %v90
  %v683 = vunpack.c.l.b16 %v91
  %v684 = vunpack.c.h.b16 %v91
  %v685 = vunpack.c.l.b16 %v92
  %v686 = vunpack.c.h.b16 %v92
  %v687 = vunpack.c.l.b16 %v93
  %v688 = vunpack.c.h.b16 %v93
  %v689 = vunpack.c.l.b16 %v94
  %v690 = vunpack.c.h.b16 %v94
  %v691 = vunpack.c.l.b16 %v95
  %v692 = vunpack.c.h.b16 %v95
  %v693 = vunpack.c.l.b16 %v96
  %v694 = vunpack.c.h.b16 %v96
  %v695 = vunpack.c.l.b16 %v97
  %v696 = vunpack.c.h.b16 %v97
  %v697 = vunpack.c.l.b16 %v98
  %v698 = vunpack.c.h.b16 %v98
  %v699 = vunpack.c.l.b16 %v99
  %v700 = vunpack.c.h.b16 %v99
  %v701 = vunpack.c.l.b16 %v100
  %v702 = vunpack.c.h.b16 %v100
  %v703 = vunpack.c.l.b16 %v101
  %v704 = vunpack.c.h.b16 %v101
  %v705 = vunpack.c.l.b16 %v102
  %v706 = vunpack.c.h.b16 %v102
  %v707 = vunpack.c.l.b16 %v103
  %v708 = vunpack.c.h.b16 %v103
  %v709 = vunpack.c.l.b16 %v104
  %v710 = vunpack.c.h.b16 %v104
  %v711 = vunpack.c.l.b16 %v105
  %v712 = vunpack.c.h.b16 %v105
  %v713 = vunpack.c.l.b16 %v106
  %v714 = vunpack.c.h.b16 %v106
  %v715 = vunpack.c.l.b16 %v107
  %v716 = vunpack.c.h.b16 %v107
  %v717 = vunpack.c.l.b16 %v108
  %v718 = vunpack.c.h.b16 %v108
  %v719 = vunpack.c.l.b16 %v109
  %v720 = vunpack.c.h.b16 %v109
  %v721 = vunpack.c.l.b16 %v110
  %v722 = vunpack.c.h.b16 %v110
  %v723 = vunpack.c.l.b16 %v111
  %v724 = vunpack.c.h.b16 %v111
  %v725 = vunpack.c.l.b16 %v112
  %v726 = vunpack.c.h.b16 %v112
  %v727 = vunpack.c.l.b16 %v113
  %v728 = vunpack.c.h.b16 %v113
  %v729 = vunpack.c.l.b16 %v114
  %v730 = vunpack.c.h.b16 %v114
  %v731 = vunpack.c.l.b16 %v115
  %v732 = vunpack.c.h.b16 %v115
  %v733 = vunpack.c.l.b16 %v116
  %v734 = vunpack.c.h.b16 %v116
  %v735 = vunpack.c.l.b16 %v117
  %v736 = vunpack.c.h.b16 %v117
  %v737 = vunpack.c.l.b16 %v118
  %v738 = vunpack.c.h.b16 %v118
  %v739 = vunpack.c.l.b16 %v119
  %v740 = vunpack.c.h.b16 %v119
  %v741 = vunpack.c.l.b16 %v120
  %v742 = vunpack.c.h.b16 %v120
  %v743 = vunpack.c.l.b16 %v121
  %v744 = vunpack.c.h.b16 %v121
  %v745 = vunpack.c.l.b16 %v122
  %v746 = vunpack.c.h.b16 %v122
  %v747 = vunpack.c.l.b16 %v123
  %v748 = vunpack.c.h.b16 %v123
  %v749 = vunpack.c.l.b16 %v124
  %v750 = vunpack.c.h.b16 %v124
  %v751 = vunpack.c.l.b16 %v125
  %v752 = vunpack.c.h.b16 %v125
  %v753 = vunpack.c.l.b16 %v126
  %v754 = vunpack.c.h.b16 %v126
  %v755 = vunpack.c.l.b16 %v127
  %v756 = vunpack.c.h.b16 %v127
  %v757 = vunpack.c.l.b16 %v128
  %v758 = vunpack.c.h.b16 %v128
  %v759 = vunpack.c.l.b16 %v129
  %v760 = vunpack.c.h.b16 %v129
  %v761 = vunpack.c.l.b16 %v130
  %v762 = vunpack.c.h.b16 %v130
  %v763 = vunpack.c.l.b16 %v131
  %v764 = vunpack.c.h.b16 %v131
  %v765 = vunpack.c.l.b16 %v132
  %v766 = vunpack.c.h.b16 %v132
  %v767 = vunpack.c.l.b16 %v133
  %v768 = vunpack.c.h.b16 %v133
  %v769 = vunpack.c.l.b16 %v134
  %v770 = vunpack.c.h.b16 %v134
  %v771 = vunpack.c.l.b16 %v135
  %v772 = vunpack.c.h.b16 %v135
  %v773 = vunpack.c.l.b16 %v136
  %v774 = vunpack.c.h.b16 %v136
  %v775 = vunpack.c.l.b16 %v137
  %v776 = vunpack.c.h.b16 %v137
  %v777 = vunpack.c.l.b16 %v138
  %v778 = vunpack.c.h.b16 %v138
  %v779 = vunpack.c.l.b16 %v139
  %v780 = vunpack.c.h.b16 %v139
  %v781 = vunpack.c.l.b16 %v140
  %v782 = vunpack.c.h.b16 %v140
  %v783 = vunpack.c.l.b16 %v141
  %v784 = vunpack.c.h.b16 %v141
  %v785 = vunpack.c.l.b16 %v142
  %v786 = vunpack.c.h.b16 %v142
  %v787 = vunpack.c.l.b16 %v143
  %v788 = vunpack.c.h.b16 %v143
  %v789 = vunpack.c.l.b16 %v144
  %v790 = vunpack.c.h.b16 %v144
  %v791 = vunpack.c.l.b16 %v145
  %v792 = vunpack.c.h.b16 %v145
  %v793 = vunpack.c.l.b16 %v146
  %v794 = vunpack.c.h.b16 %v146
  %v795 = vunpack.c.l.b16 %v147
  %v796 = vunpack.c.h.b16 %v147
  %v797 = vunpack.c.l.b16 %v148
  %v798 = vunpack.c.h.b16 %v148
  %v799 = vunpack.c.l.b16 %v149
  %v800 = vunpack.c.h.b16 %v149
  %v801 = vunpack.c.l.b16 %v150
  %v802 = vunpack.c.h.b16 %v150
  %v803 = vunpack.c.l.b16 %v151
  %v804 = vunpack.c.h.b16 %v151
  %v805 = vunpack.c.l.b16 %v152
  %v806 = vunpack.c.h.b16 %v152
  %v807 = vunpack.c.l.b16 %v153
  %v808 = vunpack.c.h.b16 %v153
  %v809 = vunpack.c.l.b16 %v154
  %v810 = vunpack.c.h.b16 %v154
  %v811 = vunpack.c.l.b16 %v155
  %v812 = vunpack.c.h.b16 %v155
  %v813 = vunpack.c.l.b16 %v156
  %v814 = vunpack.c.h.b16 %v156
  %v815 = vunpack.c.l.b16 %v157
  %v816 = vunpack.c.h.b16 %v157
  %v817 = vunpack.c.l.b16 %v158
  %v818 = vunpack.c.h.b16 %v158
  %v819 = vunpack.c.l.b16 %v159
  %v820 = vunpack.c.h.b16 %v159
  %v821 = vunpack.c.l.b16 %v160
  %v822 = vunpack.c.h.b16 %v160
  %v823 = vunpack.c.l.b16 %v161
  %v824 = vunpack.c.h.b16 %v161
  %v825 = vunpack.c.l.b16 %v162
  %v826 = vunpack.c.h.b16 %v162
  %v827 = vunpack.c.l.b16 %v163
  %v828 = vunpack.c.h.b16 %v163
  %v829 = vunpack.c.l.b16 %v164
  %v830 = vunpack.c.h.b16 %v164
  %v831 = vunpack.c.l.b16 %v165
  %v832 = vunpack.c.h.b16 %v165
  %v833 = vunpack.c.l.b16 %v166
  %v834 = vunpack.c.h.b16 %v166
  %v835 = vunpack.c.l.b16 %v167
  %v836 = vunpack.c.h.b16 %v167
  %v837 = vunpack.c.l.b16 %v168
  %v838 = vunpack.c.h.b16 %v168
  %v839 = vunpack.c.l.b16 %v169
  %v840 = vunpack.c.h.b16 %v169
  %v841 = vunpack.c.l.b16 %v170
  %v842 = vunpack.c.h.b16 %v170
  %v843 = vunpack.c.l.b16 %v171
  %v844 = vunpack.c.h.b16 %v171
  %v845 = vunpack.c.l.b16 %v172
  %v846 = vunpack.c.h.b16 %v172
  %v847 = vunpack.c.l.b16 %v173
  %v848 = vunpack.c.h.b16 %v173
  %v849 = vunpack.c.l.b16 %v174
  %v850 = vunpack.c.h.b16 %v174
  %v851 = vunpack.c.l.b16 %v175
  %v852 = vunpack.c.h.b16 %v175
  %v853 = vunpack.c.l.b16 %v176
  %v854 = vunpack.c.h.b16 %v176
  %v855 = vunpack.c.l.b16 %v177
  %v856 = vunpack.c.h.b16 %v177
  %v857 = vunpack.c.l.b16 %v178
  %v858 = vunpack.c.h.b16 %v178
  %v859 = vunpack.c.l.b16 %v179
  %v860 = vunpack.c.h.b16 %v179
  %v861 = vunpack.c.l.b16 %v180
  %v862 = vunpack.c.h.b16 %v180
  %v863 = vunpack.c.l.b16 %v181
  %v864 = vunpack.c.h.b16 %v181
  %v865 = vunpack.c.l.b16 %v182
  %v866 = vunpack.c.h.b16 %v182
  %v867 = vunpack.c.l.b16 %v183
  %v868 = vunpack.c.h.b16 %v183
  %v869 = vunpack.c.l.b16 %v184
  %v870 = vunpack.c.h.b16 %v184
  %v871 = vunpack.c.l.b16 %v185
  %v872 = vunpack.c.h.b16 %v185
  %v873 = vunpack.c.l.b16 %v186
  %v874 = vunpack.c.h.b16 %v186
  %v875 = vunpack.c.l.b16 %v187
  %v876 = vunpack.c.h.b16 %v187
  %v877 = vunpack.c.l.b16 %v188
  %v878 = vunpack.c.h.b16 %v188
  %v879 = vunpack.c.l.b16 %v189
  %v880 = vunpack.c.h.b16 %v189
  %v881 = vunpack.c.l.b16 %v190
  %v882 = vunpack.c.h.b16 %v190
  %v883 = vunpack.c.l.b16 %v191
  %v884 = vunpack.c.h.b16 %v191
  %v885 = vunpack.c.l.b16 %v192
  %v886 = vunpack.c.h.b16 %v192
  %v887 = vunpack.c.l.b16 %v193
  %v888 = vunpack.c.h.b16 %v193
  %v889 = vunpack.c.l.b16 %v194
  %v890 = vunpack.c.h.b16 %v194
  %v891 = vunpack.c.l.b16 %v195
  %v892 = vunpack.c.h.b16 %v195
  %v893 = vunpack.c.l.b16 %v196
  %v894 = vunpack.c.h.b16 %v196
  %v895 = vunpack.c.l.b16 %v197
  %v896 = vunpack.c.h.b16 %v197
  %v897 = vunpack.c.l.b16 %v198
  %v898 = vunpack.c.h.b16 %v198
  %v899 = vunpack.c.l.b16 %v199
  %v900 = vunpack.c.h.b16 %v199
  %v901 = vunpack.c.l.b16 %v200
  %v902 = vunpack.c.h.b16 %v200
  %v903 = vunpack.c.l.b16 %v201
  %v904 = vunpack.c.h.b16 %v201
  %v905 = vunpack.c.l.b16 %v202
  %v906 = vunpack.c.h.b16 %v202
  %v907 = vunpack.c.l.b16 %v203
  %v908 = vunpack.c.h.b16 %v203
  %v909 = vunpack.c.l.b16 %v204
  %v910 = vunpack.c.h.b16 %v204
  %v911 = vunpack.c.l.b16 %v205
  %v912 = vunpack.c.h.b16 %v205
  %v913 = vunpack.c.l.b16 %v206
  %v914 = vunpack.c.h.b16 %v206
  %v915 = vunpack.c.l.b16 %v207
  %v916 = vunpack.c.h.b16 %v207
  %v917 = vunpack.c.l.b16 %v208
  %v918 = vunpack.c.h.b16 %v208
  %v919 = vunpack.c.l.b16 %v209
  %v920 = vunpack.c.h.b16 %v209
  %v921 = vunpack.c.l.b16 %v210
  %v922 = vunpack.c.h.b16 %v210
  %v923 = vunpack.c.l.b16 %v211
  %v924 = vunpack.c.h.b16 %v211
  %v925 = vunpack.c.l.b16 %v212
  %v926 = vunpack.c.h.b16 %v212
  %v927 = vunpack.c.l.b16 %v213
  %v928 = vunpack.c.h.b16 %v213
  %v929 = vunpack.c.l.b16 %v214
  %v930 = vunpack.c.h.b16 %v214
  %v931 = vunpack.c.l.b16 %v215
  %v932 = vunpack.c.h.b16 %v215
  %v933 = vunpack.c.l.b16 %v216
  %v934 = vunpack.c.h.b16 %v216
  %v935 = vunpack.c.l.b16 %v217
  %v936 = vunpack.c.h.b16 %v217
  %v937 = vunpack.c.l.b16 %v218
  %v938 = vunpack.c.h.b16 %v218
  %v939 = vunpack.c.l.b16 %v219
  %v940 = vunpack.c.h.b16 %v219
  %v941 = vunpack.c.l.b16 %v220
  %v942 = vunpack.c.h.b16 %v220
  %v943 = vunpack.c.l.b16 %v221
  %v944 = vunpack.c.h.b16 %v221
  %v945 = vunpack.c.l.b16 %v222
  %v946 = vunpack.c.h.b16 %v222
  %v947 = vunpack.c.l.b16 %v223
  %v948 = vunpack.c.h.b16 %v223
  %v949 = vunpack.c.l.b16 %v224
  %v950 = vunpack.c.h.b16 %v224
  %v951 = vunpack.c.l.b16 %v225
  %v952 = vunpack.c.h.b16 %v225
  %v953 = vunpack.c.l.b16 %v226
  %v954 = vunpack.c.h.b16 %v226
  %v955 = vunpack.c.l.b16 %v227
  %v956 = vunpack.c.h.b16 %v227
  %v957 = vunpack.c.l.b16 %v228
  %v958 = vunpack.c.h.b16 %v228
  %v959 = vunpack.c.l.b16 %v229
  %v960 = vunpack.c.h.b16 %v229
  %v961 = vunpack.c.l.b16 %v230
  %v962 = vunpack.c.h.b16 %v230
  %v963 = vunpack.c.l.b16 %v231
  %v964 = vunpack.c.h.b16 %v231
  %v965 = vunpack.c.l.b16 %v232
  %v966 = vunpack.c.h.b16 %v232
  %v967 = vunpack.c.l.b16 %v233
  %v968 = vunpack.c.h.b16 %v233
  %v969 = vunpack.c.l.b16 %v234
  %v970 = vunpack.c.h.b16 %v234
  %v971 = vunpack.c.l.b16 %v235
  %v972 = vunpack.c.h.b16 %v235
  %v973 = vunpack.c.l.b16 %v236
  %v974 = vunpack.c.h.b16 %v236
  %v975 = vunpack.c.l.b16 %v237
  %v976 = vunpack.c.h.b16 %v237
  %v977 = vunpack.c.l.b16 %v238
  %v978 = vunpack.c.h.b16 %v238
  %v979 = vunpack.c.l.b16 %v239
  %v980 = vunpack.c.h.b16 %v239
  %v981 = vunpack.c.l.b16 %v240
  %v982 = vunpack.c.h.b16 %v240
  %v983 = vunpack.c.l.b16 %v241
  %v984 = vunpack.c.h.b16 %v241
  %v985 = vunpack.c.l.b16 %v242
  %v986 = vunpack.c.h.b16 %v242
  %v987 = vunpack.c.l.b16 %v243
  %v988 = vunpack.c.h.b16 %v243
  %v989 = vunpack.c.l.b16 %v244
  %v990 = vunpack.c.h.b16 %v244
  %v991 = vunpack.c.l.b16 %v245
  %v992 = vunpack.c.h.b16 %v245
  %v993 = vunpack.c.l.b16 %v246
  %v994 = vunpack.c.h.b16 %v246
  %v995 = vunpack.c.l.b16 %v247
  %v996 = vunpack.c.h.b16 %v247
  %v997 = vunpack.c.l.b16 %v248
  %v998 = vunpack.c.h.b16 %v248
  %v999 = vunpack.c.l.b16 %v249
  %v1000 = vunpack.c.h.b16 %v249
  %v1001 = vunpack.c.l.b16 %v250
  %v1002 = vunpack.c.h.b16 %v250
  %v1003 = vunpack.c.l.b16 %v251
  %v1004 = vunpack.c.h.b16 %v251
  %v1005 = vunpack.c.l.b16 %v252
  %v1006 = vunpack.c.h.b16 %v252
  %v1007 = vunpack.c.l.b16 %v253
  %v1008 = vunpack.c.h.b16 %v253
  %v1009 = vunpack.c.l.b16 %v254
  %v1010 = vunpack.c.h.b16 %v254
  %v1011 = vunpack.c.l.b16 %v255
  %v1012 = vunpack.c.h.b16 %v255
  %v1013 = vunpack.c.l.b16 %v256
  %v1014 = vunpack.c.h.b16 %v256
  %v1015 = vunpack.c.l.b16 %v257
  %v1016 = vunpack.c.h.b16 %v257
  %v1017 = vunpack.c.l.b16 %v258
  %v1018 = vunpack.c.h.b16 %v258
  %v1019 = vunpack.c.l.b16 %v259
  %v1020 = vunpack.c.h.b16 %v259
  %v1021 = vunpack.c.l.b16 %v260
  %v1022 = vunpack.c.h.b16 %v260
  %v1023 = vunpack.c.l.b16 %v261
  %v1024 = vunpack.c.h.b16 %v261
  %v1025 = vunpack.c.l.b16 %v262
  %v1026 = vunpack.c.h.b16 %v262
  %v1027 = vunpack.c.l.b16 %v263
  %v1028 = vunpack.c.h.b16 %v263
  %v1029 = vunpack.c.l.b16 %v264
  %v1030 = vunpack.c.h.b16 %v264
  %v1031 = vunpack.c.l.b16 %v265
  %v1032 = vunpack.c.h.b16 %v265
  %v1033 = vunpack.c.l.b16 %v266
  %v1034 = vunpack.c.h.b16 %v266
  %v1035 = vunpack.c.l.b16 %v267
  %v1036 = vunpack.c.h.b16 %v267
  %v1037 = vunpack.c.l.b16 %v268
  %v1038 = vunpack.c.h.b16 %v268
  %v1039 = vunpack.c.l.b16 %v269
  %v1040 = vunpack.c.h.b16 %v269
  %v1041 = vunpack.c.l.b16 %v270
  %v1042 = vunpack.c.h.b16 %v270
  %v1043 = vunpack.c.l.b16 %v271
  %v1044 = vunpack.c.h.b16 %v271
  %v1045 = vunpack.c.l.b16 %v272
  %v1046 = vunpack.c.h.b16 %v272
  %v1047 = vunpack.c.l.b16 %v273
  %v1048 = vunpack.c.h.b16 %v273
  %v1049 = vpack.c.b16 %v553, %v537
  %v1050 = vpack.c.b16 %v554, %v538
  %v1051 = vpack.c.b16 %v555, %v539
  %v1052 = vpack.c.b16 %v556, %v540
  %v1053 = vpack.c.b16 %v557, %v541
  %v1054 = vpack.c.b16 %v558, %v542
  %v1055 = vpack.c.b16 %v559, %v543
  %v1056 = vpack.c.b16 %v560, %v544
  %v1057 = vpack.c.b16 %v561, %v545
  %v1058 = vpack.c.b16 %v562, %v546
  %v1059 = vpack.c.b16 %v563, %v547
  %v1060 = vpack.c.b16 %v564, %v548
  %v1061 = vpack.c.b16 %v565, %v549
  %v1062 = vpack.c.b16 %v566, %v550
  %v1063 = vpack.c.b16 %v567, %v551
  %v1064 = vpack.c.b16 %v568, %v552
  %v1065 = vpack.c.b16 %v585, %v569
  %v1066 = vpack.c.b16 %v586, %v570
  %v1067 = vpack.c.b16 %v587, %v571
  %v1068 = vpack.c.b16 %v588, %v572
  %v1069 = vpack.c.b16 %v589, %v573
  %v1070 = vpack.c.b16 %v590, %v574
  %v1071 = vpack.c.b16 %v591, %v575
  %v1072 = vpack.c.b16 %v592, %v576
  %v1073 = vpack.c.b16 %v593, %v577
  %v1074 = vpack.c.b16 %v594, %v578
  %v1075 = vpack.c.b16 %v595, %v579
  %v1076 = vpack.c.b16 %v596, %v580
  %v1077 = vpack.c.b16 %v597, %v581
  %v1078 = vpack.c.b16 %v598, %v582
  %v1079 = vpack.c.b16 %v599, %v583
  %v1080 = vpack.c.b16 %v600, %v584
  %v1081 = vpack.c.b16 %v617, %v601
  %v1082 = vpack.c.b16 %v618, %v602
  %v1083 = vpack.c.b16 %v619, %v603
  %v1084 = vpack.c.b16 %v620, %v604
  %v1085 = vpack.c.b16 %v621, %v605
  %v1086 = vpack.c.b16 %v622, %v606
  %v1087 = vpack.c.b16 %v623, %v607
  %v1088 = vpack.c.b16 %v624, %v608
  %v1089 = vpack.c.b16 %v625, %v609
  %v1090 = vpack.c.b16 %v626, %v610
  %v1091 = vpack.c.b16 %v627, %v611
  %v1092 = vpack.c.b16 %v628, %v612
  %v1093 = vpack.c.b16 %v629, %v613
  %v1094 = vpack.c.b16 %v630, %v614
  %v1095 = vpack.c.b16 %v631, %v615
  %v1096 = vpack.c.b16 %v632, %v616
  %v1097 = vpack.c.b16 %v649, %v633
  %v1098 = vpack.c.b16 %v650, %v634
  %v1099 = vpack.c.b16 %v651, %v635
  %v1100 = vpack.c.b16 %v652, %v636
  %v1101 = vpack.c.b16 %v653, %v637
  %v1102 = vpack.c.b16 %v654, %v638
  %v1103 = vpack.c.b16 %v655, %v639
  %v1104 = vpack.c.b16 %v656, %v640
  %v1105 = vpack.c.b16 %v657, %v641
  %v1106 = vpack.c.b16 %v658, %v642
  %v1107 = vpack.c.b16 %v659, %v643
  %v1108 = vpack.c.b16 %v660, %v644
  %v1109 = vpack.c.b16 %v661, %v645
  %v1110 = vpack.c.b16 %v662, %v646
  %v1111 = vpack.c.b16 %v663, %v647
  %v1112 = vpack.c.b16 %v664, %v648
  %v1113 = vpack.c.b16 %v681, %v665
  %v1114 = vpack.c.b16 %v682, %v666
  %v1115 = vpack.c.b16 %v683, %v667
  %v1116 = vpack.c.b16 %v684, %v668
  %v1117 = vpack.c.b16 %v685, %v669
  %v1118 = vpack.c.b16 %v686, %v670
  %v1119 = vpack.c.b16 %v687, %v671
  %v1120 = vpack.c.b16 %v688, %v672
  %v1121 = vpack.c.b16 %v689, %v673
  %v1122 = vpack.c.b16 %v690, %v674
  %v1123 = vpack.c.b16 %v691, %v675
  %v1124 = vpack.c.b16 %v692, %v676
  %v1125 = vpack.c.b16 %v693, %v677
  %v1126 = vpack.c.b16 %v694, %v678
  %v1127 = vpack.c.b16 %v695, %v679
  %v1128 = vpack.c.b16 %v696, %v680
  %v1129 = vpack.c.b16 %v713, %v697
  %v1130 = vpack.c.b16 %v714, %v698
  %v1131 = vpack.c.b16 %v715, %v699
  %v1132 = vpack.c.b16 %v716, %v700
  %v1133 = vpack.c.b16 %v717, %v701
  %v1134 = vpack.c.b16 %v718, %v702
  %v1135 = vpack.c.b16 %v719, %v703
  %v1136 = vpack.c.b16 %v720, %v704
  %v1137 = vpack.c.b16 %v721, %v705
  %v1138 = vpack.c.b16 %v722, %v706
  %v1139 = vpack.c.b16 %v723, %v707
  %v1140 = vpack.c.b16 %v724, %v708
  %v1141 = vpack.c.b16 %v725, %v709
  %v1142 = vpack.c.b16 %v726, %v710
  %v1143 = vpack.c.b16 %v727, %v711
  %v1144 = vpack.c.b16 %v728, %v712
  %v1145 = vpack.c.b16 %v745, %v729
  %v1146 = vpack.c.b16 %v746, %v730
  %v1147 = vpack.c.b16 %v747, %v731
  %v1148 = vpack.c.b16 %v748, %v732
  %v1149 = vpack.c.b16 %v749, %v733
  %v1150 = vpack.c.b16 %v750, %v734
  %v1151 = vpack.c.b16 %v751, %v735
  %v1152 = vpack.c.b16 %v752, %v736
  %v1153 = vpack.c.b16 %v753, %v737
  %v1154 = vpack.c.b16 %v754, %v738
  %v1155 = vpack.c.b16 %v755, %v739
  %v1156 = vpack.c.b16 %v756, %v740
  %v1157 = vpack.c.b16 %v757, %v741
  %v1158 = vpack.c.b16 %v758, %v742
  %v1159 = vpack.c.b16 %v759, %v743
  %v1160 = vpack.c.b16 %v760, %v744
  %v1161 = vpack.c.b16 %v777, %v761
  %v1162 = vpack.c.b16 %v778, %v762
  %v1163 = vpack.c.b16 %v779, %v763
  %v1164 = vpack.c.b16 %v780, %v764
  %v1165 = vpack.c.b16 %v781, %v765
  %v1166 = vpack.c.b16 %v782, %v766
  %v1167 = vpack.c.b16 %v783, %v767
  %v1168 = vpack.c.b16 %v784, %v768
  %v1169 = vpack.c.b16 %v785, %v769
  %v1170 = vpack.c.b16 %v786, %v770
  %v1171 = vpack.c.b16 %v787, %v771
  %v1172 = vpack.c.b16 %v788, %v772
  %v1173 = vpack.c.b16 %v789, %v773
  %v1174 = vpack.c.b16 %v790, %v774
  %v1175 = vpack.c.b16 %v791, %v775
  %v1176 = vpack.c.b16 %v792, %v776
  %v1177 = vpack.c.b16 %v809, %v793
  %v1178 = vpack.c.b16 %v810, %v794
  %v1179 = vpack.c.b16 %v811, %v795
  %v1180 = vpack.c.b16 %v812, %v796
  %v1181 = vpack.c.b16 %v813, %v797
  %v1182 = vpack.c.b16 %v814, %v798
  %v1183 = vpack.c.b16 %v815, %v799
  %v1184 = vpack.c.b16 %v816, %v800
  %v1185 = vpack.c.b16 %v817, %v801
  %v1186 = vpack.c.b16 %v818, %v802
  %v1187 = vpack.c.b16 %v819, %v803
  %v1188 = vpack.c.b16 %v820, %v804
  %v1189 = vpack.c.b16 %v821, %v805
  %v1190 = vpack.c.b16 %v822, %v806
  %v1191 = vpack.c.b16 %v823, %v807
  %v1192 = vpack.c.b16 %v824, %v808
  %v1193 = vpack.c.b16 %v841, %v825
  %v1194 = vpack.c.b16 %v842, %v826
  %v1195 = vpack.c.b16 %v843, %v827
  %v1196 = vpack.c.b16 %v844, %v828
  %v1197 = vpack.c.b16 %v845, %v829
  %v1198 = vpack.c.b16 %v846, %v830
  %v1199 = vpack.c.b16 %v847, %v831
  %v1200 = vpack.c.b16 %v848, %v832
  %v1201 = vpack.c.b16 %v849, %v833
  %v1202 = vpack.c.b16 %v850, %v834
  %v1203 = vpack.c.b16 %v851, %v835
  %v1204 = vpack.c.b16 %v852, %v836
  %v1205 = vpack.c.b16 %v853, %v837
  %v1206 = vpack.c.b16 %v854, %v838
  %v1207 = vpack.c.b16 %v855, %v839
  %v1208 = vpack.c.b16 %v856, %v840
  %v1209 = vpack.c.b16 %v873, %v857
  %v1210 = vpack.c.b16 %v874, %v858
  %v1211 = vpack.c.b16 %v875, %v859
  %v1212 = vpack.c.b16 %v876, %v860
  %v1213 = vpack.c.b16 %v877, %v861
  %v1214 = vpack.c.b16 %v878, %v862
  %v1215 = vpack.c.b16 %v879, %v863
  %v1216 = vpack.c.b16 %v880, %v864
  %v1217 = vpack.c.b16 %v881, %v865
  %v1218 = vpack.c.b16 %v882, %v866
  %v1219 = vpack.c.b16 %v883, %v867
  %v1220 = vpack.c.b16 %v884, %v868
  %v1221 = vpack.c.b16 %v885, %v869
  %v1222 = vpack.c.b16 %v886, %v870
  %v1223 = vpack.c.b16 %v887, %v871
  %v1224 = vpack.c.b16 %v888, %v872
  %v1225 = vpack.c.b16 %v905, %v889
  %v1226 = vpack.c.b16 %v906, %v890
  %v1227 = vpack.c.b16 %v907, %v891
  %v1228 = vpack.c.b16 %v908, %v892
  %v1229 = vpack.c.b16 %v909, %v893
  %v1230 = vpack.c.b16 %v910, %v894
  %v1231 = vpack.c.b16 %v911, %v895
  %v1232 = vpack.c.b16 %v912, %v896
  %v1233 = vpack.c.b16 %v913, %v897
  %v1234 = vpack.c.b16 %v914, %v898
  %v1235 = vpack.c.b16 %v915, %v899
  %v1236 = vpack.c.b16 %v916, %v900
  %v1237 = vpack.c.b16 %v917, %v901
  %v1238 = vpack.c.b16 %v918, %v902
  %v1239 = vpack.c.b16 %v919, %v903
  %v1240 = vpack.c.b16 %v920, %v904
  %v1241 = vpack.c.b16 %v937, %v921
  %v1242 = vpack.c.b16 %v938, %v922
  %v1243 = vpack.c.b16 %v939, %v923
  %v1244 = vpack.c.b16 %v940, %v924
  %v1245 = vpack.c.b16 %v941, %v925
  %v1246 = vpack.c.b16 %v942, %v926
  %v1247 = vpack.c.b16 %v943, %v927
  %v1248 = vpack.c.b16 %v944, %v928
  %v1249 = vpack.c.b16 %v945, %v929
  %v1250 = vpack.c.b16 %v946, %v930
  %v1251 = vpack.c.b16 %v947, %v931
  %v1252 = vpack.c.b16 %v948, %v932
  %v1253 = vpack.c.b16 %v949, %v933
  %v1254 = vpack.c.b16 %v950, %v934
  %v1255 = vpack.c.b16 %v951, %v935
  %v1256 = vpack.c.b16 %v952, %v936
  %v1257 = vpack.c.b16 %v969, %v953
  %v1258 = vpack.c.b16 %v970, %v954
  %v1259 = vpack.c.b16 %v971, %v955
  %v1260 = vpack.c.b16 %v972, %v956
  %v1261 = vpack.c.b16 %v973, %v957
  %v1262 = vpack.c.b16 %v974, %v958
  %v1263 = vpack.c.b16 %v975, %v959
  %v1264 = vpack.c.b16 %v976, %v960
  %v1265 = vpack.c.b16 %v977, %v961
  %v1266 = vpack.c.b16 %v978, %v962
  %v1267 = vpack.c.b16 %v979, %v963
  %v1268 = vpack.c.b16 %v980, %v964
  %v1269 = vpack.c.b16 %v981, %v965
  %v1270 = vpack.c.b16 %v982, %v966
  %v1271 = vpack.c.b16 %v983, %v967
  %v1272 = vpack.c.b16 %v984, %v968
  %v1273 = vpack.c.b16 %v1001, %v985
  %v1274 = vpack.c.b16 %v1002, %v986
  %v1275 = vpack.c.b16 %v1003, %v987
  %v1276 = vpack.c.b16 %v1004, %v988
  %v1277 = vpack.c.b16 %v1005, %v989
  %v1278 = vpack.c.b16 %v1006, %v990
  %v1279 = vpack.c.b16 %v1007, %v991
  %v1280 = vpack.c.b16 %v1008, %v992
  %v1281 = vpack.c.b16 %v1009, %v993
  %v1282 = vpack.c.b16 %v1010, %v994
  %v1283 = vpack.c.b16 %v1011, %v995
  %v1284 = vpack.c.b16 %v1012, %v996
  %v1285 = vpack.c.b16 %v1013, %v997
  %v1286 = vpack.c.b16 %v1014, %v998
  %v1287 = vpack.c.b16 %v1015, %v999
  %v1288 = vpack.c.b16 %v1016, %v1000
  %v1289 = vpack.c.b16 %v1033, %v1017
  %v1290 = vpack.c.b16 %v1034, %v1018
  %v1291 = vpack.c.b16 %v1035, %v1019
  %v1292 = vpack.c.b16 %v1036, %v1020
  %v1293 = vpack.c.b16 %v1037, %v1021
  %v1294 = vpack.c.b16 %v1038, %v1022
  %v1295 = vpack.c.b16 %v1039, %v1023
  %v1296 = vpack.c.b16 %v1040, %v1024
  %v1297 = vpack.c.b16 %v1041, %v1025
  %v1298 = vpack.c.b16 %v1042, %v1026
  %v1299 = vpack.c.b16 %v1043, %v1027
  %v1300 = vpack.c.b16 %v1044, %v1028
  %v1301 = vpack.c.b16 %v1045, %v1029
  %v1302 = vpack.c.b16 %v1046, %v1030
  %v1303 = vpack.c.b16 %v1047, %v1031
  %v1304 = vpack.c.b16 %v1048, %v1032
  %1561 = vmatpush.bf16.msra.mxu0 %v1161
  %1562 = vmatpush.bf16.msra.mxu0 %v1145
  %1563 = vmatpush.bf16.msra.mxu0 %v1129
  %1564 = vmatpush.bf16.msra.mxu0 %v1113
  %1565 = vmatpush.bf16.msra.mxu0 %v1097
  %1566 = vmatpush.bf16.msra.mxu0 %v1081
  %1567 = vmatpush.bf16.msra.mxu0 %v1065
  %1568 = vmatpush.bf16.msra.mxu0 %v1049
  %1569 = vmatmul.bf16.gmra.mxu0 %v277
  %v1570 = vpop.f32.mrf.mxu0
  %v1571 = vadd.f32 0.0, %v1570
  %v1572 = vpop.f32.mrf.mxu0
  %1573 = vdwg.mxu0
  %1574 = vmatpush.bf16.msra.mxu0 %v1289
  %1575 = vmatpush.bf16.msra.mxu0 %v1273
  %1576 = vmatpush.bf16.msra.mxu0 %v1257
  %1577 = vmatpush.bf16.msra.mxu0 %v1241
  %1578 = vmatpush.bf16.msra.mxu0 %v1225
  %1579 = vmatpush.bf16.msra.mxu0 %v1209
  %1580 = vmatpush.bf16.msra.mxu0 %v1193
  %1581 = vmatpush.bf16.msra.mxu0 %v1177
  %1582 = vmatmul.bf16.gmra.mxu0 %v278
  %v1583 = vpop.f32.mrf.mxu0
  %v1584 = vadd.f32 %v1571, %v1583
  %v1585 = vpop.f32.mrf.mxu0
  %1586 = vdwg.mxu0
  %1587 = vmatpush.bf16.msra.mxu0 %v1162
  %1588 = vmatpush.bf16.msra.mxu0 %v1146
  %1589 = vmatpush.bf16.msra.mxu0 %v1130
  %1590 = vmatpush.bf16.msra.mxu0 %v1114
  %1591 = vmatpush.bf16.msra.mxu0 %v1098
  %1592 = vmatpush.bf16.msra.mxu0 %v1082
  %1593 = vmatpush.bf16.msra.mxu0 %v1066
  %1594 = vmatpush.bf16.msra.mxu0 %v1050
  %1595 = vmatmul.bf16.gmra.mxu0 %v277
  %v1596 = vpop.f32.mrf.mxu0
  %v1597 = vadd.f32 0.0, %v1596
  %v1598 = vpop.f32.mrf.mxu0
  %1599 = vdwg.mxu0
  %1600 = vmatpush.bf16.msra.mxu0 %v1290
  %1601 = vmatpush.bf16.msra.mxu0 %v1274
  %1602 = vmatpush.bf16.msra.mxu0 %v1258
  %1603 = vmatpush.bf16.msra.mxu0 %v1242
  %1604 = vmatpush.bf16.msra.mxu0 %v1226
  %1605 = vmatpush.bf16.msra.mxu0 %v1210
  %1606 = vmatpush.bf16.msra.mxu0 %v1194
  %1607 = vmatpush.bf16.msra.mxu0 %v1178
  %1608 = vmatmul.bf16.gmra.mxu0 %v278
  %v1609 = vpop.f32.mrf.mxu0
  %v1610 = vadd.f32 %v1597, %v1609
  %v1611 = vpop.f32.mrf.mxu0
  %1612 = vdwg.mxu0
  %1613 = vmatpush.bf16.msra.mxu0 %v1163
  %1614 = vmatpush.bf16.msra.mxu0 %v1147
  %1615 = vmatpush.bf16.msra.mxu0 %v1131
  %1616 = vmatpush.bf16.msra.mxu0 %v1115
  %1617 = vmatpush.bf16.msra.mxu0 %v1099
  %1618 = vmatpush.bf16.msra.mxu0 %v1083
  %1619 = vmatpush.bf16.msra.mxu0 %v1067
  %1620 = vmatpush.bf16.msra.mxu0 %v1051
  %1621 = vmatmul.bf16.gmra.mxu0 %v277
  %v1622 = vpop.f32.mrf.mxu0
  %v1623 = vadd.f32 0.0, %v1622
  %v1624 = vpop.f32.mrf.mxu0
  %1625 = vdwg.mxu0
  %1626 = vmatpush.bf16.msra.mxu0 %v1291
  %1627 = vmatpush.bf16.msra.mxu0 %v1275
  %1628 = vmatpush.bf16.msra.mxu0 %v1259
  %1629 = vmatpush.bf16.msra.mxu0 %v1243
  %1630 = vmatpush.bf16.msra.mxu0 %v1227
  %1631 = vmatpush.bf16.msra.mxu0 %v1211
  %1632 = vmatpush.bf16.msra.mxu0 %v1195
  %1633 = vmatpush.bf16.msra.mxu0 %v1179
  %1634 = vmatmul.bf16.gmra.mxu0 %v278
  %v1635 = vpop.f32.mrf.mxu0
  %v1636 = vadd.f32 %v1623, %v1635
  %v1637 = vpop.f32.mrf.mxu0
  %1638 = vdwg.mxu0
  %1639 = vmatpush.bf16.msra.mxu0 %v1164
  %1640 = vmatpush.bf16.msra.mxu0 %v1148
  %1641 = vmatpush.bf16.msra.mxu0 %v1132
  %1642 = vmatpush.bf16.msra.mxu0 %v1116
  %1643 = vmatpush.bf16.msra.mxu0 %v1100
  %1644 = vmatpush.bf16.msra.mxu0 %v1084
  %1645 = vmatpush.bf16.msra.mxu0 %v1068
  %1646 = vmatpush.bf16.msra.mxu0 %v1052
  %1647 = vmatmul.bf16.gmra.mxu0 %v277
  %v1648 = vpop.f32.mrf.mxu0
  %v1649 = vadd.f32 0.0, %v1648
  %v1650 = vpop.f32.mrf.mxu0
  %1651 = vdwg.mxu0
  %1652 = vmatpush.bf16.msra.mxu0 %v1292
  %1653 = vmatpush.bf16.msra.mxu0 %v1276
  %1654 = vmatpush.bf16.msra.mxu0 %v1260
  %1655 = vmatpush.bf16.msra.mxu0 %v1244
  %1656 = vmatpush.bf16.msra.mxu0 %v1228
  %1657 = vmatpush.bf16.msra.mxu0 %v1212
  %1658 = vmatpush.bf16.msra.mxu0 %v1196
  %1659 = vmatpush.bf16.msra.mxu0 %v1180
  %1660 = vmatmul.bf16.gmra.mxu0 %v278
  %v1661 = vpop.f32.mrf.mxu0
  %v1662 = vadd.f32 %v1649, %v1661
  %v1663 = vpop.f32.mrf.mxu0
  %1664 = vdwg.mxu0
  %1665 = vmatpush.bf16.msra.mxu0 %v1165
  %1666 = vmatpush.bf16.msra.mxu0 %v1149
  %1667 = vmatpush.bf16.msra.mxu0 %v1133
  %1668 = vmatpush.bf16.msra.mxu0 %v1117
  %1669 = vmatpush.bf16.msra.mxu0 %v1101
  %1670 = vmatpush.bf16.msra.mxu0 %v1085
  %1671 = vmatpush.bf16.msra.mxu0 %v1069
  %1672 = vmatpush.bf16.msra.mxu0 %v1053
  %1673 = vmatmul.bf16.gmra.mxu0 %v277
  %v1674 = vpop.f32.mrf.mxu0
  %v1675 = vadd.f32 0.0, %v1674
  %v1676 = vpop.f32.mrf.mxu0
  %1677 = vdwg.mxu0
  %1678 = vmatpush.bf16.msra.mxu0 %v1293
  %1679 = vmatpush.bf16.msra.mxu0 %v1277
  %1680 = vmatpush.bf16.msra.mxu0 %v1261
  %1681 = vmatpush.bf16.msra.mxu0 %v1245
  %1682 = vmatpush.bf16.msra.mxu0 %v1229
  %1683 = vmatpush.bf16.msra.mxu0 %v1213
  %1684 = vmatpush.bf16.msra.mxu0 %v1197
  %1685 = vmatpush.bf16.msra.mxu0 %v1181
  %1686 = vmatmul.bf16.gmra.mxu0 %v278
  %v1687 = vpop.f32.mrf.mxu0
  %v1688 = vadd.f32 %v1675, %v1687
  %v1689 = vpop.f32.mrf.mxu0
  %1690 = vdwg.mxu0
  %1691 = vmatpush.bf16.msra.mxu0 %v1166
  %1692 = vmatpush.bf16.msra.mxu0 %v1150
  %1693 = vmatpush.bf16.msra.mxu0 %v1134
  %1694 = vmatpush.bf16.msra.mxu0 %v1118
  %1695 = vmatpush.bf16.msra.mxu0 %v1102
  %1696 = vmatpush.bf16.msra.mxu0 %v1086
  %1697 = vmatpush.bf16.msra.mxu0 %v1070
  %1698 = vmatpush.bf16.msra.mxu0 %v1054
  %1699 = vmatmul.bf16.gmra.mxu0 %v277
  %v1700 = vpop.f32.mrf.mxu0
  %v1701 = vadd.f32 0.0, %v1700
  %v1702 = vpop.f32.mrf.mxu0
  %1703 = vdwg.mxu0
  %1704 = vmatpush.bf16.msra.mxu0 %v1294
  %1705 = vmatpush.bf16.msra.mxu0 %v1278
  %1706 = vmatpush.bf16.msra.mxu0 %v1262
  %1707 = vmatpush.bf16.msra.mxu0 %v1246
  %1708 = vmatpush.bf16.msra.mxu0 %v1230
  %1709 = vmatpush.bf16.msra.mxu0 %v1214
  %1710 = vmatpush.bf16.msra.mxu0 %v1198
  %1711 = vmatpush.bf16.msra.mxu0 %v1182
  %1712 = vmatmul.bf16.gmra.mxu0 %v278
  %v1713 = vpop.f32.mrf.mxu0
  %v1714 = vadd.f32 %v1701, %v1713
  %v1715 = vpop.f32.mrf.mxu0
  %1716 = vdwg.mxu0
  %1717 = vmatpush.bf16.msra.mxu0 %v1167
  %1718 = vmatpush.bf16.msra.mxu0 %v1151
  %1719 = vmatpush.bf16.msra.mxu0 %v1135
  %1720 = vmatpush.bf16.msra.mxu0 %v1119
  %1721 = vmatpush.bf16.msra.mxu0 %v1103
  %1722 = vmatpush.bf16.msra.mxu0 %v1087
  %1723 = vmatpush.bf16.msra.mxu0 %v1071
  %1724 = vmatpush.bf16.msra.mxu0 %v1055
  %1725 = vmatmul.bf16.gmra.mxu0 %v277
  %v1726 = vpop.f32.mrf.mxu0
  %v1727 = vadd.f32 0.0, %v1726
  %v1728 = vpop.f32.mrf.mxu0
  %1729 = vdwg.mxu0
  %1730 = vmatpush.bf16.msra.mxu0 %v1295
  %1731 = vmatpush.bf16.msra.mxu0 %v1279
  %1732 = vmatpush.bf16.msra.mxu0 %v1263
  %1733 = vmatpush.bf16.msra.mxu0 %v1247
  %1734 = vmatpush.bf16.msra.mxu0 %v1231
  %1735 = vmatpush.bf16.msra.mxu0 %v1215
  %1736 = vmatpush.bf16.msra.mxu0 %v1199
  %1737 = vmatpush.bf16.msra.mxu0 %v1183
  %1738 = vmatmul.bf16.gmra.mxu0 %v278
  %v1739 = vpop.f32.mrf.mxu0
  %v1740 = vadd.f32 %v1727, %v1739
  %v1741 = vpop.f32.mrf.mxu0
  %1742 = vdwg.mxu0
  %1743 = vmatpush.bf16.msra.mxu0 %v1168
  %1744 = vmatpush.bf16.msra.mxu0 %v1152
  %1745 = vmatpush.bf16.msra.mxu0 %v1136
  %1746 = vmatpush.bf16.msra.mxu0 %v1120
  %1747 = vmatpush.bf16.msra.mxu0 %v1104
  %1748 = vmatpush.bf16.msra.mxu0 %v1088
  %1749 = vmatpush.bf16.msra.mxu0 %v1072
  %1750 = vmatpush.bf16.msra.mxu0 %v1056
  %1751 = vmatmul.bf16.gmra.mxu0 %v277
  %v1752 = vpop.f32.mrf.mxu0
  %v1753 = vadd.f32 0.0, %v1752
  %v1754 = vpop.f32.mrf.mxu0
  %1755 = vdwg.mxu0
  %1756 = vmatpush.bf16.msra.mxu0 %v1296
  %1757 = vmatpush.bf16.msra.mxu0 %v1280
  %1758 = vmatpush.bf16.msra.mxu0 %v1264
  %1759 = vmatpush.bf16.msra.mxu0 %v1248
  %1760 = vmatpush.bf16.msra.mxu0 %v1232
  %1761 = vmatpush.bf16.msra.mxu0 %v1216
  %1762 = vmatpush.bf16.msra.mxu0 %v1200
  %1763 = vmatpush.bf16.msra.mxu0 %v1184
  %1764 = vmatmul.bf16.gmra.mxu0 %v278
  %v1765 = vpop.f32.mrf.mxu0
  %v1766 = vadd.f32 %v1753, %v1765
  %v1767 = vpop.f32.mrf.mxu0
  %1768 = vdwg.mxu0
  %1769 = vmatpush.bf16.msra.mxu0 %v1169
  %1770 = vmatpush.bf16.msra.mxu0 %v1153
  %1771 = vmatpush.bf16.msra.mxu0 %v1137
  %1772 = vmatpush.bf16.msra.mxu0 %v1121
  %1773 = vmatpush.bf16.msra.mxu0 %v1105
  %1774 = vmatpush.bf16.msra.mxu0 %v1089
  %1775 = vmatpush.bf16.msra.mxu0 %v1073
  %1776 = vmatpush.bf16.msra.mxu0 %v1057
  %1777 = vmatmul.bf16.gmra.mxu0 %v277
  %v1778 = vpop.f32.mrf.mxu0
  %v1779 = vadd.f32 0.0, %v1778
  %v1780 = vpop.f32.mrf.mxu0
  %1781 = vdwg.mxu0
  %1782 = vmatpush.bf16.msra.mxu0 %v1297
  %1783 = vmatpush.bf16.msra.mxu0 %v1281
  %1784 = vmatpush.bf16.msra.mxu0 %v1265
  %1785 = vmatpush.bf16.msra.mxu0 %v1249
  %1786 = vmatpush.bf16.msra.mxu0 %v1233
  %1787 = vmatpush.bf16.msra.mxu0 %v1217
  %1788 = vmatpush.bf16.msra.mxu0 %v1201
  %1789 = vmatpush.bf16.msra.mxu0 %v1185
  %1790 = vmatmul.bf16.gmra.mxu0 %v278
  %v1791 = vpop.f32.mrf.mxu0
  %v1792 = vadd.f32 %v1779, %v1791
  %v1793 = vpop.f32.mrf.mxu0
  %1794 = vdwg.mxu0
  %1795 = vmatpush.bf16.msra.mxu0 %v1170
  %1796 = vmatpush.bf16.msra.mxu0 %v1154
  %1797 = vmatpush.bf16.msra.mxu0 %v1138
  %1798 = vmatpush.bf16.msra.mxu0 %v1122
  %1799 = vmatpush.bf16.msra.mxu0 %v1106
  %1800 = vmatpush.bf16.msra.mxu0 %v1090
  %1801 = vmatpush.bf16.msra.mxu0 %v1074
  %1802 = vmatpush.bf16.msra.mxu0 %v1058
  %1803 = vmatmul.bf16.gmra.mxu0 %v277
  %v1804 = vpop.f32.mrf.mxu0
  %v1805 = vadd.f32 0.0, %v1804
  %v1806 = vpop.f32.mrf.mxu0
  %1807 = vdwg.mxu0
  %1808 = vmatpush.bf16.msra.mxu0 %v1298
  %1809 = vmatpush.bf16.msra.mxu0 %v1282
  %1810 = vmatpush.bf16.msra.mxu0 %v1266
  %1811 = vmatpush.bf16.msra.mxu0 %v1250
  %1812 = vmatpush.bf16.msra.mxu0 %v1234
  %1813 = vmatpush.bf16.msra.mxu0 %v1218
  %1814 = vmatpush.bf16.msra.mxu0 %v1202
  %1815 = vmatpush.bf16.msra.mxu0 %v1186
  %1816 = vmatmul.bf16.gmra.mxu0 %v278
  %v1817 = vpop.f32.mrf.mxu0
  %v1818 = vadd.f32 %v1805, %v1817
  %v1819 = vpop.f32.mrf.mxu0
  %1820 = vdwg.mxu0
  %1821 = vmatpush.bf16.msra.mxu0 %v1171
  %1822 = vmatpush.bf16.msra.mxu0 %v1155
  %1823 = vmatpush.bf16.msra.mxu0 %v1139
  %1824 = vmatpush.bf16.msra.mxu0 %v1123
  %1825 = vmatpush.bf16.msra.mxu0 %v1107
  %1826 = vmatpush.bf16.msra.mxu0 %v1091
  %1827 = vmatpush.bf16.msra.mxu0 %v1075
  %1828 = vmatpush.bf16.msra.mxu0 %v1059
  %1829 = vmatmul.bf16.gmra.mxu0 %v277
  %v1830 = vpop.f32.mrf.mxu0
  %v1831 = vadd.f32 0.0, %v1830
  %v1832 = vpop.f32.mrf.mxu0
  %1833 = vdwg.mxu0
  %1834 = vmatpush.bf16.msra.mxu0 %v1299
  %1835 = vmatpush.bf16.msra.mxu0 %v1283
  %1836 = vmatpush.bf16.msra.mxu0 %v1267
  %1837 = vmatpush.bf16.msra.mxu0 %v1251
  %1838 = vmatpush.bf16.msra.mxu0 %v1235
  %1839 = vmatpush.bf16.msra.mxu0 %v1219
  %1840 = vmatpush.bf16.msra.mxu0 %v1203
  %1841 = vmatpush.bf16.msra.mxu0 %v1187
  %1842 = vmatmul.bf16.gmra.mxu0 %v278
  %v1843 = vpop.f32.mrf.mxu0
  %v1844 = vadd.f32 %v1831, %v1843
  %v1845 = vpop.f32.mrf.mxu0
  %1846 = vdwg.mxu0
  %1847 = vmatpush.bf16.msra.mxu0 %v1172
  %1848 = vmatpush.bf16.msra.mxu0 %v1156
  %1849 = vmatpush.bf16.msra.mxu0 %v1140
  %1850 = vmatpush.bf16.msra.mxu0 %v1124
  %1851 = vmatpush.bf16.msra.mxu0 %v1108
  %1852 = vmatpush.bf16.msra.mxu0 %v1092
  %1853 = vmatpush.bf16.msra.mxu0 %v1076
  %1854 = vmatpush.bf16.msra.mxu0 %v1060
  %1855 = vmatmul.bf16.gmra.mxu0 %v277
  %v1856 = vpop.f32.mrf.mxu0
  %v1857 = vadd.f32 0.0, %v1856
  %v1858 = vpop.f32.mrf.mxu0
  %1859 = vdwg.mxu0
  %1860 = vmatpush.bf16.msra.mxu0 %v1300
  %1861 = vmatpush.bf16.msra.mxu0 %v1284
  %1862 = vmatpush.bf16.msra.mxu0 %v1268
  %1863 = vmatpush.bf16.msra.mxu0 %v1252
  %1864 = vmatpush.bf16.msra.mxu0 %v1236
  %1865 = vmatpush.bf16.msra.mxu0 %v1220
  %1866 = vmatpush.bf16.msra.mxu0 %v1204
  %1867 = vmatpush.bf16.msra.mxu0 %v1188
  %1868 = vmatmul.bf16.gmra.mxu0 %v278
  %v1869 = vpop.f32.mrf.mxu0
  %v1870 = vadd.f32 %v1857, %v1869
  %v1871 = vpop.f32.mrf.mxu0
  %1872 = vdwg.mxu0
  %1873 = vmatpush.bf16.msra.mxu0 %v1173
  %1874 = vmatpush.bf16.msra.mxu0 %v1157
  %1875 = vmatpush.bf16.msra.mxu0 %v1141
  %1876 = vmatpush.bf16.msra.mxu0 %v1125
  %1877 = vmatpush.bf16.msra.mxu0 %v1109
  %1878 = vmatpush.bf16.msra.mxu0 %v1093
  %1879 = vmatpush.bf16.msra.mxu0 %v1077
  %1880 = vmatpush.bf16.msra.mxu0 %v1061
  %1881 = vmatmul.bf16.gmra.mxu0 %v277
  %v1882 = vpop.f32.mrf.mxu0
  %v1883 = vadd.f32 0.0, %v1882
  %v1884 = vpop.f32.mrf.mxu0
  %1885 = vdwg.mxu0
  %1886 = vmatpush.bf16.msra.mxu0 %v1301
  %1887 = vmatpush.bf16.msra.mxu0 %v1285
  %1888 = vmatpush.bf16.msra.mxu0 %v1269
  %1889 = vmatpush.bf16.msra.mxu0 %v1253
  %1890 = vmatpush.bf16.msra.mxu0 %v1237
  %1891 = vmatpush.bf16.msra.mxu0 %v1221
  %1892 = vmatpush.bf16.msra.mxu0 %v1205
  %1893 = vmatpush.bf16.msra.mxu0 %v1189
  %1894 = vmatmul.bf16.gmra.mxu0 %v278
  %v1895 = vpop.f32.mrf.mxu0
  %v1896 = vadd.f32 %v1883, %v1895
  %v1897 = vpop.f32.mrf.mxu0
  %1898 = vdwg.mxu0
  %1899 = vmatpush.bf16.msra.mxu0 %v1174
  %1900 = vmatpush.bf16.msra.mxu0 %v1158
  %1901 = vmatpush.bf16.msra.mxu0 %v1142
  %1902 = vmatpush.bf16.msra.mxu0 %v1126
  %1903 = vmatpush.bf16.msra.mxu0 %v1110
  %1904 = vmatpush.bf16.msra.mxu0 %v1094
  %1905 = vmatpush.bf16.msra.mxu0 %v1078
  %1906 = vmatpush.bf16.msra.mxu0 %v1062
  %1907 = vmatmul.bf16.gmra.mxu0 %v277
  %v1908 = vpop.f32.mrf.mxu0
  %v1909 = vadd.f32 0.0, %v1908
  %v1910 = vpop.f32.mrf.mxu0
  %1911 = vdwg.mxu0
  %1912 = vmatpush.bf16.msra.mxu0 %v1302
  %1913 = vmatpush.bf16.msra.mxu0 %v1286
  %1914 = vmatpush.bf16.msra.mxu0 %v1270
  %1915 = vmatpush.bf16.msra.mxu0 %v1254
  %1916 = vmatpush.bf16.msra.mxu0 %v1238
  %1917 = vmatpush.bf16.msra.mxu0 %v1222
  %1918 = vmatpush.bf16.msra.mxu0 %v1206
  %1919 = vmatpush.bf16.msra.mxu0 %v1190
  %1920 = vmatmul.bf16.gmra.mxu0 %v278
  %v1921 = vpop.f32.mrf.mxu0
  %v1922 = vadd.f32 %v1909, %v1921
  %v1923 = vpop.f32.mrf.mxu0
  %1924 = vdwg.mxu0
  %1925 = vmatpush.bf16.msra.mxu0 %v1175
  %1926 = vmatpush.bf16.msra.mxu0 %v1159
  %1927 = vmatpush.bf16.msra.mxu0 %v1143
  %1928 = vmatpush.bf16.msra.mxu0 %v1127
  %1929 = vmatpush.bf16.msra.mxu0 %v1111
  %1930 = vmatpush.bf16.msra.mxu0 %v1095
  %1931 = vmatpush.bf16.msra.mxu0 %v1079
  %1932 = vmatpush.bf16.msra.mxu0 %v1063
  %1933 = vmatmul.bf16.gmra.mxu0 %v277
  %v1934 = vpop.f32.mrf.mxu0
  %v1935 = vadd.f32 0.0, %v1934
  %v1936 = vpop.f32.mrf.mxu0
  %1937 = vdwg.mxu0
  %1938 = vmatpush.bf16.msra.mxu0 %v1303
  %1939 = vmatpush.bf16.msra.mxu0 %v1287
  %1940 = vmatpush.bf16.msra.mxu0 %v1271
  %1941 = vmatpush.bf16.msra.mxu0 %v1255
  %1942 = vmatpush.bf16.msra.mxu0 %v1239
  %1943 = vmatpush.bf16.msra.mxu0 %v1223
  %1944 = vmatpush.bf16.msra.mxu0 %v1207
  %1945 = vmatpush.bf16.msra.mxu0 %v1191
  %1946 = vmatmul.bf16.gmra.mxu0 %v278
  %v1947 = vpop.f32.mrf.mxu0
  %v1948 = vadd.f32 %v1935, %v1947
  %v1949 = vpop.f32.mrf.mxu0
  %1950 = vdwg.mxu0
  %1951 = vmatpush.bf16.msra.mxu0 %v1176
  %1952 = vmatpush.bf16.msra.mxu0 %v1160
  %1953 = vmatpush.bf16.msra.mxu0 %v1144
  %1954 = vmatpush.bf16.msra.mxu0 %v1128
  %1955 = vmatpush.bf16.msra.mxu0 %v1112
  %1956 = vmatpush.bf16.msra.mxu0 %v1096
  %1957 = vmatpush.bf16.msra.mxu0 %v1080
  %1958 = vmatpush.bf16.msra.mxu0 %v1064
  %1959 = vmatmul.bf16.gmra.mxu0 %v277
  %v1960 = vpop.f32.mrf.mxu0
  %v1961 = vadd.f32 0.0, %v1960
  %v1962 = vpop.f32.mrf.mxu0
  %1963 = vdwg.mxu0
  %1964 = vmatpush.bf16.msra.mxu0 %v1304
  %1965 = vmatpush.bf16.msra.mxu0 %v1288
  %1966 = vmatpush.bf16.msra.mxu0 %v1272
  %1967 = vmatpush.bf16.msra.mxu0 %v1256
  %1968 = vmatpush.bf16.msra.mxu0 %v1240
  %1969 = vmatpush.bf16.msra.mxu0 %v1224
  %1970 = vmatpush.bf16.msra.mxu0 %v1208
  %1971 = vmatpush.bf16.msra.mxu0 %v1192
  %1972 = vmatmul.bf16.gmra.mxu0 %v278
  %v1973 = vpop.f32.mrf.mxu0
  %v1974 = vadd.f32 %v1961, %v1973
  %v1975 = vpop.f32.mrf.mxu0
  %1976 = vdwg.mxu0
  %v1977 = vadd.f32 %v1584, %v1610
  %v1978 = vadd.f32 %v1977, %v1636
  %v1979 = vadd.f32 %v1978, %v1662
  %v1980 = vadd.f32 %v1979, %v1688
  %v1981 = vadd.f32 %v1980, %v1714
  %v1982 = vadd.f32 %v1981, %v1740
  %v1983 = vadd.f32 %v1982, %v1766
  %v1984 = vadd.f32 %v1983, %v1792
  %v1985 = vadd.f32 %v1984, %v1818
  %v1986 = vadd.f32 %v1985, %v1844
  %v1987 = vadd.f32 %v1986, %v1870
  %v1988 = vadd.f32 %v1987, %v1896
  %v1989 = vadd.f32 %v1988, %v1922
  %v1990 = vadd.f32 %v1989, %v1948
  %v1991 = vadd.f32 %v1990, %v1974
  %1992 = vadd.xlane.f32.xlu0 %v1991
  %v1993 = vpop.xlane.xlu0 %1992
  %v1994 = vrcp.pop 2048.0
  %v1995 = vmul.f32 2048.0, %v1994
  %v1996 = vsub.f32 1.0, %v1995
  %v1997 = vmul.f32 %v1994, %v1996
  %v1998 = vadd.f32 %v1994, %v1997
  %vm1999 = vweird.f32 %v1994
  %v2000 = vsel %vm1999, %v1994, %v1998
  %v2001 = vmul.f32 %v1993, %v2000
  %v2002 = vsub.f32 %v1584, %v2001
  %v2003 = vsub.f32 %v1610, %v2001
  %v2004 = vsub.f32 %v1636, %v2001
  %v2005 = vsub.f32 %v1662, %v2001
  %v2006 = vsub.f32 %v1688, %v2001
  %v2007 = vsub.f32 %v1714, %v2001
  %v2008 = vsub.f32 %v1740, %v2001
  %v2009 = vsub.f32 %v1766, %v2001
  %v2010 = vsub.f32 %v1792, %v2001
  %v2011 = vsub.f32 %v1818, %v2001
  %v2012 = vsub.f32 %v1844, %v2001
  %v2013 = vsub.f32 %v1870, %v2001
  %v2014 = vsub.f32 %v1896, %v2001
  %v2015 = vsub.f32 %v1922, %v2001
  %v2016 = vsub.f32 %v1948, %v2001
  %v2017 = vsub.f32 %v1974, %v2001
  %v2018 = vmul.f32 %v2002, %v2002
  %v2019 = vmul.f32 %v2003, %v2003
  %v2020 = vmul.f32 %v2004, %v2004
  %v2021 = vmul.f32 %v2005, %v2005
  %v2022 = vmul.f32 %v2006, %v2006
  %v2023 = vmul.f32 %v2007, %v2007
  %v2024 = vmul.f32 %v2008, %v2008
  %v2025 = vmul.f32 %v2009, %v2009
  %v2026 = vmul.f32 %v2010, %v2010
  %v2027 = vmul.f32 %v2011, %v2011
  %v2028 = vmul.f32 %v2012, %v2012
  %v2029 = vmul.f32 %v2013, %v2013
  %v2030 = vmul.f32 %v2014, %v2014
  %v2031 = vmul.f32 %v2015, %v2015
  %v2032 = vmul.f32 %v2016, %v2016
  %v2033 = vmul.f32 %v2017, %v2017
  %v2034 = vadd.f32 %v2018, %v2019
  %v2035 = vadd.f32 %v2034, %v2020
  %v2036 = vadd.f32 %v2035, %v2021
  %v2037 = vadd.f32 %v2036, %v2022
  %v2038 = vadd.f32 %v2037, %v2023
  %v2039 = vadd.f32 %v2038, %v2024
  %v2040 = vadd.f32 %v2039, %v2025
  %v2041 = vadd.f32 %v2040, %v2026
  %v2042 = vadd.f32 %v2041, %v2027
  %v2043 = vadd.f32 %v2042, %v2028
  %v2044 = vadd.f32 %v2043, %v2029
  %v2045 = vadd.f32 %v2044, %v2030
  %v2046 = vadd.f32 %v2045, %v2031
  %v2047 = vadd.f32 %v2046, %v2032
  %v2048 = vadd.f32 %v2047, %v2033
  %2049 = vadd.xlane.f32.xlu0 %v2048
  %v2050 = vpop.xlane.xlu0 %2049
  %v2051 = vmul.f32 %v2050, %v2000
  %v2052 = vadd.f32 %v2051, 1e-05
  %v2053 = vrsqrt.pop %v2052
  %v2054 = vmul.f32 %v2053, %v2052
  %v2055 = vmul.f32 %v2054, %v2053
  %v2056 = vmul.f32 0.5, %v2055
  %v2057 = vsub.f32 1.5, %v2056
  %v2058 = vmul.f32 %v2053, %v2057
  %vm2059 = vweird.f32 %v2052
  %vm2060 = vweird.f32 %v2053
  %vm2061 = vmor %vm2059, %vm2060
  %v2062 = vsel %vm2061, %v2053, %v2058
  %v2063 = vmul.f32 %v2002, %v2062
  %v2064 = vmul.f32 %v2003, %v2062
  %v2065 = vmul.f32 %v2004, %v2062
  %v2066 = vmul.f32 %v2005, %v2062
  %v2067 = vmul.f32 %v2006, %v2062
  %v2068 = vmul.f32 %v2007, %v2062
  %v2069 = vmul.f32 %v2008, %v2062
  %v2070 = vmul.f32 %v2009, %v2062
  %v2071 = vmul.f32 %v2010, %v2062
  %v2072 = vmul.f32 %v2011, %v2062
  %v2073 = vmul.f32 %v2012, %v2062
  %v2074 = vmul.f32 %v2013, %v2062
  %v2075 = vmul.f32 %v2014, %v2062
  %v2076 = vmul.f32 %v2015, %v2062
  %v2077 = vmul.f32 %v2016, %v2062
  %v2078 = vmul.f32 %v2017, %v2062
  %v2079 = vld [vmem:[%s2] sm:$0xff]
  %2081 = vset.pattern.permute.xlu0 0
  %2082 = vperm.xlu0 %2081, %v2079
  %v2083 = vpop.permute.xlu0 %2082
  %v2085 = vmul.f32 %v2063, %v2083
  %v2086 = vmul.f32 %v2064, %v2083
  %v2087 = vmul.f32 %v2065, %v2083
  %v2088 = vmul.f32 %v2066, %v2083
  %v2089 = vmul.f32 %v2067, %v2083
  %v2090 = vmul.f32 %v2068, %v2083
  %v2091 = vmul.f32 %v2069, %v2083
  %v2092 = vmul.f32 %v2070, %v2083
  %v2093 = vmul.f32 %v2071, %v2083
  %v2094 = vmul.f32 %v2072, %v2083
  %v2095 = vmul.f32 %v2073, %v2083
  %v2096 = vmul.f32 %v2074, %v2083
  %v2097 = vmul.f32 %v2075, %v2083
  %v2098 = vmul.f32 %v2076, %v2083
  %v2099 = vmul.f32 %v2077, %v2083
  %v2100 = vmul.f32 %v2078, %v2083
  %v2101 = vld [vmem:[%s3] sm:$0xff]
  %2103 = vset.pattern.permute.xlu0 0
  %2104 = vperm.xlu0 %2103, %v2101
  %v2105 = vpop.permute.xlu0 %2104
  %v2107 = vadd.f32 %v2085, %v2105
  %v2108 = vadd.f32 %v2086, %v2105
  %v2109 = vadd.f32 %v2087, %v2105
  %v2110 = vadd.f32 %v2088, %v2105
  %v2111 = vadd.f32 %v2089, %v2105
  %v2112 = vadd.f32 %v2090, %v2105
  %v2113 = vadd.f32 %v2091, %v2105
  %v2114 = vadd.f32 %v2092, %v2105
  %v2115 = vadd.f32 %v2093, %v2105
  %v2116 = vadd.f32 %v2094, %v2105
  %v2117 = vadd.f32 %v2095, %v2105
  %v2118 = vadd.f32 %v2096, %v2105
  %v2119 = vadd.f32 %v2097, %v2105
  %v2120 = vadd.f32 %v2098, %v2105
  %v2121 = vadd.f32 %v2099, %v2105
  %v2122 = vadd.f32 %v2100, %v2105
  %vm2123 = vcmp.gt.f32.partialorder %v2107, 0.0
  %vm2124 = vcmp.gt.f32.partialorder %v2108, 0.0
  %vm2125 = vcmp.gt.f32.partialorder %v2109, 0.0
  %vm2126 = vcmp.gt.f32.partialorder %v2110, 0.0
  %vm2127 = vcmp.gt.f32.partialorder %v2111, 0.0
  %vm2128 = vcmp.gt.f32.partialorder %v2112, 0.0
  %vm2129 = vcmp.gt.f32.partialorder %v2113, 0.0
  %vm2130 = vcmp.gt.f32.partialorder %v2114, 0.0
  %vm2131 = vcmp.gt.f32.partialorder %v2115, 0.0
  %vm2132 = vcmp.gt.f32.partialorder %v2116, 0.0
  %vm2133 = vcmp.gt.f32.partialorder %v2117, 0.0
  %vm2134 = vcmp.gt.f32.partialorder %v2118, 0.0
  %vm2135 = vcmp.gt.f32.partialorder %v2119, 0.0
  %vm2136 = vcmp.gt.f32.partialorder %v2120, 0.0
  %vm2137 = vcmp.gt.f32.partialorder %v2121, 0.0
  %vm2138 = vcmp.gt.f32.partialorder %v2122, 0.0
  %v2139 = vmul.f32 %v2107, 1.442695
  %v2140 = vpow.pop %v2139
  %v2141 = vmul.f32 %v2108, 1.442695
  %v2142 = vpow.pop %v2141
  %v2143 = vmul.f32 %v2109, 1.442695
  %v2144 = vpow.pop %v2143
  %v2145 = vmul.f32 %v2110, 1.442695
  %v2146 = vpow.pop %v2145
  %v2147 = vmul.f32 %v2111, 1.442695
  %v2148 = vpow.pop %v2147
  %v2149 = vmul.f32 %v2112, 1.442695
  %v2150 = vpow.pop %v2149
  %v2151 = vmul.f32 %v2113, 1.442695
  %v2152 = vpow.pop %v2151
  %v2153 = vmul.f32 %v2114, 1.442695
  %v2154 = vpow.pop %v2153
  %v2155 = vmul.f32 %v2115, 1.442695
  %v2156 = vpow.pop %v2155
  %v2157 = vmul.f32 %v2116, 1.442695
  %v2158 = vpow.pop %v2157
  %v2159 = vmul.f32 %v2117, 1.442695
  %v2160 = vpow.pop %v2159
  %v2161 = vmul.f32 %v2118, 1.442695
  %v2162 = vpow.pop %v2161
  %v2163 = vmul.f32 %v2119, 1.442695
  %v2164 = vpow.pop %v2163
  %v2165 = vmul.f32 %v2120, 1.442695
  %v2166 = vpow.pop %v2165
  %v2167 = vmul.f32 %v2121, 1.442695
  %v2168 = vpow.pop %v2167
  %v2169 = vmul.f32 %v2122, 1.442695
  %v2170 = vpow.pop %v2169
  %v2171 = vsub.f32 %v2140, 1.0
  %v2172 = vsub.f32 %v2142, 1.0
  %v2173 = vsub.f32 %v2144, 1.0
  %v2174 = vsub.f32 %v2146, 1.0
  %v2175 = vsub.f32 %v2148, 1.0
  %v2176 = vsub.f32 %v2150, 1.0
  %v2177 = vsub.f32 %v2152, 1.0
  %v2178 = vsub.f32 %v2154, 1.0
  %v2179 = vsub.f32 %v2156, 1.0
  %v2180 = vsub.f32 %v2158, 1.0
  %v2181 = vsub.f32 %v2160, 1.0
  %v2182 = vsub.f32 %v2162, 1.0
  %v2183 = vsub.f32 %v2164, 1.0
  %v2184 = vsub.f32 %v2166, 1.0
  %v2185 = vsub.f32 %v2168, 1.0
  %v2186 = vsub.f32 %v2170, 1.0
  %v2187 = vsel %vm2123, %v2107, %v2171
  %v2188 = vsel %vm2124, %v2108, %v2172
  %v2189 = vsel %vm2125, %v2109, %v2173
  %v2190 = vsel %vm2126, %v2110, %v2174
  %v2191 = vsel %vm2127, %v2111, %v2175
  %v2192 = vsel %vm2128, %v2112, %v2176
  %v2193 = vsel %vm2129, %v2113, %v2177
  %v2194 = vsel %vm2130, %v2114, %v2178
  %v2195 = vsel %vm2131, %v2115, %v2179
  %v2196 = vsel %vm2132, %v2116, %v2180
  %v2197 = vsel %vm2133, %v2117, %v2181
  %v2198 = vsel %vm2134, %v2118, %v2182
  %v2199 = vsel %vm2135, %v2119, %v2183
  %v2200 = vsel %vm2136, %v2120, %v2184
  %v2201 = vsel %vm2137, %v2121, %v2185
  %v2202 = vsel %vm2138, %v2122, %v2186
  %v2203 = vpack.c.bf16 %v2188, %v2187
  %v2204 = vpack.c.bf16 %v2190, %v2189
  %v2205 = vpack.c.bf16 %v2192, %v2191
  %v2206 = vpack.c.bf16 %v2194, %v2193
  %v2207 = vpack.c.bf16 %v2196, %v2195
  %v2208 = vpack.c.bf16 %v2198, %v2197
  %v2209 = vpack.c.bf16 %v2200, %v2199
  %v2210 = vpack.c.bf16 %v2202, %v2201
  %2211 = vst [vmem:[%s4] sm:$0xff] %v2203
  %2212 = vst [vmem:[%s4 + $0x8] sm:$0xff] %v2204
  %2213 = vst [vmem:[%s4 + $0x10] sm:$0xff] %v2205
  %2214 = vst [vmem:[%s4 + $0x18] sm:$0xff] %v2206
  %2215 = vst [vmem:[%s4 + $0x20] sm:$0xff] %v2207
  %2216 = vst [vmem:[%s4 + $0x28] sm:$0xff] %v2208
  %2217 = vst [vmem:[%s4 + $0x30] sm:$0xff] %v2209
  %2218 = vst [vmem:[%s4 + $0x38] sm:$0xff] %v2210
  // Predicated region
  $region18: #{generator_forward.8} parent=0 // pred_check
    _
  $region19: #{generator_forward.8} parent=0 // pred_check_branch
    %2220 = sbr.rel (0) target = $region21
  $region20: #{generator_forward.8} parent=0 // pred_region
    _
  $region21: #{generator_forward.8} parent=0 // pred_fallthru
    _
  // Predicated region
  $region22: #{generator_forward.8} parent=0 // pred_check
    _
  $region23: #{generator_forward.8} parent=0 // pred_check_branch
    %2222 = sbr.rel (0) target = $region25
  $region24: #{generator_forward.8} parent=0 // pred_region
    _
  $region25: #{generator_forward.8} parent=0 // pred_fallthru
    _

// kernel: generator_forward.9
$region0: #{generator_forward.9}
  #allocation0 [shape = 'u32[]', space=smem, size = 0x4, offset = 0x4, fixed_abs, tag = 'smem constant byte address 0x4 - core index']
  #allocation1 [shape = 'u32[72,128]{1,0:T(1,128)}', space=vmem, size = 0x9000, scoped, tag = 'internal scratch']
  %s0 = inlined_call_operand.vmem [shape: bf16[1,128], index: 0, kind: input, shape index: {}]
  %s1 = inlined_call_operand.vmem [shape: bf16[128,8192], index: 1, kind: input, shape index: {}]
  %s2 = inlined_call_operand.vmem [shape: f32[1,8192], index: 2, kind: output, shape index: {}]
  %s3 = sld [smem:[#allocation0]]
  $region64: #{generator_forward.9} parent=0
    _
  %s5 = ssub.s32 1, %s3
  %s6 = scalar_select 0, %s5, %s3
  $region1: #{generator_forward.9} parent=0
    #allocation2 [shape = 'u8[2097152]{0}', space=vmem, size = 0x200000, scoped, tag = 'input window, operand 1']
    loop: start=0, step=1, limit=4
    $region2: #{generator_forward.9} parent=1 // loop_pre_header
      _
    $region3: #{generator_forward.9} parent=1 // loop_header
      %s8 = sphi 0, %s12
      %p9 = scmp.ge.s32.totalorder %s8, 4
      %s16 = sphi 0, %s16
      %s18 = sphi 0, %s16
      %s19 = sphi 0, %s18
      %s33 = sphi 0, %s19
      %s39 = sphi 0, %s41
      %s42 = sphi 0, %s39
      %s43 = sphi 0, %s42
      %s59 = sphi 0, %s43
      %s65 = sphi 0, %s67
      %s68 = sphi 0, %s65
      %s69 = sphi 0, %s68
      %s85 = sphi 0, %s69
    $region4: #{generator_forward.9} parent=1 // loop_header_branch
      %11 = sbr.rel (%p9) target = $region8
    $region5: #{generator_forward.9} parent=1 // loop_body
      %s13 = ssub.s32 %s8, 1
      %s14 = ssub.s32 %s8, 2
      %s15 = sadd.s32 %s8, 1
      %s17 = sadd.s32 %s16, 1
      %p20 = scmp.eq.s32.totalorder %s8, 1
      %p21 = scmp.ne.s32.totalorder %s16, %s18
      %p22 = scmp.eq.s32.totalorder %s8, 0
      %p23 = por %p21, %p22
      %p24 = scmp.ne.s32.totalorder %s16, %s18
      %p25 = scmp.eq.s32.totalorder %s13, 1
      %p26 = por %p24, %p25
      %p27 = scmp.ne.s32.totalorder %s18, %s19
      %p28 = scmp.eq.s32.totalorder %s13, 0
      %p29 = por %p27, %p28
      %p30 = scmp.ne.s32.totalorder %s18, %s19
      %p31 = scmp.eq.s32.totalorder %s14, 1
      %p32 = por %p30, %p31
      %p34 = scmp.ne.s32.totalorder %s19, %s33
      %p35 = scmp.eq.s32.totalorder %s14, 0
      %p36 = por %p34, %p35
      %s37 = ssub.s32 %s8, %s15
      %p38 = scmp.eq.s32.totalorder %s37, 0
      %s40 = sadd.s32 %s39, 1
      %s41 = scalar_select %p38, %s39, %s40
      %p44 = pneg %p38
      %p45 = scmp.eq.s32.totalorder %s8, 1
      %p46 = por %p44, %p45
      %p47 = scmp.ne.s32.totalorder %s39, %s42
      %p48 = scmp.eq.s32.totalorder %s8, 0
      %p49 = por %p47, %p48
      %p50 = scmp.ne.s32.totalorder %s39, %s42
      %p51 = scmp.eq.s32.totalorder %s13, 1
      %p52 = por %p50, %p51
      %p53 = scmp.ne.s32.totalorder %s42, %s43
      %p54 = scmp.eq.s32.totalorder %s13, 0
      %p55 = por %p53, %p54
      %p56 = scmp.ne.s32.totalorder %s42, %s43
      %p57 = scmp.eq.s32.totalorder %s14, 1
      %p58 = por %p56, %p57
      %p60 = scmp.ne.s32.totalorder %s43, %s59
      %p61 = scmp.eq.s32.totalorder %s14, 0
      %p62 = por %p60, %p61
      %s63 = ssub.s32 %s8, %s15
      %p64 = scmp.eq.s32.totalorder %s63, 0
      %s66 = sadd.s32 %s65, 1
      %s67 = scalar_select %p64, %s65, %s66
      %p70 = pneg %p64
      %p71 = scmp.eq.s32.totalorder %s8, 1
      %p72 = por %p70, %p71
      %p73 = scmp.ne.s32.totalorder %s65, %s68
      %p74 = scmp.eq.s32.totalorder %s8, 0
      %p75 = por %p73, %p74
      %p76 = scmp.ne.s32.totalorder %s65, %s68
      %p77 = scmp.eq.s32.totalorder %s13, 1
      %p78 = por %p76, %p77
      %p79 = scmp.ne.s32.totalorder %s68, %s69
      %p80 = scmp.eq.s32.totalorder %s13, 0
      %p81 = por %p79, %p80
      %p82 = scmp.ne.s32.totalorder %s68, %s69
      %p83 = scmp.eq.s32.totalorder %s14, 1
      %p84 = por %p82, %p83
      %p86 = scmp.ne.s32.totalorder %s69, %s85
      %p87 = scmp.eq.s32.totalorder %s14, 0
      %p88 = por %p86, %p87
      %p89 = scmp.le.s32.totalorder 1, %s8
      %p90 = scmp.lt.s32.totalorder %s8, 3
      %p91 = pnand %p89, %p90
      %p92 = pneg %p91
      // Predicated region
      $region9: #{generator_forward.9} parent=5 // pred_check
        _
      $region10: #{generator_forward.9} parent=5 // pred_check_branch
        %94 = sbr.rel (%p91) target = $region12
      $region11: #{generator_forward.9} parent=5 // pred_region
        %s95 = ssub.s32 %s8, 1
        // Predicated region
        $region13: #{generator_forward.9} parent=11 // pred_check
          %p96 = pneg %p29
        $region14: #{generator_forward.9} parent=11 // pred_check_branch
          %98 = sbr.rel (%p96) target = $region16
        $region15: #{generator_forward.9} parent=11 // pred_region
          _
        $region16: #{generator_forward.9} parent=11 // pred_fallthru
          _
      $region12: #{generator_forward.9} parent=5 // pred_fallthru
        _
      %p99 = scmp.lt.s32.totalorder %s8, 2
      // Predicated region
      $region17: #{generator_forward.9} parent=5 // pred_check
        %p100 = pneg %p99
      $region18: #{generator_forward.9} parent=5 // pred_check_branch
        %102 = sbr.rel (%p100) target = $region20
      $region19: #{generator_forward.9} parent=5 // pred_region
        // Predicated region
        $region21: #{generator_forward.9} parent=19 // pred_check
          %p103 = pneg %p49
        $region22: #{generator_forward.9} parent=19 // pred_check_branch
          %105 = sbr.rel (%p103) target = $region24
        $region23: #{generator_forward.9} parent=19 // pred_region
          %s106 = sand.u32 %s39, 1
          %s107 = sand.u32 %s39, 1
          %s108 = smul.addr %s107, 2048
          %s109 = scalar_lea.vmem [#allocation2], %s108
          %s110 = smul.u32 32, %s8
          %s111 = smul.addr %s110, 4
          %s112 = scalar_lea.vmem %s1, %s111
          // Predicated region
          $region25: #{generator_forward.9} parent=23 // pred_check
            _
          $region26: #{generator_forward.9} parent=23 // pred_check_branch
            %114 = sbr.rel (0) target = $region28
          $region27: #{generator_forward.9} parent=23 // pred_region
            // Predicated region
            $region29: #{generator_forward.9} parent=27 // pred_check
              _
            $region30: #{generator_forward.9} parent=27 // pred_check_branch
              %116 = sbr.rel (0) target = $region32
            $region31: #{generator_forward.9} parent=27 // pred_region
              loop: start=0, step=1, limit=1
              $region33: #{generator_forward.9} parent=31 // loop_pre_header
                _
              $region34: #{generator_forward.9} parent=31 // loop_header
                %s118 = sphi 0, %s122
                %p119 = scmp.ge.s32.totalorder %s118, 1
                %s123 = sphi %s112, %s112
                %s124 = sphi %s109, %s109
              $region35: #{generator_forward.9} parent=31 // loop_header_branch
                %121 = sbr.rel (%p119) target = $region39
              $region36: #{generator_forward.9} parent=31 // loop_body
                %v125 = vld [vmem:[%s123] sm:$0xff]
                %126 = vst [vmem:[%s124] sm:$0xff] %v125
                %v127 = vld [vmem:[%s123 + $0x8] sm:$0xff]
                %128 = vst [vmem:[%s124 + $0x8] sm:$0xff] %v127
                %v129 = vld [vmem:[%s123 + $0x10] sm:$0xff]
                %130 = vst [vmem:[%s124 + $0x10] sm:$0xff] %v129
                %v131 = vld [vmem:[%s123 + $0x18] sm:$0xff]
                %132 = vst [vmem:[%s124 + $0x18] sm:$0xff] %v131
                %v133 = vld [vmem:[%s123 + $0x20] sm:$0xff]
                %134 = vst [vmem:[%s124 + $0x20] sm:$0xff] %v133
                %v135 = vld [vmem:[%s123 + $0x28] sm:$0xff]
                %136 = vst [vmem:[%s124 + $0x28] sm:$0xff] %v135
                %v137 = vld [vmem:[%s123 + $0x30] sm:$0xff]
                %138 = vst [vmem:[%s124 + $0x30] sm:$0xff] %v137
                %v139 = vld [vmem:[%s123 + $0x38] sm:$0xff]
                %140 = vst [vmem:[%s124 + $0x38] sm:$0xff] %v139
                %v141 = vld [vmem:[%s123 + $0x40] sm:$0xff]
                %142 = vst [vmem:[%s124 + $0x40] sm:$0xff] %v141
                %v143 = vld [vmem:[%s123 + $0x48] sm:$0xff]
                %144 = vst [vmem:[%s124 + $0x48] sm:$0xff] %v143
                %v145 = vld [vmem:[%s123 + $0x50] sm:$0xff]
                %146 = vst [vmem:[%s124 + $0x50] sm:$0xff] %v145
                %v147 = vld [vmem:[%s123 + $0x58] sm:$0xff]
                %148 = vst [vmem:[%s124 + $0x58] sm:$0xff] %v147
                %v149 = vld [vmem:[%s123 + $0x60] sm:$0xff]
                %150 = vst [vmem:[%s124 + $0x60] sm:$0xff] %v149
                %v151 = vld [vmem:[%s123 + $0x68] sm:$0xff]
                %152 = vst [vmem:[%s124 + $0x68] sm:$0xff] %v151
                %v153 = vld [vmem:[%s123 + $0x70] sm:$0xff]
                %154 = vst [vmem:[%s124 + $0x70] sm:$0xff] %v153
                %v155 = vld [vmem:[%s123 + $0x78] sm:$0xff]
                %156 = vst [vmem:[%s124 + $0x78] sm:$0xff] %v155
                %v157 = vld [vmem:[%s123 + $0x100] sm:$0xff]
                %158 = vst [vmem:[%s124 + $0x80] sm:$0xff] %v157
                %v159 = vld [vmem:[%s123 + $0x108] sm:$0xff]
                %160 = vst [vmem:[%s124 + $0x88] sm:$0xff] %v159
                %v161 = vld [vmem:[%s123 + $0x110] sm:$0xff]
                %162 = vst [vmem:[%s124 + $0x90] sm:$0xff] %v161
                %v163 = vld [vmem:[%s123 + $0x118] sm:$0xff]
                %164 = vst [vmem:[%s124 + $0x98] sm:$0xff] %v163
                %v165 = vld [vmem:[%s123 + $0x120] sm:$0xff]
                %166 = vst [vmem:[%s124 + $0xa0] sm:$0xff] %v165
                %v167 = vld [vmem:[%s123 + $0x128] sm:$0xff]
                %168 = vst [vmem:[%s124 + $0xa8] sm:$0xff] %v167
                %v169 = vld [vmem:[%s123 + $0x130] sm:$0xff]
                %170 = vst [vmem:[%s124 + $0xb0] sm:$0xff] %v169
                %v171 = vld [vmem:[%s123 + $0x138] sm:$0xff]
                %172 = vst [vmem:[%s124 + $0xb8] sm:$0xff] %v171
                %v173 = vld [vmem:[%s123 + $0x140] sm:$0xff]
                %174 = vst [vmem:[%s124 + $0xc0] sm:$0xff] %v173
                %v175 = vld [vmem:[%s123 + $0x148] sm:$0xff]
                %176 = vst [vmem:[%s124 + $0xc8] sm:$0xff] %v175
                %v177 = vld [vmem:[%s123 + $0x150] sm:$0xff]
                %178 = vst [vmem:[%s124 + $0xd0] sm:$0xff] %v177
                %v179 = vld [vmem:[%s123 + $0x158] sm:$0xff]
                %180 = vst [vmem:[%s124 + $0xd8] sm:$0xff] %v179
                %v181 = vld [vmem:[%s123 + $0x160] sm:$0xff]
                %182 = vst [vmem:[%s124 + $0xe0] sm:$0xff] %v181
                %v183 = vld [vmem:[%s123 + $0x168] sm:$0xff]
                %184 = vst [vmem:[%s124 + $0xe8] sm:$0xff] %v183
                %v185 = vld [vmem:[%s123 + $0x170] sm:$0xff]
                %186 = vst [vmem:[%s124 + $0xf0] sm:$0xff] %v185
                %v187 = vld [vmem:[%s123 + $0x178] sm:$0xff]
                %188 = vst [vmem:[%s124 + $0xf8] sm:$0xff] %v187
                %v189 = vld [vmem:[%s123 + $0x200] sm:$0xff]
                %190 = vst [vmem:[%s124 + $0x100] sm:$0xff] %v189
                %v191 = vld [vmem:[%s123 + $0x208] sm:$0xff]
                %192 = vst [vmem:[%s124 + $0x108] sm:$0xff] %v191
                %v193 = vld [vmem:[%s123 + $0x210] sm:$0xff]
                %194 = vst [vmem:[%s124 + $0x110] sm:$0xff] %v193
                %v195 = vld [vmem:[%s123 + $0x218] sm:$0xff]
                %196 = vst [vmem:[%s124 + $0x118] sm:$0xff] %v195
                %v197 = vld [vmem:[%s123 + $0x220] sm:$0xff]
                %198 = vst [vmem:[%s124 + $0x120] sm:$0xff] %v197
                %v199 = vld [vmem:[%s123 + $0x228] sm:$0xff]
                %200 = vst [vmem:[%s124 + $0x128] sm:$0xff] %v199
                %v201 = vld [vmem:[%s123 + $0x230] sm:$0xff]
                %202 = vst [vmem:[%s124 + $0x130] sm:$0xff] %v201
                %v203 = vld [vmem:[%s123 + $0x238] sm:$0xff]
                %204 = vst [vmem:[%s124 + $0x138] sm:$0xff] %v203
                %v205 = vld [vmem:[%s123 + $0x240] sm:$0xff]
                %206 = vst [vmem:[%s124 + $0x140] sm:$0xff] %v205
                %v207 = vld [vmem:[%s123 + $0x248] sm:$0xff]
                %208 = vst [vmem:[%s124 + $0x148] sm:$0xff] %v207
                %v209 = vld [vmem:[%s123 + $0x250] sm:$0xff]
                %210 = vst [vmem:[%s124 + $0x150] sm:$0xff] %v209
                %v211 = vld [vmem:[%s123 + $0x258] sm:$0xff]
                %212 = vst [vmem:[%s124 + $0x158] sm:$0xff] %v211
                %v213 = vld [vmem:[%s123 + $0x260] sm:$0xff]
                %214 = vst [vmem:[%s124 + $0x160] sm:$0xff] %v213
                %v215 = vld [vmem:[%s123 + $0x268] sm:$0xff]
                %216 = vst [vmem:[%s124 + $0x168] sm:$0xff] %v215
                %v217 = vld [vmem:[%s123 + $0x270] sm:$0xff]
                %218 = vst [vmem:[%s124 + $0x170] sm:$0xff] %v217
                %v219 = vld [vmem:[%s123 + $0x278] sm:$0xff]
                %220 = vst [vmem:[%s124 + $0x178] sm:$0xff] %v219
                %v221 = vld [vmem:[%s123 + $0x300] sm:$0xff]
                %222 = vst [vmem:[%s124 + $0x180] sm:$0xff] %v221
                %v223 = vld [vmem:[%s123 + $0x308] sm:$0xff]
                %224 = vst [vmem:[%s124 + $0x188] sm:$0xff] %v223
                %v225 = vld [vmem:[%s123 + $0x310] sm:$0xff]
                %226 = vst [vmem:[%s124 + $0x190] sm:$0xff] %v225
                %v227 = vld [vmem:[%s123 + $0x318] sm:$0xff]
                %228 = vst [vmem:[%s124 + $0x198] sm:$0xff] %v227
                %v229 = vld [vmem:[%s123 + $0x320] sm:$0xff]
                %230 = vst [vmem:[%s124 + $0x1a0] sm:$0xff] %v229
                %v231 = vld [vmem:[%s123 + $0x328] sm:$0xff]
                %232 = vst [vmem:[%s124 + $0x1a8] sm:$0xff] %v231
                %v233 = vld [vmem:[%s123 + $0x330] sm:$0xff]
                %234 = vst [vmem:[%s124 + $0x1b0] sm:$0xff] %v233
                %v235 = vld [vmem:[%s123 + $0x338] sm:$0xff]
                %236 = vst [vmem:[%s124 + $0x1b8] sm:$0xff] %v235
                %v237 = vld [vmem:[%s123 + $0x340] sm:$0xff]
                %238 = vst [vmem:[%s124 + $0x1c0] sm:$0xff] %v237
                %v239 = vld [vmem:[%s123 + $0x348] sm:$0xff]
                %240 = vst [vmem:[%s124 + $0x1c8] sm:$0xff] %v239
                %v241 = vld [vmem:[%s123 + $0x350] sm:$0xff]
                %242 = vst [vmem:[%s124 + $0x1d0] sm:$0xff] %v241
                %v243 = vld [vmem:[%s123 + $0x358] sm:$0xff]
                %244 = vst [vmem:[%s124 + $0x1d8] sm:$0xff] %v243
                %v245 = vld [vmem:[%s123 + $0x360] sm:$0xff]
                %246 = vst [vmem:[%s124 + $0x1e0] sm:$0xff] %v245
                %v247 = vld [vmem:[%s123 + $0x368] sm:$0xff]
                %248 = vst [vmem:[%s124 + $0x1e8] sm:$0xff] %v247
                %v249 = vld [vmem:[%s123 + $0x370] sm:$0xff]
                %250 = vst [vmem:[%s124 + $0x1f0] sm:$0xff] %v249
                %v251 = vld [vmem:[%s123 + $0x378] sm:$0xff]
                %252 = vst [vmem:[%s124 + $0x1f8] sm:$0xff] %v251
                %v253 = vld [vmem:[%s123 + $0x400] sm:$0xff]
                %254 = vst [vmem:[%s124 + $0x200] sm:$0xff] %v253
                %v255 = vld [vmem:[%s123 + $0x408] sm:$0xff]
                %256 = vst [vmem:[%s124 + $0x208] sm:$0xff] %v255
                %v257 = vld [vmem:[%s123 + $0x410] sm:$0xff]
                %258 = vst [vmem:[%s124 + $0x210] sm:$0xff] %v257
                %v259 = vld [vmem:[%s123 + $0x418] sm:$0xff]
                %260 = vst [vmem:[%s124 + $0x218] sm:$0xff] %v259
                %v261 = vld [vmem:[%s123 + $0x420] sm:$0xff]
                %262 = vst [vmem:[%s124 + $0x220] sm:$0xff] %v261
                %v263 = vld [vmem:[%s123 + $0x428] sm:$0xff]
                %264 = vst [vmem:[%s124 + $0x228] sm:$0xff] %v263
                %v265 = vld [vmem:[%s123 + $0x430] sm:$0xff]
                %266 = vst [vmem:[%s124 + $0x230] sm:$0xff] %v265
                %v267 = vld [vmem:[%s123 + $0x438] sm:$0xff]
                %268 = vst [vmem:[%s124 + $0x238] sm:$0xff] %v267
                %v269 = vld [vmem:[%s123 + $0x440] sm:$0xff]
                %270 = vst [vmem:[%s124 + $0x240] sm:$0xff] %v269
                %v271 = vld [vmem:[%s123 + $0x448] sm:$0xff]
                %272 = vst [vmem:[%s124 + $0x248] sm:$0xff] %v271
                %v273 = vld [vmem:[%s123 + $0x450] sm:$0xff]
                %274 = vst [vmem:[%s124 + $0x250] sm:$0xff] %v273
                %v275 = vld [vmem:[%s123 + $0x458] sm:$0xff]
                %276 = vst [vmem:[%s124 + $0x258] sm:$0xff] %v275
                %v277 = vld [vmem:[%s123 + $0x460] sm:$0xff]
                %278 = vst [vmem:[%s124 + $0x260] sm:$0xff] %v277
                %v279 = vld [vmem:[%s123 + $0x468] sm:$0xff]
                %280 = vst [vmem:[%s124 + $0x268] sm:$0xff] %v279
                %v281 = vld [vmem:[%s123 + $0x470] sm:$0xff]
                %282 = vst [vmem:[%s124 + $0x270] sm:$0xff] %v281
                %v283 = vld [vmem:[%s123 + $0x478] sm:$0xff]
                %284 = vst [vmem:[%s124 + $0x278] sm:$0xff] %v283
                %v285 = vld [vmem:[%s123 + $0x500] sm:$0xff]
                %286 = vst [vmem:[%s124 + $0x280] sm:$0xff] %v285
                %v287 = vld [vmem:[%s123 + $0x508] sm:$0xff]
                %288 = vst [vmem:[%s124 + $0x288] sm:$0xff] %v287
                %v289 = vld [vmem:[%s123 + $0x510] sm:$0xff]
                %290 = vst [vmem:[%s124 + $0x290] sm:$0xff] %v289
                %v291 = vld [vmem:[%s123 + $0x518] sm:$0xff]
                %292 = vst [vmem:[%s124 + $0x298] sm:$0xff] %v291
                %v293 = vld [vmem:[%s123 + $0x520] sm:$0xff]
                %294 = vst [vmem:[%s124 + $0x2a0] sm:$0xff] %v293
                %v295 = vld [vmem:[%s123 + $0x528] sm:$0xff]
                %296 = vst [vmem:[%s124 + $0x2a8] sm:$0xff] %v295
                %v297 = vld [vmem:[%s123 + $0x530] sm:$0xff]
                %298 = vst [vmem:[%s124 + $0x2b0] sm:$0xff] %v297
                %v299 = vld [vmem:[%s123 + $0x538] sm:$0xff]
                %300 = vst [vmem:[%s124 + $0x2b8] sm:$0xff] %v299
                %v301 = vld [vmem:[%s123 + $0x540] sm:$0xff]
                %302 = vst [vmem:[%s124 + $0x2c0] sm:$0xff] %v301
                %v303 = vld [vmem:[%s123 + $0x548] sm:$0xff]
                %304 = vst [vmem:[%s124 + $0x2c8] sm:$0xff] %v303
                %v305 = vld [vmem:[%s123 + $0x550] sm:$0xff]
                %306 = vst [vmem:[%s124 + $0x2d0] sm:$0xff] %v305
                %v307 = vld [vmem:[%s123 + $0x558] sm:$0xff]
                %308 = vst [vmem:[%s124 + $0x2d8] sm:$0xff] %v307
                %v309 = vld [vmem:[%s123 + $0x560] sm:$0xff]
                %310 = vst [vmem:[%s124 + $0x2e0] sm:$0xff] %v309
                %v311 = vld [vmem:[%s123 + $0x568] sm:$0xff]
                %312 = vst [vmem:[%s124 + $0x2e8] sm:$0xff] %v311
                %v313 = vld [vmem:[%s123 + $0x570] sm:$0xff]
                %314 = vst [vmem:[%s124 + $0x2f0] sm:$0xff] %v313
                %v315 = vld [vmem:[%s123 + $0x578] sm:$0xff]
                %316 = vst [vmem:[%s124 + $0x2f8] sm:$0xff] %v315
                %v317 = vld [vmem:[%s123 + $0x600] sm:$0xff]
                %318 = vst [vmem:[%s124 + $0x300] sm:$0xff] %v317
                %v319 = vld [vmem:[%s123 + $0x608] sm:$0xff]
                %320 = vst [vmem:[%s124 + $0x308] sm:$0xff] %v319
                %v321 = vld [vmem:[%s123 + $0x610] sm:$0xff]
                %322 = vst [vmem:[%s124 + $0x310] sm:$0xff] %v321
                %v323 = vld [vmem:[%s123 + $0x618] sm:$0xff]
                %324 = vst [vmem:[%s124 + $0x318] sm:$0xff] %v323
                %v325 = vld [vmem:[%s123 + $0x620] sm:$0xff]
                %326 = vst [vmem:[%s124 + $0x320] sm:$0xff] %v325
                %v327 = vld [vmem:[%s123 + $0x628] sm:$0xff]
                %328 = vst [vmem:[%s124 + $0x328] sm:$0xff] %v327
                %v329 = vld [vmem:[%s123 + $0x630] sm:$0xff]
                %330 = vst [vmem:[%s124 + $0x330] sm:$0xff] %v329
                %v331 = vld [vmem:[%s123 + $0x638] sm:$0xff]
                %332 = vst [vmem:[%s124 + $0x338] sm:$0xff] %v331
                %v333 = vld [vmem:[%s123 + $0x640] sm:$0xff]
                %334 = vst [vmem:[%s124 + $0x340] sm:$0xff] %v333
                %v335 = vld [vmem:[%s123 + $0x648] sm:$0xff]
                %336 = vst [vmem:[%s124 + $0x348] sm:$0xff] %v335
                %v337 = vld [vmem:[%s123 + $0x650] sm:$0xff]
                %338 = vst [vmem:[%s124 + $0x350] sm:$0xff] %v337
                %v339 = vld [vmem:[%s123 + $0x658] sm:$0xff]
                %340 = vst [vmem:[%s124 + $0x358] sm:$0xff] %v339
                %v341 = vld [vmem:[%s123 + $0x660] sm:$0xff]
                %342 = vst [vmem:[%s124 + $0x360] sm:$0xff] %v341
                %v343 = vld [vmem:[%s123 + $0x668] sm:$0xff]
                %344 = vst [vmem:[%s124 + $0x368] sm:$0xff] %v343
                %v345 = vld [vmem:[%s123 + $0x670] sm:$0xff]
                %346 = vst [vmem:[%s124 + $0x370] sm:$0xff] %v345
                %v347 = vld [vmem:[%s123 + $0x678] sm:$0xff]
                %348 = vst [vmem:[%s124 + $0x378] sm:$0xff] %v347
                %v349 = vld [vmem:[%s123 + $0x700] sm:$0xff]
                %350 = vst [vmem:[%s124 + $0x380] sm:$0xff] %v349
                %v351 = vld [vmem:[%s123 + $0x708] sm:$0xff]
                %352 = vst [vmem:[%s124 + $0x388] sm:$0xff] %v351
                %v353 = vld [vmem:[%s123 + $0x710] sm:$0xff]
                %354 = vst [vmem:[%s124 + $0x390] sm:$0xff] %v353
                %v355 = vld [vmem:[%s123 + $0x718] sm:$0xff]
                %356 = vst [vmem:[%s124 + $0x398] sm:$0xff] %v355
                %v357 = vld [vmem:[%s123 + $0x720] sm:$0xff]
                %358 = vst [vmem:[%s124 + $0x3a0] sm:$0xff] %v357
                %v359 = vld [vmem:[%s123 + $0x728] sm:$0xff]
                %360 = vst [vmem:[%s124 + $0x3a8] sm:$0xff] %v359
                %v361 = vld [vmem:[%s123 + $0x730] sm:$0xff]
                %362 = vst [vmem:[%s124 + $0x3b0] sm:$0xff] %v361
                %v363 = vld [vmem:[%s123 + $0x738] sm:$0xff]
                %364 = vst [vmem:[%s124 + $0x3b8] sm:$0xff] %v363
                %v365 = vld [vmem:[%s123 + $0x740] sm:$0xff]
                %366 = vst [vmem:[%s124 + $0x3c0] sm:$0xff] %v365
                %v367 = vld [vmem:[%s123 + $0x748] sm:$0xff]
                %368 = vst [vmem:[%s124 + $0x3c8] sm:$0xff] %v367
                %v369 = vld [vmem:[%s123 + $0x750] sm:$0xff]
                %370 = vst [vmem:[%s124 + $0x3d0] sm:$0xff] %v369
                %v371 = vld [vmem:[%s123 + $0x758] sm:$0xff]
                %372 = vst [vmem:[%s124 + $0x3d8] sm:$0xff] %v371
                %v373 = vld [vmem:[%s123 + $0x760] sm:$0xff]
                %374 = vst [vmem:[%s124 + $0x3e0] sm:$0xff] %v373
                %v375 = vld [vmem:[%s123 + $0x768] sm:$0xff]
                %376 = vst [vmem:[%s124 + $0x3e8] sm:$0xff] %v375
                %v377 = vld [vmem:[%s123 + $0x770] sm:$0xff]
                %378 = vst [vmem:[%s124 + $0x3f0] sm:$0xff] %v377
                %v379 = vld [vmem:[%s123 + $0x778] sm:$0xff]
                %380 = vst [vmem:[%s124 + $0x3f8] sm:$0xff] %v379
                %v381 = vld [vmem:[%s123 + $0x800] sm:$0xff]
                %382 = vst [vmem:[%s124 + $0x400] sm:$0xff] %v381
                %v383 = vld [vmem:[%s123 + $0x808] sm:$0xff]
                %384 = vst [vmem:[%s124 + $0x408] sm:$0xff] %v383
                %v385 = vld [vmem:[%s123 + $0x810] sm:$0xff]
                %386 = vst [vmem:[%s124 + $0x410] sm:$0xff] %v385
                %v387 = vld [vmem:[%s123 + $0x818] sm:$0xff]
                %388 = vst [vmem:[%s124 + $0x418] sm:$0xff] %v387
                %v389 = vld [vmem:[%s123 + $0x820] sm:$0xff]
                %390 = vst [vmem:[%s124 + $0x420] sm:$0xff] %v389
                %v391 = vld [vmem:[%s123 + $0x828] sm:$0xff]
                %392 = vst [vmem:[%s124 + $0x428] sm:$0xff] %v391
                %v393 = vld [vmem:[%s123 + $0x830] sm:$0xff]
                %394 = vst [vmem:[%s124 + $0x430] sm:$0xff] %v393
                %v395 = vld [vmem:[%s123 + $0x838] sm:$0xff]
                %396 = vst [vmem:[%s124 + $0x438] sm:$0xff] %v395
                %v397 = vld [vmem:[%s123 + $0x840] sm:$0xff]
                %398 = vst [vmem:[%s124 + $0x440] sm:$0xff] %v397
                %v399 = vld [vmem:[%s123 + $0x848] sm:$0xff]
                %400 = vst [vmem:[%s124 + $0x448] sm:$0xff] %v399
                %v401 = vld [vmem:[%s123 + $0x850] sm:$0xff]
                %402 = vst [vmem:[%s124 + $0x450] sm:$0xff] %v401
                %v403 = vld [vmem:[%s123 + $0x858] sm:$0xff]
                %404 = vst [vmem:[%s124 + $0x458] sm:$0xff] %v403
                %v405 = vld [vmem:[%s123 + $0x860] sm:$0xff]
                %406 = vst [vmem:[%s124 + $0x460] sm:$0xff] %v405
                %v407 = vld [vmem:[%s123 + $0x868] sm:$0xff]
                %408 = vst [vmem:[%s124 + $0x468] sm:$0xff] %v407
                %v409 = vld [vmem:[%s123 + $0x870] sm:$0xff]
                %410 = vst [vmem:[%s124 + $0x470] sm:$0xff] %v409
                %v411 = vld [vmem:[%s123 + $0x878] sm:$0xff]
                %412 = vst [vmem:[%s124 + $0x478] sm:$0xff] %v411
                %v413 = vld [vmem:[%s123 + $0x900] sm:$0xff]
                %414 = vst [vmem:[%s124 + $0x480] sm:$0xff] %v413
                %v415 = vld [vmem:[%s123 + $0x908] sm:$0xff]
                %416 = vst [vmem:[%s124 + $0x488] sm:$0xff] %v415
                %v417 = vld [vmem:[%s123 + $0x910] sm:$0xff]
                %418 = vst [vmem:[%s124 + $0x490] sm:$0xff] %v417
                %v419 = vld [vmem:[%s123 + $0x918] sm:$0xff]
                %420 = vst [vmem:[%s124 + $0x498] sm:$0xff] %v419
                %v421 = vld [vmem:[%s123 + $0x920] sm:$0xff]
                %422 = vst [vmem:[%s124 + $0x4a0] sm:$0xff] %v421
                %v423 = vld [vmem:[%s123 + $0x928] sm:$0xff]
                %424 = vst [vmem:[%s124 + $0x4a8] sm:$0xff] %v423
                %v425 = vld [vmem:[%s123 + $0x930] sm:$0xff]
                %426 = vst [vmem:[%s124 + $0x4b0] sm:$0xff] %v425
                %v427 = vld [vmem:[%s123 + $0x938] sm:$0xff]
                %428 = vst [vmem:[%s124 + $0x4b8] sm:$0xff] %v427
                %v429 = vld [vmem:[%s123 + $0x940] sm:$0xff]
                %430 = vst [vmem:[%s124 + $0x4c0] sm:$0xff] %v429
                %v431 = vld [vmem:[%s123 + $0x948] sm:$0xff]
                %432 = vst [vmem:[%s124 + $0x4c8] sm:$0xff] %v431
                %v433 = vld [vmem:[%s123 + $0x950] sm:$0xff]
                %434 = vst [vmem:[%s124 + $0x4d0] sm:$0xff] %v433
                %v435 = vld [vmem:[%s123 + $0x958] sm:$0xff]
                %436 = vst [vmem:[%s124 + $0x4d8] sm:$0xff] %v435
                %v437 = vld [vmem:[%s123 + $0x960] sm:$0xff]
                %438 = vst [vmem:[%s124 + $0x4e0] sm:$0xff] %v437
                %v439 = vld [vmem:[%s123 + $0x968] sm:$0xff]
                %440 = vst [vmem:[%s124 + $0x4e8] sm:$0xff] %v439
                %v441 = vld [vmem:[%s123 + $0x970] sm:$0xff]
                %442 = vst [vmem:[%s124 + $0x4f0] sm:$0xff] %v441
                %v443 = vld [vmem:[%s123 + $0x978] sm:$0xff]
                %444 = vst [vmem:[%s124 + $0x4f8] sm:$0xff] %v443
                %v445 = vld [vmem:[%s123 + $0xa00] sm:$0xff]
                %446 = vst [vmem:[%s124 + $0x500] sm:$0xff] %v445
                %v447 = vld [vmem:[%s123 + $0xa08] sm:$0xff]
                %448 = vst [vmem:[%s124 + $0x508] sm:$0xff] %v447
                %v449 = vld [vmem:[%s123 + $0xa10] sm:$0xff]
                %450 = vst [vmem:[%s124 + $0x510] sm:$0xff] %v449
                %v451 = vld [vmem:[%s123 + $0xa18] sm:$0xff]
                %452 = vst [vmem:[%s124 + $0x518] sm:$0xff] %v451
                %v453 = vld [vmem:[%s123 + $0xa20] sm:$0xff]
                %454 = vst [vmem:[%s124 + $0x520] sm:$0xff] %v453
                %v455 = vld [vmem:[%s123 + $0xa28] sm:$0xff]
                %456 = vst [vmem:[%s124 + $0x528] sm:$0xff] %v455
                %v457 = vld [vmem:[%s123 + $0xa30] sm:$0xff]
                %458 = vst [vmem:[%s124 + $0x530] sm:$0xff] %v457
                %v459 = vld [vmem:[%s123 + $0xa38] sm:$0xff]
                %460 = vst [vmem:[%s124 + $0x538] sm:$0xff] %v459
                %v461 = vld [vmem:[%s123 + $0xa40] sm:$0xff]
                %462 = vst [vmem:[%s124 + $0x540] sm:$0xff] %v461
                %v463 = vld [vmem:[%s123 + $0xa48] sm:$0xff]
                %464 = vst [vmem:[%s124 + $0x548] sm:$0xff] %v463
                %v465 = vld [vmem:[%s123 + $0xa50] sm:$0xff]
                %466 = vst [vmem:[%s124 + $0x550] sm:$0xff] %v465
                %v467 = vld [vmem:[%s123 + $0xa58] sm:$0xff]
                %468 = vst [vmem:[%s124 + $0x558] sm:$0xff] %v467
                %v469 = vld [vmem:[%s123 + $0xa60] sm:$0xff]
                %470 = vst [vmem:[%s124 + $0x560] sm:$0xff] %v469
                %v471 = vld [vmem:[%s123 + $0xa68] sm:$0xff]
                %472 = vst [vmem:[%s124 + $0x568] sm:$0xff] %v471
                %v473 = vld [vmem:[%s123 + $0xa70] sm:$0xff]
                %474 = vst [vmem:[%s124 + $0x570] sm:$0xff] %v473
                %v475 = vld [vmem:[%s123 + $0xa78] sm:$0xff]
                %476 = vst [vmem:[%s124 + $0x578] sm:$0xff] %v475
                %v477 = vld [vmem:[%s123 + $0xb00] sm:$0xff]
                %478 = vst [vmem:[%s124 + $0x580] sm:$0xff] %v477
                %v479 = vld [vmem:[%s123 + $0xb08] sm:$0xff]
                %480 = vst [vmem:[%s124 + $0x588] sm:$0xff] %v479
                %v481 = vld [vmem:[%s123 + $0xb10] sm:$0xff]
                %482 = vst [vmem:[%s124 + $0x590] sm:$0xff] %v481
                %v483 = vld [vmem:[%s123 + $0xb18] sm:$0xff]
                %484 = vst [vmem:[%s124 + $0x598] sm:$0xff] %v483
                %v485 = vld [vmem:[%s123 + $0xb20] sm:$0xff]
                %486 = vst [vmem:[%s124 + $0x5a0] sm:$0xff] %v485
                %v487 = vld [vmem:[%s123 + $0xb28] sm:$0xff]
                %488 = vst [vmem:[%s124 + $0x5a8] sm:$0xff] %v487
                %v489 = vld [vmem:[%s123 + $0xb30] sm:$0xff]
                %490 = vst [vmem:[%s124 + $0x5b0] sm:$0xff] %v489
                %v491 = vld [vmem:[%s123 + $0xb38] sm:$0xff]
                %492 = vst [vmem:[%s124 + $0x5b8] sm:$0xff] %v491
                %v493 = vld [vmem:[%s123 + $0xb40] sm:$0xff]
                %494 = vst [vmem:[%s124 + $0x5c0] sm:$0xff] %v493
                %v495 = vld [vmem:[%s123 + $0xb48] sm:$0xff]
                %496 = vst [vmem:[%s124 + $0x5c8] sm:$0xff] %v495
                %v497 = vld [vmem:[%s123 + $0xb50] sm:$0xff]
                %498 = vst [vmem:[%s124 + $0x5d0] sm:$0xff] %v497
                %v499 = vld [vmem:[%s123 + $0xb58] sm:$0xff]
                %500 = vst [vmem:[%s124 + $0x5d8] sm:$0xff] %v499
                %v501 = vld [vmem:[%s123 + $0xb60] sm:$0xff]
                %502 = vst [vmem:[%s124 + $0x5e0] sm:$0xff] %v501
                %v503 = vld [vmem:[%s123 + $0xb68] sm:$0xff]
                %504 = vst [vmem:[%s124 + $0x5e8] sm:$0xff] %v503
                %v505 = vld [vmem:[%s123 + $0xb70] sm:$0xff]
                %506 = vst [vmem:[%s124 + $0x5f0] sm:$0xff] %v505
                %v507 = vld [vmem:[%s123 + $0xb78] sm:$0xff]
                %508 = vst [vmem:[%s124 + $0x5f8] sm:$0xff] %v507
                %v509 = vld [vmem:[%s123 + $0xc00] sm:$0xff]
                %510 = vst [vmem:[%s124 + $0x600] sm:$0xff] %v509
                %v511 = vld [vmem:[%s123 + $0xc08] sm:$0xff]
                %512 = vst [vmem:[%s124 + $0x608] sm:$0xff] %v511
                %v513 = vld [vmem:[%s123 + $0xc10] sm:$0xff]
                %514 = vst [vmem:[%s124 + $0x610] sm:$0xff] %v513
                %v515 = vld [vmem:[%s123 + $0xc18] sm:$0xff]
                %516 = vst [vmem:[%s124 + $0x618] sm:$0xff] %v515
                %v517 = vld [vmem:[%s123 + $0xc20] sm:$0xff]
                %518 = vst [vmem:[%s124 + $0x620] sm:$0xff] %v517
                %v519 = vld [vmem:[%s123 + $0xc28] sm:$0xff]
                %520 = vst [vmem:[%s124 + $0x628] sm:$0xff] %v519
                %v521 = vld [vmem:[%s123 + $0xc30] sm:$0xff]
                %522 = vst [vmem:[%s124 + $0x630] sm:$0xff] %v521
                %v523 = vld [vmem:[%s123 + $0xc38] sm:$0xff]
                %524 = vst [vmem:[%s124 + $0x638] sm:$0xff] %v523
                %v525 = vld [vmem:[%s123 + $0xc40] sm:$0xff]
                %526 = vst [vmem:[%s124 + $0x640] sm:$0xff] %v525
                %v527 = vld [vmem:[%s123 + $0xc48] sm:$0xff]
                %528 = vst [vmem:[%s124 + $0x648] sm:$0xff] %v527
                %v529 = vld [vmem:[%s123 + $0xc50] sm:$0xff]
                %530 = vst [vmem:[%s124 + $0x650] sm:$0xff] %v529
                %v531 = vld [vmem:[%s123 + $0xc58] sm:$0xff]
                %532 = vst [vmem:[%s124 + $0x658] sm:$0xff] %v531
                %v533 = vld [vmem:[%s123 + $0xc60] sm:$0xff]
                %534 = vst [vmem:[%s124 + $0x660] sm:$0xff] %v533
                %v535 = vld [vmem:[%s123 + $0xc68] sm:$0xff]
                %536 = vst [vmem:[%s124 + $0x668] sm:$0xff] %v535
                %v537 = vld [vmem:[%s123 + $0xc70] sm:$0xff]
                %538 = vst [vmem:[%s124 + $0x670] sm:$0xff] %v537
                %v539 = vld [vmem:[%s123 + $0xc78] sm:$0xff]
                %540 = vst [vmem:[%s124 + $0x678] sm:$0xff] %v539
                %v541 = vld [vmem:[%s123 + $0xd00] sm:$0xff]
                %542 = vst [vmem:[%s124 + $0x680] sm:$0xff] %v541
                %v543 = vld [vmem:[%s123 + $0xd08] sm:$0xff]
                %544 = vst [vmem:[%s124 + $0x688] sm:$0xff] %v543
                %v545 = vld [vmem:[%s123 + $0xd10] sm:$0xff]
                %546 = vst [vmem:[%s124 + $0x690] sm:$0xff] %v545
                %v547 = vld [vmem:[%s123 + $0xd18] sm:$0xff]
                %548 = vst [vmem:[%s124 + $0x698] sm:$0xff] %v547
                %v549 = vld [vmem:[%s123 + $0xd20] sm:$0xff]
                %550 = vst [vmem:[%s124 + $0x6a0] sm:$0xff] %v549
                %v551 = vld [vmem:[%s123 + $0xd28] sm:$0xff]
                %552 = vst [vmem:[%s124 + $0x6a8] sm:$0xff] %v551
                %v553 = vld [vmem:[%s123 + $0xd30] sm:$0xff]
                %554 = vst [vmem:[%s124 + $0x6b0] sm:$0xff] %v553
                %v555 = vld [vmem:[%s123 + $0xd38] sm:$0xff]
                %556 = vst [vmem:[%s124 + $0x6b8] sm:$0xff] %v555
                %v557 = vld [vmem:[%s123 + $0xd40] sm:$0xff]
                %558 = vst [vmem:[%s124 + $0x6c0] sm:$0xff] %v557
                %v559 = vld [vmem:[%s123 + $0xd48] sm:$0xff]
                %560 = vst [vmem:[%s124 + $0x6c8] sm:$0xff] %v559
                %v561 = vld [vmem:[%s123 + $0xd50] sm:$0xff]
                %562 = vst [vmem:[%s124 + $0x6d0] sm:$0xff] %v561
                %v563 = vld [vmem:[%s123 + $0xd58] sm:$0xff]
                %564 = vst [vmem:[%s124 + $0x6d8] sm:$0xff] %v563
                %v565 = vld [vmem:[%s123 + $0xd60] sm:$0xff]
                %566 = vst [vmem:[%s124 + $0x6e0] sm:$0xff] %v565
                %v567 = vld [vmem:[%s123 + $0xd68] sm:$0xff]
                %568 = vst [vmem:[%s124 + $0x6e8] sm:$0xff] %v567
                %v569 = vld [vmem:[%s123 + $0xd70] sm:$0xff]
                %570 = vst [vmem:[%s124 + $0x6f0] sm:$0xff] %v569
                %v571 = vld [vmem:[%s123 + $0xd78] sm:$0xff]
                %572 = vst [vmem:[%s124 + $0x6f8] sm:$0xff] %v571
                %v573 = vld [vmem:[%s123 + $0xe00] sm:$0xff]
                %574 = vst [vmem:[%s124 + $0x700] sm:$0xff] %v573
                %v575 = vld [vmem:[%s123 + $0xe08] sm:$0xff]
                %576 = vst [vmem:[%s124 + $0x708] sm:$0xff] %v575
                %v577 = vld [vmem:[%s123 + $0xe10] sm:$0xff]
                %578 = vst [vmem:[%s124 + $0x710] sm:$0xff] %v577
                %v579 = vld [vmem:[%s123 + $0xe18] sm:$0xff]
                %580 = vst [vmem:[%s124 + $0x718] sm:$0xff] %v579
                %v581 = vld [vmem:[%s123 + $0xe20] sm:$0xff]
                %582 = vst [vmem:[%s124 + $0x720] sm:$0xff] %v581
                %v583 = vld [vmem:[%s123 + $0xe28] sm:$0xff]
                %584 = vst [vmem:[%s124 + $0x728] sm:$0xff] %v583
                %v585 = vld [vmem:[%s123 + $0xe30] sm:$0xff]
                %586 = vst [vmem:[%s124 + $0x730] sm:$0xff] %v585
                %v587 = vld [vmem:[%s123 + $0xe38] sm:$0xff]
                %588 = vst [vmem:[%s124 + $0x738] sm:$0xff] %v587
                %v589 = vld [vmem:[%s123 + $0xe40] sm:$0xff]
                %590 = vst [vmem:[%s124 + $0x740] sm:$0xff] %v589
                %v591 = vld [vmem:[%s123 + $0xe48] sm:$0xff]
                %592 = vst [vmem:[%s124 + $0x748] sm:$0xff] %v591
                %v593 = vld [vmem:[%s123 + $0xe50] sm:$0xff]
                %594 = vst [vmem:[%s124 + $0x750] sm:$0xff] %v593
                %v595 = vld [vmem:[%s123 + $0xe58] sm:$0xff]
                %596 = vst [vmem:[%s124 + $0x758] sm:$0xff] %v595
                %v597 = vld [vmem:[%s123 + $0xe60] sm:$0xff]
                %598 = vst [vmem:[%s124 + $0x760] sm:$0xff] %v597
                %v599 = vld [vmem:[%s123 + $0xe68] sm:$0xff]
                %600 = vst [vmem:[%s124 + $0x768] sm:$0xff] %v599
                %v601 = vld [vmem:[%s123 + $0xe70] sm:$0xff]
                %602 = vst [vmem:[%s124 + $0x770] sm:$0xff] %v601
                %v603 = vld [vmem:[%s123 + $0xe78] sm:$0xff]
                %604 = vst [vmem:[%s124 + $0x778] sm:$0xff] %v603
                %v605 = vld [vmem:[%s123 + $0xf00] sm:$0xff]
                %606 = vst [vmem:[%s124 + $0x780] sm:$0xff] %v605
                %v607 = vld [vmem:[%s123 + $0xf08] sm:$0xff]
                %608 = vst [vmem:[%s124 + $0x788] sm:$0xff] %v607
                %v609 = vld [vmem:[%s123 + $0xf10] sm:$0xff]
                %610 = vst [vmem:[%s124 + $0x790] sm:$0xff] %v609
                %v611 = vld [vmem:[%s123 + $0xf18] sm:$0xff]
                %612 = vst [vmem:[%s124 + $0x798] sm:$0xff] %v611
                %v613 = vld [vmem:[%s123 + $0xf20] sm:$0xff]
                %614 = vst [vmem:[%s124 + $0x7a0] sm:$0xff] %v613
                %v615 = vld [vmem:[%s123 + $0xf28] sm:$0xff]
                %616 = vst [vmem:[%s124 + $0x7a8] sm:$0xff] %v615
                %v617 = vld [vmem:[%s123 + $0xf30] sm:$0xff]
                %618 = vst [vmem:[%s124 + $0x7b0] sm:$0xff] %v617
                %v619 = vld [vmem:[%s123 + $0xf38] sm:$0xff]
                %620 = vst [vmem:[%s124 + $0x7b8] sm:$0xff] %v619
                %v621 = vld [vmem:[%s123 + $0xf40] sm:$0xff]
                %622 = vst [vmem:[%s124 + $0x7c0] sm:$0xff] %v621
                %v623 = vld [vmem:[%s123 + $0xf48] sm:$0xff]
                %624 = vst [vmem:[%s124 + $0x7c8] sm:$0xff] %v623
                %v625 = vld [vmem:[%s123 + $0xf50] sm:$0xff]
                %626 = vst [vmem:[%s124 + $0x7d0] sm:$0xff] %v625
                %v627 = vld [vmem:[%s123 + $0xf58] sm:$0xff]
                %628 = vst [vmem:[%s124 + $0x7d8] sm:$0xff] %v627
                %v629 = vld [vmem:[%s123 + $0xf60] sm:$0xff]
                %630 = vst [vmem:[%s124 + $0x7e0] sm:$0xff] %v629
                %v631 = vld [vmem:[%s123 + $0xf68] sm:$0xff]
                %632 = vst [vmem:[%s124 + $0x7e8] sm:$0xff] %v631
                %v633 = vld [vmem:[%s123 + $0xf70] sm:$0xff]
                %634 = vst [vmem:[%s124 + $0x7f0] sm:$0xff] %v633
                %v635 = vld [vmem:[%s123 + $0xf78] sm:$0xff]
                %636 = vst [vmem:[%s124 + $0x7f8] sm:$0xff] %v635
              $region37: #{generator_forward.9} parent=31 // loop_footer
                %s122 = sadd.s32 1, %s118
              $region38: #{generator_forward.9} parent=31 // loop_footer_branch
                %117 = sbr.rel target = $region34
              $region39: #{generator_forward.9} parent=31 // loop_exit
                _
            $region32: #{generator_forward.9} parent=27 // pred_fallthru
              _
            // Predicated region
            $region40: #{generator_forward.9} parent=27 // pred_check
              _
            $region41: #{generator_forward.9} parent=27 // pred_check_branch
              %638 = sbr.rel target = $region43
            $region42: #{generator_forward.9} parent=27 // pred_region
              _
            $region43: #{generator_forward.9} parent=27 // pred_fallthru
              _
          $region28: #{generator_forward.9} parent=23 // pred_fallthru
            _
          %639 = vnop
        $region24: #{generator_forward.9} parent=19 // pred_fallthru
          _
      $region20: #{generator_forward.9} parent=5 // pred_fallthru
        _
      %p640 = scmp.le.s32.totalorder 1, %s8
      %p641 = scmp.lt.s32.totalorder %s8, 3
      %p642 = pnand %p640, %p641
      %p643 = pneg %p642
      // Predicated region
      $region44: #{generator_forward.9} parent=5 // pred_check
        _
      $region45: #{generator_forward.9} parent=5 // pred_check_branch
        %645 = sbr.rel (%p642) target = $region47
      $region46: #{generator_forward.9} parent=5 // pred_region
        %s646 = ssub.s32 %s8, 1
        %s647 = sand.u32 %s42, 1
        %s648 = sand.u32 %s42, 1
        %s649 = smul.addr %s648, 2048
        %s650 = scalar_lea.vmem [#allocation2], %s649
        // Predicated region
        $region48: #{generator_forward.9} parent=46 // pred_check
          %p651 = pneg %p55
        $region49: #{generator_forward.9} parent=46 // pred_check_branch
          %653 = sbr.rel (%p651) target = $region51
        $region50: #{generator_forward.9} parent=46 // pred_region
          _
        $region51: #{generator_forward.9} parent=46 // pred_fallthru
          _
        %p654 = pneg %p29
        %p655 = pneg %p26
        %s656 = sand.u32 %s42, 1
        %s657 = sand.u32 %s42, 1
        %s658 = smul.addr %s657, 2048
        %s659 = scalar_lea.vmem [#allocation2], %s658
        %p660 = pneg %p55
        %p661 = pneg %p52
        %p662 = pneg %p81
        %p663 = pneg %p78
        %s664 = smul.u32 32, %s13
        %p665 = scmp.lt.s32.totalorder %s664, 63
        %s666 = scalar_select %p665, %s664, 63
        %s667 = scalar_lea.vmem %s2, %s666
        %s668 = smul.u32 32, %s13
        %s669 = smul.u32 32, %s13
        %p670 = scmp.lt.s32.totalorder %s669, 63
        %s671 = scalar_select %p670, %s669, 63
        %s672 = scalar_lea.vmem %s2, %s671
        %s673 = smul.u32 32, %s13
        %v674 = vld [vmem:[%s0] sm:$0x1]
        %v675 = vld [vmem:[%s650] sm:$0xff]
        %v676 = vld [vmem:[%s650 + $0x8] sm:$0xff]
        %v677 = vld [vmem:[%s650 + $0x10] sm:$0xff]
        %v678 = vld [vmem:[%s650 + $0x18] sm:$0xff]
        %v679 = vld [vmem:[%s650 + $0x20] sm:$0xff]
        %v680 = vld [vmem:[%s650 + $0x28] sm:$0xff]
        %v681 = vld [vmem:[%s650 + $0x30] sm:$0xff]
        %v682 = vld [vmem:[%s650 + $0x38] sm:$0xff]
        %v683 = vld [vmem:[%s650 + $0x40] sm:$0xff]
        %v684 = vld [vmem:[%s650 + $0x48] sm:$0xff]
        %v685 = vld [vmem:[%s650 + $0x50] sm:$0xff]
        %v686 = vld [vmem:[%s650 + $0x58] sm:$0xff]
        %v687 = vld [vmem:[%s650 + $0x60] sm:$0xff]
        %v688 = vld [vmem:[%s650 + $0x68] sm:$0xff]
        %v689 = vld [vmem:[%s650 + $0x70] sm:$0xff]
        %v690 = vld [vmem:[%s650 + $0x78] sm:$0xff]
        %v691 = vld [vmem:[%s650 + $0x80] sm:$0xff]
        %v692 = vld [vmem:[%s650 + $0x88] sm:$0xff]
        %v693 = vld [vmem:[%s650 + $0x90] sm:$0xff]
        %v694 = vld [vmem:[%s650 + $0x98] sm:$0xff]
        %v695 = vld [vmem:[%s650 + $0xa0] sm:$0xff]
        %v696 = vld [vmem:[%s650 + $0xa8] sm:$0xff]
        %v697 = vld [vmem:[%s650 + $0xb0] sm:$0xff]
        %v698 = vld [vmem:[%s650 + $0xb8] sm:$0xff]
        %v699 = vld [vmem:[%s650 + $0xc0] sm:$0xff]
        %v700 = vld [vmem:[%s650 + $0xc8] sm:$0xff]
        %v701 = vld [vmem:[%s650 + $0xd0] sm:$0xff]
        %v702 = vld [vmem:[%s650 + $0xd8] sm:$0xff]
        %v703 = vld [vmem:[%s650 + $0xe0] sm:$0xff]
        %v704 = vld [vmem:[%s650 + $0xe8] sm:$0xff]
        %v705 = vld [vmem:[%s650 + $0xf0] sm:$0xff]
        %v706 = vld [vmem:[%s650 + $0xf8] sm:$0xff]
        %v707 = vld [vmem:[%s650 + $0x100] sm:$0xff]
        %v708 = vld [vmem:[%s650 + $0x108] sm:$0xff]
        %v709 = vld [vmem:[%s650 + $0x110] sm:$0xff]
        %v710 = vld [vmem:[%s650 + $0x118] sm:$0xff]
        %v711 = vld [vmem:[%s650 + $0x120] sm:$0xff]
        %v712 = vld [vmem:[%s650 + $0x128] sm:$0xff]
        %v713 = vld [vmem:[%s650 + $0x130] sm:$0xff]
        %v714 = vld [vmem:[%s650 + $0x138] sm:$0xff]
        %v715 = vld [vmem:[%s650 + $0x140] sm:$0xff]
        %v716 = vld [vmem:[%s650 + $0x148] sm:$0xff]
        %v717 = vld [vmem:[%s650 + $0x150] sm:$0xff]
        %v718 = vld [vmem:[%s650 + $0x158] sm:$0xff]
        %v719 = vld [vmem:[%s650 + $0x160] sm:$0xff]
        %v720 = vld [vmem:[%s650 + $0x168] sm:$0xff]
        %v721 = vld [vmem:[%s650 + $0x170] sm:$0xff]
        %v722 = vld [vmem:[%s650 + $0x178] sm:$0xff]
        %v723 = vld [vmem:[%s650 + $0x180] sm:$0xff]
        %v724 = vld [vmem:[%s650 + $0x188] sm:$0xff]
        %v725 = vld [vmem:[%s650 + $0x190] sm:$0xff]
        %v726 = vld [vmem:[%s650 + $0x198] sm:$0xff]
        %v727 = vld [vmem:[%s650 + $0x1a0] sm:$0xff]
        %v728 = vld [vmem:[%s650 + $0x1a8] sm:$0xff]
        %v729 = vld [vmem:[%s650 + $0x1b0] sm:$0xff]
        %v730 = vld [vmem:[%s650 + $0x1b8] sm:$0xff]
        %v731 = vld [vmem:[%s650 + $0x1c0] sm:$0xff]
        %v732 = vld [vmem:[%s650 + $0x1c8] sm:$0xff]
        %v733 = vld [vmem:[%s650 + $0x1d0] sm:$0xff]
        %v734 = vld [vmem:[%s650 + $0x1d8] sm:$0xff]
        %v735 = vld [vmem:[%s650 + $0x1e0] sm:$0xff]
        %v736 = vld [vmem:[%s650 + $0x1e8] sm:$0xff]
        %v737 = vld [vmem:[%s650 + $0x1f0] sm:$0xff]
        %v738 = vld [vmem:[%s650 + $0x1f8] sm:$0xff]
        %v739 = vld [vmem:[%s650 + $0x200] sm:$0xff]
        %v740 = vld [vmem:[%s650 + $0x208] sm:$0xff]
        %v741 = vld [vmem:[%s650 + $0x210] sm:$0xff]
        %v742 = vld [vmem:[%s650 + $0x218] sm:$0xff]
        %v743 = vld [vmem:[%s650 + $0x220] sm:$0xff]
        %v744 = vld [vmem:[%s650 + $0x228] sm:$0xff]
        %v745 = vld [vmem:[%s650 + $0x230] sm:$0xff]
        %v746 = vld [vmem:[%s650 + $0x238] sm:$0xff]
        %v747 = vld [vmem:[%s650 + $0x240] sm:$0xff]
        %v748 = vld [vmem:[%s650 + $0x248] sm:$0xff]
        %v749 = vld [vmem:[%s650 + $0x250] sm:$0xff]
        %v750 = vld [vmem:[%s650 + $0x258] sm:$0xff]
        %v751 = vld [vmem:[%s650 + $0x260] sm:$0xff]
        %v752 = vld [vmem:[%s650 + $0x268] sm:$0xff]
        %v753 = vld [vmem:[%s650 + $0x270] sm:$0xff]
        %v754 = vld [vmem:[%s650 + $0x278] sm:$0xff]
        %v755 = vld [vmem:[%s650 + $0x280] sm:$0xff]
        %v756 = vld [vmem:[%s650 + $0x288] sm:$0xff]
        %v757 = vld [vmem:[%s650 + $0x290] sm:$0xff]
        %v758 = vld [vmem:[%s650 + $0x298] sm:$0xff]
        %v759 = vld [vmem:[%s650 + $0x2a0] sm:$0xff]
        %v760 = vld [vmem:[%s650 + $0x2a8] sm:$0xff]
        %v761 = vld [vmem:[%s650 + $0x2b0] sm:$0xff]
        %v762 = vld [vmem:[%s650 + $0x2b8] sm:$0xff]
        %v763 = vld [vmem:[%s650 + $0x2c0] sm:$0xff]
        %v764 = vld [vmem:[%s650 + $0x2c8] sm:$0xff]
        %v765 = vld [vmem:[%s650 + $0x2d0] sm:$0xff]
        %v766 = vld [vmem:[%s650 + $0x2d8] sm:$0xff]
        %v767 = vld [vmem:[%s650 + $0x2e0] sm:$0xff]
        %v768 = vld [vmem:[%s650 + $0x2e8] sm:$0xff]
        %v769 = vld [vmem:[%s650 + $0x2f0] sm:$0xff]
        %v770 = vld [vmem:[%s650 + $0x2f8] sm:$0xff]
        %v771 = vld [vmem:[%s650 + $0x300] sm:$0xff]
        %v772 = vld [vmem:[%s650 + $0x308] sm:$0xff]
        %v773 = vld [vmem:[%s650 + $0x310] sm:$0xff]
        %v774 = vld [vmem:[%s650 + $0x318] sm:$0xff]
        %v775 = vld [vmem:[%s650 + $0x320] sm:$0xff]
        %v776 = vld [vmem:[%s650 + $0x328] sm:$0xff]
        %v777 = vld [vmem:[%s650 + $0x330] sm:$0xff]
        %v778 = vld [vmem:[%s650 + $0x338] sm:$0xff]
        %v779 = vld [vmem:[%s650 + $0x340] sm:$0xff]
        %v780 = vld [vmem:[%s650 + $0x348] sm:$0xff]
        %v781 = vld [vmem:[%s650 + $0x350] sm:$0xff]
        %v782 = vld [vmem:[%s650 + $0x358] sm:$0xff]
        %v783 = vld [vmem:[%s650 + $0x360] sm:$0xff]
        %v784 = vld [vmem:[%s650 + $0x368] sm:$0xff]
        %v785 = vld [vmem:[%s650 + $0x370] sm:$0xff]
        %v786 = vld [vmem:[%s650 + $0x378] sm:$0xff]
        %v787 = vld [vmem:[%s650 + $0x380] sm:$0xff]
        %v788 = vld [vmem:[%s650 + $0x388] sm:$0xff]
        %v789 = vld [vmem:[%s650 + $0x390] sm:$0xff]
        %v790 = vld [vmem:[%s650 + $0x398] sm:$0xff]
        %v791 = vld [vmem:[%s650 + $0x3a0] sm:$0xff]
        %v792 = vld [vmem:[%s650 + $0x3a8] sm:$0xff]
        %v793 = vld [vmem:[%s650 + $0x3b0] sm:$0xff]
        %v794 = vld [vmem:[%s650 + $0x3b8] sm:$0xff]
        %v795 = vld [vmem:[%s650 + $0x3c0] sm:$0xff]
        %v796 = vld [vmem:[%s650 + $0x3c8] sm:$0xff]
        %v797 = vld [vmem:[%s650 + $0x3d0] sm:$0xff]
        %v798 = vld [vmem:[%s650 + $0x3d8] sm:$0xff]
        %v799 = vld [vmem:[%s650 + $0x3e0] sm:$0xff]
        %v800 = vld [vmem:[%s650 + $0x3e8] sm:$0xff]
        %v801 = vld [vmem:[%s650 + $0x3f0] sm:$0xff]
        %v802 = vld [vmem:[%s650 + $0x3f8] sm:$0xff]
        %v803 = vld [vmem:[%s650 + $0x400] sm:$0xff]
        %v804 = vld [vmem:[%s650 + $0x408] sm:$0xff]
        %v805 = vld [vmem:[%s650 + $0x410] sm:$0xff]
        %v806 = vld [vmem:[%s650 + $0x418] sm:$0xff]
        %v807 = vld [vmem:[%s650 + $0x420] sm:$0xff]
        %v808 = vld [vmem:[%s650 + $0x428] sm:$0xff]
        %v809 = vld [vmem:[%s650 + $0x430] sm:$0xff]
        %v810 = vld [vmem:[%s650 + $0x438] sm:$0xff]
        %v811 = vld [vmem:[%s650 + $0x440] sm:$0xff]
        %v812 = vld [vmem:[%s650 + $0x448] sm:$0xff]
        %v813 = vld [vmem:[%s650 + $0x450] sm:$0xff]
        %v814 = vld [vmem:[%s650 + $0x458] sm:$0xff]
        %v815 = vld [vmem:[%s650 + $0x460] sm:$0xff]
        %v816 = vld [vmem:[%s650 + $0x468] sm:$0xff]
        %v817 = vld [vmem:[%s650 + $0x470] sm:$0xff]
        %v818 = vld [vmem:[%s650 + $0x478] sm:$0xff]
        %v819 = vld [vmem:[%s650 + $0x480] sm:$0xff]
        %v820 = vld [vmem:[%s650 + $0x488] sm:$0xff]
        %v821 = vld [vmem:[%s650 + $0x490] sm:$0xff]
        %v822 = vld [vmem:[%s650 + $0x498] sm:$0xff]
        %v823 = vld [vmem:[%s650 + $0x4a0] sm:$0xff]
        %v824 = vld [vmem:[%s650 + $0x4a8] sm:$0xff]
        %v825 = vld [vmem:[%s650 + $0x4b0] sm:$0xff]
        %v826 = vld [vmem:[%s650 + $0x4b8] sm:$0xff]
        %v827 = vld [vmem:[%s650 + $0x4c0] sm:$0xff]
        %v828 = vld [vmem:[%s650 + $0x4c8] sm:$0xff]
        %v829 = vld [vmem:[%s650 + $0x4d0] sm:$0xff]
        %v830 = vld [vmem:[%s650 + $0x4d8] sm:$0xff]
        %v831 = vld [vmem:[%s650 + $0x4e0] sm:$0xff]
        %v832 = vld [vmem:[%s650 + $0x4e8] sm:$0xff]
        %v833 = vld [vmem:[%s650 + $0x4f0] sm:$0xff]
        %v834 = vld [vmem:[%s650 + $0x4f8] sm:$0xff]
        %v835 = vld [vmem:[%s650 + $0x500] sm:$0xff]
        %v836 = vld [vmem:[%s650 + $0x508] sm:$0xff]
        %v837 = vld [vmem:[%s650 + $0x510] sm:$0xff]
        %v838 = vld [vmem:[%s650 + $0x518] sm:$0xff]
        %v839 = vld [vmem:[%s650 + $0x520] sm:$0xff]
        %v840 = vld [vmem:[%s650 + $0x528] sm:$0xff]
        %v841 = vld [vmem:[%s650 + $0x530] sm:$0xff]
        %v842 = vld [vmem:[%s650 + $0x538] sm:$0xff]
        %v843 = vld [vmem:[%s650 + $0x540] sm:$0xff]
        %v844 = vld [vmem:[%s650 + $0x548] sm:$0xff]
        %v845 = vld [vmem:[%s650 + $0x550] sm:$0xff]
        %v846 = vld [vmem:[%s650 + $0x558] sm:$0xff]
        %v847 = vld [vmem:[%s650 + $0x560] sm:$0xff]
        %v848 = vld [vmem:[%s650 + $0x568] sm:$0xff]
        %v849 = vld [vmem:[%s650 + $0x570] sm:$0xff]
        %v850 = vld [vmem:[%s650 + $0x578] sm:$0xff]
        %v851 = vld [vmem:[%s650 + $0x580] sm:$0xff]
        %v852 = vld [vmem:[%s650 + $0x588] sm:$0xff]
        %v853 = vld [vmem:[%s650 + $0x590] sm:$0xff]
        %v854 = vld [vmem:[%s650 + $0x598] sm:$0xff]
        %v855 = vld [vmem:[%s650 + $0x5a0] sm:$0xff]
        %v856 = vld [vmem:[%s650 + $0x5a8] sm:$0xff]
        %v857 = vld [vmem:[%s650 + $0x5b0] sm:$0xff]
        %v858 = vld [vmem:[%s650 + $0x5b8] sm:$0xff]
        %v859 = vld [vmem:[%s650 + $0x5c0] sm:$0xff]
        %v860 = vld [vmem:[%s650 + $0x5c8] sm:$0xff]
        %v861 = vld [vmem:[%s650 + $0x5d0] sm:$0xff]
        %v862 = vld [vmem:[%s650 + $0x5d8] sm:$0xff]
        %v863 = vld [vmem:[%s650 + $0x5e0] sm:$0xff]
        %v864 = vld [vmem:[%s650 + $0x5e8] sm:$0xff]
        %v865 = vld [vmem:[%s650 + $0x5f0] sm:$0xff]
        %v866 = vld [vmem:[%s650 + $0x5f8] sm:$0xff]
        %v867 = vld [vmem:[%s650 + $0x600] sm:$0xff]
        %v868 = vld [vmem:[%s650 + $0x608] sm:$0xff]
        %v869 = vld [vmem:[%s650 + $0x610] sm:$0xff]
        %v870 = vld [vmem:[%s650 + $0x618] sm:$0xff]
        %v871 = vld [vmem:[%s650 + $0x620] sm:$0xff]
        %v872 = vld [vmem:[%s650 + $0x628] sm:$0xff]
        %v873 = vld [vmem:[%s650 + $0x630] sm:$0xff]
        %v874 = vld [vmem:[%s650 + $0x638] sm:$0xff]
        %v875 = vld [vmem:[%s650 + $0x640] sm:$0xff]
        %v876 = vld [vmem:[%s650 + $0x648] sm:$0xff]
        %v877 = vld [vmem:[%s650 + $0x650] sm:$0xff]
        %v878 = vld [vmem:[%s650 + $0x658] sm:$0xff]
        %v879 = vld [vmem:[%s650 + $0x660] sm:$0xff]
        %v880 = vld [vmem:[%s650 + $0x668] sm:$0xff]
        %v881 = vld [vmem:[%s650 + $0x670] sm:$0xff]
        %v882 = vld [vmem:[%s650 + $0x678] sm:$0xff]
        %v883 = vld [vmem:[%s650 + $0x680] sm:$0xff]
        %v884 = vld [vmem:[%s650 + $0x688] sm:$0xff]
        %v885 = vld [vmem:[%s650 + $0x690] sm:$0xff]
        %v886 = vld [vmem:[%s650 + $0x698] sm:$0xff]
        %v887 = vld [vmem:[%s650 + $0x6a0] sm:$0xff]
        %v888 = vld [vmem:[%s650 + $0x6a8] sm:$0xff]
        %v889 = vld [vmem:[%s650 + $0x6b0] sm:$0xff]
        %v890 = vld [vmem:[%s650 + $0x6b8] sm:$0xff]
        %v891 = vld [vmem:[%s650 + $0x6c0] sm:$0xff]
        %v892 = vld [vmem:[%s650 + $0x6c8] sm:$0xff]
        %v893 = vld [vmem:[%s650 + $0x6d0] sm:$0xff]
        %v894 = vld [vmem:[%s650 + $0x6d8] sm:$0xff]
        %v895 = vld [vmem:[%s650 + $0x6e0] sm:$0xff]
        %v896 = vld [vmem:[%s650 + $0x6e8] sm:$0xff]
        %v897 = vld [vmem:[%s650 + $0x6f0] sm:$0xff]
        %v898 = vld [vmem:[%s650 + $0x6f8] sm:$0xff]
        %v899 = vld [vmem:[%s650 + $0x700] sm:$0xff]
        %v900 = vld [vmem:[%s650 + $0x708] sm:$0xff]
        %v901 = vld [vmem:[%s650 + $0x710] sm:$0xff]
        %v902 = vld [vmem:[%s650 + $0x718] sm:$0xff]
        %v903 = vld [vmem:[%s650 + $0x720] sm:$0xff]
        %v904 = vld [vmem:[%s650 + $0x728] sm:$0xff]
        %v905 = vld [vmem:[%s650 + $0x730] sm:$0xff]
        %v906 = vld [vmem:[%s650 + $0x738] sm:$0xff]
        %v907 = vld [vmem:[%s650 + $0x740] sm:$0xff]
        %v908 = vld [vmem:[%s650 + $0x748] sm:$0xff]
        %v909 = vld [vmem:[%s650 + $0x750] sm:$0xff]
        %v910 = vld [vmem:[%s650 + $0x758] sm:$0xff]
        %v911 = vld [vmem:[%s650 + $0x760] sm:$0xff]
        %v912 = vld [vmem:[%s650 + $0x768] sm:$0xff]
        %v913 = vld [vmem:[%s650 + $0x770] sm:$0xff]
        %v914 = vld [vmem:[%s650 + $0x778] sm:$0xff]
        %v915 = vld [vmem:[%s650 + $0x780] sm:$0xff]
        %v916 = vld [vmem:[%s650 + $0x788] sm:$0xff]
        %v917 = vld [vmem:[%s650 + $0x790] sm:$0xff]
        %v918 = vld [vmem:[%s650 + $0x798] sm:$0xff]
        %v919 = vld [vmem:[%s650 + $0x7a0] sm:$0xff]
        %v920 = vld [vmem:[%s650 + $0x7a8] sm:$0xff]
        %v921 = vld [vmem:[%s650 + $0x7b0] sm:$0xff]
        %v922 = vld [vmem:[%s650 + $0x7b8] sm:$0xff]
        %v923 = vld [vmem:[%s650 + $0x7c0] sm:$0xff]
        %v924 = vld [vmem:[%s650 + $0x7c8] sm:$0xff]
        %v925 = vld [vmem:[%s650 + $0x7d0] sm:$0xff]
        %v926 = vld [vmem:[%s650 + $0x7d8] sm:$0xff]
        %v927 = vld [vmem:[%s650 + $0x7e0] sm:$0xff]
        %v928 = vld [vmem:[%s650 + $0x7e8] sm:$0xff]
        %v929 = vld [vmem:[%s650 + $0x7f0] sm:$0xff]
        %v930 = vld [vmem:[%s650 + $0x7f8] sm:$0xff]
        %v1187 = vunpack.c.l.b16 %v675
        %v1188 = vunpack.c.h.b16 %v675
        %v1189 = vunpack.c.l.b16 %v676
        %v1190 = vunpack.c.h.b16 %v676
        %v1191 = vunpack.c.l.b16 %v677
        %v1192 = vunpack.c.h.b16 %v677
        %v1193 = vunpack.c.l.b16 %v678
        %v1194 = vunpack.c.h.b16 %v678
        %v1195 = vunpack.c.l.b16 %v679
        %v1196 = vunpack.c.h.b16 %v679
        %v1197 = vunpack.c.l.b16 %v680
        %v1198 = vunpack.c.h.b16 %v680
        %v1199 = vunpack.c.l.b16 %v681
        %v1200 = vunpack.c.h.b16 %v681
        %v1201 = vunpack.c.l.b16 %v682
        %v1202 = vunpack.c.h.b16 %v682
        %v1203 = vunpack.c.l.b16 %v683
        %v1204 = vunpack.c.h.b16 %v683
        %v1205 = vunpack.c.l.b16 %v684
        %v1206 = vunpack.c.h.b16 %v684
        %v1207 = vunpack.c.l.b16 %v685
        %v1208 = vunpack.c.h.b16 %v685
        %v1209 = vunpack.c.l.b16 %v686
        %v1210 = vunpack.c.h.b16 %v686
        %v1211 = vunpack.c.l.b16 %v687
        %v1212 = vunpack.c.h.b16 %v687
        %v1213 = vunpack.c.l.b16 %v688
        %v1214 = vunpack.c.h.b16 %v688
        %v1215 = vunpack.c.l.b16 %v689
        %v1216 = vunpack.c.h.b16 %v689
        %v1217 = vunpack.c.l.b16 %v690
        %v1218 = vunpack.c.h.b16 %v690
        %v1219 = vunpack.c.l.b16 %v691
        %v1220 = vunpack.c.h.b16 %v691
        %v1221 = vunpack.c.l.b16 %v692
        %v1222 = vunpack.c.h.b16 %v692
        %v1223 = vunpack.c.l.b16 %v693
        %v1224 = vunpack.c.h.b16 %v693
        %v1225 = vunpack.c.l.b16 %v694
        %v1226 = vunpack.c.h.b16 %v694
        %v1227 = vunpack.c.l.b16 %v695
        %v1228 = vunpack.c.h.b16 %v695
        %v1229 = vunpack.c.l.b16 %v696
        %v1230 = vunpack.c.h.b16 %v696
        %v1231 = vunpack.c.l.b16 %v697
        %v1232 = vunpack.c.h.b16 %v697
        %v1233 = vunpack.c.l.b16 %v698
        %v1234 = vunpack.c.h.b16 %v698
        %v1235 = vunpack.c.l.b16 %v699
        %v1236 = vunpack.c.h.b16 %v699
        %v1237 = vunpack.c.l.b16 %v700
        %v1238 = vunpack.c.h.b16 %v700
        %v1239 = vunpack.c.l.b16 %v701
        %v1240 = vunpack.c.h.b16 %v701
        %v1241 = vunpack.c.l.b16 %v702
        %v1242 = vunpack.c.h.b16 %v702
        %v1243 = vunpack.c.l.b16 %v703
        %v1244 = vunpack.c.h.b16 %v703
        %v1245 = vunpack.c.l.b16 %v704
        %v1246 = vunpack.c.h.b16 %v704
        %v1247 = vunpack.c.l.b16 %v705
        %v1248 = vunpack.c.h.b16 %v705
        %v1249 = vunpack.c.l.b16 %v706
        %v1250 = vunpack.c.h.b16 %v706
        %v1251 = vunpack.c.l.b16 %v707
        %v1252 = vunpack.c.h.b16 %v707
        %v1253 = vunpack.c.l.b16 %v708
        %v1254 = vunpack.c.h.b16 %v708
        %v1255 = vunpack.c.l.b16 %v709
        %v1256 = vunpack.c.h.b16 %v709
        %v1257 = vunpack.c.l.b16 %v710
        %v1258 = vunpack.c.h.b16 %v710
        %v1259 = vunpack.c.l.b16 %v711
        %v1260 = vunpack.c.h.b16 %v711
        %v1261 = vunpack.c.l.b16 %v712
        %v1262 = vunpack.c.h.b16 %v712
        %v1263 = vunpack.c.l.b16 %v713
        %v1264 = vunpack.c.h.b16 %v713
        %v1265 = vunpack.c.l.b16 %v714
        %v1266 = vunpack.c.h.b16 %v714
        %v1267 = vunpack.c.l.b16 %v715
        %v1268 = vunpack.c.h.b16 %v715
        %v1269 = vunpack.c.l.b16 %v716
        %v1270 = vunpack.c.h.b16 %v716
        %v1271 = vunpack.c.l.b16 %v717
        %v1272 = vunpack.c.h.b16 %v717
        %v1273 = vunpack.c.l.b16 %v718
        %v1274 = vunpack.c.h.b16 %v718
        %v1275 = vunpack.c.l.b16 %v719
        %v1276 = vunpack.c.h.b16 %v719
        %v1277 = vunpack.c.l.b16 %v720
        %v1278 = vunpack.c.h.b16 %v720
        %v1279 = vunpack.c.l.b16 %v721
        %v1280 = vunpack.c.h.b16 %v721
        %v1281 = vunpack.c.l.b16 %v722
        %v1282 = vunpack.c.h.b16 %v722
        %v1283 = vunpack.c.l.b16 %v723
        %v1284 = vunpack.c.h.b16 %v723
        %v1285 = vunpack.c.l.b16 %v724
        %v1286 = vunpack.c.h.b16 %v724
        %v1287 = vunpack.c.l.b16 %v725
        %v1288 = vunpack.c.h.b16 %v725
        %v1289 = vunpack.c.l.b16 %v726
        %v1290 = vunpack.c.h.b16 %v726
        %v1291 = vunpack.c.l.b16 %v727
        %v1292 = vunpack.c.h.b16 %v727
        %v1293 = vunpack.c.l.b16 %v728
        %v1294 = vunpack.c.h.b16 %v728
        %v1295 = vunpack.c.l.b16 %v729
        %v1296 = vunpack.c.h.b16 %v729
        %v1297 = vunpack.c.l.b16 %v730
        %v1298 = vunpack.c.h.b16 %v730
        %v1299 = vunpack.c.l.b16 %v731
        %v1300 = vunpack.c.h.b16 %v731
        %v1301 = vunpack.c.l.b16 %v732
        %v1302 = vunpack.c.h.b16 %v732
        %v1303 = vunpack.c.l.b16 %v733
        %v1304 = vunpack.c.h.b16 %v733
        %v1305 = vunpack.c.l.b16 %v734
        %v1306 = vunpack.c.h.b16 %v734
        %v1307 = vunpack.c.l.b16 %v735
        %v1308 = vunpack.c.h.b16 %v735
        %v1309 = vunpack.c.l.b16 %v736
        %v1310 = vunpack.c.h.b16 %v736
        %v1311 = vunpack.c.l.b16 %v737
        %v1312 = vunpack.c.h.b16 %v737
        %v1313 = vunpack.c.l.b16 %v738
        %v1314 = vunpack.c.h.b16 %v738
        %v1315 = vunpack.c.l.b16 %v739
        %v1316 = vunpack.c.h.b16 %v739
        %v1317 = vunpack.c.l.b16 %v740
        %v1318 = vunpack.c.h.b16 %v740
        %v1319 = vunpack.c.l.b16 %v741
        %v1320 = vunpack.c.h.b16 %v741
        %v1321 = vunpack.c.l.b16 %v742
        %v1322 = vunpack.c.h.b16 %v742
        %v1323 = vunpack.c.l.b16 %v743
        %v1324 = vunpack.c.h.b16 %v743
        %v1325 = vunpack.c.l.b16 %v744
        %v1326 = vunpack.c.h.b16 %v744
        %v1327 = vunpack.c.l.b16 %v745
        %v1328 = vunpack.c.h.b16 %v745
        %v1329 = vunpack.c.l.b16 %v746
        %v1330 = vunpack.c.h.b16 %v746
        %v1331 = vunpack.c.l.b16 %v747
        %v1332 = vunpack.c.h.b16 %v747
        %v1333 = vunpack.c.l.b16 %v748
        %v1334 = vunpack.c.h.b16 %v748
        %v1335 = vunpack.c.l.b16 %v749
        %v1336 = vunpack.c.h.b16 %v749
        %v1337 = vunpack.c.l.b16 %v750
        %v1338 = vunpack.c.h.b16 %v750
        %v1339 = vunpack.c.l.b16 %v751
        %v1340 = vunpack.c.h.b16 %v751
        %v1341 = vunpack.c.l.b16 %v752
        %v1342 = vunpack.c.h.b16 %v752
        %v1343 = vunpack.c.l.b16 %v753
        %v1344 = vunpack.c.h.b16 %v753
        %v1345 = vunpack.c.l.b16 %v754
        %v1346 = vunpack.c.h.b16 %v754
        %v1347 = vunpack.c.l.b16 %v755
        %v1348 = vunpack.c.h.b16 %v755
        %v1349 = vunpack.c.l.b16 %v756
        %v1350 = vunpack.c.h.b16 %v756
        %v1351 = vunpack.c.l.b16 %v757
        %v1352 = vunpack.c.h.b16 %v757
        %v1353 = vunpack.c.l.b16 %v758
        %v1354 = vunpack.c.h.b16 %v758
        %v1355 = vunpack.c.l.b16 %v759
        %v1356 = vunpack.c.h.b16 %v759
        %v1357 = vunpack.c.l.b16 %v760
        %v1358 = vunpack.c.h.b16 %v760
        %v1359 = vunpack.c.l.b16 %v761
        %v1360 = vunpack.c.h.b16 %v761
        %v1361 = vunpack.c.l.b16 %v762
        %v1362 = vunpack.c.h.b16 %v762
        %v1363 = vunpack.c.l.b16 %v763
        %v1364 = vunpack.c.h.b16 %v763
        %v1365 = vunpack.c.l.b16 %v764
        %v1366 = vunpack.c.h.b16 %v764
        %v1367 = vunpack.c.l.b16 %v765
        %v1368 = vunpack.c.h.b16 %v765
        %v1369 = vunpack.c.l.b16 %v766
        %v1370 = vunpack.c.h.b16 %v766
        %v1371 = vunpack.c.l.b16 %v767
        %v1372 = vunpack.c.h.b16 %v767
        %v1373 = vunpack.c.l.b16 %v768
        %v1374 = vunpack.c.h.b16 %v768
        %v1375 = vunpack.c.l.b16 %v769
        %v1376 = vunpack.c.h.b16 %v769
        %v1377 = vunpack.c.l.b16 %v770
        %v1378 = vunpack.c.h.b16 %v770
        %v1379 = vunpack.c.l.b16 %v771
        %v1380 = vunpack.c.h.b16 %v771
        %v1381 = vunpack.c.l.b16 %v772
        %v1382 = vunpack.c.h.b16 %v772
        %v1383 = vunpack.c.l.b16 %v773
        %v1384 = vunpack.c.h.b16 %v773
        %v1385 = vunpack.c.l.b16 %v774
        %v1386 = vunpack.c.h.b16 %v774
        %v1387 = vunpack.c.l.b16 %v775
        %v1388 = vunpack.c.h.b16 %v775
        %v1389 = vunpack.c.l.b16 %v776
        %v1390 = vunpack.c.h.b16 %v776
        %v1391 = vunpack.c.l.b16 %v777
        %v1392 = vunpack.c.h.b16 %v777
        %v1393 = vunpack.c.l.b16 %v778
        %v1394 = vunpack.c.h.b16 %v778
        %v1395 = vunpack.c.l.b16 %v779
        %v1396 = vunpack.c.h.b16 %v779
        %v1397 = vunpack.c.l.b16 %v780
        %v1398 = vunpack.c.h.b16 %v780
        %v1399 = vunpack.c.l.b16 %v781
        %v1400 = vunpack.c.h.b16 %v781
        %v1401 = vunpack.c.l.b16 %v782
        %v1402 = vunpack.c.h.b16 %v782
        %v1403 = vunpack.c.l.b16 %v783
        %v1404 = vunpack.c.h.b16 %v783
        %v1405 = vunpack.c.l.b16 %v784
        %v1406 = vunpack.c.h.b16 %v784
        %v1407 = vunpack.c.l.b16 %v785
        %v1408 = vunpack.c.h.b16 %v785
        %v1409 = vunpack.c.l.b16 %v786
        %v1410 = vunpack.c.h.b16 %v786
        %v1411 = vunpack.c.l.b16 %v787
        %v1412 = vunpack.c.h.b16 %v787
        %v1413 = vunpack.c.l.b16 %v788
        %v1414 = vunpack.c.h.b16 %v788
        %v1415 = vunpack.c.l.b16 %v789
        %v1416 = vunpack.c.h.b16 %v789
        %v1417 = vunpack.c.l.b16 %v790
        %v1418 = vunpack.c.h.b16 %v790
        %v1419 = vunpack.c.l.b16 %v791
        %v1420 = vunpack.c.h.b16 %v791
        %v1421 = vunpack.c.l.b16 %v792
        %v1422 = vunpack.c.h.b16 %v792
        %v1423 = vunpack.c.l.b16 %v793
        %v1424 = vunpack.c.h.b16 %v793
        %v1425 = vunpack.c.l.b16 %v794
        %v1426 = vunpack.c.h.b16 %v794
        %v1427 = vunpack.c.l.b16 %v795
        %v1428 = vunpack.c.h.b16 %v795
        %v1429 = vunpack.c.l.b16 %v796
        %v1430 = vunpack.c.h.b16 %v796
        %v1431 = vunpack.c.l.b16 %v797
        %v1432 = vunpack.c.h.b16 %v797
        %v1433 = vunpack.c.l.b16 %v798
        %v1434 = vunpack.c.h.b16 %v798
        %v1435 = vunpack.c.l.b16 %v799
        %v1436 = vunpack.c.h.b16 %v799
        %v1437 = vunpack.c.l.b16 %v800
        %v1438 = vunpack.c.h.b16 %v800
        %v1439 = vunpack.c.l.b16 %v801
        %v1440 = vunpack.c.h.b16 %v801
        %v1441 = vunpack.c.l.b16 %v802
        %v1442 = vunpack.c.h.b16 %v802
        %v1443 = vunpack.c.l.b16 %v803
        %v1444 = vunpack.c.h.b16 %v803
        %v1445 = vunpack.c.l.b16 %v804
        %v1446 = vunpack.c.h.b16 %v804
        %v1447 = vunpack.c.l.b16 %v805
        %v1448 = vunpack.c.h.b16 %v805
        %v1449 = vunpack.c.l.b16 %v806
        %v1450 = vunpack.c.h.b16 %v806
        %v1451 = vunpack.c.l.b16 %v807
        %v1452 = vunpack.c.h.b16 %v807
        %v1453 = vunpack.c.l.b16 %v808
        %v1454 = vunpack.c.h.b16 %v808
        %v1455 = vunpack.c.l.b16 %v809
        %v1456 = vunpack.c.h.b16 %v809
        %v1457 = vunpack.c.l.b16 %v810
        %v1458 = vunpack.c.h.b16 %v810
        %v1459 = vunpack.c.l.b16 %v811
        %v1460 = vunpack.c.h.b16 %v811
        %v1461 = vunpack.c.l.b16 %v812
        %v1462 = vunpack.c.h.b16 %v812
        %v1463 = vunpack.c.l.b16 %v813
        %v1464 = vunpack.c.h.b16 %v813
        %v1465 = vunpack.c.l.b16 %v814
        %v1466 = vunpack.c.h.b16 %v814
        %v1467 = vunpack.c.l.b16 %v815
        %v1468 = vunpack.c.h.b16 %v815
        %v1469 = vunpack.c.l.b16 %v816
        %v1470 = vunpack.c.h.b16 %v816
        %v1471 = vunpack.c.l.b16 %v817
        %v1472 = vunpack.c.h.b16 %v817
        %v1473 = vunpack.c.l.b16 %v818
        %v1474 = vunpack.c.h.b16 %v818
        %v1475 = vunpack.c.l.b16 %v819
        %v1476 = vunpack.c.h.b16 %v819
        %v1477 = vunpack.c.l.b16 %v820
        %v1478 = vunpack.c.h.b16 %v820
        %v1479 = vunpack.c.l.b16 %v821
        %v1480 = vunpack.c.h.b16 %v821
        %v1481 = vunpack.c.l.b16 %v822
        %v1482 = vunpack.c.h.b16 %v822
        %v1483 = vunpack.c.l.b16 %v823
        %v1484 = vunpack.c.h.b16 %v823
        %v1485 = vunpack.c.l.b16 %v824
        %v1486 = vunpack.c.h.b16 %v824
        %v1487 = vunpack.c.l.b16 %v825
        %v1488 = vunpack.c.h.b16 %v825
        %v1489 = vunpack.c.l.b16 %v826
        %v1490 = vunpack.c.h.b16 %v826
        %v1491 = vunpack.c.l.b16 %v827
        %v1492 = vunpack.c.h.b16 %v827
        %v1493 = vunpack.c.l.b16 %v828
        %v1494 = vunpack.c.h.b16 %v828
        %v1495 = vunpack.c.l.b16 %v829
        %v1496 = vunpack.c.h.b16 %v829
        %v1497 = vunpack.c.l.b16 %v830
        %v1498 = vunpack.c.h.b16 %v830
        %v1499 = vunpack.c.l.b16 %v831
        %v1500 = vunpack.c.h.b16 %v831
        %v1501 = vunpack.c.l.b16 %v832
        %v1502 = vunpack.c.h.b16 %v832
        %v1503 = vunpack.c.l.b16 %v833
        %v1504 = vunpack.c.h.b16 %v833
        %v1505 = vunpack.c.l.b16 %v834
        %v1506 = vunpack.c.h.b16 %v834
        %v1507 = vunpack.c.l.b16 %v835
        %v1508 = vunpack.c.h.b16 %v835
        %v1509 = vunpack.c.l.b16 %v836
        %v1510 = vunpack.c.h.b16 %v836
        %v1511 = vunpack.c.l.b16 %v837
        %v1512 = vunpack.c.h.b16 %v837
        %v1513 = vunpack.c.l.b16 %v838
        %v1514 = vunpack.c.h.b16 %v838
        %v1515 = vunpack.c.l.b16 %v839
        %v1516 = vunpack.c.h.b16 %v839
        %v1517 = vunpack.c.l.b16 %v840
        %v1518 = vunpack.c.h.b16 %v840
        %v1519 = vunpack.c.l.b16 %v841
        %v1520 = vunpack.c.h.b16 %v841
        %v1521 = vunpack.c.l.b16 %v842
        %v1522 = vunpack.c.h.b16 %v842
        %v1523 = vunpack.c.l.b16 %v843
        %v1524 = vunpack.c.h.b16 %v843
        %v1525 = vunpack.c.l.b16 %v844
        %v1526 = vunpack.c.h.b16 %v844
        %v1527 = vunpack.c.l.b16 %v845
        %v1528 = vunpack.c.h.b16 %v845
        %v1529 = vunpack.c.l.b16 %v846
        %v1530 = vunpack.c.h.b16 %v846
        %v1531 = vunpack.c.l.b16 %v847
        %v1532 = vunpack.c.h.b16 %v847
        %v1533 = vunpack.c.l.b16 %v848
        %v1534 = vunpack.c.h.b16 %v848
        %v1535 = vunpack.c.l.b16 %v849
        %v1536 = vunpack.c.h.b16 %v849
        %v1537 = vunpack.c.l.b16 %v850
        %v1538 = vunpack.c.h.b16 %v850
        %v1539 = vunpack.c.l.b16 %v851
        %v1540 = vunpack.c.h.b16 %v851
        %v1541 = vunpack.c.l.b16 %v852
        %v1542 = vunpack.c.h.b16 %v852
        %v1543 = vunpack.c.l.b16 %v853
        %v1544 = vunpack.c.h.b16 %v853
        %v1545 = vunpack.c.l.b16 %v854
        %v1546 = vunpack.c.h.b16 %v854
        %v1547 = vunpack.c.l.b16 %v855
        %v1548 = vunpack.c.h.b16 %v855
        %v1549 = vunpack.c.l.b16 %v856
        %v1550 = vunpack.c.h.b16 %v856
        %v1551 = vunpack.c.l.b16 %v857
        %v1552 = vunpack.c.h.b16 %v857
        %v1553 = vunpack.c.l.b16 %v858
        %v1554 = vunpack.c.h.b16 %v858
        %v1555 = vunpack.c.l.b16 %v859
        %v1556 = vunpack.c.h.b16 %v859
        %v1557 = vunpack.c.l.b16 %v860
        %v1558 = vunpack.c.h.b16 %v860
        %v1559 = vunpack.c.l.b16 %v861
        %v1560 = vunpack.c.h.b16 %v861
        %v1561 = vunpack.c.l.b16 %v862
        %v1562 = vunpack.c.h.b16 %v862
        %v1563 = vunpack.c.l.b16 %v863
        %v1564 = vunpack.c.h.b16 %v863
        %v1565 = vunpack.c.l.b16 %v864
        %v1566 = vunpack.c.h.b16 %v864
        %v1567 = vunpack.c.l.b16 %v865
        %v1568 = vunpack.c.h.b16 %v865
        %v1569 = vunpack.c.l.b16 %v866
        %v1570 = vunpack.c.h.b16 %v866
        %v1571 = vunpack.c.l.b16 %v867
        %v1572 = vunpack.c.h.b16 %v867
        %v1573 = vunpack.c.l.b16 %v868
        %v1574 = vunpack.c.h.b16 %v868
        %v1575 = vunpack.c.l.b16 %v869
        %v1576 = vunpack.c.h.b16 %v869
        %v1577 = vunpack.c.l.b16 %v870
        %v1578 = vunpack.c.h.b16 %v870
        %v1579 = vunpack.c.l.b16 %v871
        %v1580 = vunpack.c.h.b16 %v871
        %v1581 = vunpack.c.l.b16 %v872
        %v1582 = vunpack.c.h.b16 %v872
        %v1583 = vunpack.c.l.b16 %v873
        %v1584 = vunpack.c.h.b16 %v873
        %v1585 = vunpack.c.l.b16 %v874
        %v1586 = vunpack.c.h.b16 %v874
        %v1587 = vunpack.c.l.b16 %v875
        %v1588 = vunpack.c.h.b16 %v875
        %v1589 = vunpack.c.l.b16 %v876
        %v1590 = vunpack.c.h.b16 %v876
        %v1591 = vunpack.c.l.b16 %v877
        %v1592 = vunpack.c.h.b16 %v877
        %v1593 = vunpack.c.l.b16 %v878
        %v1594 = vunpack.c.h.b16 %v878
        %v1595 = vunpack.c.l.b16 %v879
        %v1596 = vunpack.c.h.b16 %v879
        %v1597 = vunpack.c.l.b16 %v880
        %v1598 = vunpack.c.h.b16 %v880
        %v1599 = vunpack.c.l.b16 %v881
        %v1600 = vunpack.c.h.b16 %v881
        %v1601 = vunpack.c.l.b16 %v882
        %v1602 = vunpack.c.h.b16 %v882
        %v1603 = vunpack.c.l.b16 %v883
        %v1604 = vunpack.c.h.b16 %v883
        %v1605 = vunpack.c.l.b16 %v884
        %v1606 = vunpack.c.h.b16 %v884
        %v1607 = vunpack.c.l.b16 %v885
        %v1608 = vunpack.c.h.b16 %v885
        %v1609 = vunpack.c.l.b16 %v886
        %v1610 = vunpack.c.h.b16 %v886
        %v1611 = vunpack.c.l.b16 %v887
        %v1612 = vunpack.c.h.b16 %v887
        %v1613 = vunpack.c.l.b16 %v888
        %v1614 = vunpack.c.h.b16 %v888
        %v1615 = vunpack.c.l.b16 %v889
        %v1616 = vunpack.c.h.b16 %v889
        %v1617 = vunpack.c.l.b16 %v890
        %v1618 = vunpack.c.h.b16 %v890
        %v1619 = vunpack.c.l.b16 %v891
        %v1620 = vunpack.c.h.b16 %v891
        %v1621 = vunpack.c.l.b16 %v892
        %v1622 = vunpack.c.h.b16 %v892
        %v1623 = vunpack.c.l.b16 %v893
        %v1624 = vunpack.c.h.b16 %v893
        %v1625 = vunpack.c.l.b16 %v894
        %v1626 = vunpack.c.h.b16 %v894
        %v1627 = vunpack.c.l.b16 %v895
        %v1628 = vunpack.c.h.b16 %v895
        %v1629 = vunpack.c.l.b16 %v896
        %v1630 = vunpack.c.h.b16 %v896
        %v1631 = vunpack.c.l.b16 %v897
        %v1632 = vunpack.c.h.b16 %v897
        %v1633 = vunpack.c.l.b16 %v898
        %v1634 = vunpack.c.h.b16 %v898
        %v1635 = vunpack.c.l.b16 %v899
        %v1636 = vunpack.c.h.b16 %v899
        %v1637 = vunpack.c.l.b16 %v900
        %v1638 = vunpack.c.h.b16 %v900
        %v1639 = vunpack.c.l.b16 %v901
        %v1640 = vunpack.c.h.b16 %v901
        %v1641 = vunpack.c.l.b16 %v902
        %v1642 = vunpack.c.h.b16 %v902
        %v1643 = vunpack.c.l.b16 %v903
        %v1644 = vunpack.c.h.b16 %v903
        %v1645 = vunpack.c.l.b16 %v904
        %v1646 = vunpack.c.h.b16 %v904
        %v1647 = vunpack.c.l.b16 %v905
        %v1648 = vunpack.c.h.b16 %v905
        %v1649 = vunpack.c.l.b16 %v906
        %v1650 = vunpack.c.h.b16 %v906
        %v1651 = vunpack.c.l.b16 %v907
        %v1652 = vunpack.c.h.b16 %v907
        %v1653 = vunpack.c.l.b16 %v908
        %v1654 = vunpack.c.h.b16 %v908
        %v1655 = vunpack.c.l.b16 %v909
        %v1656 = vunpack.c.h.b16 %v909
        %v1657 = vunpack.c.l.b16 %v910
        %v1658 = vunpack.c.h.b16 %v910
        %v1659 = vunpack.c.l.b16 %v911
        %v1660 = vunpack.c.h.b16 %v911
        %v1661 = vunpack.c.l.b16 %v912
        %v1662 = vunpack.c.h.b16 %v912
        %v1663 = vunpack.c.l.b16 %v913
        %v1664 = vunpack.c.h.b16 %v913
        %v1665 = vunpack.c.l.b16 %v914
        %v1666 = vunpack.c.h.b16 %v914
        %v1667 = vunpack.c.l.b16 %v915
        %v1668 = vunpack.c.h.b16 %v915
        %v1669 = vunpack.c.l.b16 %v916
        %v1670 = vunpack.c.h.b16 %v916
        %v1671 = vunpack.c.l.b16 %v917
        %v1672 = vunpack.c.h.b16 %v917
        %v1673 = vunpack.c.l.b16 %v918
        %v1674 = vunpack.c.h.b16 %v918
        %v1675 = vunpack.c.l.b16 %v919
        %v1676 = vunpack.c.h.b16 %v919
        %v1677 = vunpack.c.l.b16 %v920
        %v1678 = vunpack.c.h.b16 %v920
        %v1679 = vunpack.c.l.b16 %v921
        %v1680 = vunpack.c.h.b16 %v921
        %v1681 = vunpack.c.l.b16 %v922
        %v1682 = vunpack.c.h.b16 %v922
        %v1683 = vunpack.c.l.b16 %v923
        %v1684 = vunpack.c.h.b16 %v923
        %v1685 = vunpack.c.l.b16 %v924
        %v1686 = vunpack.c.h.b16 %v924
        %v1687 = vunpack.c.l.b16 %v925
        %v1688 = vunpack.c.h.b16 %v925
        %v1689 = vunpack.c.l.b16 %v926
        %v1690 = vunpack.c.h.b16 %v926
        %v1691 = vunpack.c.l.b16 %v927
        %v1692 = vunpack.c.h.b16 %v927
        %v1693 = vunpack.c.l.b16 %v928
        %v1694 = vunpack.c.h.b16 %v928
        %v1695 = vunpack.c.l.b16 %v929
        %v1696 = vunpack.c.h.b16 %v929
        %v1697 = vunpack.c.l.b16 %v930
        %v1698 = vunpack.c.h.b16 %v930
        %v1699 = vpack.c.b16 %v1219, %v1187
        %v1700 = vpack.c.b16 %v1220, %v1188
        %v1701 = vpack.c.b16 %v1221, %v1189
        %v1702 = vpack.c.b16 %v1222, %v1190
        %v1703 = vpack.c.b16 %v1223, %v1191
        %v1704 = vpack.c.b16 %v1224, %v1192
        %v1705 = vpack.c.b16 %v1225, %v1193
        %v1706 = vpack.c.b16 %v1226, %v1194
        %v1707 = vpack.c.b16 %v1227, %v1195
        %v1708 = vpack.c.b16 %v1228, %v1196
        %v1709 = vpack.c.b16 %v1229, %v1197
        %v1710 = vpack.c.b16 %v1230, %v1198
        %v1711 = vpack.c.b16 %v1231, %v1199
        %v1712 = vpack.c.b16 %v1232, %v1200
        %v1713 = vpack.c.b16 %v1233, %v1201
        %v1714 = vpack.c.b16 %v1234, %v1202
        %v1715 = vpack.c.b16 %v1235, %v1203
        %v1716 = vpack.c.b16 %v1236, %v1204
        %v1717 = vpack.c.b16 %v1237, %v1205
        %v1718 = vpack.c.b16 %v1238, %v1206
        %v1719 = vpack.c.b16 %v1239, %v1207
        %v1720 = vpack.c.b16 %v1240, %v1208
        %v1721 = vpack.c.b16 %v1241, %v1209
        %v1722 = vpack.c.b16 %v1242, %v1210
        %v1723 = vpack.c.b16 %v1243, %v1211
        %v1724 = vpack.c.b16 %v1244, %v1212
        %v1725 = vpack.c.b16 %v1245, %v1213
        %v1726 = vpack.c.b16 %v1246, %v1214
        %v1727 = vpack.c.b16 %v1247, %v1215
        %v1728 = vpack.c.b16 %v1248, %v1216
        %v1729 = vpack.c.b16 %v1249, %v1217
        %v1730 = vpack.c.b16 %v1250, %v1218
        %v1731 = vpack.c.b16 %v1283, %v1251
        %v1732 = vpack.c.b16 %v1284, %v1252
        %v1733 = vpack.c.b16 %v1285, %v1253
        %v1734 = vpack.c.b16 %v1286, %v1254
        %v1735 = vpack.c.b16 %v1287, %v1255
        %v1736 = vpack.c.b16 %v1288, %v1256
        %v1737 = vpack.c.b16 %v1289, %v1257
        %v1738 = vpack.c.b16 %v1290, %v1258
        %v1739 = vpack.c.b16 %v1291, %v1259
        %v1740 = vpack.c.b16 %v1292, %v1260
        %v1741 = vpack.c.b16 %v1293, %v1261
        %v1742 = vpack.c.b16 %v1294, %v1262
        %v1743 = vpack.c.b16 %v1295, %v1263
        %v1744 = vpack.c.b16 %v1296, %v1264
        %v1745 = vpack.c.b16 %v1297, %v1265
        %v1746 = vpack.c.b16 %v1298, %v1266
        %v1747 = vpack.c.b16 %v1299, %v1267
        %v1748 = vpack.c.b16 %v1300, %v1268
        %v1749 = vpack.c.b16 %v1301, %v1269
        %v1750 = vpack.c.b16 %v1302, %v1270
        %v1751 = vpack.c.b16 %v1303, %v1271
        %v1752 = vpack.c.b16 %v1304, %v1272
        %v1753 = vpack.c.b16 %v1305, %v1273
        %v1754 = vpack.c.b16 %v1306, %v1274
        %v1755 = vpack.c.b16 %v1307, %v1275
        %v1756 = vpack.c.b16 %v1308, %v1276
        %v1757 = vpack.c.b16 %v1309, %v1277
        %v1758 = vpack.c.b16 %v1310, %v1278
        %v1759 = vpack.c.b16 %v1311, %v1279
        %v1760 = vpack.c.b16 %v1312, %v1280
        %v1761 = vpack.c.b16 %v1313, %v1281
        %v1762 = vpack.c.b16 %v1314, %v1282
        %v1763 = vpack.c.b16 %v1347, %v1315
        %v1764 = vpack.c.b16 %v1348, %v1316
        %v1765 = vpack.c.b16 %v1349, %v1317
        %v1766 = vpack.c.b16 %v1350, %v1318
        %v1767 = vpack.c.b16 %v1351, %v1319
        %v1768 = vpack.c.b16 %v1352, %v1320
        %v1769 = vpack.c.b16 %v1353, %v1321
        %v1770 = vpack.c.b16 %v1354, %v1322
        %v1771 = vpack.c.b16 %v1355, %v1323
        %v1772 = vpack.c.b16 %v1356, %v1324
        %v1773 = vpack.c.b16 %v1357, %v1325
        %v1774 = vpack.c.b16 %v1358, %v1326
        %v1775 = vpack.c.b16 %v1359, %v1327
        %v1776 = vpack.c.b16 %v1360, %v1328
        %v1777 = vpack.c.b16 %v1361, %v1329
        %v1778 = vpack.c.b16 %v1362, %v1330
        %v1779 = vpack.c.b16 %v1363, %v1331
        %v1780 = vpack.c.b16 %v1364, %v1332
        %v1781 = vpack.c.b16 %v1365, %v1333
        %v1782 = vpack.c.b16 %v1366, %v1334
        %v1783 = vpack.c.b16 %v1367, %v1335
        %v1784 = vpack.c.b16 %v1368, %v1336
        %v1785 = vpack.c.b16 %v1369, %v1337
        %v1786 = vpack.c.b16 %v1370, %v1338
        %v1787 = vpack.c.b16 %v1371, %v1339
        %v1788 = vpack.c.b16 %v1372, %v1340
        %v1789 = vpack.c.b16 %v1373, %v1341
        %v1790 = vpack.c.b16 %v1374, %v1342
        %v1791 = vpack.c.b16 %v1375, %v1343
        %v1792 = vpack.c.b16 %v1376, %v1344
        %v1793 = vpack.c.b16 %v1377, %v1345
        %v1794 = vpack.c.b16 %v1378, %v1346
        %v1795 = vpack.c.b16 %v1411, %v1379
        %v1796 = vpack.c.b16 %v1412, %v1380
        %v1797 = vpack.c.b16 %v1413, %v1381
        %v1798 = vpack.c.b16 %v1414, %v1382
        %v1799 = vpack.c.b16 %v1415, %v1383
        %v1800 = vpack.c.b16 %v1416, %v1384
        %v1801 = vpack.c.b16 %v1417, %v1385
        %v1802 = vpack.c.b16 %v1418, %v1386
        %v1803 = vpack.c.b16 %v1419, %v1387
        %v1804 = vpack.c.b16 %v1420, %v1388
        %v1805 = vpack.c.b16 %v1421, %v1389
        %v1806 = vpack.c.b16 %v1422, %v1390
        %v1807 = vpack.c.b16 %v1423, %v1391
        %v1808 = vpack.c.b16 %v1424, %v1392
        %v1809 = vpack.c.b16 %v1425, %v1393
        %v1810 = vpack.c.b16 %v1426, %v1394
        %v1811 = vpack.c.b16 %v1427, %v1395
        %v1812 = vpack.c.b16 %v1428, %v1396
        %v1813 = vpack.c.b16 %v1429, %v1397
        %v1814 = vpack.c.b16 %v1430, %v1398
        %v1815 = vpack.c.b16 %v1431, %v1399
        %v1816 = vpack.c.b16 %v1432, %v1400
        %v1817 = vpack.c.b16 %v1433, %v1401
        %v1818 = vpack.c.b16 %v1434, %v1402
        %v1819 = vpack.c.b16 %v1435, %v1403
        %v1820 = vpack.c.b16 %v1436, %v1404
        %v1821 = vpack.c.b16 %v1437, %v1405
        %v1822 = vpack.c.b16 %v1438, %v1406
        %v1823 = vpack.c.b16 %v1439, %v1407
        %v1824 = vpack.c.b16 %v1440, %v1408
        %v1825 = vpack.c.b16 %v1441, %v1409
        %v1826 = vpack.c.b16 %v1442, %v1410
        %v1827 = vpack.c.b16 %v1475, %v1443
        %v1828 = vpack.c.b16 %v1476, %v1444
        %v1829 = vpack.c.b16 %v1477, %v1445
        %v1830 = vpack.c.b16 %v1478, %v1446
        %v1831 = vpack.c.b16 %v1479, %v1447
        %v1832 = vpack.c.b16 %v1480, %v1448
        %v1833 = vpack.c.b16 %v1481, %v1449
        %v1834 = vpack.c.b16 %v1482, %v1450
        %v1835 = vpack.c.b16 %v1483, %v1451
        %v1836 = vpack.c.b16 %v1484, %v1452
        %v1837 = vpack.c.b16 %v1485, %v1453
        %v1838 = vpack.c.b16 %v1486, %v1454
        %v1839 = vpack.c.b16 %v1487, %v1455
        %v1840 = vpack.c.b16 %v1488, %v1456
        %v1841 = vpack.c.b16 %v1489, %v1457
        %v1842 = vpack.c.b16 %v1490, %v1458
        %v1843 = vpack.c.b16 %v1491, %v1459
        %v1844 = vpack.c.b16 %v1492, %v1460
        %v1845 = vpack.c.b16 %v1493, %v1461
        %v1846 = vpack.c.b16 %v1494, %v1462
        %v1847 = vpack.c.b16 %v1495, %v1463
        %v1848 = vpack.c.b16 %v1496, %v1464
        %v1849 = vpack.c.b16 %v1497, %v1465
        %v1850 = vpack.c.b16 %v1498, %v1466
        %v1851 = vpack.c.b16 %v1499, %v1467
        %v1852 = vpack.c.b16 %v1500, %v1468
        %v1853 = vpack.c.b16 %v1501, %v1469
        %v1854 = vpack.c.b16 %v1502, %v1470
        %v1855 = vpack.c.b16 %v1503, %v1471
        %v1856 = vpack.c.b16 %v1504, %v1472
        %v1857 = vpack.c.b16 %v1505, %v1473
        %v1858 = vpack.c.b16 %v1506, %v1474
        %v1859 = vpack.c.b16 %v1539, %v1507
        %v1860 = vpack.c.b16 %v1540, %v1508
        %v1861 = vpack.c.b16 %v1541, %v1509
        %v1862 = vpack.c.b16 %v1542, %v1510
        %v1863 = vpack.c.b16 %v1543, %v1511
        %v1864 = vpack.c.b16 %v1544, %v1512
        %v1865 = vpack.c.b16 %v1545, %v1513
        %v1866 = vpack.c.b16 %v1546, %v1514
        %v1867 = vpack.c.b16 %v1547, %v1515
        %v1868 = vpack.c.b16 %v1548, %v1516
        %v1869 = vpack.c.b16 %v1549, %v1517
        %v1870 = vpack.c.b16 %v1550, %v1518
        %v1871 = vpack.c.b16 %v1551, %v1519
        %v1872 = vpack.c.b16 %v1552, %v1520
        %v1873 = vpack.c.b16 %v1553, %v1521
        %v1874 = vpack.c.b16 %v1554, %v1522
        %v1875 = vpack.c.b16 %v1555, %v1523
        %v1876 = vpack.c.b16 %v1556, %v1524
        %v1877 = vpack.c.b16 %v1557, %v1525
        %v1878 = vpack.c.b16 %v1558, %v1526
        %v1879 = vpack.c.b16 %v1559, %v1527
        %v1880 = vpack.c.b16 %v1560, %v1528
        %v1881 = vpack.c.b16 %v1561, %v1529
        %v1882 = vpack.c.b16 %v1562, %v1530
        %v1883 = vpack.c.b16 %v1563, %v1531
        %v1884 = vpack.c.b16 %v1564, %v1532
        %v1885 = vpack.c.b16 %v1565, %v1533
        %v1886 = vpack.c.b16 %v1566, %v1534
        %v1887 = vpack.c.b16 %v1567, %v1535
        %v1888 = vpack.c.b16 %v1568, %v1536
        %v1889 = vpack.c.b16 %v1569, %v1537
        %v1890 = vpack.c.b16 %v1570, %v1538
        %v1891 = vpack.c.b16 %v1603, %v1571
        %v1892 = vpack.c.b16 %v1604, %v1572
        %v1893 = vpack.c.b16 %v1605, %v1573
        %v1894 = vpack.c.b16 %v1606, %v1574
        %v1895 = vpack.c.b16 %v1607, %v1575
        %v1896 = vpack.c.b16 %v1608, %v1576
        %v1897 = vpack.c.b16 %v1609, %v1577
        %v1898 = vpack.c.b16 %v1610, %v1578
        %v1899 = vpack.c.b16 %v1611, %v1579
        %v1900 = vpack.c.b16 %v1612, %v1580
        %v1901 = vpack.c.b16 %v1613, %v1581
        %v1902 = vpack.c.b16 %v1614, %v1582
        %v1903 = vpack.c.b16 %v1615, %v1583
        %v1904 = vpack.c.b16 %v1616, %v1584
        %v1905 = vpack.c.b16 %v1617, %v1585
        %v1906 = vpack.c.b16 %v1618, %v1586
        %v1907 = vpack.c.b16 %v1619, %v1587
        %v1908 = vpack.c.b16 %v1620, %v1588
        %v1909 = vpack.c.b16 %v1621, %v1589
        %v1910 = vpack.c.b16 %v1622, %v1590
        %v1911 = vpack.c.b16 %v1623, %v1591
        %v1912 = vpack.c.b16 %v1624, %v1592
        %v1913 = vpack.c.b16 %v1625, %v1593
        %v1914 = vpack.c.b16 %v1626, %v1594
        %v1915 = vpack.c.b16 %v1627, %v1595
        %v1916 = vpack.c.b16 %v1628, %v1596
        %v1917 = vpack.c.b16 %v1629, %v1597
        %v1918 = vpack.c.b16 %v1630, %v1598
        %v1919 = vpack.c.b16 %v1631, %v1599
        %v1920 = vpack.c.b16 %v1632, %v1600
        %v1921 = vpack.c.b16 %v1633, %v1601
        %v1922 = vpack.c.b16 %v1634, %v1602
        %v1923 = vpack.c.b16 %v1667, %v1635
        %v1924 = vpack.c.b16 %v1668, %v1636
        %v1925 = vpack.c.b16 %v1669, %v1637
        %v1926 = vpack.c.b16 %v1670, %v1638
        %v1927 = vpack.c.b16 %v1671, %v1639
        %v1928 = vpack.c.b16 %v1672, %v1640
        %v1929 = vpack.c.b16 %v1673, %v1641
        %v1930 = vpack.c.b16 %v1674, %v1642
        %v1931 = vpack.c.b16 %v1675, %v1643
        %v1932 = vpack.c.b16 %v1676, %v1644
        %v1933 = vpack.c.b16 %v1677, %v1645
        %v1934 = vpack.c.b16 %v1678, %v1646
        %v1935 = vpack.c.b16 %v1679, %v1647
        %v1936 = vpack.c.b16 %v1680, %v1648
        %v1937 = vpack.c.b16 %v1681, %v1649
        %v1938 = vpack.c.b16 %v1682, %v1650
        %v1939 = vpack.c.b16 %v1683, %v1651
        %v1940 = vpack.c.b16 %v1684, %v1652
        %v1941 = vpack.c.b16 %v1685, %v1653
        %v1942 = vpack.c.b16 %v1686, %v1654
        %v1943 = vpack.c.b16 %v1687, %v1655
        %v1944 = vpack.c.b16 %v1688, %v1656
        %v1945 = vpack.c.b16 %v1689, %v1657
        %v1946 = vpack.c.b16 %v1690, %v1658
        %v1947 = vpack.c.b16 %v1691, %v1659
        %v1948 = vpack.c.b16 %v1692, %v1660
        %v1949 = vpack.c.b16 %v1693, %v1661
        %v1950 = vpack.c.b16 %v1694, %v1662
        %v1951 = vpack.c.b16 %v1695, %v1663
        %v1952 = vpack.c.b16 %v1696, %v1664
        %v1953 = vpack.c.b16 %v1697, %v1665
        %v1954 = vpack.c.b16 %v1698, %v1666
        %2211 = vmatpush.bf16.msra.mxu0 %v1923
        %2212 = vmatpush.bf16.msra.mxu0 %v1891
        %2213 = vmatpush.bf16.msra.mxu0 %v1859
        %2214 = vmatpush.bf16.msra.mxu0 %v1827
        %2215 = vmatpush.bf16.msra.mxu0 %v1795
        %2216 = vmatpush.bf16.msra.mxu0 %v1763
        %2217 = vmatpush.bf16.msra.mxu0 %v1731
        %2218 = vmatpush.bf16.msra.mxu0 %v1699
        %2219 = vmatmul.bf16.gmra.mxu0 %v674
        %v2220 = vpop.f32.mrf.mxu0
        %v2221 = vadd.f32 0.0, %v2220
        %v2222 = vpop.f32.mrf.mxu0
        %2223 = vdwg.mxu0
        %2224 = vmatpush.bf16.msra.mxu0 %v1924
        %2225 = vmatpush.bf16.msra.mxu0 %v1892
        %2226 = vmatpush.bf16.msra.mxu0 %v1860
        %2227 = vmatpush.bf16.msra.mxu0 %v1828
        %2228 = vmatpush.bf16.msra.mxu0 %v1796
        %2229 = vmatpush.bf16.msra.mxu0 %v1764
        %2230 = vmatpush.bf16.msra.mxu0 %v1732
        %2231 = vmatpush.bf16.msra.mxu0 %v1700
        %2232 = vmatmul.bf16.gmra.mxu0 %v674
        %v2233 = vpop.f32.mrf.mxu0
        %v2234 = vadd.f32 0.0, %v2233
        %v2235 = vpop.f32.mrf.mxu0
        %2236 = vdwg.mxu0
        %2237 = vmatpush.bf16.msra.mxu0 %v1925
        %2238 = vmatpush.bf16.msra.mxu0 %v1893
        %2239 = vmatpush.bf16.msra.mxu0 %v1861
        %2240 = vmatpush.bf16.msra.mxu0 %v1829
        %2241 = vmatpush.bf16.msra.mxu0 %v1797
        %2242 = vmatpush.bf16.msra.mxu0 %v1765
        %2243 = vmatpush.bf16.msra.mxu0 %v1733
        %2244 = vmatpush.bf16.msra.mxu0 %v1701
        %2245 = vmatmul.bf16.gmra.mxu0 %v674
        %v2246 = vpop.f32.mrf.mxu0
        %v2247 = vadd.f32 0.0, %v2246
        %v2248 = vpop.f32.mrf.mxu0
        %2249 = vdwg.mxu0
        %2250 = vmatpush.bf16.msra.mxu0 %v1926
        %2251 = vmatpush.bf16.msra.mxu0 %v1894
        %2252 = vmatpush.bf16.msra.mxu0 %v1862
        %2253 = vmatpush.bf16.msra.mxu0 %v1830
        %2254 = vmatpush.bf16.msra.mxu0 %v1798
        %2255 = vmatpush.bf16.msra.mxu0 %v1766
        %2256 = vmatpush.bf16.msra.mxu0 %v1734
        %2257 = vmatpush.bf16.msra.mxu0 %v1702
        %2258 = vmatmul.bf16.gmra.mxu0 %v674
        %v2259 = vpop.f32.mrf.mxu0
        %v2260 = vadd.f32 0.0, %v2259
        %v2261 = vpop.f32.mrf.mxu0
        %2262 = vdwg.mxu0
        %2263 = vmatpush.bf16.msra.mxu0 %v1927
        %2264 = vmatpush.bf16.msra.mxu0 %v1895
        %2265 = vmatpush.bf16.msra.mxu0 %v1863
        %2266 = vmatpush.bf16.msra.mxu0 %v1831
        %2267 = vmatpush.bf16.msra.mxu0 %v1799
        %2268 = vmatpush.bf16.msra.mxu0 %v1767
        %2269 = vmatpush.bf16.msra.mxu0 %v1735
        %2270 = vmatpush.bf16.msra.mxu0 %v1703
        %2271 = vmatmul.bf16.gmra.mxu0 %v674
        %v2272 = vpop.f32.mrf.mxu0
        %v2273 = vadd.f32 0.0, %v2272
        %v2274 = vpop.f32.mrf.mxu0
        %2275 = vdwg.mxu0
        %2276 = vmatpush.bf16.msra.mxu0 %v1928
        %2277 = vmatpush.bf16.msra.mxu0 %v1896
        %2278 = vmatpush.bf16.msra.mxu0 %v1864
        %2279 = vmatpush.bf16.msra.mxu0 %v1832
        %2280 = vmatpush.bf16.msra.mxu0 %v1800
        %2281 = vmatpush.bf16.msra.mxu0 %v1768
        %2282 = vmatpush.bf16.msra.mxu0 %v1736
        %2283 = vmatpush.bf16.msra.mxu0 %v1704
        %2284 = vmatmul.bf16.gmra.mxu0 %v674
        %v2285 = vpop.f32.mrf.mxu0
        %v2286 = vadd.f32 0.0, %v2285
        %v2287 = vpop.f32.mrf.mxu0
        %2288 = vdwg.mxu0
        %2289 = vmatpush.bf16.msra.mxu0 %v1929
        %2290 = vmatpush.bf16.msra.mxu0 %v1897
        %2291 = vmatpush.bf16.msra.mxu0 %v1865
        %2292 = vmatpush.bf16.msra.mxu0 %v1833
        %2293 = vmatpush.bf16.msra.mxu0 %v1801
        %2294 = vmatpush.bf16.msra.mxu0 %v1769
        %2295 = vmatpush.bf16.msra.mxu0 %v1737
        %2296 = vmatpush.bf16.msra.mxu0 %v1705
        %2297 = vmatmul.bf16.gmra.mxu0 %v674
        %v2298 = vpop.f32.mrf.mxu0
        %v2299 = vadd.f32 0.0, %v2298
        %v2300 = vpop.f32.mrf.mxu0
        %2301 = vdwg.mxu0
        %2302 = vmatpush.bf16.msra.mxu0 %v1930
        %2303 = vmatpush.bf16.msra.mxu0 %v1898
        %2304 = vmatpush.bf16.msra.mxu0 %v1866
        %2305 = vmatpush.bf16.msra.mxu0 %v1834
        %2306 = vmatpush.bf16.msra.mxu0 %v1802
        %2307 = vmatpush.bf16.msra.mxu0 %v1770
        %2308 = vmatpush.bf16.msra.mxu0 %v1738
        %2309 = vmatpush.bf16.msra.mxu0 %v1706
        %2310 = vmatmul.bf16.gmra.mxu0 %v674
        %v2311 = vpop.f32.mrf.mxu0
        %v2312 = vadd.f32 0.0, %v2311
        %v2313 = vpop.f32.mrf.mxu0
        %2314 = vdwg.mxu0
        %2315 = vmatpush.bf16.msra.mxu0 %v1931
        %2316 = vmatpush.bf16.msra.mxu0 %v1899
        %2317 = vmatpush.bf16.msra.mxu0 %v1867
        %2318 = vmatpush.bf16.msra.mxu0 %v1835
        %2319 = vmatpush.bf16.msra.mxu0 %v1803
        %2320 = vmatpush.bf16.msra.mxu0 %v1771
        %2321 = vmatpush.bf16.msra.mxu0 %v1739
        %2322 = vmatpush.bf16.msra.mxu0 %v1707
        %2323 = vmatmul.bf16.gmra.mxu0 %v674
        %v2324 = vpop.f32.mrf.mxu0
        %v2325 = vadd.f32 0.0, %v2324
        %v2326 = vpop.f32.mrf.mxu0
        %2327 = vdwg.mxu0
        %2328 = vmatpush.bf16.msra.mxu0 %v1932
        %2329 = vmatpush.bf16.msra.mxu0 %v1900
        %2330 = vmatpush.bf16.msra.mxu0 %v1868
        %2331 = vmatpush.bf16.msra.mxu0 %v1836
        %2332 = vmatpush.bf16.msra.mxu0 %v1804
        %2333 = vmatpush.bf16.msra.mxu0 %v1772
        %2334 = vmatpush.bf16.msra.mxu0 %v1740
        %2335 = vmatpush.bf16.msra.mxu0 %v1708
        %2336 = vmatmul.bf16.gmra.mxu0 %v674
        %v2337 = vpop.f32.mrf.mxu0
        %v2338 = vadd.f32 0.0, %v2337
        %v2339 = vpop.f32.mrf.mxu0
        %2340 = vdwg.mxu0
        %2341 = vmatpush.bf16.msra.mxu0 %v1933
        %2342 = vmatpush.bf16.msra.mxu0 %v1901
        %2343 = vmatpush.bf16.msra.mxu0 %v1869
        %2344 = vmatpush.bf16.msra.mxu0 %v1837
        %2345 = vmatpush.bf16.msra.mxu0 %v1805
        %2346 = vmatpush.bf16.msra.mxu0 %v1773
        %2347 = vmatpush.bf16.msra.mxu0 %v1741
        %2348 = vmatpush.bf16.msra.mxu0 %v1709
        %2349 = vmatmul.bf16.gmra.mxu0 %v674
        %v2350 = vpop.f32.mrf.mxu0
        %v2351 = vadd.f32 0.0, %v2350
        %v2352 = vpop.f32.mrf.mxu0
        %2353 = vdwg.mxu0
        %2354 = vmatpush.bf16.msra.mxu0 %v1934
        %2355 = vmatpush.bf16.msra.mxu0 %v1902
        %2356 = vmatpush.bf16.msra.mxu0 %v1870
        %2357 = vmatpush.bf16.msra.mxu0 %v1838
        %2358 = vmatpush.bf16.msra.mxu0 %v1806
        %2359 = vmatpush.bf16.msra.mxu0 %v1774
        %2360 = vmatpush.bf16.msra.mxu0 %v1742
        %2361 = vmatpush.bf16.msra.mxu0 %v1710
        %2362 = vmatmul.bf16.gmra.mxu0 %v674
        %v2363 = vpop.f32.mrf.mxu0
        %v2364 = vadd.f32 0.0, %v2363
        %v2365 = vpop.f32.mrf.mxu0
        %2366 = vdwg.mxu0
        %2367 = vmatpush.bf16.msra.mxu0 %v1935
        %2368 = vmatpush.bf16.msra.mxu0 %v1903
        %2369 = vmatpush.bf16.msra.mxu0 %v1871
        %2370 = vmatpush.bf16.msra.mxu0 %v1839
        %2371 = vmatpush.bf16.msra.mxu0 %v1807
        %2372 = vmatpush.bf16.msra.mxu0 %v1775
        %2373 = vmatpush.bf16.msra.mxu0 %v1743
        %2374 = vmatpush.bf16.msra.mxu0 %v1711
        %2375 = vmatmul.bf16.gmra.mxu0 %v674
        %v2376 = vpop.f32.mrf.mxu0
        %v2377 = vadd.f32 0.0, %v2376
        %v2378 = vpop.f32.mrf.mxu0
        %2379 = vdwg.mxu0
        %2380 = vmatpush.bf16.msra.mxu0 %v1936
        %2381 = vmatpush.bf16.msra.mxu0 %v1904
        %2382 = vmatpush.bf16.msra.mxu0 %v1872
        %2383 = vmatpush.bf16.msra.mxu0 %v1840
        %2384 = vmatpush.bf16.msra.mxu0 %v1808
        %2385 = vmatpush.bf16.msra.mxu0 %v1776
        %2386 = vmatpush.bf16.msra.mxu0 %v1744
        %2387 = vmatpush.bf16.msra.mxu0 %v1712
        %2388 = vmatmul.bf16.gmra.mxu0 %v674
        %v2389 = vpop.f32.mrf.mxu0
        %v2390 = vadd.f32 0.0, %v2389
        %v2391 = vpop.f32.mrf.mxu0
        %2392 = vdwg.mxu0
        %2393 = vmatpush.bf16.msra.mxu0 %v1937
        %2394 = vmatpush.bf16.msra.mxu0 %v1905
        %2395 = vmatpush.bf16.msra.mxu0 %v1873
        %2396 = vmatpush.bf16.msra.mxu0 %v1841
        %2397 = vmatpush.bf16.msra.mxu0 %v1809
        %2398 = vmatpush.bf16.msra.mxu0 %v1777
        %2399 = vmatpush.bf16.msra.mxu0 %v1745
        %2400 = vmatpush.bf16.msra.mxu0 %v1713
        %2401 = vmatmul.bf16.gmra.mxu0 %v674
        %v2402 = vpop.f32.mrf.mxu0
        %v2403 = vadd.f32 0.0, %v2402
        %v2404 = vpop.f32.mrf.mxu0
        %2405 = vdwg.mxu0
        %2406 = vmatpush.bf16.msra.mxu0 %v1938
        %2407 = vmatpush.bf16.msra.mxu0 %v1906
        %2408 = vmatpush.bf16.msra.mxu0 %v1874
        %2409 = vmatpush.bf16.msra.mxu0 %v1842
        %2410 = vmatpush.bf16.msra.mxu0 %v1810
        %2411 = vmatpush.bf16.msra.mxu0 %v1778
        %2412 = vmatpush.bf16.msra.mxu0 %v1746
        %2413 = vmatpush.bf16.msra.mxu0 %v1714
        %2414 = vmatmul.bf16.gmra.mxu0 %v674
        %v2415 = vpop.f32.mrf.mxu0
        %v2416 = vadd.f32 0.0, %v2415
        %v2417 = vpop.f32.mrf.mxu0
        %2418 = vdwg.mxu0
        %2419 = vmatpush.bf16.msra.mxu0 %v1939
        %2420 = vmatpush.bf16.msra.mxu0 %v1907
        %2421 = vmatpush.bf16.msra.mxu0 %v1875
        %2422 = vmatpush.bf16.msra.mxu0 %v1843
        %2423 = vmatpush.bf16.msra.mxu0 %v1811
        %2424 = vmatpush.bf16.msra.mxu0 %v1779
        %2425 = vmatpush.bf16.msra.mxu0 %v1747
        %2426 = vmatpush.bf16.msra.mxu0 %v1715
        %2427 = vmatmul.bf16.gmra.mxu0 %v674
        %v2428 = vpop.f32.mrf.mxu0
        %v2429 = vadd.f32 0.0, %v2428
        %v2430 = vpop.f32.mrf.mxu0
        %2431 = vdwg.mxu0
        %2432 = vmatpush.bf16.msra.mxu0 %v1940
        %2433 = vmatpush.bf16.msra.mxu0 %v1908
        %2434 = vmatpush.bf16.msra.mxu0 %v1876
        %2435 = vmatpush.bf16.msra.mxu0 %v1844
        %2436 = vmatpush.bf16.msra.mxu0 %v1812
        %2437 = vmatpush.bf16.msra.mxu0 %v1780
        %2438 = vmatpush.bf16.msra.mxu0 %v1748
        %2439 = vmatpush.bf16.msra.mxu0 %v1716
        %2440 = vmatmul.bf16.gmra.mxu0 %v674
        %v2441 = vpop.f32.mrf.mxu0
        %v2442 = vadd.f32 0.0, %v2441
        %v2443 = vpop.f32.mrf.mxu0
        %2444 = vdwg.mxu0
        %2445 = vmatpush.bf16.msra.mxu0 %v1941
        %2446 = vmatpush.bf16.msra.mxu0 %v1909
        %2447 = vmatpush.bf16.msra.mxu0 %v1877
        %2448 = vmatpush.bf16.msra.mxu0 %v1845
        %2449 = vmatpush.bf16.msra.mxu0 %v1813
        %2450 = vmatpush.bf16.msra.mxu0 %v1781
        %2451 = vmatpush.bf16.msra.mxu0 %v1749
        %2452 = vmatpush.bf16.msra.mxu0 %v1717
        %2453 = vmatmul.bf16.gmra.mxu0 %v674
        %v2454 = vpop.f32.mrf.mxu0
        %v2455 = vadd.f32 0.0, %v2454
        %v2456 = vpop.f32.mrf.mxu0
        %2457 = vdwg.mxu0
        %2458 = vmatpush.bf16.msra.mxu0 %v1942
        %2459 = vmatpush.bf16.msra.mxu0 %v1910
        %2460 = vmatpush.bf16.msra.mxu0 %v1878
        %2461 = vmatpush.bf16.msra.mxu0 %v1846
        %2462 = vmatpush.bf16.msra.mxu0 %v1814
        %2463 = vmatpush.bf16.msra.mxu0 %v1782
        %2464 = vmatpush.bf16.msra.mxu0 %v1750
        %2465 = vmatpush.bf16.msra.mxu0 %v1718
        %2466 = vmatmul.bf16.gmra.mxu0 %v674
        %v2467 = vpop.f32.mrf.mxu0
        %v2468 = vadd.f32 0.0, %v2467
        %v2469 = vpop.f32.mrf.mxu0
        %2470 = vdwg.mxu0
        %2471 = vmatpush.bf16.msra.mxu0 %v1943
        %2472 = vmatpush.bf16.msra.mxu0 %v1911
        %2473 = vmatpush.bf16.msra.mxu0 %v1879
        %2474 = vmatpush.bf16.msra.mxu0 %v1847
        %2475 = vmatpush.bf16.msra.mxu0 %v1815
        %2476 = vmatpush.bf16.msra.mxu0 %v1783
        %2477 = vmatpush.bf16.msra.mxu0 %v1751
        %2478 = vmatpush.bf16.msra.mxu0 %v1719
        %2479 = vmatmul.bf16.gmra.mxu0 %v674
        %v2480 = vpop.f32.mrf.mxu0
        %v2481 = vadd.f32 0.0, %v2480
        %v2482 = vpop.f32.mrf.mxu0
        %2483 = vdwg.mxu0
        %2484 = vmatpush.bf16.msra.mxu0 %v1944
        %2485 = vmatpush.bf16.msra.mxu0 %v1912
        %2486 = vmatpush.bf16.msra.mxu0 %v1880
        %2487 = vmatpush.bf16.msra.mxu0 %v1848
        %2488 = vmatpush.bf16.msra.mxu0 %v1816
        %2489 = vmatpush.bf16.msra.mxu0 %v1784
        %2490 = vmatpush.bf16.msra.mxu0 %v1752
        %2491 = vmatpush.bf16.msra.mxu0 %v1720
        %2492 = vmatmul.bf16.gmra.mxu0 %v674
        %v2493 = vpop.f32.mrf.mxu0
        %v2494 = vadd.f32 0.0, %v2493
        %v2495 = vpop.f32.mrf.mxu0
        %2496 = vdwg.mxu0
        %2497 = vmatpush.bf16.msra.mxu0 %v1945
        %2498 = vmatpush.bf16.msra.mxu0 %v1913
        %2499 = vmatpush.bf16.msra.mxu0 %v1881
        %2500 = vmatpush.bf16.msra.mxu0 %v1849
        %2501 = vmatpush.bf16.msra.mxu0 %v1817
        %2502 = vmatpush.bf16.msra.mxu0 %v1785
        %2503 = vmatpush.bf16.msra.mxu0 %v1753
        %2504 = vmatpush.bf16.msra.mxu0 %v1721
        %2505 = vmatmul.bf16.gmra.mxu0 %v674
        %v2506 = vpop.f32.mrf.mxu0
        %v2507 = vadd.f32 0.0, %v2506
        %v2508 = vpop.f32.mrf.mxu0
        %2509 = vdwg.mxu0
        %2510 = vmatpush.bf16.msra.mxu0 %v1946
        %2511 = vmatpush.bf16.msra.mxu0 %v1914
        %2512 = vmatpush.bf16.msra.mxu0 %v1882
        %2513 = vmatpush.bf16.msra.mxu0 %v1850
        %2514 = vmatpush.bf16.msra.mxu0 %v1818
        %2515 = vmatpush.bf16.msra.mxu0 %v1786
        %2516 = vmatpush.bf16.msra.mxu0 %v1754
        %2517 = vmatpush.bf16.msra.mxu0 %v1722
        %2518 = vmatmul.bf16.gmra.mxu0 %v674
        %v2519 = vpop.f32.mrf.mxu0
        %v2520 = vadd.f32 0.0, %v2519
        %v2521 = vpop.f32.mrf.mxu0
        %2522 = vdwg.mxu0
        %2523 = vmatpush.bf16.msra.mxu0 %v1947
        %2524 = vmatpush.bf16.msra.mxu0 %v1915
        %2525 = vmatpush.bf16.msra.mxu0 %v1883
        %2526 = vmatpush.bf16.msra.mxu0 %v1851
        %2527 = vmatpush.bf16.msra.mxu0 %v1819
        %2528 = vmatpush.bf16.msra.mxu0 %v1787
        %2529 = vmatpush.bf16.msra.mxu0 %v1755
        %2530 = vmatpush.bf16.msra.mxu0 %v1723
        %2531 = vmatmul.bf16.gmra.mxu0 %v674
        %v2532 = vpop.f32.mrf.mxu0
        %v2533 = vadd.f32 0.0, %v2532
        %v2534 = vpop.f32.mrf.mxu0
        %2535 = vdwg.mxu0
        %2536 = vmatpush.bf16.msra.mxu0 %v1948
        %2537 = vmatpush.bf16.msra.mxu0 %v1916
        %2538 = vmatpush.bf16.msra.mxu0 %v1884
        %2539 = vmatpush.bf16.msra.mxu0 %v1852
        %2540 = vmatpush.bf16.msra.mxu0 %v1820
        %2541 = vmatpush.bf16.msra.mxu0 %v1788
        %2542 = vmatpush.bf16.msra.mxu0 %v1756
        %2543 = vmatpush.bf16.msra.mxu0 %v1724
        %2544 = vmatmul.bf16.gmra.mxu0 %v674
        %v2545 = vpop.f32.mrf.mxu0
        %v2546 = vadd.f32 0.0, %v2545
        %v2547 = vpop.f32.mrf.mxu0
        %2548 = vdwg.mxu0
        %2549 = vmatpush.bf16.msra.mxu0 %v1949
        %2550 = vmatpush.bf16.msra.mxu0 %v1917
        %2551 = vmatpush.bf16.msra.mxu0 %v1885
        %2552 = vmatpush.bf16.msra.mxu0 %v1853
        %2553 = vmatpush.bf16.msra.mxu0 %v1821
        %2554 = vmatpush.bf16.msra.mxu0 %v1789
        %2555 = vmatpush.bf16.msra.mxu0 %v1757
        %2556 = vmatpush.bf16.msra.mxu0 %v1725
        %2557 = vmatmul.bf16.gmra.mxu0 %v674
        %v2558 = vpop.f32.mrf.mxu0
        %v2559 = vadd.f32 0.0, %v2558
        %v2560 = vpop.f32.mrf.mxu0
        %2561 = vdwg.mxu0
        %2562 = vmatpush.bf16.msra.mxu0 %v1950
        %2563 = vmatpush.bf16.msra.mxu0 %v1918
        %2564 = vmatpush.bf16.msra.mxu0 %v1886
        %2565 = vmatpush.bf16.msra.mxu0 %v1854
        %2566 = vmatpush.bf16.msra.mxu0 %v1822
        %2567 = vmatpush.bf16.msra.mxu0 %v1790
        %2568 = vmatpush.bf16.msra.mxu0 %v1758
        %2569 = vmatpush.bf16.msra.mxu0 %v1726
        %2570 = vmatmul.bf16.gmra.mxu0 %v674
        %v2571 = vpop.f32.mrf.mxu0
        %v2572 = vadd.f32 0.0, %v2571
        %v2573 = vpop.f32.mrf.mxu0
        %2574 = vdwg.mxu0
        %2575 = vmatpush.bf16.msra.mxu0 %v1951
        %2576 = vmatpush.bf16.msra.mxu0 %v1919
        %2577 = vmatpush.bf16.msra.mxu0 %v1887
        %2578 = vmatpush.bf16.msra.mxu0 %v1855
        %2579 = vmatpush.bf16.msra.mxu0 %v1823
        %2580 = vmatpush.bf16.msra.mxu0 %v1791
        %2581 = vmatpush.bf16.msra.mxu0 %v1759
        %2582 = vmatpush.bf16.msra.mxu0 %v1727
        %2583 = vmatmul.bf16.gmra.mxu0 %v674
        %v2584 = vpop.f32.mrf.mxu0
        %v2585 = vadd.f32 0.0, %v2584
        %v2586 = vpop.f32.mrf.mxu0
        %2587 = vdwg.mxu0
        %2588 = vmatpush.bf16.msra.mxu0 %v1952
        %2589 = vmatpush.bf16.msra.mxu0 %v1920
        %2590 = vmatpush.bf16.msra.mxu0 %v1888
        %2591 = vmatpush.bf16.msra.mxu0 %v1856
        %2592 = vmatpush.bf16.msra.mxu0 %v1824
        %2593 = vmatpush.bf16.msra.mxu0 %v1792
        %2594 = vmatpush.bf16.msra.mxu0 %v1760
        %2595 = vmatpush.bf16.msra.mxu0 %v1728
        %2596 = vmatmul.bf16.gmra.mxu0 %v674
        %v2597 = vpop.f32.mrf.mxu0
        %v2598 = vadd.f32 0.0, %v2597
        %v2599 = vpop.f32.mrf.mxu0
        %2600 = vdwg.mxu0
        %2601 = vmatpush.bf16.msra.mxu0 %v1953
        %2602 = vmatpush.bf16.msra.mxu0 %v1921
        %2603 = vmatpush.bf16.msra.mxu0 %v1889
        %2604 = vmatpush.bf16.msra.mxu0 %v1857
        %2605 = vmatpush.bf16.msra.mxu0 %v1825
        %2606 = vmatpush.bf16.msra.mxu0 %v1793
        %2607 = vmatpush.bf16.msra.mxu0 %v1761
        %2608 = vmatpush.bf16.msra.mxu0 %v1729
        %2609 = vmatmul.bf16.gmra.mxu0 %v674
        %v2610 = vpop.f32.mrf.mxu0
        %v2611 = vadd.f32 0.0, %v2610
        %v2612 = vpop.f32.mrf.mxu0
        %2613 = vdwg.mxu0
        %2614 = vmatpush.bf16.msra.mxu0 %v1954
        %2615 = vmatpush.bf16.msra.mxu0 %v1922
        %2616 = vmatpush.bf16.msra.mxu0 %v1890
        %2617 = vmatpush.bf16.msra.mxu0 %v1858
        %2618 = vmatpush.bf16.msra.mxu0 %v1826
        %2619 = vmatpush.bf16.msra.mxu0 %v1794
        %2620 = vmatpush.bf16.msra.mxu0 %v1762
        %2621 = vmatpush.bf16.msra.mxu0 %v1730
        %2622 = vmatmul.bf16.gmra.mxu0 %v674
        %v2623 = vpop.f32.mrf.mxu0
        %v2624 = vadd.f32 0.0, %v2623
        %v2625 = vpop.f32.mrf.mxu0
        %2626 = vdwg.mxu0
        %v2627 = vtanh.pop %v2221
        %v2628 = vtanh.pop %v2234
        %v2629 = vtanh.pop %v2247
        %v2630 = vtanh.pop %v2260
        %v2631 = vtanh.pop %v2273
        %v2632 = vtanh.pop %v2286
        %v2633 = vtanh.pop %v2299
        %v2634 = vtanh.pop %v2312
        %v2635 = vtanh.pop %v2325
        %v2636 = vtanh.pop %v2338
        %v2637 = vtanh.pop %v2351
        %v2638 = vtanh.pop %v2364
        %v2639 = vtanh.pop %v2377
        %v2640 = vtanh.pop %v2390
        %v2641 = vtanh.pop %v2403
        %v2642 = vtanh.pop %v2416
        %v2643 = vtanh.pop %v2429
        %v2644 = vtanh.pop %v2442
        %v2645 = vtanh.pop %v2455
        %v2646 = vtanh.pop %v2468
        %v2647 = vtanh.pop %v2481
        %v2648 = vtanh.pop %v2494
        %v2649 = vtanh.pop %v2507
        %v2650 = vtanh.pop %v2520
        %v2651 = vtanh.pop %v2533
        %v2652 = vtanh.pop %v2546
        %v2653 = vtanh.pop %v2559
        %v2654 = vtanh.pop %v2572
        %v2655 = vtanh.pop %v2585
        %v2656 = vtanh.pop %v2598
        %v2657 = vtanh.pop %v2611
        %v2658 = vtanh.pop %v2624
        %v2691 = vrot.slane %v2628, 7
        %v2692 = vrot.slane %v2629, 6
        %v2693 = vrot.slane %v2630, 5
        %v2694 = vrot.slane %v2631, 4
        %v2695 = vrot.slane %v2632, 3
        %v2696 = vrot.slane %v2633, 2
        %v2697 = vrot.slane %v2634, 1
        %v2698 = vrot.slane %v2636, 7
        %v2699 = vrot.slane %v2637, 6
        %v2700 = vrot.slane %v2638, 5
        %v2701 = vrot.slane %v2639, 4
        %v2702 = vrot.slane %v2640, 3
        %v2703 = vrot.slane %v2641, 2
        %v2704 = vrot.slane %v2642, 1
        %v2705 = vrot.slane %v2644, 7
        %v2706 = vrot.slane %v2645, 6
        %v2707 = vrot.slane %v2646, 5
        %v2708 = vrot.slane %v2647, 4
        %v2709 = vrot.slane %v2648, 3
        %v2710 = vrot.slane %v2649, 2
        %v2711 = vrot.slane %v2650, 1
        %v2712 = vrot.slane %v2652, 7
        %v2713 = vrot.slane %v2653, 6
        %v2714 = vrot.slane %v2654, 5
        %v2715 = vrot.slane %v2655, 4
        %v2716 = vrot.slane %v2656, 3
        %v2717 = vrot.slane %v2657, 2
        %v2718 = vrot.slane %v2658, 1
        %vm2719 = vcmask 1040384
        %v2720 = vsel %vm2719, %v2627, %v2691
        %vm2721 = vcmask 1042434
        %v2722 = vsel %vm2721, %v2692, %v2693
        %vm2723 = vcmask 1041408
        %v2724 = vsel %vm2723, %v2720, %v2722
        %vm2725 = vcmask 1044484
        %v2726 = vsel %vm2725, %v2694, %v2695
        %vm2727 = vcmask 1046534
        %v2728 = vsel %vm2727, %v2696, %v2697
        %vm2729 = vcmask 1045508
        %v2730 = vsel %vm2729, %v2726, %v2728
        %vm2731 = vcmask 1043456
        %v2732 = vsel %vm2731, %v2724, %v2730
        %v2733 = vsel %vm2719, %v2635, %v2698
        %v2734 = vsel %vm2721, %v2699, %v2700
        %v2735 = vsel %vm2723, %v2733, %v2734
        %v2736 = vsel %vm2725, %v2701, %v2702
        %v2737 = vsel %vm2727, %v2703, %v2704
        %v2738 = vsel %vm2729, %v2736, %v2737
        %v2739 = vsel %vm2731, %v2735, %v2738
        %v2740 = vsel %vm2719, %v2643, %v2705
        %v2741 = vsel %vm2721, %v2706, %v2707
        %v2742 = vsel %vm2723, %v2740, %v2741
        %v2743 = vsel %vm2725, %v2708, %v2709
        %v2744 = vsel %vm2727, %v2710, %v2711
        %v2745 = vsel %vm2729, %v2743, %v2744
        %v2746 = vsel %vm2731, %v2742, %v2745
        %v2747 = vsel %vm2719, %v2651, %v2712
        %v2748 = vsel %vm2721, %v2713, %v2714
        %v2749 = vsel %vm2723, %v2747, %v2748
        %v2750 = vsel %vm2725, %v2715, %v2716
        %v2751 = vsel %vm2727, %v2717, %v2718
        %v2752 = vsel %vm2729, %v2750, %v2751
        %v2753 = vsel %vm2731, %v2749, %v2752
        %2758 = vst [vmem:[%s672] sm:$0xff] %v2732
        %2759 = vst [vmem:[%s672 + $0x8] sm:$0xff] %v2739
        %2760 = vst [vmem:[%s672 + $0x10] sm:$0xff] %v2746
        %2761 = vst [vmem:[%s672 + $0x18] sm:$0xff] %v2753
        %s2762 = smul.u32 32, %s13
        %p2763 = scmp.lt.s32.totalorder %s2762, 63
        %s2764 = scalar_select %p2763, %s2762, 63
        %s2765 = scalar_lea.vmem %s2, %s2764
        // Predicated region
        $region52: #{generator_forward.9} parent=46 // pred_check
          %p2766 = pneg %p78
        $region53: #{generator_forward.9} parent=46 // pred_check_branch
          %2768 = sbr.rel (%p2766) target = $region55
        $region54: #{generator_forward.9} parent=46 // pred_region
          %s2769 = smul.u32 32, %s13
        $region55: #{generator_forward.9} parent=46 // pred_fallthru
          _
      $region47: #{generator_forward.9} parent=5 // pred_fallthru
        _
      %p2770 = scmp.le.s32.totalorder 2, %s8
      // Predicated region
      $region56: #{generator_forward.9} parent=5 // pred_check
        %p2771 = pneg %p2770
      $region57: #{generator_forward.9} parent=5 // pred_check_branch
        %2773 = sbr.rel (%p2771) target = $region59
      $region58: #{generator_forward.9} parent=5 // pred_region
        %s2774 = ssub.s32 %s8, 2
        // Predicated region
        $region60: #{generator_forward.9} parent=58 // pred_check
          %p2775 = pneg %p84
        $region61: #{generator_forward.9} parent=58 // pred_check_branch
          %2777 = sbr.rel (%p2775) target = $region63
        $region62: #{generator_forward.9} parent=58 // pred_region
          %s2778 = smul.u32 32, %s14
          %p2779 = scmp.lt.s32.totalorder %s2778, 63
          %s2780 = scalar_select %p2779, %s2778, 63
          %s2781 = scalar_lea.vmem %s2, %s2780
        $region63: #{generator_forward.9} parent=58 // pred_fallthru
          _
      $region59: #{generator_forward.9} parent=5 // pred_fallthru
        _
    $region6: #{generator_forward.9} parent=1 // loop_footer
      %s12 = sadd.s32 1, %s8
    $region7: #{generator_forward.9} parent=1 // loop_footer_branch
      %7 = sbr.rel target = $region3
    $region8: #{generator_forward.9} parent=1 // loop_exit
      _

</llo_original>
